<compile_context>
chip_gen: v6e
topology: v6e:2x2x1
jax: 0.10.0
libtpu: 0.0.40
codegen_flags: <defaults>
</compile_context>

<pallas_src>
import functools

import jax
import jax.numpy as jnp
from jax.experimental import pallas as pl
from jax.experimental.pallas import tpu as pltpu


# ----------------------------------------------------------------------------
# In-kernel helpers (element-wise math kept in f32)
# ----------------------------------------------------------------------------
def _erf_approx(x):
    # Abramowitz & Stegun 7.1.26 rational approximation, ~1.5e-7 abs error,
    # i.e. float32-level agreement with torch.nn.GELU() (exact erf form).
    a1, a2, a3, a4, a5 = 0.254829592, -0.284496736, 1.421413741, -1.453152027, 1.061405429
    p = 0.3275911
    sgn = jnp.where(x >= 0.0, 1.0, -1.0)
    ax = jnp.abs(x)
    # reciprocal on the EUP slot instead of a VALU divide.
    t = pl.reciprocal(1.0 + p * ax, approx=True)
    poly = ((((a5 * t + a4) * t + a3) * t + a2) * t + a1) * t
    return sgn * (1.0 - poly * jnp.exp(-ax * ax))


def _gelu_exact(x):
    # GELU(x) = 0.5 * x * (1 + erf(x / sqrt(2)))  -- matches torch.nn.GELU()
    return 0.5 * x * (1.0 + _erf_approx(x * 0.7071067811865476))


def _layernorm_f32(x, gamma, beta):
    # Per-row LayerNorm over the last (channel) dim, eps=1e-5 (PyTorch default).
    mu = jnp.mean(x, axis=-1, keepdims=True)
    xc = x - mu
    var = jnp.mean(xc * xc, axis=-1, keepdims=True)
    return xc * jax.lax.rsqrt(var + 1e-5) * gamma + beta


# ----------------------------------------------------------------------------
# Fused attention-branch kernel:  out = proj_out(attn(proj_qkv(LN(x)))) + x
# One grid step = one stripe of `nw` windows (a full row of windows), so the
# HBM block is a fully contiguous (ws, W, c) slab.
# ----------------------------------------------------------------------------
def _atn_row_kernel(x_ref, lng_ref, lnb_ref, wi_ref, bi_ref, wo_ref, bo_ref,
                    o_ref, *, heads, ws, scale):
    blk = x_ref[0]                               # (ws, W, c) f32
    wdt, c = blk.shape[1], blk.shape[2]
    ch = c // heads
    nw = wdt // ws

    gamma = lng_ref[...]                         # (1, c)  f32
    beta = lnb_ref[...]                          # (1, c)  f32
    w_in = wi_ref[...]                           # (c, 3c) bf16
    b_in = bi_ref[...]                           # (1, 3c) f32
    w_out = wo_ref[...]                          # (c, c)  bf16
    b_out = bo_ref[...]                          # (1, c)  f32

    for j in range(nw):                          # static unroll over window cols
        # (ws, ws, c) window -> (T, c); only leading dims collapse (cheap).
        xw = blk[:, j * ws:(j + 1) * ws, :].reshape(ws * ws, c)

        # LayerNorm in f32.
        xn = _layernorm_f32(xw, gamma, beta)

        # qkv 1x1 projection: bf16 MXU inputs, f32 accumulation.
        qkv = jnp.dot(xn.astype(jnp.bfloat16), w_in,
                      preferred_element_type=jnp.float32) + b_in       # (T, 3c)

        # attention + fused output projection + residual.
        # out = b_out + x_window + sum_h (softmax(q_h k_h^T * s) v_h) @ W_out[h]
        y = xw + b_out
        for h in range(heads):
            qh = qkv[:, h * ch:(h + 1) * ch].astype(jnp.bfloat16)          # (T, ch)
            kh = qkv[:, c + h * ch:c + (h + 1) * ch].astype(jnp.bfloat16)  # (T, ch)
            vh = qkv[:, 2 * c + h * ch:2 * c + (h + 1) * ch].astype(jnp.bfloat16)

            s = jax.lax.dot_general(qh, kh, (((1,), (1,)), ((), ())),
                                    preferred_element_type=jnp.float32) * scale
            s = s - jnp.max(s, axis=-1, keepdims=True)
            p = jnp.exp(s)                                                  # f32
            p = p * pl.reciprocal(jnp.sum(p, axis=-1, keepdims=True), approx=True)

            oh = jnp.dot(p.astype(jnp.bfloat16), vh,
                         preferred_element_type=jnp.float32)                # (T, ch)
            y = y + jnp.dot(oh.astype(jnp.bfloat16),
                            w_out[h * ch:(h + 1) * ch, :],
                            preferred_element_type=jnp.float32)

        o_ref[:, :, j * ws:(j + 1) * ws, :] = (
            y.reshape(1, ws, ws, c).astype(o_ref.dtype))


def atn_branch(x_nhwc, params, *, heads, window_size, shifts):
    """x = atn(norm(x)) + x, fully fused.  x: (B, H, W, C) f32."""
    b, h, w, c = x_nhwc.shape
    ws = window_size
    nh = h // ws
    scale = float(c // heads) ** (-0.5)

    # roll commutes with the per-pixel LayerNorm and with the residual add,
    # so rolling x once up-front and rolling the branch output back is exact.
    # TODO(synk): like the reference, shifted windows use no attention mask.
    xr = jnp.roll(x_nhwc, shift=(-shifts, -shifts), axis=(1, 2)) if shifts > 0 else x_nhwc

    out = pl.pallas_call(
        functools.partial(_atn_row_kernel, heads=heads, ws=ws, scale=scale),
        out_shape=jax.ShapeDtypeStruct((b, h, w, c), x_nhwc.dtype),
        grid=(b, nh),
        in_specs=[
            pl.BlockSpec((1, ws, w, c), lambda bi, hi: (bi, hi, 0, 0)),   # x stripe
            pl.BlockSpec((1, c), lambda bi, hi: (0, 0)),                  # ln gamma
            pl.BlockSpec((1, c), lambda bi, hi: (0, 0)),                  # ln beta
            pl.BlockSpec((c, 3 * c), lambda bi, hi: (0, 0)),              # W_qkv (bf16)
            pl.BlockSpec((1, 3 * c), lambda bi, hi: (0, 0)),              # b_qkv
            pl.BlockSpec((c, c), lambda bi, hi: (0, 0)),                  # W_out (bf16)
            pl.BlockSpec((1, c), lambda bi, hi: (0, 0)),                  # b_out
        ],
        out_specs=pl.BlockSpec((1, ws, w, c), lambda bi, hi: (bi, hi, 0, 0)),
        compiler_params=pltpu.CompilerParams(
            dimension_semantics=("parallel", "parallel"),
            vmem_limit_bytes=32 * 1024 * 1024),
    )(xr,
      params["ln_g"].reshape(1, c), params["ln_b"].reshape(1, c),
      params["w_inp"].astype(jnp.bfloat16), params["b_inp"].reshape(1, 3 * c),
      params["w_out"].astype(jnp.bfloat16), params["b_out"].reshape(1, c))

    if shifts > 0:
        out = jnp.roll(out, shift=(shifts, shifts), axis=(1, 2))
    return out


# ----------------------------------------------------------------------------
# Fused FFN-branch kernel:  out = W1 @ gelu(W0 @ LN(x) + b0) + b1 + x
# Grid over row tiles of the flattened pixel matrix (N, C); the (tn, C*exp)
# intermediate lives entirely in VMEM/registers.
# ----------------------------------------------------------------------------
def _ffn_row_kernel(x_ref, lng_ref, lnb_ref, w0_ref, b0_ref, w1_ref, b1_ref, o_ref):
    x = x_ref[...]                                                       # (tn, c) f32
    xn = _layernorm_f32(x, lng_ref[...], lnb_ref[...])
    hmid = jnp.dot(xn.astype(jnp.bfloat16), w0_ref[...],
                   preferred_element_type=jnp.float32) + b0_ref[...]     # (tn, c*e)
    hmid = _gelu_exact(hmid)                                             # f32
    y = jnp.dot(hmid.astype(jnp.bfloat16), w1_ref[...],
                preferred_element_type=jnp.float32) + b1_ref[...]        # (tn, c)
    o_ref[...] = (y + x).astype(o_ref.dtype)


def _ffn_row_tile(n_rows, c, c_exp, budget_bytes=8 << 20):
    """Largest row tile (multiple of 8, divisor of n_rows) whose double-buffered
    in/out blocks + f32 intermediate fit a conservative VMEM budget, while
    keeping >= 2 grid steps so v7x can shard across both TensorCores."""
    if n_rows % 8:
        return n_rows                      # full-extent block is always legal
    best = 8
    for t in range(8, min(n_rows, 4096) + 1, 8):
        if n_rows % t:
            continue
        vmem = 4 * t * (4 * c + c_exp)     # 2x dbl-buffered (in+out) f32 + hidden
        if vmem > budget_bytes:
            break
        if n_rows // t >= 2:
            best = t
    return best


def ffn_branch(x_nhwc, params):
    """x = ffn(norm(x)) + x, fully fused.  x: (B, H, W, C) f32."""
    b, h, w, c = x_nhwc.shape
    ce = params["w_ffn0"].shape[1]
    n = b * h * w
    x2 = x_nhwc.reshape(n, c)
    tn = _ffn_row_tile(n, c, ce)

    out = pl.pallas_call(
        _ffn_row_kernel,
        out_shape=jax.ShapeDtypeStruct((n, c), x2.dtype),
        grid=(n // tn,),
        in_specs=[
            pl.BlockSpec((tn, c), lambda i: (i, 0)),
            pl.BlockSpec((1, c), lambda i: (0, 0)),       # ln gamma
            pl.BlockSpec((1, c), lambda i: (0, 0)),       # ln beta
            pl.BlockSpec((c, ce), lambda i: (0, 0)),      # W0 (bf16)
            pl.BlockSpec((1, ce), lambda i: (0, 0)),      # b0
            pl.BlockSpec((ce, c), lambda i: (0, 0)),      # W1 (bf16)
            pl.BlockSpec((1, c), lambda i: (0, 0)),       # b1
        ],
        out_specs=pl.BlockSpec((tn, c), lambda i: (i, 0)),
        compiler_params=pltpu.CompilerParams(
            dimension_semantics=("parallel",),
            vmem_limit_bytes=32 * 1024 * 1024),
    )(x2,
      params["ln_g"].reshape(1, c), params["ln_b"].reshape(1, c),
      params["w_ffn0"].astype(jnp.bfloat16), params["b_ffn0"].reshape(1, ce),
      params["w_ffn1"].astype(jnp.bfloat16), params["b_ffn1"].reshape(1, c))
    return out.reshape(b, h, w, c)


# ----------------------------------------------------------------------------
# Module forward
# ----------------------------------------------------------------------------
def transformer_forward(x_nchw, params, *, heads, window_size, shifts):
    # x_nchw: (b, c, h, w) float32, like the PyTorch module.
    x = jnp.transpose(x_nchw, (0, 2, 3, 1))                              # -> NHWC
    x = atn_branch(x, params, heads=heads, window_size=window_size, shifts=shifts)
    x = ffn_branch(x, params)                                            # shared LayerNorm params
    return jnp.transpose(x, (0, 3, 1, 2))                                # -> NCHW


# ----------------------------------------------------------------------------
# Deterministic synthetic parameters
# ----------------------------------------------------------------------------
def init_params(key, c, exp_ratio):
    ks = jax.random.split(key, 10)

    def wgt(k, shape, scale=0.05):
        return scale * jax.random.normal(k, shape, jnp.float32)

    return dict(
        # shared LayerNorm(channels)
        ln_g=1.0 + 0.02 * jax.random.normal(ks[0], (c,), jnp.float32),
        ln_b=0.02 * jax.random.normal(ks[1], (c,), jnp.float32),
        # ATN: project_inp (c -> 3c), project_out (c -> c)   [1x1 convs, (cin,cout)]
        w_inp=wgt(ks[2], (c, 3 * c)),
        b_inp=wgt(ks[3], (3 * c,), 0.01),
        w_out=wgt(ks[4], (c, c)),
        b_out=wgt(ks[5], (c,), 0.01),
        # FFN: conv1x1_0 (c -> c*exp), conv1x1_1 (c*exp -> c)
        w_ffn0=wgt(ks[6], (c, c * exp_ratio)),
        b_ffn0=wgt(ks[7], (c * exp_ratio,), 0.01),
        w_ffn1=wgt(ks[8], (c * exp_ratio, c)),
        b_ffn1=wgt(ks[9], (c,), 0.01),
    )


if __name__ == "__main__":
    key = jax.random.PRNGKey(0)
    kx, kp = jax.random.split(key)

    # Transformer(inp_channels=16, out_channels=16, exp_ratio=2, shifts=0,
    #             window_size=8, heads=4, norm=True)
    b, c, h, w = 2, 16, 16, 16
    heads, window_size, shifts, exp_ratio = 4, 8, 0, 2

    x = jax.random.normal(kx, (b, c, h, w), jnp.float32)
    params = init_params(kp, c, exp_ratio)

    fwd = jax.jit(functools.partial(
        transformer_forward, heads=heads, window_size=window_size, shifts=shifts))
    y = fwd(x, params)
    jax.block_until_ready(y)

    assert y.shape == x.shape and y.dtype == x.dtype
    assert bool(jnp.all(jnp.isfinite(y)))
    print("KERNEL_OK")
</pallas_src>

<mosaic_0001>
module attributes {stable_mosaic.version = 11 : i64} {
  func.func @_atn_row_kernel(%arg0: i32, %arg1: i32, %arg2: memref<1x8x16x16xf32, #tpu.memory_space<vmem>>, %arg3: memref<1x16xf32, #tpu.memory_space<vmem>>, %arg4: memref<1x16xf32, #tpu.memory_space<vmem>>, %arg5: memref<16x48xbf16, #tpu.memory_space<vmem>>, %arg6: memref<1x48xf32, #tpu.memory_space<vmem>>, %arg7: memref<16x16xbf16, #tpu.memory_space<vmem>>, %arg8: memref<1x16xf32, #tpu.memory_space<vmem>>, %arg9: memref<1x8x16x16xf32, #tpu.memory_space<vmem>>) attributes {dimension_semantics = [#tpu.dimension_semantics<parallel>, #tpu.dimension_semantics<parallel>], iteration_bounds = array<i64: 2, 2>, scalar_prefetch = 0 : i64, scratch_operands = 0 : i64, tpu.core_type = #tpu.core_type<tc>, window_params = [{transform_indices = @transform_0, window_bounds = array<i64: 1, 8, 16, 16>}, {pipeline_mode = #tpu.pipeline_mode<synchronous>, transform_indices = @transform_1, window_bounds = array<i64: 1, 16>}, {pipeline_mode = #tpu.pipeline_mode<synchronous>, transform_indices = @transform_2, window_bounds = array<i64: 1, 16>}, {pipeline_mode = #tpu.pipeline_mode<synchronous>, transform_indices = @transform_3, window_bounds = array<i64: 16, 48>}, {pipeline_mode = #tpu.pipeline_mode<synchronous>, transform_indices = @transform_4, window_bounds = array<i64: 1, 48>}, {pipeline_mode = #tpu.pipeline_mode<synchronous>, transform_indices = @transform_5, window_bounds = array<i64: 16, 16>}, {pipeline_mode = #tpu.pipeline_mode<synchronous>, transform_indices = @transform_6, window_bounds = array<i64: 1, 16>}, {transform_indices = @transform_7, window_bounds = array<i64: 1, 8, 16, 16>}]} {
    %c0 = arith.constant 0 : index
    %c0_0 = arith.constant 0 : index
    %c0_1 = arith.constant 0 : index
    %c0_2 = arith.constant 0 : index
    %0 = vector.load %arg2[%c0, %c0_0, %c0_1, %c0_2] : memref<1x8x16x16xf32, #tpu.memory_space<vmem>>, vector<1x8x16x16xf32>
    %1 = vector.shape_cast %0 : vector<1x8x16x16xf32> to vector<8x16x16xf32>
    %c0_3 = arith.constant 0 : index
    %c0_4 = arith.constant 0 : index
    %2 = vector.load %arg3[%c0_3, %c0_4] : memref<1x16xf32, #tpu.memory_space<vmem>>, vector<1x16xf32>
    %c0_5 = arith.constant 0 : index
    %c0_6 = arith.constant 0 : index
    %3 = vector.load %arg4[%c0_5, %c0_6] : memref<1x16xf32, #tpu.memory_space<vmem>>, vector<1x16xf32>
    %c0_7 = arith.constant 0 : index
    %c0_8 = arith.constant 0 : index
    %4 = vector.load %arg5[%c0_7, %c0_8] : memref<16x48xbf16, #tpu.memory_space<vmem>>, vector<16x48xbf16>
    %c0_9 = arith.constant 0 : index
    %c0_10 = arith.constant 0 : index
    %5 = vector.load %arg6[%c0_9, %c0_10] : memref<1x48xf32, #tpu.memory_space<vmem>>, vector<1x48xf32>
    %c0_11 = arith.constant 0 : index
    %c0_12 = arith.constant 0 : index
    %6 = vector.load %arg7[%c0_11, %c0_12] : memref<16x16xbf16, #tpu.memory_space<vmem>>, vector<16x16xbf16>
    %c0_13 = arith.constant 0 : index
    %c0_14 = arith.constant 0 : index
    %7 = vector.load %arg8[%c0_13, %c0_14] : memref<1x16xf32, #tpu.memory_space<vmem>>, vector<1x16xf32>
    %8 = vector.extract_strided_slice %1 {offsets = [0, 0, 0], sizes = [8, 8, 16], strides = [1, 1, 1]} : vector<8x16x16xf32> to vector<8x8x16xf32>
    %9 = vector.shape_cast %8 : vector<8x8x16xf32> to vector<64x16xf32>
    %cst = arith.constant dense<0.000000e+00> : vector<64xf32>
    %10 = vector.multi_reduction <add>, %9, %cst [1] : vector<64x16xf32> to vector<64xf32>
    %11 = vector.shape_cast %10 : vector<64xf32> to vector<64x1xf32>
    %cst_15 = arith.constant 1.600000e+01 : f32
    %12 = vector.broadcast %cst_15 : f32 to vector<64x1xf32>
    %13 = arith.divf %11, %12 : vector<64x1xf32>
    %14 = vector.broadcast %13 : vector<64x1xf32> to vector<64x16xf32>
    %15 = arith.subf %9, %14 : vector<64x16xf32>
    %16 = arith.mulf %15, %15 : vector<64x16xf32>
    %cst_16 = arith.constant dense<0.000000e+00> : vector<64xf32>
    %17 = vector.multi_reduction <add>, %16, %cst_16 [1] : vector<64x16xf32> to vector<64xf32>
    %18 = vector.shape_cast %17 : vector<64xf32> to vector<64x1xf32>
    %cst_17 = arith.constant 1.600000e+01 : f32
    %19 = vector.broadcast %cst_17 : f32 to vector<64x1xf32>
    %20 = arith.divf %18, %19 : vector<64x1xf32>
    %cst_18 = arith.constant 9.99999974E-6 : f32
    %21 = vector.broadcast %cst_18 : f32 to vector<64x1xf32>
    %22 = arith.addf %20, %21 : vector<64x1xf32>
    %23 = math.rsqrt %22 : vector<64x1xf32>
    %24 = vector.broadcast %23 : vector<64x1xf32> to vector<64x16xf32>
    %25 = arith.mulf %15, %24 : vector<64x16xf32>
    %26 = vector.broadcast %2 : vector<1x16xf32> to vector<64x16xf32>
    %27 = arith.mulf %25, %26 : vector<64x16xf32>
    %28 = vector.broadcast %3 : vector<1x16xf32> to vector<64x16xf32>
    %29 = arith.addf %27, %28 : vector<64x16xf32>
    %30 = arith.truncf %29 : vector<64x16xf32> to vector<64x16xbf16>
    %cst_19 = arith.constant dense<0.000000e+00> : vector<64x48xf32>
    %31 = tpu.matmul %30, %4, %cst_19 {dimension_numbers = #tpu.dot_dimension_numbers<[1], [0], [0], [1], [0, 0, 1, 1], [], []>} : vector<64x16xbf16>, vector<16x48xbf16>, vector<64x48xf32> -> vector<64x48xf32>
    %32 = vector.broadcast %5 : vector<1x48xf32> to vector<64x48xf32>
    %33 = arith.addf %31, %32 : vector<64x48xf32>
    %34 = vector.broadcast %7 : vector<1x16xf32> to vector<64x16xf32>
    %35 = arith.addf %9, %34 : vector<64x16xf32>
    %36 = vector.extract_strided_slice %33 {offsets = [0, 0], sizes = [64, 4], strides = [1, 1]} : vector<64x48xf32> to vector<64x4xf32>
    %37 = arith.truncf %36 : vector<64x4xf32> to vector<64x4xbf16>
    %38 = vector.extract_strided_slice %33 {offsets = [0, 16], sizes = [64, 4], strides = [1, 1]} : vector<64x48xf32> to vector<64x4xf32>
    %39 = arith.truncf %38 : vector<64x4xf32> to vector<64x4xbf16>
    %40 = vector.extract_strided_slice %33 {offsets = [0, 32], sizes = [64, 4], strides = [1, 1]} : vector<64x48xf32> to vector<64x4xf32>
    %41 = arith.truncf %40 : vector<64x4xf32> to vector<64x4xbf16>
    %cst_20 = arith.constant dense<0.000000e+00> : vector<64x64xf32>
    %42 = tpu.matmul %37, %39, %cst_20 {dimension_numbers = #tpu.dot_dimension_numbers<[1], [1], [0], [0], [0, 0, 1, 0], [], []>} : vector<64x4xbf16>, vector<64x4xbf16>, vector<64x64xf32> -> vector<64x64xf32>
    %cst_21 = arith.constant 5.000000e-01 : f32
    %43 = vector.broadcast %cst_21 : f32 to vector<64x64xf32>
    %44 = arith.mulf %42, %43 : vector<64x64xf32>
    %cst_22 = arith.constant dense<0xFF800000> : vector<64xf32>
    %45 = vector.multi_reduction <maximumf>, %44, %cst_22 [1] : vector<64x64xf32> to vector<64xf32>
    %46 = vector.shape_cast %45 : vector<64xf32> to vector<64x1xf32>
    %47 = vector.broadcast %46 : vector<64x1xf32> to vector<64x64xf32>
    %48 = arith.subf %44, %47 : vector<64x64xf32>
    %49 = math.exp %48 : vector<64x64xf32>
    %cst_23 = arith.constant dense<0.000000e+00> : vector<64xf32>
    %50 = vector.multi_reduction <add>, %49, %cst_23 [1] : vector<64x64xf32> to vector<64xf32>
    %51 = vector.shape_cast %50 : vector<64xf32> to vector<64x1xf32>
    %52 = tpu.reciprocal %51 {approx = true} : vector<64x1xf32> -> vector<64x1xf32>
    %53 = vector.broadcast %52 : vector<64x1xf32> to vector<64x64xf32>
    %54 = arith.mulf %49, %53 : vector<64x64xf32>
    %55 = arith.truncf %54 : vector<64x64xf32> to vector<64x64xbf16>
    %cst_24 = arith.constant dense<0.000000e+00> : vector<64x4xf32>
    %56 = tpu.matmul %55, %41, %cst_24 {dimension_numbers = #tpu.dot_dimension_numbers<[1], [0], [0], [1], [0, 0, 1, 1], [], []>} : vector<64x64xbf16>, vector<64x4xbf16>, vector<64x4xf32> -> vector<64x4xf32>
    %57 = arith.truncf %56 : vector<64x4xf32> to vector<64x4xbf16>
    %58 = vector.extract_strided_slice %6 {offsets = [0, 0], sizes = [4, 16], strides = [1, 1]} : vector<16x16xbf16> to vector<4x16xbf16>
    %cst_25 = arith.constant dense<0.000000e+00> : vector<64x16xf32>
    %59 = tpu.matmul %57, %58, %cst_25 {dimension_numbers = #tpu.dot_dimension_numbers<[1], [0], [0], [1], [0, 0, 1, 1], [], []>} : vector<64x4xbf16>, vector<4x16xbf16>, vector<64x16xf32> -> vector<64x16xf32>
    %60 = arith.addf %35, %59 : vector<64x16xf32>
    %61 = vector.extract_strided_slice %33 {offsets = [0, 4], sizes = [64, 4], strides = [1, 1]} : vector<64x48xf32> to vector<64x4xf32>
    %62 = arith.truncf %61 : vector<64x4xf32> to vector<64x4xbf16>
    %63 = vector.extract_strided_slice %33 {offsets = [0, 20], sizes = [64, 4], strides = [1, 1]} : vector<64x48xf32> to vector<64x4xf32>
    %64 = arith.truncf %63 : vector<64x4xf32> to vector<64x4xbf16>
    %65 = vector.extract_strided_slice %33 {offsets = [0, 36], sizes = [64, 4], strides = [1, 1]} : vector<64x48xf32> to vector<64x4xf32>
    %66 = arith.truncf %65 : vector<64x4xf32> to vector<64x4xbf16>
    %cst_26 = arith.constant dense<0.000000e+00> : vector<64x64xf32>
    %67 = tpu.matmul %62, %64, %cst_26 {dimension_numbers = #tpu.dot_dimension_numbers<[1], [1], [0], [0], [0, 0, 1, 0], [], []>} : vector<64x4xbf16>, vector<64x4xbf16>, vector<64x64xf32> -> vector<64x64xf32>
    %cst_27 = arith.constant 5.000000e-01 : f32
    %68 = vector.broadcast %cst_27 : f32 to vector<64x64xf32>
    %69 = arith.mulf %67, %68 : vector<64x64xf32>
    %cst_28 = arith.constant dense<0xFF800000> : vector<64xf32>
    %70 = vector.multi_reduction <maximumf>, %69, %cst_28 [1] : vector<64x64xf32> to vector<64xf32>
    %71 = vector.shape_cast %70 : vector<64xf32> to vector<64x1xf32>
    %72 = vector.broadcast %71 : vector<64x1xf32> to vector<64x64xf32>
    %73 = arith.subf %69, %72 : vector<64x64xf32>
    %74 = math.exp %73 : vector<64x64xf32>
    %cst_29 = arith.constant dense<0.000000e+00> : vector<64xf32>
    %75 = vector.multi_reduction <add>, %74, %cst_29 [1] : vector<64x64xf32> to vector<64xf32>
    %76 = vector.shape_cast %75 : vector<64xf32> to vector<64x1xf32>
    %77 = tpu.reciprocal %76 {approx = true} : vector<64x1xf32> -> vector<64x1xf32>
    %78 = vector.broadcast %77 : vector<64x1xf32> to vector<64x64xf32>
    %79 = arith.mulf %74, %78 : vector<64x64xf32>
    %80 = arith.truncf %79 : vector<64x64xf32> to vector<64x64xbf16>
    %cst_30 = arith.constant dense<0.000000e+00> : vector<64x4xf32>
    %81 = tpu.matmul %80, %66, %cst_30 {dimension_numbers = #tpu.dot_dimension_numbers<[1], [0], [0], [1], [0, 0, 1, 1], [], []>} : vector<64x64xbf16>, vector<64x4xbf16>, vector<64x4xf32> -> vector<64x4xf32>
    %82 = arith.truncf %81 : vector<64x4xf32> to vector<64x4xbf16>
    %83 = vector.extract_strided_slice %6 {offsets = [4, 0], sizes = [4, 16], strides = [1, 1]} : vector<16x16xbf16> to vector<4x16xbf16>
    %cst_31 = arith.constant dense<0.000000e+00> : vector<64x16xf32>
    %84 = tpu.matmul %82, %83, %cst_31 {dimension_numbers = #tpu.dot_dimension_numbers<[1], [0], [0], [1], [0, 0, 1, 1], [], []>} : vector<64x4xbf16>, vector<4x16xbf16>, vector<64x16xf32> -> vector<64x16xf32>
    %85 = arith.addf %60, %84 : vector<64x16xf32>
    %86 = vector.extract_strided_slice %33 {offsets = [0, 8], sizes = [64, 4], strides = [1, 1]} : vector<64x48xf32> to vector<64x4xf32>
    %87 = arith.truncf %86 : vector<64x4xf32> to vector<64x4xbf16>
    %88 = vector.extract_strided_slice %33 {offsets = [0, 24], sizes = [64, 4], strides = [1, 1]} : vector<64x48xf32> to vector<64x4xf32>
    %89 = arith.truncf %88 : vector<64x4xf32> to vector<64x4xbf16>
    %90 = vector.extract_strided_slice %33 {offsets = [0, 40], sizes = [64, 4], strides = [1, 1]} : vector<64x48xf32> to vector<64x4xf32>
    %91 = arith.truncf %90 : vector<64x4xf32> to vector<64x4xbf16>
    %cst_32 = arith.constant dense<0.000000e+00> : vector<64x64xf32>
    %92 = tpu.matmul %87, %89, %cst_32 {dimension_numbers = #tpu.dot_dimension_numbers<[1], [1], [0], [0], [0, 0, 1, 0], [], []>} : vector<64x4xbf16>, vector<64x4xbf16>, vector<64x64xf32> -> vector<64x64xf32>
    %cst_33 = arith.constant 5.000000e-01 : f32
    %93 = vector.broadcast %cst_33 : f32 to vector<64x64xf32>
    %94 = arith.mulf %92, %93 : vector<64x64xf32>
    %cst_34 = arith.constant dense<0xFF800000> : vector<64xf32>
    %95 = vector.multi_reduction <maximumf>, %94, %cst_34 [1] : vector<64x64xf32> to vector<64xf32>
    %96 = vector.shape_cast %95 : vector<64xf32> to vector<64x1xf32>
    %97 = vector.broadcast %96 : vector<64x1xf32> to vector<64x64xf32>
    %98 = arith.subf %94, %97 : vector<64x64xf32>
    %99 = math.exp %98 : vector<64x64xf32>
    %cst_35 = arith.constant dense<0.000000e+00> : vector<64xf32>
    %100 = vector.multi_reduction <add>, %99, %cst_35 [1] : vector<64x64xf32> to vector<64xf32>
    %101 = vector.shape_cast %100 : vector<64xf32> to vector<64x1xf32>
    %102 = tpu.reciprocal %101 {approx = true} : vector<64x1xf32> -> vector<64x1xf32>
    %103 = vector.broadcast %102 : vector<64x1xf32> to vector<64x64xf32>
    %104 = arith.mulf %99, %103 : vector<64x64xf32>
    %105 = arith.truncf %104 : vector<64x64xf32> to vector<64x64xbf16>
    %cst_36 = arith.constant dense<0.000000e+00> : vector<64x4xf32>
    %106 = tpu.matmul %105, %91, %cst_36 {dimension_numbers = #tpu.dot_dimension_numbers<[1], [0], [0], [1], [0, 0, 1, 1], [], []>} : vector<64x64xbf16>, vector<64x4xbf16>, vector<64x4xf32> -> vector<64x4xf32>
    %107 = arith.truncf %106 : vector<64x4xf32> to vector<64x4xbf16>
    %108 = vector.extract_strided_slice %6 {offsets = [8, 0], sizes = [4, 16], strides = [1, 1]} : vector<16x16xbf16> to vector<4x16xbf16>
    %cst_37 = arith.constant dense<0.000000e+00> : vector<64x16xf32>
    %109 = tpu.matmul %107, %108, %cst_37 {dimension_numbers = #tpu.dot_dimension_numbers<[1], [0], [0], [1], [0, 0, 1, 1], [], []>} : vector<64x4xbf16>, vector<4x16xbf16>, vector<64x16xf32> -> vector<64x16xf32>
    %110 = arith.addf %85, %109 : vector<64x16xf32>
    %111 = vector.extract_strided_slice %33 {offsets = [0, 12], sizes = [64, 4], strides = [1, 1]} : vector<64x48xf32> to vector<64x4xf32>
    %112 = arith.truncf %111 : vector<64x4xf32> to vector<64x4xbf16>
    %113 = vector.extract_strided_slice %33 {offsets = [0, 28], sizes = [64, 4], strides = [1, 1]} : vector<64x48xf32> to vector<64x4xf32>
    %114 = arith.truncf %113 : vector<64x4xf32> to vector<64x4xbf16>
    %115 = vector.extract_strided_slice %33 {offsets = [0, 44], sizes = [64, 4], strides = [1, 1]} : vector<64x48xf32> to vector<64x4xf32>
    %116 = arith.truncf %115 : vector<64x4xf32> to vector<64x4xbf16>
    %cst_38 = arith.constant dense<0.000000e+00> : vector<64x64xf32>
    %117 = tpu.matmul %112, %114, %cst_38 {dimension_numbers = #tpu.dot_dimension_numbers<[1], [1], [0], [0], [0, 0, 1, 0], [], []>} : vector<64x4xbf16>, vector<64x4xbf16>, vector<64x64xf32> -> vector<64x64xf32>
    %cst_39 = arith.constant 5.000000e-01 : f32
    %118 = vector.broadcast %cst_39 : f32 to vector<64x64xf32>
    %119 = arith.mulf %117, %118 : vector<64x64xf32>
    %cst_40 = arith.constant dense<0xFF800000> : vector<64xf32>
    %120 = vector.multi_reduction <maximumf>, %119, %cst_40 [1] : vector<64x64xf32> to vector<64xf32>
    %121 = vector.shape_cast %120 : vector<64xf32> to vector<64x1xf32>
    %122 = vector.broadcast %121 : vector<64x1xf32> to vector<64x64xf32>
    %123 = arith.subf %119, %122 : vector<64x64xf32>
    %124 = math.exp %123 : vector<64x64xf32>
    %cst_41 = arith.constant dense<0.000000e+00> : vector<64xf32>
    %125 = vector.multi_reduction <add>, %124, %cst_41 [1] : vector<64x64xf32> to vector<64xf32>
    %126 = vector.shape_cast %125 : vector<64xf32> to vector<64x1xf32>
    %127 = tpu.reciprocal %126 {approx = true} : vector<64x1xf32> -> vector<64x1xf32>
    %128 = vector.broadcast %127 : vector<64x1xf32> to vector<64x64xf32>
    %129 = arith.mulf %124, %128 : vector<64x64xf32>
    %130 = arith.truncf %129 : vector<64x64xf32> to vector<64x64xbf16>
    %cst_42 = arith.constant dense<0.000000e+00> : vector<64x4xf32>
    %131 = tpu.matmul %130, %116, %cst_42 {dimension_numbers = #tpu.dot_dimension_numbers<[1], [0], [0], [1], [0, 0, 1, 1], [], []>} : vector<64x64xbf16>, vector<64x4xbf16>, vector<64x4xf32> -> vector<64x4xf32>
    %132 = arith.truncf %131 : vector<64x4xf32> to vector<64x4xbf16>
    %133 = vector.extract_strided_slice %6 {offsets = [12, 0], sizes = [4, 16], strides = [1, 1]} : vector<16x16xbf16> to vector<4x16xbf16>
    %cst_43 = arith.constant dense<0.000000e+00> : vector<64x16xf32>
    %134 = tpu.matmul %132, %133, %cst_43 {dimension_numbers = #tpu.dot_dimension_numbers<[1], [0], [0], [1], [0, 0, 1, 1], [], []>} : vector<64x4xbf16>, vector<4x16xbf16>, vector<64x16xf32> -> vector<64x16xf32>
    %135 = arith.addf %110, %134 : vector<64x16xf32>
    %136 = vector.shape_cast %135 : vector<64x16xf32> to vector<1x8x8x16xf32>
    %c0_44 = arith.constant 0 : index
    %c0_45 = arith.constant 0 : index
    %c0_46 = arith.constant 0 : index
    %c0_47 = arith.constant 0 : index
    %137 = vector.load %arg9[%c0_44, %c0_45, %c0_46, %c0_47] : memref<1x8x16x16xf32, #tpu.memory_space<vmem>>, vector<1x8x8x16xf32>
    tpu.vector_store %arg9[%c0_44, %c0_45, %c0_46, %c0_47], %136 {strides = array<i32>} : memref<1x8x16x16xf32, #tpu.memory_space<vmem>>, vector<1x8x8x16xf32>,
    %138 = vector.extract_strided_slice %1 {offsets = [0, 8, 0], sizes = [8, 8, 16], strides = [1, 1, 1]} : vector<8x16x16xf32> to vector<8x8x16xf32>
    %139 = vector.shape_cast %138 : vector<8x8x16xf32> to vector<64x16xf32>
    %cst_48 = arith.constant dense<0.000000e+00> : vector<64xf32>
    %140 = vector.multi_reduction <add>, %139, %cst_48 [1] : vector<64x16xf32> to vector<64xf32>
    %141 = vector.shape_cast %140 : vector<64xf32> to vector<64x1xf32>
    %cst_49 = arith.constant 1.600000e+01 : f32
    %142 = vector.broadcast %cst_49 : f32 to vector<64x1xf32>
    %143 = arith.divf %141, %142 : vector<64x1xf32>
    %144 = vector.broadcast %143 : vector<64x1xf32> to vector<64x16xf32>
    %145 = arith.subf %139, %144 : vector<64x16xf32>
    %146 = arith.mulf %145, %145 : vector<64x16xf32>
    %cst_50 = arith.constant dense<0.000000e+00> : vector<64xf32>
    %147 = vector.multi_reduction <add>, %146, %cst_50 [1] : vector<64x16xf32> to vector<64xf32>
    %148 = vector.shape_cast %147 : vector<64xf32> to vector<64x1xf32>
    %cst_51 = arith.constant 1.600000e+01 : f32
    %149 = vector.broadcast %cst_51 : f32 to vector<64x1xf32>
    %150 = arith.divf %148, %149 : vector<64x1xf32>
    %cst_52 = arith.constant 9.99999974E-6 : f32
    %151 = vector.broadcast %cst_52 : f32 to vector<64x1xf32>
    %152 = arith.addf %150, %151 : vector<64x1xf32>
    %153 = math.rsqrt %152 : vector<64x1xf32>
    %154 = vector.broadcast %153 : vector<64x1xf32> to vector<64x16xf32>
    %155 = arith.mulf %145, %154 : vector<64x16xf32>
    %156 = vector.broadcast %2 : vector<1x16xf32> to vector<64x16xf32>
    %157 = arith.mulf %155, %156 : vector<64x16xf32>
    %158 = vector.broadcast %3 : vector<1x16xf32> to vector<64x16xf32>
    %159 = arith.addf %157, %158 : vector<64x16xf32>
    %160 = arith.truncf %159 : vector<64x16xf32> to vector<64x16xbf16>
    %cst_53 = arith.constant dense<0.000000e+00> : vector<64x48xf32>
    %161 = tpu.matmul %160, %4, %cst_53 {dimension_numbers = #tpu.dot_dimension_numbers<[1], [0], [0], [1], [0, 0, 1, 1], [], []>} : vector<64x16xbf16>, vector<16x48xbf16>, vector<64x48xf32> -> vector<64x48xf32>
    %162 = vector.broadcast %5 : vector<1x48xf32> to vector<64x48xf32>
    %163 = arith.addf %161, %162 : vector<64x48xf32>
    %164 = vector.broadcast %7 : vector<1x16xf32> to vector<64x16xf32>
    %165 = arith.addf %139, %164 : vector<64x16xf32>
    %166 = vector.extract_strided_slice %163 {offsets = [0, 0], sizes = [64, 4], strides = [1, 1]} : vector<64x48xf32> to vector<64x4xf32>
    %167 = arith.truncf %166 : vector<64x4xf32> to vector<64x4xbf16>
    %168 = vector.extract_strided_slice %163 {offsets = [0, 16], sizes = [64, 4], strides = [1, 1]} : vector<64x48xf32> to vector<64x4xf32>
    %169 = arith.truncf %168 : vector<64x4xf32> to vector<64x4xbf16>
    %170 = vector.extract_strided_slice %163 {offsets = [0, 32], sizes = [64, 4], strides = [1, 1]} : vector<64x48xf32> to vector<64x4xf32>
    %171 = arith.truncf %170 : vector<64x4xf32> to vector<64x4xbf16>
    %cst_54 = arith.constant dense<0.000000e+00> : vector<64x64xf32>
    %172 = tpu.matmul %167, %169, %cst_54 {dimension_numbers = #tpu.dot_dimension_numbers<[1], [1], [0], [0], [0, 0, 1, 0], [], []>} : vector<64x4xbf16>, vector<64x4xbf16>, vector<64x64xf32> -> vector<64x64xf32>
    %cst_55 = arith.constant 5.000000e-01 : f32
    %173 = vector.broadcast %cst_55 : f32 to vector<64x64xf32>
    %174 = arith.mulf %172, %173 : vector<64x64xf32>
    %cst_56 = arith.constant dense<0xFF800000> : vector<64xf32>
    %175 = vector.multi_reduction <maximumf>, %174, %cst_56 [1] : vector<64x64xf32> to vector<64xf32>
    %176 = vector.shape_cast %175 : vector<64xf32> to vector<64x1xf32>
    %177 = vector.broadcast %176 : vector<64x1xf32> to vector<64x64xf32>
    %178 = arith.subf %174, %177 : vector<64x64xf32>
    %179 = math.exp %178 : vector<64x64xf32>
    %cst_57 = arith.constant dense<0.000000e+00> : vector<64xf32>
    %180 = vector.multi_reduction <add>, %179, %cst_57 [1] : vector<64x64xf32> to vector<64xf32>
    %181 = vector.shape_cast %180 : vector<64xf32> to vector<64x1xf32>
    %182 = tpu.reciprocal %181 {approx = true} : vector<64x1xf32> -> vector<64x1xf32>
    %183 = vector.broadcast %182 : vector<64x1xf32> to vector<64x64xf32>
    %184 = arith.mulf %179, %183 : vector<64x64xf32>
    %185 = arith.truncf %184 : vector<64x64xf32> to vector<64x64xbf16>
    %cst_58 = arith.constant dense<0.000000e+00> : vector<64x4xf32>
    %186 = tpu.matmul %185, %171, %cst_58 {dimension_numbers = #tpu.dot_dimension_numbers<[1], [0], [0], [1], [0, 0, 1, 1], [], []>} : vector<64x64xbf16>, vector<64x4xbf16>, vector<64x4xf32> -> vector<64x4xf32>
    %187 = arith.truncf %186 : vector<64x4xf32> to vector<64x4xbf16>
    %188 = vector.extract_strided_slice %6 {offsets = [0, 0], sizes = [4, 16], strides = [1, 1]} : vector<16x16xbf16> to vector<4x16xbf16>
    %cst_59 = arith.constant dense<0.000000e+00> : vector<64x16xf32>
    %189 = tpu.matmul %187, %188, %cst_59 {dimension_numbers = #tpu.dot_dimension_numbers<[1], [0], [0], [1], [0, 0, 1, 1], [], []>} : vector<64x4xbf16>, vector<4x16xbf16>, vector<64x16xf32> -> vector<64x16xf32>
    %190 = arith.addf %165, %189 : vector<64x16xf32>
    %191 = vector.extract_strided_slice %163 {offsets = [0, 4], sizes = [64, 4], strides = [1, 1]} : vector<64x48xf32> to vector<64x4xf32>
    %192 = arith.truncf %191 : vector<64x4xf32> to vector<64x4xbf16>
    %193 = vector.extract_strided_slice %163 {offsets = [0, 20], sizes = [64, 4], strides = [1, 1]} : vector<64x48xf32> to vector<64x4xf32>
    %194 = arith.truncf %193 : vector<64x4xf32> to vector<64x4xbf16>
    %195 = vector.extract_strided_slice %163 {offsets = [0, 36], sizes = [64, 4], strides = [1, 1]} : vector<64x48xf32> to vector<64x4xf32>
    %196 = arith.truncf %195 : vector<64x4xf32> to vector<64x4xbf16>
    %cst_60 = arith.constant dense<0.000000e+00> : vector<64x64xf32>
    %197 = tpu.matmul %192, %194, %cst_60 {dimension_numbers = #tpu.dot_dimension_numbers<[1], [1], [0], [0], [0, 0, 1, 0], [], []>} : vector<64x4xbf16>, vector<64x4xbf16>, vector<64x64xf32> -> vector<64x64xf32>
    %cst_61 = arith.constant 5.000000e-01 : f32
    %198 = vector.broadcast %cst_61 : f32 to vector<64x64xf32>
    %199 = arith.mulf %197, %198 : vector<64x64xf32>
    %cst_62 = arith.constant dense<0xFF800000> : vector<64xf32>
    %200 = vector.multi_reduction <maximumf>, %199, %cst_62 [1] : vector<64x64xf32> to vector<64xf32>
    %201 = vector.shape_cast %200 : vector<64xf32> to vector<64x1xf32>
    %202 = vector.broadcast %201 : vector<64x1xf32> to vector<64x64xf32>
    %203 = arith.subf %199, %202 : vector<64x64xf32>
    %204 = math.exp %203 : vector<64x64xf32>
    %cst_63 = arith.constant dense<0.000000e+00> : vector<64xf32>
    %205 = vector.multi_reduction <add>, %204, %cst_63 [1] : vector<64x64xf32> to vector<64xf32>
    %206 = vector.shape_cast %205 : vector<64xf32> to vector<64x1xf32>
    %207 = tpu.reciprocal %206 {approx = true} : vector<64x1xf32> -> vector<64x1xf32>
    %208 = vector.broadcast %207 : vector<64x1xf32> to vector<64x64xf32>
    %209 = arith.mulf %204, %208 : vector<64x64xf32>
    %210 = arith.truncf %209 : vector<64x64xf32> to vector<64x64xbf16>
    %cst_64 = arith.constant dense<0.000000e+00> : vector<64x4xf32>
    %211 = tpu.matmul %210, %196, %cst_64 {dimension_numbers = #tpu.dot_dimension_numbers<[1], [0], [0], [1], [0, 0, 1, 1], [], []>} : vector<64x64xbf16>, vector<64x4xbf16>, vector<64x4xf32> -> vector<64x4xf32>
    %212 = arith.truncf %211 : vector<64x4xf32> to vector<64x4xbf16>
    %213 = vector.extract_strided_slice %6 {offsets = [4, 0], sizes = [4, 16], strides = [1, 1]} : vector<16x16xbf16> to vector<4x16xbf16>
    %cst_65 = arith.constant dense<0.000000e+00> : vector<64x16xf32>
    %214 = tpu.matmul %212, %213, %cst_65 {dimension_numbers = #tpu.dot_dimension_numbers<[1], [0], [0], [1], [0, 0, 1, 1], [], []>} : vector<64x4xbf16>, vector<4x16xbf16>, vector<64x16xf32> -> vector<64x16xf32>
    %215 = arith.addf %190, %214 : vector<64x16xf32>
    %216 = vector.extract_strided_slice %163 {offsets = [0, 8], sizes = [64, 4], strides = [1, 1]} : vector<64x48xf32> to vector<64x4xf32>
    %217 = arith.truncf %216 : vector<64x4xf32> to vector<64x4xbf16>
    %218 = vector.extract_strided_slice %163 {offsets = [0, 24], sizes = [64, 4], strides = [1, 1]} : vector<64x48xf32> to vector<64x4xf32>
    %219 = arith.truncf %218 : vector<64x4xf32> to vector<64x4xbf16>
    %220 = vector.extract_strided_slice %163 {offsets = [0, 40], sizes = [64, 4], strides = [1, 1]} : vector<64x48xf32> to vector<64x4xf32>
    %221 = arith.truncf %220 : vector<64x4xf32> to vector<64x4xbf16>
    %cst_66 = arith.constant dense<0.000000e+00> : vector<64x64xf32>
    %222 = tpu.matmul %217, %219, %cst_66 {dimension_numbers = #tpu.dot_dimension_numbers<[1], [1], [0], [0], [0, 0, 1, 0], [], []>} : vector<64x4xbf16>, vector<64x4xbf16>, vector<64x64xf32> -> vector<64x64xf32>
    %cst_67 = arith.constant 5.000000e-01 : f32
    %223 = vector.broadcast %cst_67 : f32 to vector<64x64xf32>
    %224 = arith.mulf %222, %223 : vector<64x64xf32>
    %cst_68 = arith.constant dense<0xFF800000> : vector<64xf32>
    %225 = vector.multi_reduction <maximumf>, %224, %cst_68 [1] : vector<64x64xf32> to vector<64xf32>
    %226 = vector.shape_cast %225 : vector<64xf32> to vector<64x1xf32>
    %227 = vector.broadcast %226 : vector<64x1xf32> to vector<64x64xf32>
    %228 = arith.subf %224, %227 : vector<64x64xf32>
    %229 = math.exp %228 : vector<64x64xf32>
    %cst_69 = arith.constant dense<0.000000e+00> : vector<64xf32>
    %230 = vector.multi_reduction <add>, %229, %cst_69 [1] : vector<64x64xf32> to vector<64xf32>
    %231 = vector.shape_cast %230 : vector<64xf32> to vector<64x1xf32>
    %232 = tpu.reciprocal %231 {approx = true} : vector<64x1xf32> -> vector<64x1xf32>
    %233 = vector.broadcast %232 : vector<64x1xf32> to vector<64x64xf32>
    %234 = arith.mulf %229, %233 : vector<64x64xf32>
    %235 = arith.truncf %234 : vector<64x64xf32> to vector<64x64xbf16>
    %cst_70 = arith.constant dense<0.000000e+00> : vector<64x4xf32>
    %236 = tpu.matmul %235, %221, %cst_70 {dimension_numbers = #tpu.dot_dimension_numbers<[1], [0], [0], [1], [0, 0, 1, 1], [], []>} : vector<64x64xbf16>, vector<64x4xbf16>, vector<64x4xf32> -> vector<64x4xf32>
    %237 = arith.truncf %236 : vector<64x4xf32> to vector<64x4xbf16>
    %238 = vector.extract_strided_slice %6 {offsets = [8, 0], sizes = [4, 16], strides = [1, 1]} : vector<16x16xbf16> to vector<4x16xbf16>
    %cst_71 = arith.constant dense<0.000000e+00> : vector<64x16xf32>
    %239 = tpu.matmul %237, %238, %cst_71 {dimension_numbers = #tpu.dot_dimension_numbers<[1], [0], [0], [1], [0, 0, 1, 1], [], []>} : vector<64x4xbf16>, vector<4x16xbf16>, vector<64x16xf32> -> vector<64x16xf32>
    %240 = arith.addf %215, %239 : vector<64x16xf32>
    %241 = vector.extract_strided_slice %163 {offsets = [0, 12], sizes = [64, 4], strides = [1, 1]} : vector<64x48xf32> to vector<64x4xf32>
    %242 = arith.truncf %241 : vector<64x4xf32> to vector<64x4xbf16>
    %243 = vector.extract_strided_slice %163 {offsets = [0, 28], sizes = [64, 4], strides = [1, 1]} : vector<64x48xf32> to vector<64x4xf32>
    %244 = arith.truncf %243 : vector<64x4xf32> to vector<64x4xbf16>
    %245 = vector.extract_strided_slice %163 {offsets = [0, 44], sizes = [64, 4], strides = [1, 1]} : vector<64x48xf32> to vector<64x4xf32>
    %246 = arith.truncf %245 : vector<64x4xf32> to vector<64x4xbf16>
    %cst_72 = arith.constant dense<0.000000e+00> : vector<64x64xf32>
    %247 = tpu.matmul %242, %244, %cst_72 {dimension_numbers = #tpu.dot_dimension_numbers<[1], [1], [0], [0], [0, 0, 1, 0], [], []>} : vector<64x4xbf16>, vector<64x4xbf16>, vector<64x64xf32> -> vector<64x64xf32>
    %cst_73 = arith.constant 5.000000e-01 : f32
    %248 = vector.broadcast %cst_73 : f32 to vector<64x64xf32>
    %249 = arith.mulf %247, %248 : vector<64x64xf32>
    %cst_74 = arith.constant dense<0xFF800000> : vector<64xf32>
    %250 = vector.multi_reduction <maximumf>, %249, %cst_74 [1] : vector<64x64xf32> to vector<64xf32>
    %251 = vector.shape_cast %250 : vector<64xf32> to vector<64x1xf32>
    %252 = vector.broadcast %251 : vector<64x1xf32> to vector<64x64xf32>
    %253 = arith.subf %249, %252 : vector<64x64xf32>
    %254 = math.exp %253 : vector<64x64xf32>
    %cst_75 = arith.constant dense<0.000000e+00> : vector<64xf32>
    %255 = vector.multi_reduction <add>, %254, %cst_75 [1] : vector<64x64xf32> to vector<64xf32>
    %256 = vector.shape_cast %255 : vector<64xf32> to vector<64x1xf32>
    %257 = tpu.reciprocal %256 {approx = true} : vector<64x1xf32> -> vector<64x1xf32>
    %258 = vector.broadcast %257 : vector<64x1xf32> to vector<64x64xf32>
    %259 = arith.mulf %254, %258 : vector<64x64xf32>
    %260 = arith.truncf %259 : vector<64x64xf32> to vector<64x64xbf16>
    %cst_76 = arith.constant dense<0.000000e+00> : vector<64x4xf32>
    %261 = tpu.matmul %260, %246, %cst_76 {dimension_numbers = #tpu.dot_dimension_numbers<[1], [0], [0], [1], [0, 0, 1, 1], [], []>} : vector<64x64xbf16>, vector<64x4xbf16>, vector<64x4xf32> -> vector<64x4xf32>
    %262 = arith.truncf %261 : vector<64x4xf32> to vector<64x4xbf16>
    %263 = vector.extract_strided_slice %6 {offsets = [12, 0], sizes = [4, 16], strides = [1, 1]} : vector<16x16xbf16> to vector<4x16xbf16>
    %cst_77 = arith.constant dense<0.000000e+00> : vector<64x16xf32>
    %264 = tpu.matmul %262, %263, %cst_77 {dimension_numbers = #tpu.dot_dimension_numbers<[1], [0], [0], [1], [0, 0, 1, 1], [], []>} : vector<64x4xbf16>, vector<4x16xbf16>, vector<64x16xf32> -> vector<64x16xf32>
    %265 = arith.addf %240, %264 : vector<64x16xf32>
    %266 = vector.shape_cast %265 : vector<64x16xf32> to vector<1x8x8x16xf32>
    %c0_78 = arith.constant 0 : index
    %c0_79 = arith.constant 0 : index
    %c8 = arith.constant 8 : index
    %c0_80 = arith.constant 0 : index
    %267 = vector.load %arg9[%c0_78, %c0_79, %c8, %c0_80] : memref<1x8x16x16xf32, #tpu.memory_space<vmem>>, vector<1x8x8x16xf32>
    tpu.vector_store %arg9[%c0_78, %c0_79, %c8, %c0_80], %266 {strides = array<i32>} : memref<1x8x16x16xf32, #tpu.memory_space<vmem>>, vector<1x8x8x16xf32>,
    return
  }
  func.func @transform_0(%arg0: i32, %arg1: i32) -> (i32, i32, i32, i32) {
    %c0_i32 = arith.constant 0 : i32
    %c0_i32_0 = arith.constant 0 : i32
    %c0_i32_1 = arith.constant 0 : i32
    return %arg0, %arg1, %c0_i32, %c0_i32_0 : i32, i32, i32, i32
  }
  func.func @transform_1(%arg0: i32, %arg1: i32) -> (i32, i32) {
    %c0_i32 = arith.constant 0 : i32
    %c0_i32_0 = arith.constant 0 : i32
    %c0_i32_1 = arith.constant 0 : i32
    return %c0_i32, %c0_i32_0 : i32, i32
  }
  func.func @transform_2(%arg0: i32, %arg1: i32) -> (i32, i32) {
    %c0_i32 = arith.constant 0 : i32
    %c0_i32_0 = arith.constant 0 : i32
    %c0_i32_1 = arith.constant 0 : i32
    return %c0_i32, %c0_i32_0 : i32, i32
  }
  func.func @transform_3(%arg0: i32, %arg1: i32) -> (i32, i32) {
    %c0_i32 = arith.constant 0 : i32
    %c0_i32_0 = arith.constant 0 : i32
    %c0_i32_1 = arith.constant 0 : i32
    return %c0_i32, %c0_i32_0 : i32, i32
  }
  func.func @transform_4(%arg0: i32, %arg1: i32) -> (i32, i32) {
    %c0_i32 = arith.constant 0 : i32
    %c0_i32_0 = arith.constant 0 : i32
    %c0_i32_1 = arith.constant 0 : i32
    return %c0_i32, %c0_i32_0 : i32, i32
  }
  func.func @transform_5(%arg0: i32, %arg1: i32) -> (i32, i32) {
    %c0_i32 = arith.constant 0 : i32
    %c0_i32_0 = arith.constant 0 : i32
    %c0_i32_1 = arith.constant 0 : i32
    return %c0_i32, %c0_i32_0 : i32, i32
  }
  func.func @transform_6(%arg0: i32, %arg1: i32) -> (i32, i32) {
    %c0_i32 = arith.constant 0 : i32
    %c0_i32_0 = arith.constant 0 : i32
    %c0_i32_1 = arith.constant 0 : i32
    return %c0_i32, %c0_i32_0 : i32, i32
  }
  func.func @transform_7(%arg0: i32, %arg1: i32) -> (i32, i32, i32, i32) {
    %c0_i32 = arith.constant 0 : i32
    %c0_i32_0 = arith.constant 0 : i32
    %c0_i32_1 = arith.constant 0 : i32
    return %arg0, %arg1, %c0_i32, %c0_i32_0 : i32, i32, i32, i32
  }
}

module attributes {stable_mosaic.version = 11 : i64} {
  func.func @_ffn_row_kernel(%arg0: i32, %arg1: memref<256x16xf32, #tpu.memory_space<vmem>>, %arg2: memref<1x16xf32, #tpu.memory_space<vmem>>, %arg3: memref<1x16xf32, #tpu.memory_space<vmem>>, %arg4: memref<16x32xbf16, #tpu.memory_space<vmem>>, %arg5: memref<1x32xf32, #tpu.memory_space<vmem>>, %arg6: memref<32x16xbf16, #tpu.memory_space<vmem>>, %arg7: memref<1x16xf32, #tpu.memory_space<vmem>>, %arg8: memref<256x16xf32, #tpu.memory_space<vmem>>) attributes {dimension_semantics = [#tpu.dimension_semantics<parallel>], iteration_bounds = array<i64: 2>, scalar_prefetch = 0 : i64, scratch_operands = 0 : i64, tpu.core_type = #tpu.core_type<tc>, window_params = [{transform_indices = @transform_0, window_bounds = array<i64: 256, 16>}, {pipeline_mode = #tpu.pipeline_mode<synchronous>, transform_indices = @transform_1, window_bounds = array<i64: 1, 16>}, {pipeline_mode = #tpu.pipeline_mode<synchronous>, transform_indices = @transform_2, window_bounds = array<i64: 1, 16>}, {pipeline_mode = #tpu.pipeline_mode<synchronous>, transform_indices = @transform_3, window_bounds = array<i64: 16, 32>}, {pipeline_mode = #tpu.pipeline_mode<synchronous>, transform_indices = @transform_4, window_bounds = array<i64: 1, 32>}, {pipeline_mode = #tpu.pipeline_mode<synchronous>, transform_indices = @transform_5, window_bounds = array<i64: 32, 16>}, {pipeline_mode = #tpu.pipeline_mode<synchronous>, transform_indices = @transform_6, window_bounds = array<i64: 1, 16>}, {transform_indices = @transform_7, window_bounds = array<i64: 256, 16>}]} {
    %c0 = arith.constant 0 : index
    %c0_0 = arith.constant 0 : index
    %0 = vector.load %arg1[%c0, %c0_0] : memref<256x16xf32, #tpu.memory_space<vmem>>, vector<256x16xf32>
    %c0_1 = arith.constant 0 : index
    %c0_2 = arith.constant 0 : index
    %1 = vector.load %arg2[%c0_1, %c0_2] : memref<1x16xf32, #tpu.memory_space<vmem>>, vector<1x16xf32>
    %c0_3 = arith.constant 0 : index
    %c0_4 = arith.constant 0 : index
    %2 = vector.load %arg3[%c0_3, %c0_4] : memref<1x16xf32, #tpu.memory_space<vmem>>, vector<1x16xf32>
    %cst = arith.constant dense<0.000000e+00> : vector<256xf32>
    %3 = vector.multi_reduction <add>, %0, %cst [1] : vector<256x16xf32> to vector<256xf32>
    %4 = vector.shape_cast %3 : vector<256xf32> to vector<256x1xf32>
    %cst_5 = arith.constant 1.600000e+01 : f32
    %5 = vector.broadcast %cst_5 : f32 to vector<256x1xf32>
    %6 = arith.divf %4, %5 : vector<256x1xf32>
    %7 = vector.broadcast %6 : vector<256x1xf32> to vector<256x16xf32>
    %8 = arith.subf %0, %7 : vector<256x16xf32>
    %9 = arith.mulf %8, %8 : vector<256x16xf32>
    %cst_6 = arith.constant dense<0.000000e+00> : vector<256xf32>
    %10 = vector.multi_reduction <add>, %9, %cst_6 [1] : vector<256x16xf32> to vector<256xf32>
    %11 = vector.shape_cast %10 : vector<256xf32> to vector<256x1xf32>
    %cst_7 = arith.constant 1.600000e+01 : f32
    %12 = vector.broadcast %cst_7 : f32 to vector<256x1xf32>
    %13 = arith.divf %11, %12 : vector<256x1xf32>
    %cst_8 = arith.constant 9.99999974E-6 : f32
    %14 = vector.broadcast %cst_8 : f32 to vector<256x1xf32>
    %15 = arith.addf %13, %14 : vector<256x1xf32>
    %16 = math.rsqrt %15 : vector<256x1xf32>
    %17 = vector.broadcast %16 : vector<256x1xf32> to vector<256x16xf32>
    %18 = arith.mulf %8, %17 : vector<256x16xf32>
    %19 = vector.broadcast %1 : vector<1x16xf32> to vector<256x16xf32>
    %20 = arith.mulf %18, %19 : vector<256x16xf32>
    %21 = vector.broadcast %2 : vector<1x16xf32> to vector<256x16xf32>
    %22 = arith.addf %20, %21 : vector<256x16xf32>
    %23 = arith.truncf %22 : vector<256x16xf32> to vector<256x16xbf16>
    %c0_9 = arith.constant 0 : index
    %c0_10 = arith.constant 0 : index
    %24 = vector.load %arg4[%c0_9, %c0_10] : memref<16x32xbf16, #tpu.memory_space<vmem>>, vector<16x32xbf16>
    %cst_11 = arith.constant dense<0.000000e+00> : vector<256x32xf32>
    %25 = tpu.matmul %23, %24, %cst_11 {dimension_numbers = #tpu.dot_dimension_numbers<[1], [0], [0], [1], [0, 0, 1, 1], [], []>} : vector<256x16xbf16>, vector<16x32xbf16>, vector<256x32xf32> -> vector<256x32xf32>
    %c0_12 = arith.constant 0 : index
    %c0_13 = arith.constant 0 : index
    %26 = vector.load %arg5[%c0_12, %c0_13] : memref<1x32xf32, #tpu.memory_space<vmem>>, vector<1x32xf32>
    %27 = vector.broadcast %26 : vector<1x32xf32> to vector<256x32xf32>
    %28 = arith.addf %25, %27 : vector<256x32xf32>
    %cst_14 = arith.constant 5.000000e-01 : f32
    %29 = vector.broadcast %cst_14 : f32 to vector<256x32xf32>
    %30 = arith.mulf %29, %28 : vector<256x32xf32>
    %cst_15 = arith.constant 0.707106769 : f32
    %31 = vector.broadcast %cst_15 : f32 to vector<256x32xf32>
    %32 = arith.mulf %28, %31 : vector<256x32xf32>
    %cst_16 = arith.constant 0.000000e+00 : f32
    %33 = vector.broadcast %cst_16 : f32 to vector<256x32xf32>
    %34 = arith.cmpf oge, %32, %33 : vector<256x32xf32>
    %cst_17 = arith.constant 1.000000e+00 : f32
    %cst_18 = arith.constant -1.000000e+00 : f32
    %35 = vector.broadcast %cst_17 : f32 to vector<256x32xf32>
    %36 = vector.broadcast %cst_18 : f32 to vector<256x32xf32>
    %37 = arith.select %34, %35, %36 : vector<256x32xi1>, vector<256x32xf32>
    %38 = math.absf %32 : vector<256x32xf32>
    %cst_19 = arith.constant 0.327591091 : f32
    %39 = vector.broadcast %cst_19 : f32 to vector<256x32xf32>
    %40 = arith.mulf %39, %38 : vector<256x32xf32>
    %cst_20 = arith.constant 1.000000e+00 : f32
    %41 = vector.broadcast %cst_20 : f32 to vector<256x32xf32>
    %42 = arith.addf %41, %40 : vector<256x32xf32>
    %43 = tpu.reciprocal %42 {approx = true} : vector<256x32xf32> -> vector<256x32xf32>
    %cst_21 = arith.constant 1.06140542 : f32
    %44 = vector.broadcast %cst_21 : f32 to vector<256x32xf32>
    %45 = arith.mulf %44, %43 : vector<256x32xf32>
    %cst_22 = arith.constant -1.45315206 : f32
    %46 = vector.broadcast %cst_22 : f32 to vector<256x32xf32>
    %47 = arith.addf %45, %46 : vector<256x32xf32>
    %48 = arith.mulf %47, %43 : vector<256x32xf32>
    %cst_23 = arith.constant 1.42141378 : f32
    %49 = vector.broadcast %cst_23 : f32 to vector<256x32xf32>
    %50 = arith.addf %48, %49 : vector<256x32xf32>
    %51 = arith.mulf %50, %43 : vector<256x32xf32>
    %cst_24 = arith.constant -0.284496725 : f32
    %52 = vector.broadcast %cst_24 : f32 to vector<256x32xf32>
    %53 = arith.addf %51, %52 : vector<256x32xf32>
    %54 = arith.mulf %53, %43 : vector<256x32xf32>
    %cst_25 = arith.constant 0.254829586 : f32
    %55 = vector.broadcast %cst_25 : f32 to vector<256x32xf32>
    %56 = arith.addf %54, %55 : vector<256x32xf32>
    %57 = arith.mulf %56, %43 : vector<256x32xf32>
    %cst_26 = arith.constant 0.000000e+00 : f32
    %58 = vector.broadcast %cst_26 : f32 to vector<256x32xf32>
    %59 = arith.subf %58, %38 : vector<256x32xf32>
    %60 = arith.mulf %59, %38 : vector<256x32xf32>
    %61 = math.exp %60 : vector<256x32xf32>
    %62 = arith.mulf %57, %61 : vector<256x32xf32>
    %cst_27 = arith.constant 1.000000e+00 : f32
    %63 = vector.broadcast %cst_27 : f32 to vector<256x32xf32>
    %64 = arith.subf %63, %62 : vector<256x32xf32>
    %65 = arith.mulf %37, %64 : vector<256x32xf32>
    %cst_28 = arith.constant 1.000000e+00 : f32
    %66 = vector.broadcast %cst_28 : f32 to vector<256x32xf32>
    %67 = arith.addf %66, %65 : vector<256x32xf32>
    %68 = arith.mulf %30, %67 : vector<256x32xf32>
    %69 = arith.truncf %68 : vector<256x32xf32> to vector<256x32xbf16>
    %c0_29 = arith.constant 0 : index
    %c0_30 = arith.constant 0 : index
    %70 = vector.load %arg6[%c0_29, %c0_30] : memref<32x16xbf16, #tpu.memory_space<vmem>>, vector<32x16xbf16>
    %cst_31 = arith.constant dense<0.000000e+00> : vector<256x16xf32>
    %71 = tpu.matmul %69, %70, %cst_31 {dimension_numbers = #tpu.dot_dimension_numbers<[1], [0], [0], [1], [0, 0, 1, 1], [], []>} : vector<256x32xbf16>, vector<32x16xbf16>, vector<256x16xf32> -> vector<256x16xf32>
    %c0_32 = arith.constant 0 : index
    %c0_33 = arith.constant 0 : index
    %72 = vector.load %arg7[%c0_32, %c0_33] : memref<1x16xf32, #tpu.memory_space<vmem>>, vector<1x16xf32>
    %73 = vector.broadcast %72 : vector<1x16xf32> to vector<256x16xf32>
    %74 = arith.addf %71, %73 : vector<256x16xf32>
    %75 = arith.addf %74, %0 : vector<256x16xf32>
    %c0_34 = arith.constant 0 : index
    %c0_35 = arith.constant 0 : index
    %76 = vector.load %arg8[%c0_34, %c0_35] : memref<256x16xf32, #tpu.memory_space<vmem>>, vector<256x16xf32>
    tpu.vector_store %arg8[%c0_34, %c0_35], %75 {strides = array<i32>} : memref<256x16xf32, #tpu.memory_space<vmem>>, vector<256x16xf32>,
    return
  }
  func.func @transform_0(%arg0: i32) -> (i32, i32) {
    %c0_i32 = arith.constant 0 : i32
    %c0_i32_0 = arith.constant 0 : i32
    return %arg0, %c0_i32 : i32, i32
  }
  func.func @transform_1(%arg0: i32) -> (i32, i32) {
    %c0_i32 = arith.constant 0 : i32
    %c0_i32_0 = arith.constant 0 : i32
    %c0_i32_1 = arith.constant 0 : i32
    return %c0_i32, %c0_i32_0 : i32, i32
  }
  func.func @transform_2(%arg0: i32) -> (i32, i32) {
    %c0_i32 = arith.constant 0 : i32
    %c0_i32_0 = arith.constant 0 : i32
    %c0_i32_1 = arith.constant 0 : i32
    return %c0_i32, %c0_i32_0 : i32, i32
  }
  func.func @transform_3(%arg0: i32) -> (i32, i32) {
    %c0_i32 = arith.constant 0 : i32
    %c0_i32_0 = arith.constant 0 : i32
    %c0_i32_1 = arith.constant 0 : i32
    return %c0_i32, %c0_i32_0 : i32, i32
  }
  func.func @transform_4(%arg0: i32) -> (i32, i32) {
    %c0_i32 = arith.constant 0 : i32
    %c0_i32_0 = arith.constant 0 : i32
    %c0_i32_1 = arith.constant 0 : i32
    return %c0_i32, %c0_i32_0 : i32, i32
  }
  func.func @transform_5(%arg0: i32) -> (i32, i32) {
    %c0_i32 = arith.constant 0 : i32
    %c0_i32_0 = arith.constant 0 : i32
    %c0_i32_1 = arith.constant 0 : i32
    return %c0_i32, %c0_i32_0 : i32, i32
  }
  func.func @transform_6(%arg0: i32) -> (i32, i32) {
    %c0_i32 = arith.constant 0 : i32
    %c0_i32_0 = arith.constant 0 : i32
    %c0_i32_1 = arith.constant 0 : i32
    return %c0_i32, %c0_i32_0 : i32, i32
  }
  func.func @transform_7(%arg0: i32) -> (i32, i32) {
    %c0_i32 = arith.constant 0 : i32
    %c0_i32_0 = arith.constant 0 : i32
    return %arg0, %c0_i32 : i32, i32
  }
}

</mosaic_0001>

<llo_original>
// kernel: transformer_forward.3
$region0: #{transformer_forward.3}
  #allocation0 [shape = 'u32[]', space=smem, size = 0x4, offset = 0x4, fixed_abs, tag = 'smem constant byte address 0x4 - core index']
  #allocation1 [shape = 'u32[144,128]{1,0:T(1,128)}', space=vmem, size = 0x12000, scoped, tag = 'internal scratch']
  %s0 = inlined_call_operand.vmem [shape: f32[512,16], index: 0, kind: input, shape index: {}]
  %s1 = inlined_call_operand.vmem [shape: f32[1,16], index: 1, kind: input, shape index: {}]
  %s2 = inlined_call_operand.vmem [shape: f32[1,16], index: 2, kind: input, shape index: {}]
  %s3 = inlined_call_operand.vmem [shape: bf16[16,32], index: 3, kind: input, shape index: {}]
  %s4 = inlined_call_operand.vmem [shape: f32[1,32], index: 4, kind: input, shape index: {}]
  %s5 = inlined_call_operand.vmem [shape: bf16[32,16], index: 5, kind: input, shape index: {}]
  %s6 = inlined_call_operand.vmem [shape: f32[1,16], index: 6, kind: input, shape index: {}]
  %s7 = inlined_call_operand.vmem [shape: f32[512,16], index: 7, kind: output, shape index: {}]
  %s8 = sld [smem:[#allocation0]]
  $region61: #{transformer_forward.3} parent=0
    _
  %s10 = ssub.s32 1, %s8
  %s11 = scalar_select 0, %s10, %s8
  loop: start=0, step=1, limit=4
  $region2: #{transformer_forward.3} parent=0 // loop_pre_header
    _
  $region3: #{transformer_forward.3} parent=0 // loop_header
    %s13 = sphi 0, %s17
    %p14 = scmp.ge.s32.totalorder %s13, 4
    %s23 = sphi 0, %s25
    %s26 = sphi 0, %s23
    %s27 = sphi 0, %s26
    %s43 = sphi 0, %s27
    %s47 = sphi 0, %s47
    %s49 = sphi 0, %s47
    %s50 = sphi 0, %s49
    %s64 = sphi 0, %s50
    %s68 = sphi 0, %s68
    %s70 = sphi 0, %s68
    %s71 = sphi 0, %s70
    %s85 = sphi 0, %s71
    %s89 = sphi 0, %s89
    %s91 = sphi 0, %s89
    %s92 = sphi 0, %s91
    %s106 = sphi 0, %s92
    %s110 = sphi 0, %s110
    %s112 = sphi 0, %s110
    %s113 = sphi 0, %s112
    %s127 = sphi 0, %s113
    %s131 = sphi 0, %s131
    %s133 = sphi 0, %s131
    %s134 = sphi 0, %s133
    %s148 = sphi 0, %s134
    %s152 = sphi 0, %s152
    %s154 = sphi 0, %s152
    %s155 = sphi 0, %s154
    %s169 = sphi 0, %s155
    %s175 = sphi 0, %s177
    %s178 = sphi 0, %s175
    %s179 = sphi 0, %s178
    %s195 = sphi 0, %s179
  $region4: #{transformer_forward.3} parent=0 // loop_header_branch
    %16 = sbr.rel (%p14) target = $region8
  $region5: #{transformer_forward.3} parent=0 // loop_body
    %s18 = ssub.s32 %s13, 1
    %s19 = ssub.s32 %s13, 2
    %s20 = sadd.s32 %s13, 1
    %s21 = ssub.s32 %s13, %s20
    %p22 = scmp.eq.s32.totalorder %s21, 0
    %s24 = sadd.s32 %s23, 1
    %s25 = scalar_select %p22, %s23, %s24
    %p28 = pneg %p22
    %p29 = scmp.eq.s32.totalorder %s13, 1
    %p30 = por %p28, %p29
    %p31 = scmp.ne.s32.totalorder %s23, %s26
    %p32 = scmp.eq.s32.totalorder %s13, 0
    %p33 = por %p31, %p32
    %p34 = scmp.ne.s32.totalorder %s23, %s26
    %p35 = scmp.eq.s32.totalorder %s18, 1
    %p36 = por %p34, %p35
    %p37 = scmp.ne.s32.totalorder %s26, %s27
    %p38 = scmp.eq.s32.totalorder %s18, 0
    %p39 = por %p37, %p38
    %p40 = scmp.ne.s32.totalorder %s26, %s27
    %p41 = scmp.eq.s32.totalorder %s19, 1
    %p42 = por %p40, %p41
    %p44 = scmp.ne.s32.totalorder %s27, %s43
    %p45 = scmp.eq.s32.totalorder %s19, 0
    %p46 = por %p44, %p45
    %s48 = sadd.s32 %s47, 1
    %p51 = scmp.eq.s32.totalorder %s13, 1
    %p52 = scmp.ne.s32.totalorder %s47, %s49
    %p53 = scmp.eq.s32.totalorder %s13, 0
    %p54 = por %p52, %p53
    %p55 = scmp.ne.s32.totalorder %s47, %s49
    %p56 = scmp.eq.s32.totalorder %s18, 1
    %p57 = por %p55, %p56
    %p58 = scmp.ne.s32.totalorder %s49, %s50
    %p59 = scmp.eq.s32.totalorder %s18, 0
    %p60 = por %p58, %p59
    %p61 = scmp.ne.s32.totalorder %s49, %s50
    %p62 = scmp.eq.s32.totalorder %s19, 1
    %p63 = por %p61, %p62
    %p65 = scmp.ne.s32.totalorder %s50, %s64
    %p66 = scmp.eq.s32.totalorder %s19, 0
    %p67 = por %p65, %p66
    %s69 = sadd.s32 %s68, 1
    %p72 = scmp.eq.s32.totalorder %s13, 1
    %p73 = scmp.ne.s32.totalorder %s68, %s70
    %p74 = scmp.eq.s32.totalorder %s13, 0
    %p75 = por %p73, %p74
    %p76 = scmp.ne.s32.totalorder %s68, %s70
    %p77 = scmp.eq.s32.totalorder %s18, 1
    %p78 = por %p76, %p77
    %p79 = scmp.ne.s32.totalorder %s70, %s71
    %p80 = scmp.eq.s32.totalorder %s18, 0
    %p81 = por %p79, %p80
    %p82 = scmp.ne.s32.totalorder %s70, %s71
    %p83 = scmp.eq.s32.totalorder %s19, 1
    %p84 = por %p82, %p83
    %p86 = scmp.ne.s32.totalorder %s71, %s85
    %p87 = scmp.eq.s32.totalorder %s19, 0
    %p88 = por %p86, %p87
    %s90 = sadd.s32 %s89, 1
    %p93 = scmp.eq.s32.totalorder %s13, 1
    %p94 = scmp.ne.s32.totalorder %s89, %s91
    %p95 = scmp.eq.s32.totalorder %s13, 0
    %p96 = por %p94, %p95
    %p97 = scmp.ne.s32.totalorder %s89, %s91
    %p98 = scmp.eq.s32.totalorder %s18, 1
    %p99 = por %p97, %p98
    %p100 = scmp.ne.s32.totalorder %s91, %s92
    %p101 = scmp.eq.s32.totalorder %s18, 0
    %p102 = por %p100, %p101
    %p103 = scmp.ne.s32.totalorder %s91, %s92
    %p104 = scmp.eq.s32.totalorder %s19, 1
    %p105 = por %p103, %p104
    %p107 = scmp.ne.s32.totalorder %s92, %s106
    %p108 = scmp.eq.s32.totalorder %s19, 0
    %p109 = por %p107, %p108
    %s111 = sadd.s32 %s110, 1
    %p114 = scmp.eq.s32.totalorder %s13, 1
    %p115 = scmp.ne.s32.totalorder %s110, %s112
    %p116 = scmp.eq.s32.totalorder %s13, 0
    %p117 = por %p115, %p116
    %p118 = scmp.ne.s32.totalorder %s110, %s112
    %p119 = scmp.eq.s32.totalorder %s18, 1
    %p120 = por %p118, %p119
    %p121 = scmp.ne.s32.totalorder %s112, %s113
    %p122 = scmp.eq.s32.totalorder %s18, 0
    %p123 = por %p121, %p122
    %p124 = scmp.ne.s32.totalorder %s112, %s113
    %p125 = scmp.eq.s32.totalorder %s19, 1
    %p126 = por %p124, %p125
    %p128 = scmp.ne.s32.totalorder %s113, %s127
    %p129 = scmp.eq.s32.totalorder %s19, 0
    %p130 = por %p128, %p129
    %s132 = sadd.s32 %s131, 1
    %p135 = scmp.eq.s32.totalorder %s13, 1
    %p136 = scmp.ne.s32.totalorder %s131, %s133
    %p137 = scmp.eq.s32.totalorder %s13, 0
    %p138 = por %p136, %p137
    %p139 = scmp.ne.s32.totalorder %s131, %s133
    %p140 = scmp.eq.s32.totalorder %s18, 1
    %p141 = por %p139, %p140
    %p142 = scmp.ne.s32.totalorder %s133, %s134
    %p143 = scmp.eq.s32.totalorder %s18, 0
    %p144 = por %p142, %p143
    %p145 = scmp.ne.s32.totalorder %s133, %s134
    %p146 = scmp.eq.s32.totalorder %s19, 1
    %p147 = por %p145, %p146
    %p149 = scmp.ne.s32.totalorder %s134, %s148
    %p150 = scmp.eq.s32.totalorder %s19, 0
    %p151 = por %p149, %p150
    %s153 = sadd.s32 %s152, 1
    %p156 = scmp.eq.s32.totalorder %s13, 1
    %p157 = scmp.ne.s32.totalorder %s152, %s154
    %p158 = scmp.eq.s32.totalorder %s13, 0
    %p159 = por %p157, %p158
    %p160 = scmp.ne.s32.totalorder %s152, %s154
    %p161 = scmp.eq.s32.totalorder %s18, 1
    %p162 = por %p160, %p161
    %p163 = scmp.ne.s32.totalorder %s154, %s155
    %p164 = scmp.eq.s32.totalorder %s18, 0
    %p165 = por %p163, %p164
    %p166 = scmp.ne.s32.totalorder %s154, %s155
    %p167 = scmp.eq.s32.totalorder %s19, 1
    %p168 = por %p166, %p167
    %p170 = scmp.ne.s32.totalorder %s155, %s169
    %p171 = scmp.eq.s32.totalorder %s19, 0
    %p172 = por %p170, %p171
    %s173 = ssub.s32 %s13, %s20
    %p174 = scmp.eq.s32.totalorder %s173, 0
    %s176 = sadd.s32 %s175, 1
    %s177 = scalar_select %p174, %s175, %s176
    %p180 = pneg %p174
    %p181 = scmp.eq.s32.totalorder %s13, 1
    %p182 = por %p180, %p181
    %p183 = scmp.ne.s32.totalorder %s175, %s178
    %p184 = scmp.eq.s32.totalorder %s13, 0
    %p185 = por %p183, %p184
    %p186 = scmp.ne.s32.totalorder %s175, %s178
    %p187 = scmp.eq.s32.totalorder %s18, 1
    %p188 = por %p186, %p187
    %p189 = scmp.ne.s32.totalorder %s178, %s179
    %p190 = scmp.eq.s32.totalorder %s18, 0
    %p191 = por %p189, %p190
    %p192 = scmp.ne.s32.totalorder %s178, %s179
    %p193 = scmp.eq.s32.totalorder %s19, 1
    %p194 = por %p192, %p193
    %p196 = scmp.ne.s32.totalorder %s179, %s195
    %p197 = scmp.eq.s32.totalorder %s19, 0
    %p198 = por %p196, %p197
    %p199 = scmp.le.s32.totalorder 1, %s13
    %p200 = scmp.lt.s32.totalorder %s13, 3
    %p201 = pnand %p199, %p200
    %p202 = pneg %p201
    // Predicated region
    $region9: #{transformer_forward.3} parent=5 // pred_check
      _
    $region10: #{transformer_forward.3} parent=5 // pred_check_branch
      %204 = sbr.rel (%p201) target = $region12
    $region11: #{transformer_forward.3} parent=5 // pred_region
      %s205 = ssub.s32 %s13, 1
      // Predicated region
      $region13: #{transformer_forward.3} parent=11 // pred_check
        %p206 = pneg %p60
      $region14: #{transformer_forward.3} parent=11 // pred_check_branch
        %208 = sbr.rel (%p206) target = $region16
      $region15: #{transformer_forward.3} parent=11 // pred_region
        _
      $region16: #{transformer_forward.3} parent=11 // pred_fallthru
        _
      // Predicated region
      $region17: #{transformer_forward.3} parent=11 // pred_check
        %p209 = pneg %p81
      $region18: #{transformer_forward.3} parent=11 // pred_check_branch
        %211 = sbr.rel (%p209) target = $region20
      $region19: #{transformer_forward.3} parent=11 // pred_region
        _
      $region20: #{transformer_forward.3} parent=11 // pred_fallthru
        _
      // Predicated region
      $region21: #{transformer_forward.3} parent=11 // pred_check
        %p212 = pneg %p102
      $region22: #{transformer_forward.3} parent=11 // pred_check_branch
        %214 = sbr.rel (%p212) target = $region24
      $region23: #{transformer_forward.3} parent=11 // pred_region
        _
      $region24: #{transformer_forward.3} parent=11 // pred_fallthru
        _
      // Predicated region
      $region25: #{transformer_forward.3} parent=11 // pred_check
        %p215 = pneg %p123
      $region26: #{transformer_forward.3} parent=11 // pred_check_branch
        %217 = sbr.rel (%p215) target = $region28
      $region27: #{transformer_forward.3} parent=11 // pred_region
        _
      $region28: #{transformer_forward.3} parent=11 // pred_fallthru
        _
      // Predicated region
      $region29: #{transformer_forward.3} parent=11 // pred_check
        %p218 = pneg %p144
      $region30: #{transformer_forward.3} parent=11 // pred_check_branch
        %220 = sbr.rel (%p218) target = $region32
      $region31: #{transformer_forward.3} parent=11 // pred_region
        _
      $region32: #{transformer_forward.3} parent=11 // pred_fallthru
        _
      // Predicated region
      $region33: #{transformer_forward.3} parent=11 // pred_check
        %p221 = pneg %p165
      $region34: #{transformer_forward.3} parent=11 // pred_check_branch
        %223 = sbr.rel (%p221) target = $region36
      $region35: #{transformer_forward.3} parent=11 // pred_region
        _
      $region36: #{transformer_forward.3} parent=11 // pred_fallthru
        _
    $region12: #{transformer_forward.3} parent=5 // pred_fallthru
      _
    %p224 = scmp.lt.s32.totalorder %s13, 2
    // Predicated region
    $region37: #{transformer_forward.3} parent=5 // pred_check
      %p225 = pneg %p224
    $region38: #{transformer_forward.3} parent=5 // pred_check_branch
      %227 = sbr.rel (%p225) target = $region40
    $region39: #{transformer_forward.3} parent=5 // pred_region
      // Predicated region
      $region41: #{transformer_forward.3} parent=39 // pred_check
        %p228 = pneg %p33
      $region42: #{transformer_forward.3} parent=39 // pred_check_branch
        %230 = sbr.rel (%p228) target = $region44
      $region43: #{transformer_forward.3} parent=39 // pred_region
        %s231 = smul.u32 32, %s13
        %p232 = scmp.lt.s32.totalorder %s231, 63
        %s233 = scalar_select %p232, %s231, 63
        %s234 = smul.addr %s233, 8
        %s235 = scalar_lea.vmem %s0, %s234
        %s236 = smul.u32 32, %s13
      $region44: #{transformer_forward.3} parent=39 // pred_fallthru
        _
    $region40: #{transformer_forward.3} parent=5 // pred_fallthru
      _
    %p237 = scmp.le.s32.totalorder 1, %s13
    %p238 = scmp.lt.s32.totalorder %s13, 3
    %p239 = pnand %p237, %p238
    %p240 = pneg %p239
    // Predicated region
    $region45: #{transformer_forward.3} parent=5 // pred_check
      _
    $region46: #{transformer_forward.3} parent=5 // pred_check_branch
      %242 = sbr.rel (%p239) target = $region48
    $region47: #{transformer_forward.3} parent=5 // pred_region
      %s243 = ssub.s32 %s13, 1
      %s244 = smul.u32 32, %s18
      %p245 = scmp.lt.s32.totalorder %s244, 63
      %s246 = scalar_select %p245, %s244, 63
      %s247 = smul.addr %s246, 8
      %s248 = scalar_lea.vmem %s0, %s247
      %p249 = pneg %p39
      %p250 = pneg %p36
      %p251 = pneg %p60
      %p252 = pneg %p57
      %p253 = pneg %p81
      %p254 = pneg %p78
      %p255 = pneg %p102
      %p256 = pneg %p99
      %p257 = pneg %p123
      %p258 = pneg %p120
      %p259 = pneg %p144
      %p260 = pneg %p141
      %p261 = pneg %p165
      %p262 = pneg %p162
      %p263 = pneg %p191
      %p264 = pneg %p188
      %s265 = smul.u32 32, %s18
      %p266 = scmp.lt.s32.totalorder %s265, 63
      %s267 = scalar_select %p266, %s265, 63
      %s268 = smul.addr %s267, 8
      %s269 = scalar_lea.vmem %s7, %s268
      %s270 = smul.u32 32, %s18
      %p271 = scmp.lt.s32.totalorder %s270, 63
      %s272 = scalar_select %p271, %s270, 63
      %s273 = smul.addr %s272, 8
      %s274 = scalar_lea.vmem %s0, %s273
      %s275 = smul.u32 32, %s18
      %s276 = smul.u32 32, %s18
      %p277 = scmp.lt.s32.totalorder %s276, 63
      %s278 = scalar_select %p277, %s276, 63
      %s279 = smul.addr %s278, 8
      %s280 = scalar_lea.vmem %s7, %s279
      %s281 = smul.u32 32, %s18
      %v283 = vld [vmem:[%s274] sm:$0xff]
      %v284 = vld [vmem:[%s274 + $0x8] sm:$0xff]
      %v285 = vld [vmem:[%s274 + $0x10] sm:$0xff]
      %v286 = vld [vmem:[%s274 + $0x18] sm:$0xff]
      %v287 = vld [vmem:[%s274 + $0x20] sm:$0xff]
      %v288 = vld [vmem:[%s274 + $0x28] sm:$0xff]
      %v289 = vld [vmem:[%s274 + $0x30] sm:$0xff]
      %v290 = vld [vmem:[%s274 + $0x38] sm:$0xff]
      %v291 = vld [vmem:[%s274 + $0x40] sm:$0xff]
      %v292 = vld [vmem:[%s274 + $0x48] sm:$0xff]
      %v293 = vld [vmem:[%s274 + $0x50] sm:$0xff]
      %v294 = vld [vmem:[%s274 + $0x58] sm:$0xff]
      %v295 = vld [vmem:[%s274 + $0x60] sm:$0xff]
      %v296 = vld [vmem:[%s274 + $0x68] sm:$0xff]
      %v297 = vld [vmem:[%s274 + $0x70] sm:$0xff]
      %v298 = vld [vmem:[%s274 + $0x78] sm:$0xff]
      %v299 = vld [vmem:[%s274 + $0x80] sm:$0xff]
      %v300 = vld [vmem:[%s274 + $0x88] sm:$0xff]
      %v301 = vld [vmem:[%s274 + $0x90] sm:$0xff]
      %v302 = vld [vmem:[%s274 + $0x98] sm:$0xff]
      %v303 = vld [vmem:[%s274 + $0xa0] sm:$0xff]
      %v304 = vld [vmem:[%s274 + $0xa8] sm:$0xff]
      %v305 = vld [vmem:[%s274 + $0xb0] sm:$0xff]
      %v306 = vld [vmem:[%s274 + $0xb8] sm:$0xff]
      %v307 = vld [vmem:[%s274 + $0xc0] sm:$0xff]
      %v308 = vld [vmem:[%s274 + $0xc8] sm:$0xff]
      %v309 = vld [vmem:[%s274 + $0xd0] sm:$0xff]
      %v310 = vld [vmem:[%s274 + $0xd8] sm:$0xff]
      %v311 = vld [vmem:[%s274 + $0xe0] sm:$0xff]
      %v312 = vld [vmem:[%s274 + $0xe8] sm:$0xff]
      %v313 = vld [vmem:[%s274 + $0xf0] sm:$0xff]
      %v314 = vld [vmem:[%s274 + $0xf8] sm:$0xff]
      %v315 = vld [vmem:[%s1] sm:$0x1]
      %v316 = vld [vmem:[%s2] sm:$0x1]
      %vm317 = vcmask 130048
      %v318 = vsel %vm317, %v283, 0.0
      %319 = vadd.xlane.f32.xlu0 %v318
      %v320 = vpop.xlane.xlu0 %319
      %v321 = vsel %vm317, %v284, 0.0
      %322 = vadd.xlane.f32.xlu0 %v321
      %v323 = vpop.xlane.xlu0 %322
      %v324 = vsel %vm317, %v285, 0.0
      %325 = vadd.xlane.f32.xlu0 %v324
      %v326 = vpop.xlane.xlu0 %325
      %v327 = vsel %vm317, %v286, 0.0
      %328 = vadd.xlane.f32.xlu0 %v327
      %v329 = vpop.xlane.xlu0 %328
      %v330 = vsel %vm317, %v287, 0.0
      %331 = vadd.xlane.f32.xlu0 %v330
      %v332 = vpop.xlane.xlu0 %331
      %v333 = vsel %vm317, %v288, 0.0
      %334 = vadd.xlane.f32.xlu0 %v333
      %v335 = vpop.xlane.xlu0 %334
      %v336 = vsel %vm317, %v289, 0.0
      %337 = vadd.xlane.f32.xlu0 %v336
      %v338 = vpop.xlane.xlu0 %337
      %v339 = vsel %vm317, %v290, 0.0
      %340 = vadd.xlane.f32.xlu0 %v339
      %v341 = vpop.xlane.xlu0 %340
      %v342 = vsel %vm317, %v291, 0.0
      %343 = vadd.xlane.f32.xlu0 %v342
      %v344 = vpop.xlane.xlu0 %343
      %v345 = vsel %vm317, %v292, 0.0
      %346 = vadd.xlane.f32.xlu0 %v345
      %v347 = vpop.xlane.xlu0 %346
      %v348 = vsel %vm317, %v293, 0.0
      %349 = vadd.xlane.f32.xlu0 %v348
      %v350 = vpop.xlane.xlu0 %349
      %v351 = vsel %vm317, %v294, 0.0
      %352 = vadd.xlane.f32.xlu0 %v351
      %v353 = vpop.xlane.xlu0 %352
      %v354 = vsel %vm317, %v295, 0.0
      %355 = vadd.xlane.f32.xlu0 %v354
      %v356 = vpop.xlane.xlu0 %355
      %v357 = vsel %vm317, %v296, 0.0
      %358 = vadd.xlane.f32.xlu0 %v357
      %v359 = vpop.xlane.xlu0 %358
      %v360 = vsel %vm317, %v297, 0.0
      %361 = vadd.xlane.f32.xlu0 %v360
      %v362 = vpop.xlane.xlu0 %361
      %v363 = vsel %vm317, %v298, 0.0
      %364 = vadd.xlane.f32.xlu0 %v363
      %v365 = vpop.xlane.xlu0 %364
      %v366 = vsel %vm317, %v299, 0.0
      %367 = vadd.xlane.f32.xlu0 %v366
      %v368 = vpop.xlane.xlu0 %367
      %v369 = vsel %vm317, %v300, 0.0
      %370 = vadd.xlane.f32.xlu0 %v369
      %v371 = vpop.xlane.xlu0 %370
      %v372 = vsel %vm317, %v301, 0.0
      %373 = vadd.xlane.f32.xlu0 %v372
      %v374 = vpop.xlane.xlu0 %373
      %v375 = vsel %vm317, %v302, 0.0
      %376 = vadd.xlane.f32.xlu0 %v375
      %v377 = vpop.xlane.xlu0 %376
      %v378 = vsel %vm317, %v303, 0.0
      %379 = vadd.xlane.f32.xlu0 %v378
      %v380 = vpop.xlane.xlu0 %379
      %v381 = vsel %vm317, %v304, 0.0
      %382 = vadd.xlane.f32.xlu0 %v381
      %v383 = vpop.xlane.xlu0 %382
      %v384 = vsel %vm317, %v305, 0.0
      %385 = vadd.xlane.f32.xlu0 %v384
      %v386 = vpop.xlane.xlu0 %385
      %v387 = vsel %vm317, %v306, 0.0
      %388 = vadd.xlane.f32.xlu0 %v387
      %v389 = vpop.xlane.xlu0 %388
      %v390 = vsel %vm317, %v307, 0.0
      %391 = vadd.xlane.f32.xlu0 %v390
      %v392 = vpop.xlane.xlu0 %391
      %v393 = vsel %vm317, %v308, 0.0
      %394 = vadd.xlane.f32.xlu0 %v393
      %v395 = vpop.xlane.xlu0 %394
      %v396 = vsel %vm317, %v309, 0.0
      %397 = vadd.xlane.f32.xlu0 %v396
      %v398 = vpop.xlane.xlu0 %397
      %v399 = vsel %vm317, %v310, 0.0
      %400 = vadd.xlane.f32.xlu0 %v399
      %v401 = vpop.xlane.xlu0 %400
      %v402 = vsel %vm317, %v311, 0.0
      %403 = vadd.xlane.f32.xlu0 %v402
      %v404 = vpop.xlane.xlu0 %403
      %v405 = vsel %vm317, %v312, 0.0
      %406 = vadd.xlane.f32.xlu0 %v405
      %v407 = vpop.xlane.xlu0 %406
      %v408 = vsel %vm317, %v313, 0.0
      %409 = vadd.xlane.f32.xlu0 %v408
      %v410 = vpop.xlane.xlu0 %409
      %v411 = vsel %vm317, %v314, 0.0
      %412 = vadd.xlane.f32.xlu0 %v411
      %v413 = vpop.xlane.xlu0 %412
      %v414 = vrcp.pop 16.0
      %v415 = vmul.f32 %v320, %v414
      %v416 = vmul.f32 %v323, %v414
      %v417 = vmul.f32 %v326, %v414
      %v418 = vmul.f32 %v329, %v414
      %v419 = vmul.f32 %v332, %v414
      %v420 = vmul.f32 %v335, %v414
      %v421 = vmul.f32 %v338, %v414
      %v422 = vmul.f32 %v341, %v414
      %v423 = vmul.f32 %v344, %v414
      %v424 = vmul.f32 %v347, %v414
      %v425 = vmul.f32 %v350, %v414
      %v426 = vmul.f32 %v353, %v414
      %v427 = vmul.f32 %v356, %v414
      %v428 = vmul.f32 %v359, %v414
      %v429 = vmul.f32 %v362, %v414
      %v430 = vmul.f32 %v365, %v414
      %v431 = vmul.f32 %v368, %v414
      %v432 = vmul.f32 %v371, %v414
      %v433 = vmul.f32 %v374, %v414
      %v434 = vmul.f32 %v377, %v414
      %v435 = vmul.f32 %v380, %v414
      %v436 = vmul.f32 %v383, %v414
      %v437 = vmul.f32 %v386, %v414
      %v438 = vmul.f32 %v389, %v414
      %v439 = vmul.f32 %v392, %v414
      %v440 = vmul.f32 %v395, %v414
      %v441 = vmul.f32 %v398, %v414
      %v442 = vmul.f32 %v401, %v414
      %v443 = vmul.f32 %v404, %v414
      %v444 = vmul.f32 %v407, %v414
      %v445 = vmul.f32 %v410, %v414
      %v446 = vmul.f32 %v413, %v414
      %v447 = vsub.f32 %v283, %v415
      %v448 = vsub.f32 %v284, %v416
      %v449 = vsub.f32 %v285, %v417
      %v450 = vsub.f32 %v286, %v418
      %v451 = vsub.f32 %v287, %v419
      %v452 = vsub.f32 %v288, %v420
      %v453 = vsub.f32 %v289, %v421
      %v454 = vsub.f32 %v290, %v422
      %v455 = vsub.f32 %v291, %v423
      %v456 = vsub.f32 %v292, %v424
      %v457 = vsub.f32 %v293, %v425
      %v458 = vsub.f32 %v294, %v426
      %v459 = vsub.f32 %v295, %v427
      %v460 = vsub.f32 %v296, %v428
      %v461 = vsub.f32 %v297, %v429
      %v462 = vsub.f32 %v298, %v430
      %v463 = vsub.f32 %v299, %v431
      %v464 = vsub.f32 %v300, %v432
      %v465 = vsub.f32 %v301, %v433
      %v466 = vsub.f32 %v302, %v434
      %v467 = vsub.f32 %v303, %v435
      %v468 = vsub.f32 %v304, %v436
      %v469 = vsub.f32 %v305, %v437
      %v470 = vsub.f32 %v306, %v438
      %v471 = vsub.f32 %v307, %v439
      %v472 = vsub.f32 %v308, %v440
      %v473 = vsub.f32 %v309, %v441
      %v474 = vsub.f32 %v310, %v442
      %v475 = vsub.f32 %v311, %v443
      %v476 = vsub.f32 %v312, %v444
      %v477 = vsub.f32 %v313, %v445
      %v478 = vsub.f32 %v314, %v446
      %v479 = vmul.f32 %v447, %v447
      %v480 = vmul.f32 %v448, %v448
      %v481 = vmul.f32 %v449, %v449
      %v482 = vmul.f32 %v450, %v450
      %v483 = vmul.f32 %v451, %v451
      %v484 = vmul.f32 %v452, %v452
      %v485 = vmul.f32 %v453, %v453
      %v486 = vmul.f32 %v454, %v454
      %v487 = vmul.f32 %v455, %v455
      %v488 = vmul.f32 %v456, %v456
      %v489 = vmul.f32 %v457, %v457
      %v490 = vmul.f32 %v458, %v458
      %v491 = vmul.f32 %v459, %v459
      %v492 = vmul.f32 %v460, %v460
      %v493 = vmul.f32 %v461, %v461
      %v494 = vmul.f32 %v462, %v462
      %v495 = vmul.f32 %v463, %v463
      %v496 = vmul.f32 %v464, %v464
      %v497 = vmul.f32 %v465, %v465
      %v498 = vmul.f32 %v466, %v466
      %v499 = vmul.f32 %v467, %v467
      %v500 = vmul.f32 %v468, %v468
      %v501 = vmul.f32 %v469, %v469
      %v502 = vmul.f32 %v470, %v470
      %v503 = vmul.f32 %v471, %v471
      %v504 = vmul.f32 %v472, %v472
      %v505 = vmul.f32 %v473, %v473
      %v506 = vmul.f32 %v474, %v474
      %v507 = vmul.f32 %v475, %v475
      %v508 = vmul.f32 %v476, %v476
      %v509 = vmul.f32 %v477, %v477
      %v510 = vmul.f32 %v478, %v478
      %v511 = vsel %vm317, %v479, 0.0
      %512 = vadd.xlane.f32.xlu0 %v511
      %v513 = vpop.xlane.xlu0 %512
      %v514 = vsel %vm317, %v480, 0.0
      %515 = vadd.xlane.f32.xlu0 %v514
      %v516 = vpop.xlane.xlu0 %515
      %v517 = vsel %vm317, %v481, 0.0
      %518 = vadd.xlane.f32.xlu0 %v517
      %v519 = vpop.xlane.xlu0 %518
      %v520 = vsel %vm317, %v482, 0.0
      %521 = vadd.xlane.f32.xlu0 %v520
      %v522 = vpop.xlane.xlu0 %521
      %v523 = vsel %vm317, %v483, 0.0
      %524 = vadd.xlane.f32.xlu0 %v523
      %v525 = vpop.xlane.xlu0 %524
      %v526 = vsel %vm317, %v484, 0.0
      %527 = vadd.xlane.f32.xlu0 %v526
      %v528 = vpop.xlane.xlu0 %527
      %v529 = vsel %vm317, %v485, 0.0
      %530 = vadd.xlane.f32.xlu0 %v529
      %v531 = vpop.xlane.xlu0 %530
      %v532 = vsel %vm317, %v486, 0.0
      %533 = vadd.xlane.f32.xlu0 %v532
      %v534 = vpop.xlane.xlu0 %533
      %v535 = vsel %vm317, %v487, 0.0
      %536 = vadd.xlane.f32.xlu0 %v535
      %v537 = vpop.xlane.xlu0 %536
      %v538 = vsel %vm317, %v488, 0.0
      %539 = vadd.xlane.f32.xlu0 %v538
      %v540 = vpop.xlane.xlu0 %539
      %v541 = vsel %vm317, %v489, 0.0
      %542 = vadd.xlane.f32.xlu0 %v541
      %v543 = vpop.xlane.xlu0 %542
      %v544 = vsel %vm317, %v490, 0.0
      %545 = vadd.xlane.f32.xlu0 %v544
      %v546 = vpop.xlane.xlu0 %545
      %v547 = vsel %vm317, %v491, 0.0
      %548 = vadd.xlane.f32.xlu0 %v547
      %v549 = vpop.xlane.xlu0 %548
      %v550 = vsel %vm317, %v492, 0.0
      %551 = vadd.xlane.f32.xlu0 %v550
      %v552 = vpop.xlane.xlu0 %551
      %v553 = vsel %vm317, %v493, 0.0
      %554 = vadd.xlane.f32.xlu0 %v553
      %v555 = vpop.xlane.xlu0 %554
      %v556 = vsel %vm317, %v494, 0.0
      %557 = vadd.xlane.f32.xlu0 %v556
      %v558 = vpop.xlane.xlu0 %557
      %v559 = vsel %vm317, %v495, 0.0
      %560 = vadd.xlane.f32.xlu0 %v559
      %v561 = vpop.xlane.xlu0 %560
      %v562 = vsel %vm317, %v496, 0.0
      %563 = vadd.xlane.f32.xlu0 %v562
      %v564 = vpop.xlane.xlu0 %563
      %v565 = vsel %vm317, %v497, 0.0
      %566 = vadd.xlane.f32.xlu0 %v565
      %v567 = vpop.xlane.xlu0 %566
      %v568 = vsel %vm317, %v498, 0.0
      %569 = vadd.xlane.f32.xlu0 %v568
      %v570 = vpop.xlane.xlu0 %569
      %v571 = vsel %vm317, %v499, 0.0
      %572 = vadd.xlane.f32.xlu0 %v571
      %v573 = vpop.xlane.xlu0 %572
      %v574 = vsel %vm317, %v500, 0.0
      %575 = vadd.xlane.f32.xlu0 %v574
      %v576 = vpop.xlane.xlu0 %575
      %v577 = vsel %vm317, %v501, 0.0
      %578 = vadd.xlane.f32.xlu0 %v577
      %v579 = vpop.xlane.xlu0 %578
      %v580 = vsel %vm317, %v502, 0.0
      %581 = vadd.xlane.f32.xlu0 %v580
      %v582 = vpop.xlane.xlu0 %581
      %v583 = vsel %vm317, %v503, 0.0
      %584 = vadd.xlane.f32.xlu0 %v583
      %v585 = vpop.xlane.xlu0 %584
      %v586 = vsel %vm317, %v504, 0.0
      %587 = vadd.xlane.f32.xlu0 %v586
      %v588 = vpop.xlane.xlu0 %587
      %v589 = vsel %vm317, %v505, 0.0
      %590 = vadd.xlane.f32.xlu0 %v589
      %v591 = vpop.xlane.xlu0 %590
      %v592 = vsel %vm317, %v506, 0.0
      %593 = vadd.xlane.f32.xlu0 %v592
      %v594 = vpop.xlane.xlu0 %593
      %v595 = vsel %vm317, %v507, 0.0
      %596 = vadd.xlane.f32.xlu0 %v595
      %v597 = vpop.xlane.xlu0 %596
      %v598 = vsel %vm317, %v508, 0.0
      %599 = vadd.xlane.f32.xlu0 %v598
      %v600 = vpop.xlane.xlu0 %599
      %v601 = vsel %vm317, %v509, 0.0
      %602 = vadd.xlane.f32.xlu0 %v601
      %v603 = vpop.xlane.xlu0 %602
      %v604 = vsel %vm317, %v510, 0.0
      %605 = vadd.xlane.f32.xlu0 %v604
      %v606 = vpop.xlane.xlu0 %605
      %v607 = vmul.f32 %v513, %v414
      %v608 = vmul.f32 %v516, %v414
      %v609 = vmul.f32 %v519, %v414
      %v610 = vmul.f32 %v522, %v414
      %v611 = vmul.f32 %v525, %v414
      %v612 = vmul.f32 %v528, %v414
      %v613 = vmul.f32 %v531, %v414
      %v614 = vmul.f32 %v534, %v414
      %v615 = vmul.f32 %v537, %v414
      %v616 = vmul.f32 %v540, %v414
      %v617 = vmul.f32 %v543, %v414
      %v618 = vmul.f32 %v546, %v414
      %v619 = vmul.f32 %v549, %v414
      %v620 = vmul.f32 %v552, %v414
      %v621 = vmul.f32 %v555, %v414
      %v622 = vmul.f32 %v558, %v414
      %v623 = vmul.f32 %v561, %v414
      %v624 = vmul.f32 %v564, %v414
      %v625 = vmul.f32 %v567, %v414
      %v626 = vmul.f32 %v570, %v414
      %v627 = vmul.f32 %v573, %v414
      %v628 = vmul.f32 %v576, %v414
      %v629 = vmul.f32 %v579, %v414
      %v630 = vmul.f32 %v582, %v414
      %v631 = vmul.f32 %v585, %v414
      %v632 = vmul.f32 %v588, %v414
      %v633 = vmul.f32 %v591, %v414
      %v634 = vmul.f32 %v594, %v414
      %v635 = vmul.f32 %v597, %v414
      %v636 = vmul.f32 %v600, %v414
      %v637 = vmul.f32 %v603, %v414
      %v638 = vmul.f32 %v606, %v414
      %v639 = vadd.f32 %v607, 1e-05
      %v640 = vadd.f32 %v608, 1e-05
      %v641 = vadd.f32 %v609, 1e-05
      %v642 = vadd.f32 %v610, 1e-05
      %v643 = vadd.f32 %v611, 1e-05
      %v644 = vadd.f32 %v612, 1e-05
      %v645 = vadd.f32 %v613, 1e-05
      %v646 = vadd.f32 %v614, 1e-05
      %v647 = vadd.f32 %v615, 1e-05
      %v648 = vadd.f32 %v616, 1e-05
      %v649 = vadd.f32 %v617, 1e-05
      %v650 = vadd.f32 %v618, 1e-05
      %v651 = vadd.f32 %v619, 1e-05
      %v652 = vadd.f32 %v620, 1e-05
      %v653 = vadd.f32 %v621, 1e-05
      %v654 = vadd.f32 %v622, 1e-05
      %v655 = vadd.f32 %v623, 1e-05
      %v656 = vadd.f32 %v624, 1e-05
      %v657 = vadd.f32 %v625, 1e-05
      %v658 = vadd.f32 %v626, 1e-05
      %v659 = vadd.f32 %v627, 1e-05
      %v660 = vadd.f32 %v628, 1e-05
      %v661 = vadd.f32 %v629, 1e-05
      %v662 = vadd.f32 %v630, 1e-05
      %v663 = vadd.f32 %v631, 1e-05
      %v664 = vadd.f32 %v632, 1e-05
      %v665 = vadd.f32 %v633, 1e-05
      %v666 = vadd.f32 %v634, 1e-05
      %v667 = vadd.f32 %v635, 1e-05
      %v668 = vadd.f32 %v636, 1e-05
      %v669 = vadd.f32 %v637, 1e-05
      %v670 = vadd.f32 %v638, 1e-05
      %v671 = vrsqrt.pop %v639
      %v672 = vrsqrt.pop %v640
      %v673 = vrsqrt.pop %v641
      %v674 = vrsqrt.pop %v642
      %v675 = vrsqrt.pop %v643
      %v676 = vrsqrt.pop %v644
      %v677 = vrsqrt.pop %v645
      %v678 = vrsqrt.pop %v646
      %v679 = vrsqrt.pop %v647
      %v680 = vrsqrt.pop %v648
      %v681 = vrsqrt.pop %v649
      %v682 = vrsqrt.pop %v650
      %v683 = vrsqrt.pop %v651
      %v684 = vrsqrt.pop %v652
      %v685 = vrsqrt.pop %v653
      %v686 = vrsqrt.pop %v654
      %v687 = vrsqrt.pop %v655
      %v688 = vrsqrt.pop %v656
      %v689 = vrsqrt.pop %v657
      %v690 = vrsqrt.pop %v658
      %v691 = vrsqrt.pop %v659
      %v692 = vrsqrt.pop %v660
      %v693 = vrsqrt.pop %v661
      %v694 = vrsqrt.pop %v662
      %v695 = vrsqrt.pop %v663
      %v696 = vrsqrt.pop %v664
      %v697 = vrsqrt.pop %v665
      %v698 = vrsqrt.pop %v666
      %v699 = vrsqrt.pop %v667
      %v700 = vrsqrt.pop %v668
      %v701 = vrsqrt.pop %v669
      %v702 = vrsqrt.pop %v670
      %v703 = vmul.f32 %v447, %v671
      %v704 = vmul.f32 %v448, %v672
      %v705 = vmul.f32 %v449, %v673
      %v706 = vmul.f32 %v450, %v674
      %v707 = vmul.f32 %v451, %v675
      %v708 = vmul.f32 %v452, %v676
      %v709 = vmul.f32 %v453, %v677
      %v710 = vmul.f32 %v454, %v678
      %v711 = vmul.f32 %v455, %v679
      %v712 = vmul.f32 %v456, %v680
      %v713 = vmul.f32 %v457, %v681
      %v714 = vmul.f32 %v458, %v682
      %v715 = vmul.f32 %v459, %v683
      %v716 = vmul.f32 %v460, %v684
      %v717 = vmul.f32 %v461, %v685
      %v718 = vmul.f32 %v462, %v686
      %v719 = vmul.f32 %v463, %v687
      %v720 = vmul.f32 %v464, %v688
      %v721 = vmul.f32 %v465, %v689
      %v722 = vmul.f32 %v466, %v690
      %v723 = vmul.f32 %v467, %v691
      %v724 = vmul.f32 %v468, %v692
      %v725 = vmul.f32 %v469, %v693
      %v726 = vmul.f32 %v470, %v694
      %v727 = vmul.f32 %v471, %v695
      %v728 = vmul.f32 %v472, %v696
      %v729 = vmul.f32 %v473, %v697
      %v730 = vmul.f32 %v474, %v698
      %v731 = vmul.f32 %v475, %v699
      %v732 = vmul.f32 %v476, %v700
      %v733 = vmul.f32 %v477, %v701
      %v734 = vmul.f32 %v478, %v702
      %v736 = vlaneseq
      %v737 = vshrl.u32 %v736, 7
      %v738 = vsub.s32 0, %v737
      %v739 = vrot.slane %v315, %v738
      %v741 = vmul.f32 %v703, %v739
      %v742 = vmul.f32 %v704, %v739
      %v743 = vmul.f32 %v705, %v739
      %v744 = vmul.f32 %v706, %v739
      %v745 = vmul.f32 %v707, %v739
      %v746 = vmul.f32 %v708, %v739
      %v747 = vmul.f32 %v709, %v739
      %v748 = vmul.f32 %v710, %v739
      %v749 = vmul.f32 %v711, %v739
      %v750 = vmul.f32 %v712, %v739
      %v751 = vmul.f32 %v713, %v739
      %v752 = vmul.f32 %v714, %v739
      %v753 = vmul.f32 %v715, %v739
      %v754 = vmul.f32 %v716, %v739
      %v755 = vmul.f32 %v717, %v739
      %v756 = vmul.f32 %v718, %v739
      %v757 = vmul.f32 %v719, %v739
      %v758 = vmul.f32 %v720, %v739
      %v759 = vmul.f32 %v721, %v739
      %v760 = vmul.f32 %v722, %v739
      %v761 = vmul.f32 %v723, %v739
      %v762 = vmul.f32 %v724, %v739
      %v763 = vmul.f32 %v725, %v739
      %v764 = vmul.f32 %v726, %v739
      %v765 = vmul.f32 %v727, %v739
      %v766 = vmul.f32 %v728, %v739
      %v767 = vmul.f32 %v729, %v739
      %v768 = vmul.f32 %v730, %v739
      %v769 = vmul.f32 %v731, %v739
      %v770 = vmul.f32 %v732, %v739
      %v771 = vmul.f32 %v733, %v739
      %v772 = vmul.f32 %v734, %v739
      %v774 = vlaneseq
      %v775 = vshrl.u32 %v774, 7
      %v776 = vsub.s32 0, %v775
      %v777 = vrot.slane %v316, %v776
      %v779 = vadd.f32 %v741, %v777
      %v780 = vadd.f32 %v742, %v777
      %v781 = vadd.f32 %v743, %v777
      %v782 = vadd.f32 %v744, %v777
      %v783 = vadd.f32 %v745, %v777
      %v784 = vadd.f32 %v746, %v777
      %v785 = vadd.f32 %v747, %v777
      %v786 = vadd.f32 %v748, %v777
      %v787 = vadd.f32 %v749, %v777
      %v788 = vadd.f32 %v750, %v777
      %v789 = vadd.f32 %v751, %v777
      %v790 = vadd.f32 %v752, %v777
      %v791 = vadd.f32 %v753, %v777
      %v792 = vadd.f32 %v754, %v777
      %v793 = vadd.f32 %v755, %v777
      %v794 = vadd.f32 %v756, %v777
      %v795 = vadd.f32 %v757, %v777
      %v796 = vadd.f32 %v758, %v777
      %v797 = vadd.f32 %v759, %v777
      %v798 = vadd.f32 %v760, %v777
      %v799 = vadd.f32 %v761, %v777
      %v800 = vadd.f32 %v762, %v777
      %v801 = vadd.f32 %v763, %v777
      %v802 = vadd.f32 %v764, %v777
      %v803 = vadd.f32 %v765, %v777
      %v804 = vadd.f32 %v766, %v777
      %v805 = vadd.f32 %v767, %v777
      %v806 = vadd.f32 %v768, %v777
      %v807 = vadd.f32 %v769, %v777
      %v808 = vadd.f32 %v770, %v777
      %v809 = vadd.f32 %v771, %v777
      %v810 = vadd.f32 %v772, %v777
      %v811 = vpack.c.bf16 %v780, %v779
      %v812 = vpack.c.bf16 %v782, %v781
      %v813 = vpack.c.bf16 %v784, %v783
      %v814 = vpack.c.bf16 %v786, %v785
      %v815 = vpack.c.bf16 %v788, %v787
      %v816 = vpack.c.bf16 %v790, %v789
      %v817 = vpack.c.bf16 %v792, %v791
      %v818 = vpack.c.bf16 %v794, %v793
      %v819 = vpack.c.bf16 %v796, %v795
      %v820 = vpack.c.bf16 %v798, %v797
      %v821 = vpack.c.bf16 %v800, %v799
      %v822 = vpack.c.bf16 %v802, %v801
      %v823 = vpack.c.bf16 %v804, %v803
      %v824 = vpack.c.bf16 %v806, %v805
      %v825 = vpack.c.bf16 %v808, %v807
      %v826 = vpack.c.bf16 %v810, %v809
      %v827 = vld [vmem:[%s3] sm:$0xf]
      %v828 = vld [vmem:[%s3 + $0x4] sm:$0xf]
      %v829 = vld [vmem:[%s4] sm:$0x1]
      %v831 = vlaneseq
      %v832 = vshrl.u32 %v831, 7
      %v833 = vsub.s32 0, %v832
      %v834 = vrot.slane %v829, %v833
      %v838 = vunpack.c.l.b16 %v827
      %v839 = vunpack.c.l.b16 %v828
      %v840 = vpack.c.b16 %v839, %v838
      %v843 = vsel %vm317, %v811, 0
      %v846 = vsel %vm317, %v812, 0
      %v849 = vsel %vm317, %v813, 0
      %v852 = vsel %vm317, %v814, 0
      %v855 = vsel %vm317, %v815, 0
      %v858 = vsel %vm317, %v816, 0
      %v861 = vsel %vm317, %v817, 0
      %v864 = vsel %vm317, %v818, 0
      %v867 = vsel %vm317, %v819, 0
      %v870 = vsel %vm317, %v820, 0
      %v873 = vsel %vm317, %v821, 0
      %v876 = vsel %vm317, %v822, 0
      %v879 = vsel %vm317, %v823, 0
      %v882 = vsel %vm317, %v824, 0
      %v885 = vsel %vm317, %v825, 0
      %v888 = vsel %vm317, %v826, 0
      %890 = vmatprep.subr.bf16.mxu0 0
      %891 = vmatpush1.bf16.msra.mxu0 0
      %892 = vmatprep.subr.bf16.mxu0 0
      %893 = vmatpush1.bf16.msra.mxu0 0
      %894 = vmatprep.subr.bf16.mxu0 0
      %895 = vmatpush1.bf16.msra.mxu0 0
      %896 = vmatprep.subr.bf16.mxu0 0
      %897 = vmatpush1.bf16.msra.mxu0 0
      %898 = vmatprep.subr.bf16.mxu0 0
      %899 = vmatpush1.bf16.msra.mxu0 0
      %900 = vmatprep.subr.bf16.mxu0 0
      %901 = vmatpush1.bf16.msra.mxu0 0
      %902 = vmatprep.subr.bf16.mxu0 0
      %903 = vmatpush1.bf16.msra.mxu0 0
      %904 = vmatprep.subr.bf16.mxu0 0
      %905 = vmatpush1.bf16.msra.mxu0 %v840
      %906 = vmatprep.subr.bf16.mxu0 0
      %907 = vmatpush2.bf16.msra.mxu0 0
      %908 = vmatprep.subr.bf16.mxu0 0
      %909 = vmatpush2.bf16.msra.mxu0 0
      %910 = vmatprep.subr.bf16.mxu0 0
      %911 = vmatpush2.bf16.msra.mxu0 0
      %912 = vmatprep.subr.bf16.mxu0 0
      %913 = vmatpush2.bf16.msra.mxu0 0
      %914 = vmatprep.subr.bf16.mxu0 0
      %915 = vmatpush2.bf16.msra.mxu0 0
      %916 = vmatprep.subr.bf16.mxu0 0
      %917 = vmatpush2.bf16.msra.mxu0 0
      %918 = vmatprep.subr.bf16.mxu0 0
      %919 = vmatpush2.bf16.msra.mxu0 0
      %920 = vmatprep.subr.bf16.mxu0 0
      %921 = vmatpush2.bf16.msra.mxu0 0
      %922 = vmatprep.mubr.bf16.mxu0 0
      %923 = vmatmul.mubr.bf16.gmra.mxu0 %v843
      %v924 = vpop.f32.mrf.mxu0
      %v925 = vadd.f32 %v834, %v924
      %v926 = vpop.f32.mrf.mxu0
      %v927 = vpop.f32.mrf.mxu0
      %v928 = vadd.f32 %v834, %v927
      %v929 = vpop.f32.mrf.mxu0
      %930 = vmatprep.mubr.bf16.mxu0 0
      %931 = vmatmul.mubr.bf16.gmra.mxu0 %v846
      %v932 = vpop.f32.mrf.mxu0
      %v933 = vadd.f32 %v834, %v932
      %v934 = vpop.f32.mrf.mxu0
      %v935 = vpop.f32.mrf.mxu0
      %v936 = vadd.f32 %v834, %v935
      %v937 = vpop.f32.mrf.mxu0
      %938 = vmatprep.mubr.bf16.mxu0 0
      %939 = vmatmul.mubr.bf16.gmra.mxu0 %v849
      %v940 = vpop.f32.mrf.mxu0
      %v941 = vadd.f32 %v834, %v940
      %v942 = vpop.f32.mrf.mxu0
      %v943 = vpop.f32.mrf.mxu0
      %v944 = vadd.f32 %v834, %v943
      %v945 = vpop.f32.mrf.mxu0
      %946 = vmatprep.mubr.bf16.mxu0 0
      %947 = vmatmul.mubr.bf16.gmra.mxu0 %v852
      %v948 = vpop.f32.mrf.mxu0
      %v949 = vadd.f32 %v834, %v948
      %v950 = vpop.f32.mrf.mxu0
      %v951 = vpop.f32.mrf.mxu0
      %v952 = vadd.f32 %v834, %v951
      %v953 = vpop.f32.mrf.mxu0
      %954 = vmatprep.mubr.bf16.mxu0 0
      %955 = vmatmul.mubr.bf16.gmra.mxu0 %v855
      %v956 = vpop.f32.mrf.mxu0
      %v957 = vadd.f32 %v834, %v956
      %v958 = vpop.f32.mrf.mxu0
      %v959 = vpop.f32.mrf.mxu0
      %v960 = vadd.f32 %v834, %v959
      %v961 = vpop.f32.mrf.mxu0
      %962 = vmatprep.mubr.bf16.mxu0 0
      %963 = vmatmul.mubr.bf16.gmra.mxu0 %v858
      %v964 = vpop.f32.mrf.mxu0
      %v965 = vadd.f32 %v834, %v964
      %v966 = vpop.f32.mrf.mxu0
      %v967 = vpop.f32.mrf.mxu0
      %v968 = vadd.f32 %v834, %v967
      %v969 = vpop.f32.mrf.mxu0
      %970 = vmatprep.mubr.bf16.mxu0 0
      %971 = vmatmul.mubr.bf16.gmra.mxu0 %v861
      %v972 = vpop.f32.mrf.mxu0
      %v973 = vadd.f32 %v834, %v972
      %v974 = vpop.f32.mrf.mxu0
      %v975 = vpop.f32.mrf.mxu0
      %v976 = vadd.f32 %v834, %v975
      %v977 = vpop.f32.mrf.mxu0
      %978 = vmatprep.mubr.bf16.mxu0 0
      %979 = vmatmul.mubr.bf16.gmra.mxu0 %v864
      %v980 = vpop.f32.mrf.mxu0
      %v981 = vadd.f32 %v834, %v980
      %v982 = vpop.f32.mrf.mxu0
      %v983 = vpop.f32.mrf.mxu0
      %v984 = vadd.f32 %v834, %v983
      %v985 = vpop.f32.mrf.mxu0
      %986 = vmatprep.mubr.bf16.mxu0 0
      %987 = vmatmul.mubr.bf16.gmra.mxu0 %v867
      %v988 = vpop.f32.mrf.mxu0
      %v989 = vadd.f32 %v834, %v988
      %v990 = vpop.f32.mrf.mxu0
      %v991 = vpop.f32.mrf.mxu0
      %v992 = vadd.f32 %v834, %v991
      %v993 = vpop.f32.mrf.mxu0
      %994 = vmatprep.mubr.bf16.mxu0 0
      %995 = vmatmul.mubr.bf16.gmra.mxu0 %v870
      %v996 = vpop.f32.mrf.mxu0
      %v997 = vadd.f32 %v834, %v996
      %v998 = vpop.f32.mrf.mxu0
      %v999 = vpop.f32.mrf.mxu0
      %v1000 = vadd.f32 %v834, %v999
      %v1001 = vpop.f32.mrf.mxu0
      %1002 = vmatprep.mubr.bf16.mxu0 0
      %1003 = vmatmul.mubr.bf16.gmra.mxu0 %v873
      %v1004 = vpop.f32.mrf.mxu0
      %v1005 = vadd.f32 %v834, %v1004
      %v1006 = vpop.f32.mrf.mxu0
      %v1007 = vpop.f32.mrf.mxu0
      %v1008 = vadd.f32 %v834, %v1007
      %v1009 = vpop.f32.mrf.mxu0
      %1010 = vmatprep.mubr.bf16.mxu0 0
      %1011 = vmatmul.mubr.bf16.gmra.mxu0 %v876
      %v1012 = vpop.f32.mrf.mxu0
      %v1013 = vadd.f32 %v834, %v1012
      %v1014 = vpop.f32.mrf.mxu0
      %v1015 = vpop.f32.mrf.mxu0
      %v1016 = vadd.f32 %v834, %v1015
      %v1017 = vpop.f32.mrf.mxu0
      %1018 = vmatprep.mubr.bf16.mxu0 0
      %1019 = vmatmul.mubr.bf16.gmra.mxu0 %v879
      %v1020 = vpop.f32.mrf.mxu0
      %v1021 = vadd.f32 %v834, %v1020
      %v1022 = vpop.f32.mrf.mxu0
      %v1023 = vpop.f32.mrf.mxu0
      %v1024 = vadd.f32 %v834, %v1023
      %v1025 = vpop.f32.mrf.mxu0
      %1026 = vmatprep.mubr.bf16.mxu0 0
      %1027 = vmatmul.mubr.bf16.gmra.mxu0 %v882
      %v1028 = vpop.f32.mrf.mxu0
      %v1029 = vadd.f32 %v834, %v1028
      %v1030 = vpop.f32.mrf.mxu0
      %v1031 = vpop.f32.mrf.mxu0
      %v1032 = vadd.f32 %v834, %v1031
      %v1033 = vpop.f32.mrf.mxu0
      %1034 = vmatprep.mubr.bf16.mxu0 0
      %1035 = vmatmul.mubr.bf16.gmra.mxu0 %v885
      %v1036 = vpop.f32.mrf.mxu0
      %v1037 = vadd.f32 %v834, %v1036
      %v1038 = vpop.f32.mrf.mxu0
      %v1039 = vpop.f32.mrf.mxu0
      %v1040 = vadd.f32 %v834, %v1039
      %v1041 = vpop.f32.mrf.mxu0
      %1042 = vmatprep.mubr.bf16.mxu0 0
      %1043 = vmatmul.mubr.bf16.gmra.mxu0 %v888
      %v1044 = vpop.f32.mrf.mxu0
      %v1045 = vadd.f32 %v834, %v1044
      %v1046 = vpop.f32.mrf.mxu0
      %v1047 = vpop.f32.mrf.mxu0
      %v1048 = vadd.f32 %v834, %v1047
      %v1049 = vpop.f32.mrf.mxu0
      %1050 = vdwg.mxu0
      %v1051 = vmul.f32 %v925, 0.5
      %v1052 = vmul.f32 %v928, 0.5
      %v1053 = vmul.f32 %v933, 0.5
      %v1054 = vmul.f32 %v936, 0.5
      %v1055 = vmul.f32 %v941, 0.5
      %v1056 = vmul.f32 %v944, 0.5
      %v1057 = vmul.f32 %v949, 0.5
      %v1058 = vmul.f32 %v952, 0.5
      %v1059 = vmul.f32 %v957, 0.5
      %v1060 = vmul.f32 %v960, 0.5
      %v1061 = vmul.f32 %v965, 0.5
      %v1062 = vmul.f32 %v968, 0.5
      %v1063 = vmul.f32 %v973, 0.5
      %v1064 = vmul.f32 %v976, 0.5
      %v1065 = vmul.f32 %v981, 0.5
      %v1066 = vmul.f32 %v984, 0.5
      %v1067 = vmul.f32 %v989, 0.5
      %v1068 = vmul.f32 %v992, 0.5
      %v1069 = vmul.f32 %v997, 0.5
      %v1070 = vmul.f32 %v1000, 0.5
      %v1071 = vmul.f32 %v1005, 0.5
      %v1072 = vmul.f32 %v1008, 0.5
      %v1073 = vmul.f32 %v1013, 0.5
      %v1074 = vmul.f32 %v1016, 0.5
      %v1075 = vmul.f32 %v1021, 0.5
      %v1076 = vmul.f32 %v1024, 0.5
      %v1077 = vmul.f32 %v1029, 0.5
      %v1078 = vmul.f32 %v1032, 0.5
      %v1079 = vmul.f32 %v1037, 0.5
      %v1080 = vmul.f32 %v1040, 0.5
      %v1081 = vmul.f32 %v1045, 0.5
      %v1082 = vmul.f32 %v1048, 0.5
      %v1083 = vmul.f32 %v925, 0.70710677
      %v1084 = vmul.f32 %v928, 0.70710677
      %v1085 = vmul.f32 %v933, 0.70710677
      %v1086 = vmul.f32 %v936, 0.70710677
      %v1087 = vmul.f32 %v941, 0.70710677
      %v1088 = vmul.f32 %v944, 0.70710677
      %v1089 = vmul.f32 %v949, 0.70710677
      %v1090 = vmul.f32 %v952, 0.70710677
      %v1091 = vmul.f32 %v957, 0.70710677
      %v1092 = vmul.f32 %v960, 0.70710677
      %v1093 = vmul.f32 %v965, 0.70710677
      %v1094 = vmul.f32 %v968, 0.70710677
      %v1095 = vmul.f32 %v973, 0.70710677
      %v1096 = vmul.f32 %v976, 0.70710677
      %v1097 = vmul.f32 %v981, 0.70710677
      %v1098 = vmul.f32 %v984, 0.70710677
      %v1099 = vmul.f32 %v989, 0.70710677
      %v1100 = vmul.f32 %v992, 0.70710677
      %v1101 = vmul.f32 %v997, 0.70710677
      %v1102 = vmul.f32 %v1000, 0.70710677
      %v1103 = vmul.f32 %v1005, 0.70710677
      %v1104 = vmul.f32 %v1008, 0.70710677
      %v1105 = vmul.f32 %v1013, 0.70710677
      %v1106 = vmul.f32 %v1016, 0.70710677
      %v1107 = vmul.f32 %v1021, 0.70710677
      %v1108 = vmul.f32 %v1024, 0.70710677
      %v1109 = vmul.f32 %v1029, 0.70710677
      %v1110 = vmul.f32 %v1032, 0.70710677
      %v1111 = vmul.f32 %v1037, 0.70710677
      %v1112 = vmul.f32 %v1040, 0.70710677
      %v1113 = vmul.f32 %v1045, 0.70710677
      %v1114 = vmul.f32 %v1048, 0.70710677
      %vm1115 = vcmp.ge.f32.partialorder %v1083, 0.0
      %vm1116 = vcmp.ge.f32.partialorder %v1084, 0.0
      %vm1117 = vcmp.ge.f32.partialorder %v1085, 0.0
      %vm1118 = vcmp.ge.f32.partialorder %v1086, 0.0
      %vm1119 = vcmp.ge.f32.partialorder %v1087, 0.0
      %vm1120 = vcmp.ge.f32.partialorder %v1088, 0.0
      %vm1121 = vcmp.ge.f32.partialorder %v1089, 0.0
      %vm1122 = vcmp.ge.f32.partialorder %v1090, 0.0
      %vm1123 = vcmp.ge.f32.partialorder %v1091, 0.0
      %vm1124 = vcmp.ge.f32.partialorder %v1092, 0.0
      %vm1125 = vcmp.ge.f32.partialorder %v1093, 0.0
      %vm1126 = vcmp.ge.f32.partialorder %v1094, 0.0
      %vm1127 = vcmp.ge.f32.partialorder %v1095, 0.0
      %vm1128 = vcmp.ge.f32.partialorder %v1096, 0.0
      %vm1129 = vcmp.ge.f32.partialorder %v1097, 0.0
      %vm1130 = vcmp.ge.f32.partialorder %v1098, 0.0
      %vm1131 = vcmp.ge.f32.partialorder %v1099, 0.0
      %vm1132 = vcmp.ge.f32.partialorder %v1100, 0.0
      %vm1133 = vcmp.ge.f32.partialorder %v1101, 0.0
      %vm1134 = vcmp.ge.f32.partialorder %v1102, 0.0
      %vm1135 = vcmp.ge.f32.partialorder %v1103, 0.0
      %vm1136 = vcmp.ge.f32.partialorder %v1104, 0.0
      %vm1137 = vcmp.ge.f32.partialorder %v1105, 0.0
      %vm1138 = vcmp.ge.f32.partialorder %v1106, 0.0
      %vm1139 = vcmp.ge.f32.partialorder %v1107, 0.0
      %vm1140 = vcmp.ge.f32.partialorder %v1108, 0.0
      %vm1141 = vcmp.ge.f32.partialorder %v1109, 0.0
      %vm1142 = vcmp.ge.f32.partialorder %v1110, 0.0
      %vm1143 = vcmp.ge.f32.partialorder %v1111, 0.0
      %vm1144 = vcmp.ge.f32.partialorder %v1112, 0.0
      %vm1145 = vcmp.ge.f32.partialorder %v1113, 0.0
      %vm1146 = vcmp.ge.f32.partialorder %v1114, 0.0
      %v1147 = vsel %vm1115, 1.0, -1.0
      %v1148 = vsel %vm1116, 1.0, -1.0
      %v1149 = vsel %vm1117, 1.0, -1.0
      %v1150 = vsel %vm1118, 1.0, -1.0
      %v1151 = vsel %vm1119, 1.0, -1.0
      %v1152 = vsel %vm1120, 1.0, -1.0
      %v1153 = vsel %vm1121, 1.0, -1.0
      %v1154 = vsel %vm1122, 1.0, -1.0
      %v1155 = vsel %vm1123, 1.0, -1.0
      %v1156 = vsel %vm1124, 1.0, -1.0
      %v1157 = vsel %vm1125, 1.0, -1.0
      %v1158 = vsel %vm1126, 1.0, -1.0
      %v1159 = vsel %vm1127, 1.0, -1.0
      %v1160 = vsel %vm1128, 1.0, -1.0
      %v1161 = vsel %vm1129, 1.0, -1.0
      %v1162 = vsel %vm1130, 1.0, -1.0
      %v1163 = vsel %vm1131, 1.0, -1.0
      %v1164 = vsel %vm1132, 1.0, -1.0
      %v1165 = vsel %vm1133, 1.0, -1.0
      %v1166 = vsel %vm1134, 1.0, -1.0
      %v1167 = vsel %vm1135, 1.0, -1.0
      %v1168 = vsel %vm1136, 1.0, -1.0
      %v1169 = vsel %vm1137, 1.0, -1.0
      %v1170 = vsel %vm1138, 1.0, -1.0
      %v1171 = vsel %vm1139, 1.0, -1.0
      %v1172 = vsel %vm1140, 1.0, -1.0
      %v1173 = vsel %vm1141, 1.0, -1.0
      %v1174 = vsel %vm1142, 1.0, -1.0
      %v1175 = vsel %vm1143, 1.0, -1.0
      %v1176 = vsel %vm1144, 1.0, -1.0
      %v1177 = vsel %vm1145, 1.0, -1.0
      %v1178 = vsel %vm1146, 1.0, -1.0
      %v1179 = vand.u32 2147483647, %v1083
      %v1180 = vand.u32 2147483647, %v1084
      %v1181 = vand.u32 2147483647, %v1085
      %v1182 = vand.u32 2147483647, %v1086
      %v1183 = vand.u32 2147483647, %v1087
      %v1184 = vand.u32 2147483647, %v1088
      %v1185 = vand.u32 2147483647, %v1089
      %v1186 = vand.u32 2147483647, %v1090
      %v1187 = vand.u32 2147483647, %v1091
      %v1188 = vand.u32 2147483647, %v1092
      %v1189 = vand.u32 2147483647, %v1093
      %v1190 = vand.u32 2147483647, %v1094
      %v1191 = vand.u32 2147483647, %v1095
      %v1192 = vand.u32 2147483647, %v1096
      %v1193 = vand.u32 2147483647, %v1097
      %v1194 = vand.u32 2147483647, %v1098
      %v1195 = vand.u32 2147483647, %v1099
      %v1196 = vand.u32 2147483647, %v1100
      %v1197 = vand.u32 2147483647, %v1101
      %v1198 = vand.u32 2147483647, %v1102
      %v1199 = vand.u32 2147483647, %v1103
      %v1200 = vand.u32 2147483647, %v1104
      %v1201 = vand.u32 2147483647, %v1105
      %v1202 = vand.u32 2147483647, %v1106
      %v1203 = vand.u32 2147483647, %v1107
      %v1204 = vand.u32 2147483647, %v1108
      %v1205 = vand.u32 2147483647, %v1109
      %v1206 = vand.u32 2147483647, %v1110
      %v1207 = vand.u32 2147483647, %v1111
      %v1208 = vand.u32 2147483647, %v1112
      %v1209 = vand.u32 2147483647, %v1113
      %v1210 = vand.u32 2147483647, %v1114
      %v1211 = vmul.f32 %v1179, 0.3275911
      %v1212 = vmul.f32 %v1180, 0.3275911
      %v1213 = vmul.f32 %v1181, 0.3275911
      %v1214 = vmul.f32 %v1182, 0.3275911
      %v1215 = vmul.f32 %v1183, 0.3275911
      %v1216 = vmul.f32 %v1184, 0.3275911
      %v1217 = vmul.f32 %v1185, 0.3275911
      %v1218 = vmul.f32 %v1186, 0.3275911
      %v1219 = vmul.f32 %v1187, 0.3275911
      %v1220 = vmul.f32 %v1188, 0.3275911
      %v1221 = vmul.f32 %v1189, 0.3275911
      %v1222 = vmul.f32 %v1190, 0.3275911
      %v1223 = vmul.f32 %v1191, 0.3275911
      %v1224 = vmul.f32 %v1192, 0.3275911
      %v1225 = vmul.f32 %v1193, 0.3275911
      %v1226 = vmul.f32 %v1194, 0.3275911
      %v1227 = vmul.f32 %v1195, 0.3275911
      %v1228 = vmul.f32 %v1196, 0.3275911
      %v1229 = vmul.f32 %v1197, 0.3275911
      %v1230 = vmul.f32 %v1198, 0.3275911
      %v1231 = vmul.f32 %v1199, 0.3275911
      %v1232 = vmul.f32 %v1200, 0.3275911
      %v1233 = vmul.f32 %v1201, 0.3275911
      %v1234 = vmul.f32 %v1202, 0.3275911
      %v1235 = vmul.f32 %v1203, 0.3275911
      %v1236 = vmul.f32 %v1204, 0.3275911
      %v1237 = vmul.f32 %v1205, 0.3275911
      %v1238 = vmul.f32 %v1206, 0.3275911
      %v1239 = vmul.f32 %v1207, 0.3275911
      %v1240 = vmul.f32 %v1208, 0.3275911
      %v1241 = vmul.f32 %v1209, 0.3275911
      %v1242 = vmul.f32 %v1210, 0.3275911
      %v1243 = vadd.f32 %v1211, 1.0
      %v1244 = vadd.f32 %v1212, 1.0
      %v1245 = vadd.f32 %v1213, 1.0
      %v1246 = vadd.f32 %v1214, 1.0
      %v1247 = vadd.f32 %v1215, 1.0
      %v1248 = vadd.f32 %v1216, 1.0
      %v1249 = vadd.f32 %v1217, 1.0
      %v1250 = vadd.f32 %v1218, 1.0
      %v1251 = vadd.f32 %v1219, 1.0
      %v1252 = vadd.f32 %v1220, 1.0
      %v1253 = vadd.f32 %v1221, 1.0
      %v1254 = vadd.f32 %v1222, 1.0
      %v1255 = vadd.f32 %v1223, 1.0
      %v1256 = vadd.f32 %v1224, 1.0
      %v1257 = vadd.f32 %v1225, 1.0
      %v1258 = vadd.f32 %v1226, 1.0
      %v1259 = vadd.f32 %v1227, 1.0
      %v1260 = vadd.f32 %v1228, 1.0
      %v1261 = vadd.f32 %v1229, 1.0
      %v1262 = vadd.f32 %v1230, 1.0
      %v1263 = vadd.f32 %v1231, 1.0
      %v1264 = vadd.f32 %v1232, 1.0
      %v1265 = vadd.f32 %v1233, 1.0
      %v1266 = vadd.f32 %v1234, 1.0
      %v1267 = vadd.f32 %v1235, 1.0
      %v1268 = vadd.f32 %v1236, 1.0
      %v1269 = vadd.f32 %v1237, 1.0
      %v1270 = vadd.f32 %v1238, 1.0
      %v1271 = vadd.f32 %v1239, 1.0
      %v1272 = vadd.f32 %v1240, 1.0
      %v1273 = vadd.f32 %v1241, 1.0
      %v1274 = vadd.f32 %v1242, 1.0
      %v1275 = vrcp.pop %v1243
      %v1276 = vrcp.pop %v1244
      %v1277 = vrcp.pop %v1245
      %v1278 = vrcp.pop %v1246
      %v1279 = vrcp.pop %v1247
      %v1280 = vrcp.pop %v1248
      %v1281 = vrcp.pop %v1249
      %v1282 = vrcp.pop %v1250
      %v1283 = vrcp.pop %v1251
      %v1284 = vrcp.pop %v1252
      %v1285 = vrcp.pop %v1253
      %v1286 = vrcp.pop %v1254
      %v1287 = vrcp.pop %v1255
      %v1288 = vrcp.pop %v1256
      %v1289 = vrcp.pop %v1257
      %v1290 = vrcp.pop %v1258
      %v1291 = vrcp.pop %v1259
      %v1292 = vrcp.pop %v1260
      %v1293 = vrcp.pop %v1261
      %v1294 = vrcp.pop %v1262
      %v1295 = vrcp.pop %v1263
      %v1296 = vrcp.pop %v1264
      %v1297 = vrcp.pop %v1265
      %v1298 = vrcp.pop %v1266
      %v1299 = vrcp.pop %v1267
      %v1300 = vrcp.pop %v1268
      %v1301 = vrcp.pop %v1269
      %v1302 = vrcp.pop %v1270
      %v1303 = vrcp.pop %v1271
      %v1304 = vrcp.pop %v1272
      %v1305 = vrcp.pop %v1273
      %v1306 = vrcp.pop %v1274
      %v1307 = vmul.f32 %v1275, 1.0614054
      %v1308 = vmul.f32 %v1276, 1.0614054
      %v1309 = vmul.f32 %v1277, 1.0614054
      %v1310 = vmul.f32 %v1278, 1.0614054
      %v1311 = vmul.f32 %v1279, 1.0614054
      %v1312 = vmul.f32 %v1280, 1.0614054
      %v1313 = vmul.f32 %v1281, 1.0614054
      %v1314 = vmul.f32 %v1282, 1.0614054
      %v1315 = vmul.f32 %v1283, 1.0614054
      %v1316 = vmul.f32 %v1284, 1.0614054
      %v1317 = vmul.f32 %v1285, 1.0614054
      %v1318 = vmul.f32 %v1286, 1.0614054
      %v1319 = vmul.f32 %v1287, 1.0614054
      %v1320 = vmul.f32 %v1288, 1.0614054
      %v1321 = vmul.f32 %v1289, 1.0614054
      %v1322 = vmul.f32 %v1290, 1.0614054
      %v1323 = vmul.f32 %v1291, 1.0614054
      %v1324 = vmul.f32 %v1292, 1.0614054
      %v1325 = vmul.f32 %v1293, 1.0614054
      %v1326 = vmul.f32 %v1294, 1.0614054
      %v1327 = vmul.f32 %v1295, 1.0614054
      %v1328 = vmul.f32 %v1296, 1.0614054
      %v1329 = vmul.f32 %v1297, 1.0614054
      %v1330 = vmul.f32 %v1298, 1.0614054
      %v1331 = vmul.f32 %v1299, 1.0614054
      %v1332 = vmul.f32 %v1300, 1.0614054
      %v1333 = vmul.f32 %v1301, 1.0614054
      %v1334 = vmul.f32 %v1302, 1.0614054
      %v1335 = vmul.f32 %v1303, 1.0614054
      %v1336 = vmul.f32 %v1304, 1.0614054
      %v1337 = vmul.f32 %v1305, 1.0614054
      %v1338 = vmul.f32 %v1306, 1.0614054
      %v1339 = vadd.f32 %v1307, -1.4531521
      %v1340 = vadd.f32 %v1308, -1.4531521
      %v1341 = vadd.f32 %v1309, -1.4531521
      %v1342 = vadd.f32 %v1310, -1.4531521
      %v1343 = vadd.f32 %v1311, -1.4531521
      %v1344 = vadd.f32 %v1312, -1.4531521
      %v1345 = vadd.f32 %v1313, -1.4531521
      %v1346 = vadd.f32 %v1314, -1.4531521
      %v1347 = vadd.f32 %v1315, -1.4531521
      %v1348 = vadd.f32 %v1316, -1.4531521
      %v1349 = vadd.f32 %v1317, -1.4531521
      %v1350 = vadd.f32 %v1318, -1.4531521
      %v1351 = vadd.f32 %v1319, -1.4531521
      %v1352 = vadd.f32 %v1320, -1.4531521
      %v1353 = vadd.f32 %v1321, -1.4531521
      %v1354 = vadd.f32 %v1322, -1.4531521
      %v1355 = vadd.f32 %v1323, -1.4531521
      %v1356 = vadd.f32 %v1324, -1.4531521
      %v1357 = vadd.f32 %v1325, -1.4531521
      %v1358 = vadd.f32 %v1326, -1.4531521
      %v1359 = vadd.f32 %v1327, -1.4531521
      %v1360 = vadd.f32 %v1328, -1.4531521
      %v1361 = vadd.f32 %v1329, -1.4531521
      %v1362 = vadd.f32 %v1330, -1.4531521
      %v1363 = vadd.f32 %v1331, -1.4531521
      %v1364 = vadd.f32 %v1332, -1.4531521
      %v1365 = vadd.f32 %v1333, -1.4531521
      %v1366 = vadd.f32 %v1334, -1.4531521
      %v1367 = vadd.f32 %v1335, -1.4531521
      %v1368 = vadd.f32 %v1336, -1.4531521
      %v1369 = vadd.f32 %v1337, -1.4531521
      %v1370 = vadd.f32 %v1338, -1.4531521
      %v1371 = vmul.f32 %v1339, %v1275
      %v1372 = vmul.f32 %v1340, %v1276
      %v1373 = vmul.f32 %v1341, %v1277
      %v1374 = vmul.f32 %v1342, %v1278
      %v1375 = vmul.f32 %v1343, %v1279
      %v1376 = vmul.f32 %v1344, %v1280
      %v1377 = vmul.f32 %v1345, %v1281
      %v1378 = vmul.f32 %v1346, %v1282
      %v1379 = vmul.f32 %v1347, %v1283
      %v1380 = vmul.f32 %v1348, %v1284
      %v1381 = vmul.f32 %v1349, %v1285
      %v1382 = vmul.f32 %v1350, %v1286
      %v1383 = vmul.f32 %v1351, %v1287
      %v1384 = vmul.f32 %v1352, %v1288
      %v1385 = vmul.f32 %v1353, %v1289
      %v1386 = vmul.f32 %v1354, %v1290
      %v1387 = vmul.f32 %v1355, %v1291
      %v1388 = vmul.f32 %v1356, %v1292
      %v1389 = vmul.f32 %v1357, %v1293
      %v1390 = vmul.f32 %v1358, %v1294
      %v1391 = vmul.f32 %v1359, %v1295
      %v1392 = vmul.f32 %v1360, %v1296
      %v1393 = vmul.f32 %v1361, %v1297
      %v1394 = vmul.f32 %v1362, %v1298
      %v1395 = vmul.f32 %v1363, %v1299
      %v1396 = vmul.f32 %v1364, %v1300
      %v1397 = vmul.f32 %v1365, %v1301
      %v1398 = vmul.f32 %v1366, %v1302
      %v1399 = vmul.f32 %v1367, %v1303
      %v1400 = vmul.f32 %v1368, %v1304
      %v1401 = vmul.f32 %v1369, %v1305
      %v1402 = vmul.f32 %v1370, %v1306
      %v1403 = vadd.f32 %v1371, 1.4214138
      %v1404 = vadd.f32 %v1372, 1.4214138
      %v1405 = vadd.f32 %v1373, 1.4214138
      %v1406 = vadd.f32 %v1374, 1.4214138
      %v1407 = vadd.f32 %v1375, 1.4214138
      %v1408 = vadd.f32 %v1376, 1.4214138
      %v1409 = vadd.f32 %v1377, 1.4214138
      %v1410 = vadd.f32 %v1378, 1.4214138
      %v1411 = vadd.f32 %v1379, 1.4214138
      %v1412 = vadd.f32 %v1380, 1.4214138
      %v1413 = vadd.f32 %v1381, 1.4214138
      %v1414 = vadd.f32 %v1382, 1.4214138
      %v1415 = vadd.f32 %v1383, 1.4214138
      %v1416 = vadd.f32 %v1384, 1.4214138
      %v1417 = vadd.f32 %v1385, 1.4214138
      %v1418 = vadd.f32 %v1386, 1.4214138
      %v1419 = vadd.f32 %v1387, 1.4214138
      %v1420 = vadd.f32 %v1388, 1.4214138
      %v1421 = vadd.f32 %v1389, 1.4214138
      %v1422 = vadd.f32 %v1390, 1.4214138
      %v1423 = vadd.f32 %v1391, 1.4214138
      %v1424 = vadd.f32 %v1392, 1.4214138
      %v1425 = vadd.f32 %v1393, 1.4214138
      %v1426 = vadd.f32 %v1394, 1.4214138
      %v1427 = vadd.f32 %v1395, 1.4214138
      %v1428 = vadd.f32 %v1396, 1.4214138
      %v1429 = vadd.f32 %v1397, 1.4214138
      %v1430 = vadd.f32 %v1398, 1.4214138
      %v1431 = vadd.f32 %v1399, 1.4214138
      %v1432 = vadd.f32 %v1400, 1.4214138
      %v1433 = vadd.f32 %v1401, 1.4214138
      %v1434 = vadd.f32 %v1402, 1.4214138
      %v1435 = vmul.f32 %v1403, %v1275
      %v1436 = vmul.f32 %v1404, %v1276
      %v1437 = vmul.f32 %v1405, %v1277
      %v1438 = vmul.f32 %v1406, %v1278
      %v1439 = vmul.f32 %v1407, %v1279
      %v1440 = vmul.f32 %v1408, %v1280
      %v1441 = vmul.f32 %v1409, %v1281
      %v1442 = vmul.f32 %v1410, %v1282
      %v1443 = vmul.f32 %v1411, %v1283
      %v1444 = vmul.f32 %v1412, %v1284
      %v1445 = vmul.f32 %v1413, %v1285
      %v1446 = vmul.f32 %v1414, %v1286
      %v1447 = vmul.f32 %v1415, %v1287
      %v1448 = vmul.f32 %v1416, %v1288
      %v1449 = vmul.f32 %v1417, %v1289
      %v1450 = vmul.f32 %v1418, %v1290
      %v1451 = vmul.f32 %v1419, %v1291
      %v1452 = vmul.f32 %v1420, %v1292
      %v1453 = vmul.f32 %v1421, %v1293
      %v1454 = vmul.f32 %v1422, %v1294
      %v1455 = vmul.f32 %v1423, %v1295
      %v1456 = vmul.f32 %v1424, %v1296
      %v1457 = vmul.f32 %v1425, %v1297
      %v1458 = vmul.f32 %v1426, %v1298
      %v1459 = vmul.f32 %v1427, %v1299
      %v1460 = vmul.f32 %v1428, %v1300
      %v1461 = vmul.f32 %v1429, %v1301
      %v1462 = vmul.f32 %v1430, %v1302
      %v1463 = vmul.f32 %v1431, %v1303
      %v1464 = vmul.f32 %v1432, %v1304
      %v1465 = vmul.f32 %v1433, %v1305
      %v1466 = vmul.f32 %v1434, %v1306
      %v1467 = vadd.f32 %v1435, -0.28449672
      %v1468 = vadd.f32 %v1436, -0.28449672
      %v1469 = vadd.f32 %v1437, -0.28449672
      %v1470 = vadd.f32 %v1438, -0.28449672
      %v1471 = vadd.f32 %v1439, -0.28449672
      %v1472 = vadd.f32 %v1440, -0.28449672
      %v1473 = vadd.f32 %v1441, -0.28449672
      %v1474 = vadd.f32 %v1442, -0.28449672
      %v1475 = vadd.f32 %v1443, -0.28449672
      %v1476 = vadd.f32 %v1444, -0.28449672
      %v1477 = vadd.f32 %v1445, -0.28449672
      %v1478 = vadd.f32 %v1446, -0.28449672
      %v1479 = vadd.f32 %v1447, -0.28449672
      %v1480 = vadd.f32 %v1448, -0.28449672
      %v1481 = vadd.f32 %v1449, -0.28449672
      %v1482 = vadd.f32 %v1450, -0.28449672
      %v1483 = vadd.f32 %v1451, -0.28449672
      %v1484 = vadd.f32 %v1452, -0.28449672
      %v1485 = vadd.f32 %v1453, -0.28449672
      %v1486 = vadd.f32 %v1454, -0.28449672
      %v1487 = vadd.f32 %v1455, -0.28449672
      %v1488 = vadd.f32 %v1456, -0.28449672
      %v1489 = vadd.f32 %v1457, -0.28449672
      %v1490 = vadd.f32 %v1458, -0.28449672
      %v1491 = vadd.f32 %v1459, -0.28449672
      %v1492 = vadd.f32 %v1460, -0.28449672
      %v1493 = vadd.f32 %v1461, -0.28449672
      %v1494 = vadd.f32 %v1462, -0.28449672
      %v1495 = vadd.f32 %v1463, -0.28449672
      %v1496 = vadd.f32 %v1464, -0.28449672
      %v1497 = vadd.f32 %v1465, -0.28449672
      %v1498 = vadd.f32 %v1466, -0.28449672
      %v1499 = vmul.f32 %v1467, %v1275
      %v1500 = vmul.f32 %v1468, %v1276
      %v1501 = vmul.f32 %v1469, %v1277
      %v1502 = vmul.f32 %v1470, %v1278
      %v1503 = vmul.f32 %v1471, %v1279
      %v1504 = vmul.f32 %v1472, %v1280
      %v1505 = vmul.f32 %v1473, %v1281
      %v1506 = vmul.f32 %v1474, %v1282
      %v1507 = vmul.f32 %v1475, %v1283
      %v1508 = vmul.f32 %v1476, %v1284
      %v1509 = vmul.f32 %v1477, %v1285
      %v1510 = vmul.f32 %v1478, %v1286
      %v1511 = vmul.f32 %v1479, %v1287
      %v1512 = vmul.f32 %v1480, %v1288
      %v1513 = vmul.f32 %v1481, %v1289
      %v1514 = vmul.f32 %v1482, %v1290
      %v1515 = vmul.f32 %v1483, %v1291
      %v1516 = vmul.f32 %v1484, %v1292
      %v1517 = vmul.f32 %v1485, %v1293
      %v1518 = vmul.f32 %v1486, %v1294
      %v1519 = vmul.f32 %v1487, %v1295
      %v1520 = vmul.f32 %v1488, %v1296
      %v1521 = vmul.f32 %v1489, %v1297
      %v1522 = vmul.f32 %v1490, %v1298
      %v1523 = vmul.f32 %v1491, %v1299
      %v1524 = vmul.f32 %v1492, %v1300
      %v1525 = vmul.f32 %v1493, %v1301
      %v1526 = vmul.f32 %v1494, %v1302
      %v1527 = vmul.f32 %v1495, %v1303
      %v1528 = vmul.f32 %v1496, %v1304
      %v1529 = vmul.f32 %v1497, %v1305
      %v1530 = vmul.f32 %v1498, %v1306
      %v1531 = vadd.f32 %v1499, 0.2548296
      %v1532 = vadd.f32 %v1500, 0.2548296
      %v1533 = vadd.f32 %v1501, 0.2548296
      %v1534 = vadd.f32 %v1502, 0.2548296
      %v1535 = vadd.f32 %v1503, 0.2548296
      %v1536 = vadd.f32 %v1504, 0.2548296
      %v1537 = vadd.f32 %v1505, 0.2548296
      %v1538 = vadd.f32 %v1506, 0.2548296
      %v1539 = vadd.f32 %v1507, 0.2548296
      %v1540 = vadd.f32 %v1508, 0.2548296
      %v1541 = vadd.f32 %v1509, 0.2548296
      %v1542 = vadd.f32 %v1510, 0.2548296
      %v1543 = vadd.f32 %v1511, 0.2548296
      %v1544 = vadd.f32 %v1512, 0.2548296
      %v1545 = vadd.f32 %v1513, 0.2548296
      %v1546 = vadd.f32 %v1514, 0.2548296
      %v1547 = vadd.f32 %v1515, 0.2548296
      %v1548 = vadd.f32 %v1516, 0.2548296
      %v1549 = vadd.f32 %v1517, 0.2548296
      %v1550 = vadd.f32 %v1518, 0.2548296
      %v1551 = vadd.f32 %v1519, 0.2548296
      %v1552 = vadd.f32 %v1520, 0.2548296
      %v1553 = vadd.f32 %v1521, 0.2548296
      %v1554 = vadd.f32 %v1522, 0.2548296
      %v1555 = vadd.f32 %v1523, 0.2548296
      %v1556 = vadd.f32 %v1524, 0.2548296
      %v1557 = vadd.f32 %v1525, 0.2548296
      %v1558 = vadd.f32 %v1526, 0.2548296
      %v1559 = vadd.f32 %v1527, 0.2548296
      %v1560 = vadd.f32 %v1528, 0.2548296
      %v1561 = vadd.f32 %v1529, 0.2548296
      %v1562 = vadd.f32 %v1530, 0.2548296
      %v1563 = vmul.f32 %v1531, %v1275
      %v1564 = vmul.f32 %v1532, %v1276
      %v1565 = vmul.f32 %v1533, %v1277
      %v1566 = vmul.f32 %v1534, %v1278
      %v1567 = vmul.f32 %v1535, %v1279
      %v1568 = vmul.f32 %v1536, %v1280
      %v1569 = vmul.f32 %v1537, %v1281
      %v1570 = vmul.f32 %v1538, %v1282
      %v1571 = vmul.f32 %v1539, %v1283
      %v1572 = vmul.f32 %v1540, %v1284
      %v1573 = vmul.f32 %v1541, %v1285
      %v1574 = vmul.f32 %v1542, %v1286
      %v1575 = vmul.f32 %v1543, %v1287
      %v1576 = vmul.f32 %v1544, %v1288
      %v1577 = vmul.f32 %v1545, %v1289
      %v1578 = vmul.f32 %v1546, %v1290
      %v1579 = vmul.f32 %v1547, %v1291
      %v1580 = vmul.f32 %v1548, %v1292
      %v1581 = vmul.f32 %v1549, %v1293
      %v1582 = vmul.f32 %v1550, %v1294
      %v1583 = vmul.f32 %v1551, %v1295
      %v1584 = vmul.f32 %v1552, %v1296
      %v1585 = vmul.f32 %v1553, %v1297
      %v1586 = vmul.f32 %v1554, %v1298
      %v1587 = vmul.f32 %v1555, %v1299
      %v1588 = vmul.f32 %v1556, %v1300
      %v1589 = vmul.f32 %v1557, %v1301
      %v1590 = vmul.f32 %v1558, %v1302
      %v1591 = vmul.f32 %v1559, %v1303
      %v1592 = vmul.f32 %v1560, %v1304
      %v1593 = vmul.f32 %v1561, %v1305
      %v1594 = vmul.f32 %v1562, %v1306
      %v1595 = vsub.f32 0.0, %v1179
      %v1596 = vsub.f32 0.0, %v1180
      %v1597 = vsub.f32 0.0, %v1181
      %v1598 = vsub.f32 0.0, %v1182
      %v1599 = vsub.f32 0.0, %v1183
      %v1600 = vsub.f32 0.0, %v1184
      %v1601 = vsub.f32 0.0, %v1185
      %v1602 = vsub.f32 0.0, %v1186
      %v1603 = vsub.f32 0.0, %v1187
      %v1604 = vsub.f32 0.0, %v1188
      %v1605 = vsub.f32 0.0, %v1189
      %v1606 = vsub.f32 0.0, %v1190
      %v1607 = vsub.f32 0.0, %v1191
      %v1608 = vsub.f32 0.0, %v1192
      %v1609 = vsub.f32 0.0, %v1193
      %v1610 = vsub.f32 0.0, %v1194
      %v1611 = vsub.f32 0.0, %v1195
      %v1612 = vsub.f32 0.0, %v1196
      %v1613 = vsub.f32 0.0, %v1197
      %v1614 = vsub.f32 0.0, %v1198
      %v1615 = vsub.f32 0.0, %v1199
      %v1616 = vsub.f32 0.0, %v1200
      %v1617 = vsub.f32 0.0, %v1201
      %v1618 = vsub.f32 0.0, %v1202
      %v1619 = vsub.f32 0.0, %v1203
      %v1620 = vsub.f32 0.0, %v1204
      %v1621 = vsub.f32 0.0, %v1205
      %v1622 = vsub.f32 0.0, %v1206
      %v1623 = vsub.f32 0.0, %v1207
      %v1624 = vsub.f32 0.0, %v1208
      %v1625 = vsub.f32 0.0, %v1209
      %v1626 = vsub.f32 0.0, %v1210
      %v1627 = vmul.f32 %v1595, %v1179
      %v1628 = vmul.f32 %v1596, %v1180
      %v1629 = vmul.f32 %v1597, %v1181
      %v1630 = vmul.f32 %v1598, %v1182
      %v1631 = vmul.f32 %v1599, %v1183
      %v1632 = vmul.f32 %v1600, %v1184
      %v1633 = vmul.f32 %v1601, %v1185
      %v1634 = vmul.f32 %v1602, %v1186
      %v1635 = vmul.f32 %v1603, %v1187
      %v1636 = vmul.f32 %v1604, %v1188
      %v1637 = vmul.f32 %v1605, %v1189
      %v1638 = vmul.f32 %v1606, %v1190
      %v1639 = vmul.f32 %v1607, %v1191
      %v1640 = vmul.f32 %v1608, %v1192
      %v1641 = vmul.f32 %v1609, %v1193
      %v1642 = vmul.f32 %v1610, %v1194
      %v1643 = vmul.f32 %v1611, %v1195
      %v1644 = vmul.f32 %v1612, %v1196
      %v1645 = vmul.f32 %v1613, %v1197
      %v1646 = vmul.f32 %v1614, %v1198
      %v1647 = vmul.f32 %v1615, %v1199
      %v1648 = vmul.f32 %v1616, %v1200
      %v1649 = vmul.f32 %v1617, %v1201
      %v1650 = vmul.f32 %v1618, %v1202
      %v1651 = vmul.f32 %v1619, %v1203
      %v1652 = vmul.f32 %v1620, %v1204
      %v1653 = vmul.f32 %v1621, %v1205
      %v1654 = vmul.f32 %v1622, %v1206
      %v1655 = vmul.f32 %v1623, %v1207
      %v1656 = vmul.f32 %v1624, %v1208
      %v1657 = vmul.f32 %v1625, %v1209
      %v1658 = vmul.f32 %v1626, %v1210
      %v1659 = vmul.f32 %v1627, 1.442695
      %v1660 = vpow.pop %v1659
      %v1661 = vmul.f32 %v1628, 1.442695
      %v1662 = vpow.pop %v1661
      %v1663 = vmul.f32 %v1629, 1.442695
      %v1664 = vpow.pop %v1663
      %v1665 = vmul.f32 %v1630, 1.442695
      %v1666 = vpow.pop %v1665
      %v1667 = vmul.f32 %v1631, 1.442695
      %v1668 = vpow.pop %v1667
      %v1669 = vmul.f32 %v1632, 1.442695
      %v1670 = vpow.pop %v1669
      %v1671 = vmul.f32 %v1633, 1.442695
      %v1672 = vpow.pop %v1671
      %v1673 = vmul.f32 %v1634, 1.442695
      %v1674 = vpow.pop %v1673
      %v1675 = vmul.f32 %v1635, 1.442695
      %v1676 = vpow.pop %v1675
      %v1677 = vmul.f32 %v1636, 1.442695
      %v1678 = vpow.pop %v1677
      %v1679 = vmul.f32 %v1637, 1.442695
      %v1680 = vpow.pop %v1679
      %v1681 = vmul.f32 %v1638, 1.442695
      %v1682 = vpow.pop %v1681
      %v1683 = vmul.f32 %v1639, 1.442695
      %v1684 = vpow.pop %v1683
      %v1685 = vmul.f32 %v1640, 1.442695
      %v1686 = vpow.pop %v1685
      %v1687 = vmul.f32 %v1641, 1.442695
      %v1688 = vpow.pop %v1687
      %v1689 = vmul.f32 %v1642, 1.442695
      %v1690 = vpow.pop %v1689
      %v1691 = vmul.f32 %v1643, 1.442695
      %v1692 = vpow.pop %v1691
      %v1693 = vmul.f32 %v1644, 1.442695
      %v1694 = vpow.pop %v1693
      %v1695 = vmul.f32 %v1645, 1.442695
      %v1696 = vpow.pop %v1695
      %v1697 = vmul.f32 %v1646, 1.442695
      %v1698 = vpow.pop %v1697
      %v1699 = vmul.f32 %v1647, 1.442695
      %v1700 = vpow.pop %v1699
      %v1701 = vmul.f32 %v1648, 1.442695
      %v1702 = vpow.pop %v1701
      %v1703 = vmul.f32 %v1649, 1.442695
      %v1704 = vpow.pop %v1703
      %v1705 = vmul.f32 %v1650, 1.442695
      %v1706 = vpow.pop %v1705
      %v1707 = vmul.f32 %v1651, 1.442695
      %v1708 = vpow.pop %v1707
      %v1709 = vmul.f32 %v1652, 1.442695
      %v1710 = vpow.pop %v1709
      %v1711 = vmul.f32 %v1653, 1.442695
      %v1712 = vpow.pop %v1711
      %v1713 = vmul.f32 %v1654, 1.442695
      %v1714 = vpow.pop %v1713
      %v1715 = vmul.f32 %v1655, 1.442695
      %v1716 = vpow.pop %v1715
      %v1717 = vmul.f32 %v1656, 1.442695
      %v1718 = vpow.pop %v1717
      %v1719 = vmul.f32 %v1657, 1.442695
      %v1720 = vpow.pop %v1719
      %v1721 = vmul.f32 %v1658, 1.442695
      %v1722 = vpow.pop %v1721
      %v1723 = vmul.f32 %v1563, %v1660
      %v1724 = vmul.f32 %v1564, %v1662
      %v1725 = vmul.f32 %v1565, %v1664
      %v1726 = vmul.f32 %v1566, %v1666
      %v1727 = vmul.f32 %v1567, %v1668
      %v1728 = vmul.f32 %v1568, %v1670
      %v1729 = vmul.f32 %v1569, %v1672
      %v1730 = vmul.f32 %v1570, %v1674
      %v1731 = vmul.f32 %v1571, %v1676
      %v1732 = vmul.f32 %v1572, %v1678
      %v1733 = vmul.f32 %v1573, %v1680
      %v1734 = vmul.f32 %v1574, %v1682
      %v1735 = vmul.f32 %v1575, %v1684
      %v1736 = vmul.f32 %v1576, %v1686
      %v1737 = vmul.f32 %v1577, %v1688
      %v1738 = vmul.f32 %v1578, %v1690
      %v1739 = vmul.f32 %v1579, %v1692
      %v1740 = vmul.f32 %v1580, %v1694
      %v1741 = vmul.f32 %v1581, %v1696
      %v1742 = vmul.f32 %v1582, %v1698
      %v1743 = vmul.f32 %v1583, %v1700
      %v1744 = vmul.f32 %v1584, %v1702
      %v1745 = vmul.f32 %v1585, %v1704
      %v1746 = vmul.f32 %v1586, %v1706
      %v1747 = vmul.f32 %v1587, %v1708
      %v1748 = vmul.f32 %v1588, %v1710
      %v1749 = vmul.f32 %v1589, %v1712
      %v1750 = vmul.f32 %v1590, %v1714
      %v1751 = vmul.f32 %v1591, %v1716
      %v1752 = vmul.f32 %v1592, %v1718
      %v1753 = vmul.f32 %v1593, %v1720
      %v1754 = vmul.f32 %v1594, %v1722
      %v1755 = vsub.f32 1.0, %v1723
      %v1756 = vsub.f32 1.0, %v1724
      %v1757 = vsub.f32 1.0, %v1725
      %v1758 = vsub.f32 1.0, %v1726
      %v1759 = vsub.f32 1.0, %v1727
      %v1760 = vsub.f32 1.0, %v1728
      %v1761 = vsub.f32 1.0, %v1729
      %v1762 = vsub.f32 1.0, %v1730
      %v1763 = vsub.f32 1.0, %v1731
      %v1764 = vsub.f32 1.0, %v1732
      %v1765 = vsub.f32 1.0, %v1733
      %v1766 = vsub.f32 1.0, %v1734
      %v1767 = vsub.f32 1.0, %v1735
      %v1768 = vsub.f32 1.0, %v1736
      %v1769 = vsub.f32 1.0, %v1737
      %v1770 = vsub.f32 1.0, %v1738
      %v1771 = vsub.f32 1.0, %v1739
      %v1772 = vsub.f32 1.0, %v1740
      %v1773 = vsub.f32 1.0, %v1741
      %v1774 = vsub.f32 1.0, %v1742
      %v1775 = vsub.f32 1.0, %v1743
      %v1776 = vsub.f32 1.0, %v1744
      %v1777 = vsub.f32 1.0, %v1745
      %v1778 = vsub.f32 1.0, %v1746
      %v1779 = vsub.f32 1.0, %v1747
      %v1780 = vsub.f32 1.0, %v1748
      %v1781 = vsub.f32 1.0, %v1749
      %v1782 = vsub.f32 1.0, %v1750
      %v1783 = vsub.f32 1.0, %v1751
      %v1784 = vsub.f32 1.0, %v1752
      %v1785 = vsub.f32 1.0, %v1753
      %v1786 = vsub.f32 1.0, %v1754
      %v1787 = vmul.f32 %v1147, %v1755
      %v1788 = vmul.f32 %v1148, %v1756
      %v1789 = vmul.f32 %v1149, %v1757
      %v1790 = vmul.f32 %v1150, %v1758
      %v1791 = vmul.f32 %v1151, %v1759
      %v1792 = vmul.f32 %v1152, %v1760
      %v1793 = vmul.f32 %v1153, %v1761
      %v1794 = vmul.f32 %v1154, %v1762
      %v1795 = vmul.f32 %v1155, %v1763
      %v1796 = vmul.f32 %v1156, %v1764
      %v1797 = vmul.f32 %v1157, %v1765
      %v1798 = vmul.f32 %v1158, %v1766
      %v1799 = vmul.f32 %v1159, %v1767
      %v1800 = vmul.f32 %v1160, %v1768
      %v1801 = vmul.f32 %v1161, %v1769
      %v1802 = vmul.f32 %v1162, %v1770
      %v1803 = vmul.f32 %v1163, %v1771
      %v1804 = vmul.f32 %v1164, %v1772
      %v1805 = vmul.f32 %v1165, %v1773
      %v1806 = vmul.f32 %v1166, %v1774
      %v1807 = vmul.f32 %v1167, %v1775
      %v1808 = vmul.f32 %v1168, %v1776
      %v1809 = vmul.f32 %v1169, %v1777
      %v1810 = vmul.f32 %v1170, %v1778
      %v1811 = vmul.f32 %v1171, %v1779
      %v1812 = vmul.f32 %v1172, %v1780
      %v1813 = vmul.f32 %v1173, %v1781
      %v1814 = vmul.f32 %v1174, %v1782
      %v1815 = vmul.f32 %v1175, %v1783
      %v1816 = vmul.f32 %v1176, %v1784
      %v1817 = vmul.f32 %v1177, %v1785
      %v1818 = vmul.f32 %v1178, %v1786
      %v1819 = vadd.f32 %v1787, 1.0
      %v1820 = vadd.f32 %v1788, 1.0
      %v1821 = vadd.f32 %v1789, 1.0
      %v1822 = vadd.f32 %v1790, 1.0
      %v1823 = vadd.f32 %v1791, 1.0
      %v1824 = vadd.f32 %v1792, 1.0
      %v1825 = vadd.f32 %v1793, 1.0
      %v1826 = vadd.f32 %v1794, 1.0
      %v1827 = vadd.f32 %v1795, 1.0
      %v1828 = vadd.f32 %v1796, 1.0
      %v1829 = vadd.f32 %v1797, 1.0
      %v1830 = vadd.f32 %v1798, 1.0
      %v1831 = vadd.f32 %v1799, 1.0
      %v1832 = vadd.f32 %v1800, 1.0
      %v1833 = vadd.f32 %v1801, 1.0
      %v1834 = vadd.f32 %v1802, 1.0
      %v1835 = vadd.f32 %v1803, 1.0
      %v1836 = vadd.f32 %v1804, 1.0
      %v1837 = vadd.f32 %v1805, 1.0
      %v1838 = vadd.f32 %v1806, 1.0
      %v1839 = vadd.f32 %v1807, 1.0
      %v1840 = vadd.f32 %v1808, 1.0
      %v1841 = vadd.f32 %v1809, 1.0
      %v1842 = vadd.f32 %v1810, 1.0
      %v1843 = vadd.f32 %v1811, 1.0
      %v1844 = vadd.f32 %v1812, 1.0
      %v1845 = vadd.f32 %v1813, 1.0
      %v1846 = vadd.f32 %v1814, 1.0
      %v1847 = vadd.f32 %v1815, 1.0
      %v1848 = vadd.f32 %v1816, 1.0
      %v1849 = vadd.f32 %v1817, 1.0
      %v1850 = vadd.f32 %v1818, 1.0
      %v1851 = vmul.f32 %v1051, %v1819
      %v1852 = vmul.f32 %v1052, %v1820
      %v1853 = vmul.f32 %v1053, %v1821
      %v1854 = vmul.f32 %v1054, %v1822
      %v1855 = vmul.f32 %v1055, %v1823
      %v1856 = vmul.f32 %v1056, %v1824
      %v1857 = vmul.f32 %v1057, %v1825
      %v1858 = vmul.f32 %v1058, %v1826
      %v1859 = vmul.f32 %v1059, %v1827
      %v1860 = vmul.f32 %v1060, %v1828
      %v1861 = vmul.f32 %v1061, %v1829
      %v1862 = vmul.f32 %v1062, %v1830
      %v1863 = vmul.f32 %v1063, %v1831
      %v1864 = vmul.f32 %v1064, %v1832
      %v1865 = vmul.f32 %v1065, %v1833
      %v1866 = vmul.f32 %v1066, %v1834
      %v1867 = vmul.f32 %v1067, %v1835
      %v1868 = vmul.f32 %v1068, %v1836
      %v1869 = vmul.f32 %v1069, %v1837
      %v1870 = vmul.f32 %v1070, %v1838
      %v1871 = vmul.f32 %v1071, %v1839
      %v1872 = vmul.f32 %v1072, %v1840
      %v1873 = vmul.f32 %v1073, %v1841
      %v1874 = vmul.f32 %v1074, %v1842
      %v1875 = vmul.f32 %v1075, %v1843
      %v1876 = vmul.f32 %v1076, %v1844
      %v1877 = vmul.f32 %v1077, %v1845
      %v1878 = vmul.f32 %v1078, %v1846
      %v1879 = vmul.f32 %v1079, %v1847
      %v1880 = vmul.f32 %v1080, %v1848
      %v1881 = vmul.f32 %v1081, %v1849
      %v1882 = vmul.f32 %v1082, %v1850
      %v1883 = vpack.c.bf16 %v1852, %v1851
      %v1884 = vpack.c.bf16 %v1854, %v1853
      %v1885 = vpack.c.bf16 %v1856, %v1855
      %v1886 = vpack.c.bf16 %v1858, %v1857
      %v1887 = vpack.c.bf16 %v1860, %v1859
      %v1888 = vpack.c.bf16 %v1862, %v1861
      %v1889 = vpack.c.bf16 %v1864, %v1863
      %v1890 = vpack.c.bf16 %v1866, %v1865
      %v1891 = vpack.c.bf16 %v1868, %v1867
      %v1892 = vpack.c.bf16 %v1870, %v1869
      %v1893 = vpack.c.bf16 %v1872, %v1871
      %v1894 = vpack.c.bf16 %v1874, %v1873
      %v1895 = vpack.c.bf16 %v1876, %v1875
      %v1896 = vpack.c.bf16 %v1878, %v1877
      %v1897 = vpack.c.bf16 %v1880, %v1879
      %v1898 = vpack.c.bf16 %v1882, %v1881
      %v1899 = vld [vmem:[%s5] sm:$0xf]
      %v1900 = vld [vmem:[%s5 + $0x4] sm:$0xf]
      %v1901 = vld [vmem:[%s5 + $0x8] sm:$0xf]
      %v1902 = vld [vmem:[%s5 + $0xc] sm:$0xf]
      %v1903 = vld [vmem:[%s6] sm:$0x1]
      %v1905 = vlaneseq
      %v1906 = vshrl.u32 %v1905, 7
      %v1907 = vsub.s32 0, %v1906
      %v1908 = vrot.slane %v1903, %v1907
      %v1914 = vunpack.c.l.b16 %v1899
      %v1915 = vunpack.c.l.b16 %v1900
      %v1916 = vunpack.c.l.b16 %v1901
      %v1917 = vunpack.c.l.b16 %v1902
      %v1918 = vpack.c.b16 %v1915, %v1914
      %v1919 = vpack.c.b16 %v1917, %v1916
      %vm1922 = vcmask 261120
      %v1924 = vsel %vm1922, %v1883, 0
      %v1927 = vsel %vm1922, %v1884, 0
      %v1930 = vsel %vm1922, %v1885, 0
      %v1933 = vsel %vm1922, %v1886, 0
      %v1936 = vsel %vm1922, %v1887, 0
      %v1939 = vsel %vm1922, %v1888, 0
      %v1942 = vsel %vm1922, %v1889, 0
      %v1945 = vsel %vm1922, %v1890, 0
      %v1948 = vsel %vm1922, %v1891, 0
      %v1951 = vsel %vm1922, %v1892, 0
      %v1954 = vsel %vm1922, %v1893, 0
      %v1957 = vsel %vm1922, %v1894, 0
      %v1960 = vsel %vm1922, %v1895, 0
      %v1963 = vsel %vm1922, %v1896, 0
      %v1966 = vsel %vm1922, %v1897, 0
      %v1969 = vsel %vm1922, %v1898, 0
      %1971 = vmatprep.subr.bf16.mxu0 0
      %1972 = vmatpush1.bf16.msra.mxu0 0
      %1973 = vmatprep.subr.bf16.mxu0 0
      %1974 = vmatpush1.bf16.msra.mxu0 0
      %1975 = vmatprep.subr.bf16.mxu0 0
      %1976 = vmatpush1.bf16.msra.mxu0 0
      %1977 = vmatprep.subr.bf16.mxu0 0
      %1978 = vmatpush1.bf16.msra.mxu0 0
      %1979 = vmatprep.subr.bf16.mxu0 0
      %1980 = vmatpush1.bf16.msra.mxu0 0
      %1981 = vmatprep.subr.bf16.mxu0 0
      %1982 = vmatpush1.bf16.msra.mxu0 0
      %1983 = vmatprep.subr.bf16.mxu0 0
      %1984 = vmatpush1.bf16.msra.mxu0 %v1919
      %1985 = vmatprep.subr.bf16.mxu0 0
      %1986 = vmatpush1.bf16.msra.mxu0 %v1918
      %1987 = vmatprep.subr.bf16.mxu0 0
      %1988 = vmatpush2.bf16.msra.mxu0 0
      %1989 = vmatprep.subr.bf16.mxu0 0
      %1990 = vmatpush2.bf16.msra.mxu0 0
      %1991 = vmatprep.subr.bf16.mxu0 0
      %1992 = vmatpush2.bf16.msra.mxu0 0
      %1993 = vmatprep.subr.bf16.mxu0 0
      %1994 = vmatpush2.bf16.msra.mxu0 0
      %1995 = vmatprep.subr.bf16.mxu0 0
      %1996 = vmatpush2.bf16.msra.mxu0 0
      %1997 = vmatprep.subr.bf16.mxu0 0
      %1998 = vmatpush2.bf16.msra.mxu0 0
      %1999 = vmatprep.subr.bf16.mxu0 0
      %2000 = vmatpush2.bf16.msra.mxu0 0
      %2001 = vmatprep.subr.bf16.mxu0 0
      %2002 = vmatpush2.bf16.msra.mxu0 0
      %2003 = vmatprep.mubr.bf16.mxu0 0
      %2004 = vmatmul.mubr.bf16.gmra.mxu0 %v1924
      %v2005 = vpop.f32.mrf.mxu0
      %v2006 = vadd.f32 %v1908, %v2005
      %v2007 = vpop.f32.mrf.mxu0
      %v2008 = vpop.f32.mrf.mxu0
      %v2009 = vadd.f32 %v1908, %v2008
      %v2010 = vpop.f32.mrf.mxu0
      %2011 = vmatprep.mubr.bf16.mxu0 0
      %2012 = vmatmul.mubr.bf16.gmra.mxu0 %v1927
      %v2013 = vpop.f32.mrf.mxu0
      %v2014 = vadd.f32 %v1908, %v2013
      %v2015 = vpop.f32.mrf.mxu0
      %v2016 = vpop.f32.mrf.mxu0
      %v2017 = vadd.f32 %v1908, %v2016
      %v2018 = vpop.f32.mrf.mxu0
      %2019 = vmatprep.mubr.bf16.mxu0 0
      %2020 = vmatmul.mubr.bf16.gmra.mxu0 %v1930
      %v2021 = vpop.f32.mrf.mxu0
      %v2022 = vadd.f32 %v1908, %v2021
      %v2023 = vpop.f32.mrf.mxu0
      %v2024 = vpop.f32.mrf.mxu0
      %v2025 = vadd.f32 %v1908, %v2024
      %v2026 = vpop.f32.mrf.mxu0
      %2027 = vmatprep.mubr.bf16.mxu0 0
      %2028 = vmatmul.mubr.bf16.gmra.mxu0 %v1933
      %v2029 = vpop.f32.mrf.mxu0
      %v2030 = vadd.f32 %v1908, %v2029
      %v2031 = vpop.f32.mrf.mxu0
      %v2032 = vpop.f32.mrf.mxu0
      %v2033 = vadd.f32 %v1908, %v2032
      %v2034 = vpop.f32.mrf.mxu0
      %2035 = vmatprep.mubr.bf16.mxu0 0
      %2036 = vmatmul.mubr.bf16.gmra.mxu0 %v1936
      %v2037 = vpop.f32.mrf.mxu0
      %v2038 = vadd.f32 %v1908, %v2037
      %v2039 = vpop.f32.mrf.mxu0
      %v2040 = vpop.f32.mrf.mxu0
      %v2041 = vadd.f32 %v1908, %v2040
      %v2042 = vpop.f32.mrf.mxu0
      %2043 = vmatprep.mubr.bf16.mxu0 0
      %2044 = vmatmul.mubr.bf16.gmra.mxu0 %v1939
      %v2045 = vpop.f32.mrf.mxu0
      %v2046 = vadd.f32 %v1908, %v2045
      %v2047 = vpop.f32.mrf.mxu0
      %v2048 = vpop.f32.mrf.mxu0
      %v2049 = vadd.f32 %v1908, %v2048
      %v2050 = vpop.f32.mrf.mxu0
      %2051 = vmatprep.mubr.bf16.mxu0 0
      %2052 = vmatmul.mubr.bf16.gmra.mxu0 %v1942
      %v2053 = vpop.f32.mrf.mxu0
      %v2054 = vadd.f32 %v1908, %v2053
      %v2055 = vpop.f32.mrf.mxu0
      %v2056 = vpop.f32.mrf.mxu0
      %v2057 = vadd.f32 %v1908, %v2056
      %v2058 = vpop.f32.mrf.mxu0
      %2059 = vmatprep.mubr.bf16.mxu0 0
      %2060 = vmatmul.mubr.bf16.gmra.mxu0 %v1945
      %v2061 = vpop.f32.mrf.mxu0
      %v2062 = vadd.f32 %v1908, %v2061
      %v2063 = vpop.f32.mrf.mxu0
      %v2064 = vpop.f32.mrf.mxu0
      %v2065 = vadd.f32 %v1908, %v2064
      %v2066 = vpop.f32.mrf.mxu0
      %2067 = vmatprep.mubr.bf16.mxu0 0
      %2068 = vmatmul.mubr.bf16.gmra.mxu0 %v1948
      %v2069 = vpop.f32.mrf.mxu0
      %v2070 = vadd.f32 %v1908, %v2069
      %v2071 = vpop.f32.mrf.mxu0
      %v2072 = vpop.f32.mrf.mxu0
      %v2073 = vadd.f32 %v1908, %v2072
      %v2074 = vpop.f32.mrf.mxu0
      %2075 = vmatprep.mubr.bf16.mxu0 0
      %2076 = vmatmul.mubr.bf16.gmra.mxu0 %v1951
      %v2077 = vpop.f32.mrf.mxu0
      %v2078 = vadd.f32 %v1908, %v2077
      %v2079 = vpop.f32.mrf.mxu0
      %v2080 = vpop.f32.mrf.mxu0
      %v2081 = vadd.f32 %v1908, %v2080
      %v2082 = vpop.f32.mrf.mxu0
      %2083 = vmatprep.mubr.bf16.mxu0 0
      %2084 = vmatmul.mubr.bf16.gmra.mxu0 %v1954
      %v2085 = vpop.f32.mrf.mxu0
      %v2086 = vadd.f32 %v1908, %v2085
      %v2087 = vpop.f32.mrf.mxu0
      %v2088 = vpop.f32.mrf.mxu0
      %v2089 = vadd.f32 %v1908, %v2088
      %v2090 = vpop.f32.mrf.mxu0
      %2091 = vmatprep.mubr.bf16.mxu0 0
      %2092 = vmatmul.mubr.bf16.gmra.mxu0 %v1957
      %v2093 = vpop.f32.mrf.mxu0
      %v2094 = vadd.f32 %v1908, %v2093
      %v2095 = vpop.f32.mrf.mxu0
      %v2096 = vpop.f32.mrf.mxu0
      %v2097 = vadd.f32 %v1908, %v2096
      %v2098 = vpop.f32.mrf.mxu0
      %2099 = vmatprep.mubr.bf16.mxu0 0
      %2100 = vmatmul.mubr.bf16.gmra.mxu0 %v1960
      %v2101 = vpop.f32.mrf.mxu0
      %v2102 = vadd.f32 %v1908, %v2101
      %v2103 = vpop.f32.mrf.mxu0
      %v2104 = vpop.f32.mrf.mxu0
      %v2105 = vadd.f32 %v1908, %v2104
      %v2106 = vpop.f32.mrf.mxu0
      %2107 = vmatprep.mubr.bf16.mxu0 0
      %2108 = vmatmul.mubr.bf16.gmra.mxu0 %v1963
      %v2109 = vpop.f32.mrf.mxu0
      %v2110 = vadd.f32 %v1908, %v2109
      %v2111 = vpop.f32.mrf.mxu0
      %v2112 = vpop.f32.mrf.mxu0
      %v2113 = vadd.f32 %v1908, %v2112
      %v2114 = vpop.f32.mrf.mxu0
      %2115 = vmatprep.mubr.bf16.mxu0 0
      %2116 = vmatmul.mubr.bf16.gmra.mxu0 %v1966
      %v2117 = vpop.f32.mrf.mxu0
      %v2118 = vadd.f32 %v1908, %v2117
      %v2119 = vpop.f32.mrf.mxu0
      %v2120 = vpop.f32.mrf.mxu0
      %v2121 = vadd.f32 %v1908, %v2120
      %v2122 = vpop.f32.mrf.mxu0
      %2123 = vmatprep.mubr.bf16.mxu0 0
      %2124 = vmatmul.mubr.bf16.gmra.mxu0 %v1969
      %v2125 = vpop.f32.mrf.mxu0
      %v2126 = vadd.f32 %v1908, %v2125
      %v2127 = vpop.f32.mrf.mxu0
      %v2128 = vpop.f32.mrf.mxu0
      %v2129 = vadd.f32 %v1908, %v2128
      %v2130 = vpop.f32.mrf.mxu0
      %2131 = vdwg.mxu0
      %v2132 = vadd.f32 %v2006, %v283
      %v2133 = vadd.f32 %v2009, %v284
      %v2134 = vadd.f32 %v2014, %v285
      %v2135 = vadd.f32 %v2017, %v286
      %v2136 = vadd.f32 %v2022, %v287
      %v2137 = vadd.f32 %v2025, %v288
      %v2138 = vadd.f32 %v2030, %v289
      %v2139 = vadd.f32 %v2033, %v290
      %v2140 = vadd.f32 %v2038, %v291
      %v2141 = vadd.f32 %v2041, %v292
      %v2142 = vadd.f32 %v2046, %v293
      %v2143 = vadd.f32 %v2049, %v294
      %v2144 = vadd.f32 %v2054, %v295
      %v2145 = vadd.f32 %v2057, %v296
      %v2146 = vadd.f32 %v2062, %v297
      %v2147 = vadd.f32 %v2065, %v298
      %v2148 = vadd.f32 %v2070, %v299
      %v2149 = vadd.f32 %v2073, %v300
      %v2150 = vadd.f32 %v2078, %v301
      %v2151 = vadd.f32 %v2081, %v302
      %v2152 = vadd.f32 %v2086, %v303
      %v2153 = vadd.f32 %v2089, %v304
      %v2154 = vadd.f32 %v2094, %v305
      %v2155 = vadd.f32 %v2097, %v306
      %v2156 = vadd.f32 %v2102, %v307
      %v2157 = vadd.f32 %v2105, %v308
      %v2158 = vadd.f32 %v2110, %v309
      %v2159 = vadd.f32 %v2113, %v310
      %v2160 = vadd.f32 %v2118, %v311
      %v2161 = vadd.f32 %v2121, %v312
      %v2162 = vadd.f32 %v2126, %v313
      %v2163 = vadd.f32 %v2129, %v314
      %2164 = vst.msk [vmem:[%s280] sm:$0xff] %vm317, %v2132
      %2165 = vst.msk [vmem:[%s280 + $0x8] sm:$0xff] %vm317, %v2133
      %2166 = vst.msk [vmem:[%s280 + $0x10] sm:$0xff] %vm317, %v2134
      %2167 = vst.msk [vmem:[%s280 + $0x18] sm:$0xff] %vm317, %v2135
      %2168 = vst.msk [vmem:[%s280 + $0x20] sm:$0xff] %vm317, %v2136
      %2169 = vst.msk [vmem:[%s280 + $0x28] sm:$0xff] %vm317, %v2137
      %2170 = vst.msk [vmem:[%s280 + $0x30] sm:$0xff] %vm317, %v2138
      %2171 = vst.msk [vmem:[%s280 + $0x38] sm:$0xff] %vm317, %v2139
      %2172 = vst.msk [vmem:[%s280 + $0x40] sm:$0xff] %vm317, %v2140
      %2173 = vst.msk [vmem:[%s280 + $0x48] sm:$0xff] %vm317, %v2141
      %2174 = vst.msk [vmem:[%s280 + $0x50] sm:$0xff] %vm317, %v2142
      %2175 = vst.msk [vmem:[%s280 + $0x58] sm:$0xff] %vm317, %v2143
      %2176 = vst.msk [vmem:[%s280 + $0x60] sm:$0xff] %vm317, %v2144
      %2177 = vst.msk [vmem:[%s280 + $0x68] sm:$0xff] %vm317, %v2145
      %2178 = vst.msk [vmem:[%s280 + $0x70] sm:$0xff] %vm317, %v2146
      %2179 = vst.msk [vmem:[%s280 + $0x78] sm:$0xff] %vm317, %v2147
      %2180 = vst.msk [vmem:[%s280 + $0x80] sm:$0xff] %vm317, %v2148
      %2181 = vst.msk [vmem:[%s280 + $0x88] sm:$0xff] %vm317, %v2149
      %2182 = vst.msk [vmem:[%s280 + $0x90] sm:$0xff] %vm317, %v2150
      %2183 = vst.msk [vmem:[%s280 + $0x98] sm:$0xff] %vm317, %v2151
      %2184 = vst.msk [vmem:[%s280 + $0xa0] sm:$0xff] %vm317, %v2152
      %2185 = vst.msk [vmem:[%s280 + $0xa8] sm:$0xff] %vm317, %v2153
      %2186 = vst.msk [vmem:[%s280 + $0xb0] sm:$0xff] %vm317, %v2154
      %2187 = vst.msk [vmem:[%s280 + $0xb8] sm:$0xff] %vm317, %v2155
      %2188 = vst.msk [vmem:[%s280 + $0xc0] sm:$0xff] %vm317, %v2156
      %2189 = vst.msk [vmem:[%s280 + $0xc8] sm:$0xff] %vm317, %v2157
      %2190 = vst.msk [vmem:[%s280 + $0xd0] sm:$0xff] %vm317, %v2158
      %2191 = vst.msk [vmem:[%s280 + $0xd8] sm:$0xff] %vm317, %v2159
      %2192 = vst.msk [vmem:[%s280 + $0xe0] sm:$0xff] %vm317, %v2160
      %2193 = vst.msk [vmem:[%s280 + $0xe8] sm:$0xff] %vm317, %v2161
      %2194 = vst.msk [vmem:[%s280 + $0xf0] sm:$0xff] %vm317, %v2162
      %2195 = vst.msk [vmem:[%s280 + $0xf8] sm:$0xff] %vm317, %v2163
      %s2196 = smul.u32 32, %s18
      %p2197 = scmp.lt.s32.totalorder %s2196, 63
      %s2198 = scalar_select %p2197, %s2196, 63
      %s2199 = smul.addr %s2198, 8
      %s2200 = scalar_lea.vmem %s7, %s2199
      // Predicated region
      $region49: #{transformer_forward.3} parent=47 // pred_check
        %p2201 = pneg %p188
      $region50: #{transformer_forward.3} parent=47 // pred_check_branch
        %2203 = sbr.rel (%p2201) target = $region52
      $region51: #{transformer_forward.3} parent=47 // pred_region
        %s2204 = smul.u32 32, %s18
      $region52: #{transformer_forward.3} parent=47 // pred_fallthru
        _
    $region48: #{transformer_forward.3} parent=5 // pred_fallthru
      _
    %p2205 = scmp.le.s32.totalorder 2, %s13
    // Predicated region
    $region53: #{transformer_forward.3} parent=5 // pred_check
      %p2206 = pneg %p2205
    $region54: #{transformer_forward.3} parent=5 // pred_check_branch
      %2208 = sbr.rel (%p2206) target = $region56
    $region55: #{transformer_forward.3} parent=5 // pred_region
      %s2209 = ssub.s32 %s13, 2
      // Predicated region
      $region57: #{transformer_forward.3} parent=55 // pred_check
        %p2210 = pneg %p194
      $region58: #{transformer_forward.3} parent=55 // pred_check_branch
        %2212 = sbr.rel (%p2210) target = $region60
      $region59: #{transformer_forward.3} parent=55 // pred_region
        %s2213 = smul.u32 32, %s19
        %p2214 = scmp.lt.s32.totalorder %s2213, 63
        %s2215 = scalar_select %p2214, %s2213, 63
        %s2216 = smul.addr %s2215, 8
        %s2217 = scalar_lea.vmem %s7, %s2216
      $region60: #{transformer_forward.3} parent=55 // pred_fallthru
        _
    $region56: #{transformer_forward.3} parent=5 // pred_fallthru
      _
  $region6: #{transformer_forward.3} parent=0 // loop_footer
    %s17 = sadd.s32 1, %s13
  $region7: #{transformer_forward.3} parent=0 // loop_footer_branch
    %12 = sbr.rel target = $region3
  $region8: #{transformer_forward.3} parent=0 // loop_exit
    _

// kernel: transformer_forward.2
$region0: #{transformer_forward.2}
  #allocation0 [shape = 'u32[]', space=smem, size = 0x4, offset = 0x4, fixed_abs, tag = 'smem constant byte address 0x4 - core index']
  #allocation1 [shape = 'u32[144,128]{1,0:T(1,128)}', space=vmem, size = 0x12000, scoped, tag = 'internal scratch']
  %s0 = inlined_call_operand.vmem [shape: f32[2,16,16,16], index: 0, kind: input, shape index: {}]
  %s1 = inlined_call_operand.vmem [shape: f32[1,16], index: 1, kind: input, shape index: {}]
  %s2 = inlined_call_operand.vmem [shape: f32[1,16], index: 2, kind: input, shape index: {}]
  %s3 = inlined_call_operand.vmem [shape: bf16[16,48], index: 3, kind: input, shape index: {}]
  %s4 = inlined_call_operand.vmem [shape: f32[1,48], index: 4, kind: input, shape index: {}]
  %s5 = inlined_call_operand.vmem [shape: bf16[16,16], index: 5, kind: input, shape index: {}]
  %s6 = inlined_call_operand.vmem [shape: f32[1,16], index: 6, kind: input, shape index: {}]
  %s7 = inlined_call_operand.vmem [shape: f32[2,16,16,16], index: 7, kind: output, shape index: {}]
  %s8 = sld [smem:[#allocation0]]
  $region61: #{transformer_forward.2} parent=0
    _
  %s10 = ssub.s32 1, %s8
  %s11 = scalar_select 0, %s10, %s8
  loop: start=0, step=1, limit=6
  $region2: #{transformer_forward.2} parent=0 // loop_pre_header
    _
  $region3: #{transformer_forward.2} parent=0 // loop_header
    %s13 = sphi 0, %s17
    %p14 = scmp.ge.s32.totalorder %s13, 6
    %s20 = sphi 0, %s32
    %s21 = sphi 0, %s28
    %s22 = sphi 0, %s20
    %s23 = sphi 0, %s21
    %s24 = sphi 0, %s22
    %s25 = sphi 0, %s23
    %s37 = sphi 0, %s39
    %s40 = sphi 0, %s37
    %s41 = sphi 0, %s40
    %s57 = sphi 0, %s41
    %s61 = sphi 0, %s61
    %s63 = sphi 0, %s61
    %s64 = sphi 0, %s63
    %s78 = sphi 0, %s64
    %s82 = sphi 0, %s82
    %s84 = sphi 0, %s82
    %s85 = sphi 0, %s84
    %s99 = sphi 0, %s85
    %s103 = sphi 0, %s103
    %s105 = sphi 0, %s103
    %s106 = sphi 0, %s105
    %s120 = sphi 0, %s106
    %s124 = sphi 0, %s124
    %s126 = sphi 0, %s124
    %s127 = sphi 0, %s126
    %s141 = sphi 0, %s127
    %s145 = sphi 0, %s145
    %s147 = sphi 0, %s145
    %s148 = sphi 0, %s147
    %s162 = sphi 0, %s148
    %s166 = sphi 0, %s166
    %s168 = sphi 0, %s166
    %s169 = sphi 0, %s168
    %s183 = sphi 0, %s169
    %s191 = sphi 0, %s193
    %s194 = sphi 0, %s191
    %s195 = sphi 0, %s194
    %s211 = sphi 0, %s195
  $region4: #{transformer_forward.2} parent=0 // loop_header_branch
    %16 = sbr.rel (%p14) target = $region8
  $region5: #{transformer_forward.2} parent=0 // loop_body
    %s18 = ssub.s32 %s13, 1
    %s19 = ssub.s32 %s13, 2
    %s26 = sadd.s32 1, %s21
    %p27 = scmp.ge.s32.totalorder %s26, 2
    %s28 = scalar_select %p27, 0, %s26
    %s29 = sadd.s32 1, %s20
    %s30 = scalar_select %p27, %s29, %s20
    %p31 = scmp.ge.s32.totalorder %s30, 2
    %s32 = scalar_select %p31, 0, %s30
    %s33 = ssub.s32 %s20, %s32
    %s34 = ssub.s32 %s21, %s28
    %s35 = sor.u32 %s33, %s34
    %p36 = scmp.eq.s32.totalorder %s35, 0
    %s38 = sadd.s32 %s37, 1
    %s39 = scalar_select %p36, %s37, %s38
    %p42 = pneg %p36
    %p43 = scmp.eq.s32.totalorder %s13, 3
    %p44 = por %p42, %p43
    %p45 = scmp.ne.s32.totalorder %s37, %s40
    %p46 = scmp.eq.s32.totalorder %s13, 0
    %p47 = por %p45, %p46
    %p48 = scmp.ne.s32.totalorder %s37, %s40
    %p49 = scmp.eq.s32.totalorder %s18, 3
    %p50 = por %p48, %p49
    %p51 = scmp.ne.s32.totalorder %s40, %s41
    %p52 = scmp.eq.s32.totalorder %s18, 0
    %p53 = por %p51, %p52
    %p54 = scmp.ne.s32.totalorder %s40, %s41
    %p55 = scmp.eq.s32.totalorder %s19, 3
    %p56 = por %p54, %p55
    %p58 = scmp.ne.s32.totalorder %s41, %s57
    %p59 = scmp.eq.s32.totalorder %s19, 0
    %p60 = por %p58, %p59
    %s62 = sadd.s32 %s61, 1
    %p65 = scmp.eq.s32.totalorder %s13, 3
    %p66 = scmp.ne.s32.totalorder %s61, %s63
    %p67 = scmp.eq.s32.totalorder %s13, 0
    %p68 = por %p66, %p67
    %p69 = scmp.ne.s32.totalorder %s61, %s63
    %p70 = scmp.eq.s32.totalorder %s18, 3
    %p71 = por %p69, %p70
    %p72 = scmp.ne.s32.totalorder %s63, %s64
    %p73 = scmp.eq.s32.totalorder %s18, 0
    %p74 = por %p72, %p73
    %p75 = scmp.ne.s32.totalorder %s63, %s64
    %p76 = scmp.eq.s32.totalorder %s19, 3
    %p77 = por %p75, %p76
    %p79 = scmp.ne.s32.totalorder %s64, %s78
    %p80 = scmp.eq.s32.totalorder %s19, 0
    %p81 = por %p79, %p80
    %s83 = sadd.s32 %s82, 1
    %p86 = scmp.eq.s32.totalorder %s13, 3
    %p87 = scmp.ne.s32.totalorder %s82, %s84
    %p88 = scmp.eq.s32.totalorder %s13, 0
    %p89 = por %p87, %p88
    %p90 = scmp.ne.s32.totalorder %s82, %s84
    %p91 = scmp.eq.s32.totalorder %s18, 3
    %p92 = por %p90, %p91
    %p93 = scmp.ne.s32.totalorder %s84, %s85
    %p94 = scmp.eq.s32.totalorder %s18, 0
    %p95 = por %p93, %p94
    %p96 = scmp.ne.s32.totalorder %s84, %s85
    %p97 = scmp.eq.s32.totalorder %s19, 3
    %p98 = por %p96, %p97
    %p100 = scmp.ne.s32.totalorder %s85, %s99
    %p101 = scmp.eq.s32.totalorder %s19, 0
    %p102 = por %p100, %p101
    %s104 = sadd.s32 %s103, 1
    %p107 = scmp.eq.s32.totalorder %s13, 3
    %p108 = scmp.ne.s32.totalorder %s103, %s105
    %p109 = scmp.eq.s32.totalorder %s13, 0
    %p110 = por %p108, %p109
    %p111 = scmp.ne.s32.totalorder %s103, %s105
    %p112 = scmp.eq.s32.totalorder %s18, 3
    %p113 = por %p111, %p112
    %p114 = scmp.ne.s32.totalorder %s105, %s106
    %p115 = scmp.eq.s32.totalorder %s18, 0
    %p116 = por %p114, %p115
    %p117 = scmp.ne.s32.totalorder %s105, %s106
    %p118 = scmp.eq.s32.totalorder %s19, 3
    %p119 = por %p117, %p118
    %p121 = scmp.ne.s32.totalorder %s106, %s120
    %p122 = scmp.eq.s32.totalorder %s19, 0
    %p123 = por %p121, %p122
    %s125 = sadd.s32 %s124, 1
    %p128 = scmp.eq.s32.totalorder %s13, 3
    %p129 = scmp.ne.s32.totalorder %s124, %s126
    %p130 = scmp.eq.s32.totalorder %s13, 0
    %p131 = por %p129, %p130
    %p132 = scmp.ne.s32.totalorder %s124, %s126
    %p133 = scmp.eq.s32.totalorder %s18, 3
    %p134 = por %p132, %p133
    %p135 = scmp.ne.s32.totalorder %s126, %s127
    %p136 = scmp.eq.s32.totalorder %s18, 0
    %p137 = por %p135, %p136
    %p138 = scmp.ne.s32.totalorder %s126, %s127
    %p139 = scmp.eq.s32.totalorder %s19, 3
    %p140 = por %p138, %p139
    %p142 = scmp.ne.s32.totalorder %s127, %s141
    %p143 = scmp.eq.s32.totalorder %s19, 0
    %p144 = por %p142, %p143
    %s146 = sadd.s32 %s145, 1
    %p149 = scmp.eq.s32.totalorder %s13, 3
    %p150 = scmp.ne.s32.totalorder %s145, %s147
    %p151 = scmp.eq.s32.totalorder %s13, 0
    %p152 = por %p150, %p151
    %p153 = scmp.ne.s32.totalorder %s145, %s147
    %p154 = scmp.eq.s32.totalorder %s18, 3
    %p155 = por %p153, %p154
    %p156 = scmp.ne.s32.totalorder %s147, %s148
    %p157 = scmp.eq.s32.totalorder %s18, 0
    %p158 = por %p156, %p157
    %p159 = scmp.ne.s32.totalorder %s147, %s148
    %p160 = scmp.eq.s32.totalorder %s19, 3
    %p161 = por %p159, %p160
    %p163 = scmp.ne.s32.totalorder %s148, %s162
    %p164 = scmp.eq.s32.totalorder %s19, 0
    %p165 = por %p163, %p164
    %s167 = sadd.s32 %s166, 1
    %p170 = scmp.eq.s32.totalorder %s13, 3
    %p171 = scmp.ne.s32.totalorder %s166, %s168
    %p172 = scmp.eq.s32.totalorder %s13, 0
    %p173 = por %p171, %p172
    %p174 = scmp.ne.s32.totalorder %s166, %s168
    %p175 = scmp.eq.s32.totalorder %s18, 3
    %p176 = por %p174, %p175
    %p177 = scmp.ne.s32.totalorder %s168, %s169
    %p178 = scmp.eq.s32.totalorder %s18, 0
    %p179 = por %p177, %p178
    %p180 = scmp.ne.s32.totalorder %s168, %s169
    %p181 = scmp.eq.s32.totalorder %s19, 3
    %p182 = por %p180, %p181
    %p184 = scmp.ne.s32.totalorder %s169, %s183
    %p185 = scmp.eq.s32.totalorder %s19, 0
    %p186 = por %p184, %p185
    %s187 = ssub.s32 %s20, %s32
    %s188 = ssub.s32 %s21, %s28
    %s189 = sor.u32 %s187, %s188
    %p190 = scmp.eq.s32.totalorder %s189, 0
    %s192 = sadd.s32 %s191, 1
    %s193 = scalar_select %p190, %s191, %s192
    %p196 = pneg %p190
    %p197 = scmp.eq.s32.totalorder %s13, 3
    %p198 = por %p196, %p197
    %p199 = scmp.ne.s32.totalorder %s191, %s194
    %p200 = scmp.eq.s32.totalorder %s13, 0
    %p201 = por %p199, %p200
    %p202 = scmp.ne.s32.totalorder %s191, %s194
    %p203 = scmp.eq.s32.totalorder %s18, 3
    %p204 = por %p202, %p203
    %p205 = scmp.ne.s32.totalorder %s194, %s195
    %p206 = scmp.eq.s32.totalorder %s18, 0
    %p207 = por %p205, %p206
    %p208 = scmp.ne.s32.totalorder %s194, %s195
    %p209 = scmp.eq.s32.totalorder %s19, 3
    %p210 = por %p208, %p209
    %p212 = scmp.ne.s32.totalorder %s195, %s211
    %p213 = scmp.eq.s32.totalorder %s19, 0
    %p214 = por %p212, %p213
    %p215 = scmp.le.s32.totalorder 1, %s13
    %p216 = scmp.lt.s32.totalorder %s13, 5
    %p217 = pnand %p215, %p216
    %p218 = pneg %p217
    // Predicated region
    $region9: #{transformer_forward.2} parent=5 // pred_check
      _
    $region10: #{transformer_forward.2} parent=5 // pred_check_branch
      %220 = sbr.rel (%p217) target = $region12
    $region11: #{transformer_forward.2} parent=5 // pred_region
      %s221 = ssub.s32 %s13, 1
      // Predicated region
      $region13: #{transformer_forward.2} parent=11 // pred_check
        %p222 = pneg %p74
      $region14: #{transformer_forward.2} parent=11 // pred_check_branch
        %224 = sbr.rel (%p222) target = $region16
      $region15: #{transformer_forward.2} parent=11 // pred_region
        _
      $region16: #{transformer_forward.2} parent=11 // pred_fallthru
        _
      // Predicated region
      $region17: #{transformer_forward.2} parent=11 // pred_check
        %p225 = pneg %p95
      $region18: #{transformer_forward.2} parent=11 // pred_check_branch
        %227 = sbr.rel (%p225) target = $region20
      $region19: #{transformer_forward.2} parent=11 // pred_region
        _
      $region20: #{transformer_forward.2} parent=11 // pred_fallthru
        _
      // Predicated region
      $region21: #{transformer_forward.2} parent=11 // pred_check
        %p228 = pneg %p116
      $region22: #{transformer_forward.2} parent=11 // pred_check_branch
        %230 = sbr.rel (%p228) target = $region24
      $region23: #{transformer_forward.2} parent=11 // pred_region
        _
      $region24: #{transformer_forward.2} parent=11 // pred_fallthru
        _
      // Predicated region
      $region25: #{transformer_forward.2} parent=11 // pred_check
        %p231 = pneg %p137
      $region26: #{transformer_forward.2} parent=11 // pred_check_branch
        %233 = sbr.rel (%p231) target = $region28
      $region27: #{transformer_forward.2} parent=11 // pred_region
        _
      $region28: #{transformer_forward.2} parent=11 // pred_fallthru
        _
      // Predicated region
      $region29: #{transformer_forward.2} parent=11 // pred_check
        %p234 = pneg %p158
      $region30: #{transformer_forward.2} parent=11 // pred_check_branch
        %236 = sbr.rel (%p234) target = $region32
      $region31: #{transformer_forward.2} parent=11 // pred_region
        _
      $region32: #{transformer_forward.2} parent=11 // pred_fallthru
        _
      // Predicated region
      $region33: #{transformer_forward.2} parent=11 // pred_check
        %p237 = pneg %p179
      $region34: #{transformer_forward.2} parent=11 // pred_check_branch
        %239 = sbr.rel (%p237) target = $region36
      $region35: #{transformer_forward.2} parent=11 // pred_region
        _
      $region36: #{transformer_forward.2} parent=11 // pred_fallthru
        _
    $region12: #{transformer_forward.2} parent=5 // pred_fallthru
      _
    %p240 = scmp.lt.s32.totalorder %s13, 4
    // Predicated region
    $region37: #{transformer_forward.2} parent=5 // pred_check
      %p241 = pneg %p240
    $region38: #{transformer_forward.2} parent=5 // pred_check_branch
      %243 = sbr.rel (%p241) target = $region40
    $region39: #{transformer_forward.2} parent=5 // pred_region
      // Predicated region
      $region41: #{transformer_forward.2} parent=39 // pred_check
        %p244 = pneg %p47
      $region42: #{transformer_forward.2} parent=39 // pred_check_branch
        %246 = sbr.rel (%p244) target = $region44
      $region43: #{transformer_forward.2} parent=39 // pred_region
        %s247 = smul.u32 8, %s21
        %p248 = scmp.lt.s32.totalorder %s20, 1
        %s249 = scalar_select %p248, %s20, 1
        %p250 = scmp.lt.s32.totalorder %s247, 15
        %s251 = scalar_select %p250, %s247, 15
        %s252 = smul.addr %s251, 2
        %s253 = smul.addr %s249, 32
        %s254 = sadd.s32 %s252, %s253
        %s255 = smul.addr %s254, 8
        %s256 = scalar_lea.vmem %s0, %s255
        %s257 = smul.u32 8, %s21
      $region44: #{transformer_forward.2} parent=39 // pred_fallthru
        _
    $region40: #{transformer_forward.2} parent=5 // pred_fallthru
      _
    %p258 = scmp.le.s32.totalorder 1, %s13
    %p259 = scmp.lt.s32.totalorder %s13, 5
    %p260 = pnand %p258, %p259
    %p261 = pneg %p260
    // Predicated region
    $region45: #{transformer_forward.2} parent=5 // pred_check
      _
    $region46: #{transformer_forward.2} parent=5 // pred_check_branch
      %263 = sbr.rel (%p260) target = $region48
    $region47: #{transformer_forward.2} parent=5 // pred_region
      %s264 = ssub.s32 %s13, 1
      %s265 = smul.u32 8, %s23
      %p266 = scmp.lt.s32.totalorder %s22, 1
      %s267 = scalar_select %p266, %s22, 1
      %p268 = scmp.lt.s32.totalorder %s265, 15
      %s269 = scalar_select %p268, %s265, 15
      %s270 = smul.addr %s269, 2
      %s271 = smul.addr %s267, 32
      %s272 = sadd.s32 %s270, %s271
      %s273 = smul.addr %s272, 8
      %s274 = scalar_lea.vmem %s0, %s273
      %p275 = pneg %p53
      %p276 = pneg %p50
      %p277 = pneg %p74
      %p278 = pneg %p71
      %p279 = pneg %p95
      %p280 = pneg %p92
      %p281 = pneg %p116
      %p282 = pneg %p113
      %p283 = pneg %p137
      %p284 = pneg %p134
      %p285 = pneg %p158
      %p286 = pneg %p155
      %p287 = pneg %p179
      %p288 = pneg %p176
      %p289 = pneg %p207
      %p290 = pneg %p204
      %s291 = smul.u32 8, %s23
      %p292 = scmp.lt.s32.totalorder %s22, 1
      %s293 = scalar_select %p292, %s22, 1
      %p294 = scmp.lt.s32.totalorder %s291, 15
      %s295 = scalar_select %p294, %s291, 15
      %s296 = smul.addr %s295, 2
      %s297 = smul.addr %s293, 32
      %s298 = sadd.s32 %s296, %s297
      %s299 = smul.addr %s298, 8
      %s300 = scalar_lea.vmem %s7, %s299
      %s301 = smul.u32 8, %s23
      %p302 = scmp.lt.s32.totalorder %s22, 1
      %s303 = scalar_select %p302, %s22, 1
      %p304 = scmp.lt.s32.totalorder %s301, 15
      %s305 = scalar_select %p304, %s301, 15
      %s306 = smul.addr %s305, 2
      %s307 = smul.addr %s303, 32
      %s308 = sadd.s32 %s306, %s307
      %s309 = smul.addr %s308, 8
      %s310 = scalar_lea.vmem %s0, %s309
      %s311 = smul.u32 8, %s23
      %s312 = smul.u32 8, %s23
      %p313 = scmp.lt.s32.totalorder %s22, 1
      %s314 = scalar_select %p313, %s22, 1
      %p315 = scmp.lt.s32.totalorder %s312, 15
      %s316 = scalar_select %p315, %s312, 15
      %s317 = smul.addr %s316, 2
      %s318 = smul.addr %s314, 32
      %s319 = sadd.s32 %s317, %s318
      %s320 = smul.addr %s319, 8
      %s321 = scalar_lea.vmem %s7, %s320
      %s322 = smul.u32 8, %s23
      %v324 = vld [vmem:[%s310] sm:$0xff]
      %v325 = vld [vmem:[%s310 + $0x8] sm:$0xff]
      %v326 = vld [vmem:[%s310 + $0x10] sm:$0xff]
      %v327 = vld [vmem:[%s310 + $0x18] sm:$0xff]
      %v328 = vld [vmem:[%s310 + $0x20] sm:$0xff]
      %v329 = vld [vmem:[%s310 + $0x28] sm:$0xff]
      %v330 = vld [vmem:[%s310 + $0x30] sm:$0xff]
      %v331 = vld [vmem:[%s310 + $0x38] sm:$0xff]
      %v332 = vld [vmem:[%s310 + $0x40] sm:$0xff]
      %v333 = vld [vmem:[%s310 + $0x48] sm:$0xff]
      %v334 = vld [vmem:[%s310 + $0x50] sm:$0xff]
      %v335 = vld [vmem:[%s310 + $0x58] sm:$0xff]
      %v336 = vld [vmem:[%s310 + $0x60] sm:$0xff]
      %v337 = vld [vmem:[%s310 + $0x68] sm:$0xff]
      %v338 = vld [vmem:[%s310 + $0x70] sm:$0xff]
      %v339 = vld [vmem:[%s310 + $0x78] sm:$0xff]
      %v340 = vld [vmem:[%s1] sm:$0x1]
      %v341 = vld [vmem:[%s2] sm:$0x1]
      %v342 = vld [vmem:[%s3] sm:$0xf]
      %v343 = vld [vmem:[%s3 + $0x4] sm:$0xf]
      %v344 = vld [vmem:[%s4] sm:$0x1]
      %v345 = vld [vmem:[%s5] sm:$0xf]
      %v346 = vld [vmem:[%s5 + $0x4] sm:$0xf]
      %v347 = vld [vmem:[%s6] sm:$0x1]
      %vm348 = vcmask 130048
      %v349 = vsel %vm348, %v324, 0.0
      %350 = vadd.xlane.f32.xlu0 %v349
      %v351 = vpop.xlane.xlu0 %350
      %v352 = vsel %vm348, %v326, 0.0
      %353 = vadd.xlane.f32.xlu0 %v352
      %v354 = vpop.xlane.xlu0 %353
      %v355 = vsel %vm348, %v328, 0.0
      %356 = vadd.xlane.f32.xlu0 %v355
      %v357 = vpop.xlane.xlu0 %356
      %v358 = vsel %vm348, %v330, 0.0
      %359 = vadd.xlane.f32.xlu0 %v358
      %v360 = vpop.xlane.xlu0 %359
      %v361 = vsel %vm348, %v332, 0.0
      %362 = vadd.xlane.f32.xlu0 %v361
      %v363 = vpop.xlane.xlu0 %362
      %v364 = vsel %vm348, %v334, 0.0
      %365 = vadd.xlane.f32.xlu0 %v364
      %v366 = vpop.xlane.xlu0 %365
      %v367 = vsel %vm348, %v336, 0.0
      %368 = vadd.xlane.f32.xlu0 %v367
      %v369 = vpop.xlane.xlu0 %368
      %v370 = vsel %vm348, %v338, 0.0
      %371 = vadd.xlane.f32.xlu0 %v370
      %v372 = vpop.xlane.xlu0 %371
      %v373 = vrcp.pop 16.0
      %v374 = vmul.f32 %v351, %v373
      %v375 = vmul.f32 %v354, %v373
      %v376 = vmul.f32 %v357, %v373
      %v377 = vmul.f32 %v360, %v373
      %v378 = vmul.f32 %v363, %v373
      %v379 = vmul.f32 %v366, %v373
      %v380 = vmul.f32 %v369, %v373
      %v381 = vmul.f32 %v372, %v373
      %v382 = vsub.f32 %v324, %v374
      %v383 = vsub.f32 %v326, %v375
      %v384 = vsub.f32 %v328, %v376
      %v385 = vsub.f32 %v330, %v377
      %v386 = vsub.f32 %v332, %v378
      %v387 = vsub.f32 %v334, %v379
      %v388 = vsub.f32 %v336, %v380
      %v389 = vsub.f32 %v338, %v381
      %v390 = vmul.f32 %v382, %v382
      %v391 = vmul.f32 %v383, %v383
      %v392 = vmul.f32 %v384, %v384
      %v393 = vmul.f32 %v385, %v385
      %v394 = vmul.f32 %v386, %v386
      %v395 = vmul.f32 %v387, %v387
      %v396 = vmul.f32 %v388, %v388
      %v397 = vmul.f32 %v389, %v389
      %v398 = vsel %vm348, %v390, 0.0
      %399 = vadd.xlane.f32.xlu0 %v398
      %v400 = vpop.xlane.xlu0 %399
      %v401 = vsel %vm348, %v391, 0.0
      %402 = vadd.xlane.f32.xlu0 %v401
      %v403 = vpop.xlane.xlu0 %402
      %v404 = vsel %vm348, %v392, 0.0
      %405 = vadd.xlane.f32.xlu0 %v404
      %v406 = vpop.xlane.xlu0 %405
      %v407 = vsel %vm348, %v393, 0.0
      %408 = vadd.xlane.f32.xlu0 %v407
      %v409 = vpop.xlane.xlu0 %408
      %v410 = vsel %vm348, %v394, 0.0
      %411 = vadd.xlane.f32.xlu0 %v410
      %v412 = vpop.xlane.xlu0 %411
      %v413 = vsel %vm348, %v395, 0.0
      %414 = vadd.xlane.f32.xlu0 %v413
      %v415 = vpop.xlane.xlu0 %414
      %v416 = vsel %vm348, %v396, 0.0
      %417 = vadd.xlane.f32.xlu0 %v416
      %v418 = vpop.xlane.xlu0 %417
      %v419 = vsel %vm348, %v397, 0.0
      %420 = vadd.xlane.f32.xlu0 %v419
      %v421 = vpop.xlane.xlu0 %420
      %v422 = vmul.f32 %v400, %v373
      %v423 = vmul.f32 %v403, %v373
      %v424 = vmul.f32 %v406, %v373
      %v425 = vmul.f32 %v409, %v373
      %v426 = vmul.f32 %v412, %v373
      %v427 = vmul.f32 %v415, %v373
      %v428 = vmul.f32 %v418, %v373
      %v429 = vmul.f32 %v421, %v373
      %v430 = vadd.f32 %v422, 1e-05
      %v431 = vadd.f32 %v423, 1e-05
      %v432 = vadd.f32 %v424, 1e-05
      %v433 = vadd.f32 %v425, 1e-05
      %v434 = vadd.f32 %v426, 1e-05
      %v435 = vadd.f32 %v427, 1e-05
      %v436 = vadd.f32 %v428, 1e-05
      %v437 = vadd.f32 %v429, 1e-05
      %v438 = vrsqrt.pop %v430
      %v439 = vrsqrt.pop %v431
      %v440 = vrsqrt.pop %v432
      %v441 = vrsqrt.pop %v433
      %v442 = vrsqrt.pop %v434
      %v443 = vrsqrt.pop %v435
      %v444 = vrsqrt.pop %v436
      %v445 = vrsqrt.pop %v437
      %v446 = vmul.f32 %v382, %v438
      %v447 = vmul.f32 %v383, %v439
      %v448 = vmul.f32 %v384, %v440
      %v449 = vmul.f32 %v385, %v441
      %v450 = vmul.f32 %v386, %v442
      %v451 = vmul.f32 %v387, %v443
      %v452 = vmul.f32 %v388, %v444
      %v453 = vmul.f32 %v389, %v445
      %v455 = vlaneseq
      %v456 = vshrl.u32 %v455, 7
      %v457 = vsub.s32 0, %v456
      %v458 = vrot.slane %v340, %v457
      %v460 = vmul.f32 %v446, %v458
      %v461 = vmul.f32 %v447, %v458
      %v462 = vmul.f32 %v448, %v458
      %v463 = vmul.f32 %v449, %v458
      %v464 = vmul.f32 %v450, %v458
      %v465 = vmul.f32 %v451, %v458
      %v466 = vmul.f32 %v452, %v458
      %v467 = vmul.f32 %v453, %v458
      %v469 = vlaneseq
      %v470 = vshrl.u32 %v469, 7
      %v471 = vsub.s32 0, %v470
      %v472 = vrot.slane %v341, %v471
      %v474 = vadd.f32 %v460, %v472
      %v475 = vadd.f32 %v461, %v472
      %v476 = vadd.f32 %v462, %v472
      %v477 = vadd.f32 %v463, %v472
      %v478 = vadd.f32 %v464, %v472
      %v479 = vadd.f32 %v465, %v472
      %v480 = vadd.f32 %v466, %v472
      %v481 = vadd.f32 %v467, %v472
      %v482 = vpack.c.bf16 %v475, %v474
      %v483 = vpack.c.bf16 %v477, %v476
      %v484 = vpack.c.bf16 %v479, %v478
      %v485 = vpack.c.bf16 %v481, %v480
      %v487 = vlaneseq
      %v488 = vshrl.u32 %v487, 7
      %v489 = vsub.s32 0, %v488
      %v490 = vrot.slane %v344, %v489
      %v494 = vunpack.c.l.b16 %v342
      %v495 = vunpack.c.l.b16 %v343
      %v496 = vpack.c.b16 %v495, %v494
      %v499 = vsel %vm348, %v482, 0
      %v502 = vsel %vm348, %v483, 0
      %v505 = vsel %vm348, %v484, 0
      %v508 = vsel %vm348, %v485, 0
      %510 = vmatprep.subr.bf16.mxu0 0
      %511 = vmatpush1.bf16.msra.mxu0 0
      %512 = vmatprep.subr.bf16.mxu0 0
      %513 = vmatpush1.bf16.msra.mxu0 0
      %514 = vmatprep.subr.bf16.mxu0 0
      %515 = vmatpush1.bf16.msra.mxu0 0
      %516 = vmatprep.subr.bf16.mxu0 0
      %517 = vmatpush1.bf16.msra.mxu0 0
      %518 = vmatprep.subr.bf16.mxu0 0
      %519 = vmatpush1.bf16.msra.mxu0 0
      %520 = vmatprep.subr.bf16.mxu0 0
      %521 = vmatpush1.bf16.msra.mxu0 0
      %522 = vmatprep.subr.bf16.mxu0 0
      %523 = vmatpush1.bf16.msra.mxu0 0
      %524 = vmatprep.subr.bf16.mxu0 0
      %525 = vmatpush1.bf16.msra.mxu0 %v496
      %526 = vmatprep.subr.bf16.mxu0 0
      %527 = vmatpush2.bf16.msra.mxu0 0
      %528 = vmatprep.subr.bf16.mxu0 0
      %529 = vmatpush2.bf16.msra.mxu0 0
      %530 = vmatprep.subr.bf16.mxu0 0
      %531 = vmatpush2.bf16.msra.mxu0 0
      %532 = vmatprep.subr.bf16.mxu0 0
      %533 = vmatpush2.bf16.msra.mxu0 0
      %534 = vmatprep.subr.bf16.mxu0 0
      %535 = vmatpush2.bf16.msra.mxu0 0
      %536 = vmatprep.subr.bf16.mxu0 0
      %537 = vmatpush2.bf16.msra.mxu0 0
      %538 = vmatprep.subr.bf16.mxu0 0
      %539 = vmatpush2.bf16.msra.mxu0 0
      %540 = vmatprep.subr.bf16.mxu0 0
      %541 = vmatpush2.bf16.msra.mxu0 0
      %542 = vmatprep.mubr.bf16.mxu0 0
      %543 = vmatmul.mubr.bf16.gmra.mxu0 %v499
      %v544 = vpop.f32.mrf.mxu0
      %v545 = vadd.f32 %v490, %v544
      %v546 = vpop.f32.mrf.mxu0
      %v547 = vpop.f32.mrf.mxu0
      %v548 = vadd.f32 %v490, %v547
      %v549 = vpop.f32.mrf.mxu0
      %550 = vmatprep.mubr.bf16.mxu0 0
      %551 = vmatmul.mubr.bf16.gmra.mxu0 %v502
      %v552 = vpop.f32.mrf.mxu0
      %v553 = vadd.f32 %v490, %v552
      %v554 = vpop.f32.mrf.mxu0
      %v555 = vpop.f32.mrf.mxu0
      %v556 = vadd.f32 %v490, %v555
      %v557 = vpop.f32.mrf.mxu0
      %558 = vmatprep.mubr.bf16.mxu0 0
      %559 = vmatmul.mubr.bf16.gmra.mxu0 %v505
      %v560 = vpop.f32.mrf.mxu0
      %v561 = vadd.f32 %v490, %v560
      %v562 = vpop.f32.mrf.mxu0
      %v563 = vpop.f32.mrf.mxu0
      %v564 = vadd.f32 %v490, %v563
      %v565 = vpop.f32.mrf.mxu0
      %566 = vmatprep.mubr.bf16.mxu0 0
      %567 = vmatmul.mubr.bf16.gmra.mxu0 %v508
      %v568 = vpop.f32.mrf.mxu0
      %v569 = vadd.f32 %v490, %v568
      %v570 = vpop.f32.mrf.mxu0
      %v571 = vpop.f32.mrf.mxu0
      %v572 = vadd.f32 %v490, %v571
      %v573 = vpop.f32.mrf.mxu0
      %574 = vdwg.mxu0
      %v576 = vlaneseq
      %v577 = vshrl.u32 %v576, 7
      %v578 = vsub.s32 0, %v577
      %v579 = vrot.slane %v347, %v578
      %v581 = vadd.f32 %v324, %v579
      %v582 = vadd.f32 %v326, %v579
      %v583 = vadd.f32 %v328, %v579
      %v584 = vadd.f32 %v330, %v579
      %v585 = vadd.f32 %v332, %v579
      %v586 = vadd.f32 %v334, %v579
      %v587 = vadd.f32 %v336, %v579
      %v588 = vadd.f32 %v338, %v579
      %v589 = vpack.c.bf16 %v548, %v545
      %v590 = vpack.c.bf16 %v556, %v553
      %v591 = vpack.c.bf16 %v564, %v561
      %v592 = vpack.c.bf16 %v572, %v569
      %597 = vrot.lane.b32.xlu0 %v589, 112
      %v598 = vpop.permute.xlu0 %597
      %599 = vrot.lane.b32.xlu0 %v590, 112
      %v600 = vpop.permute.xlu0 %599
      %601 = vrot.lane.b32.xlu0 %v591, 112
      %v602 = vpop.permute.xlu0 %601
      %603 = vrot.lane.b32.xlu0 %v592, 112
      %v604 = vpop.permute.xlu0 %603
      %vm605 = vcmask 31744
      %v607 = vsel %vm605, %v589, 0
      %v610 = vsel %vm605, %v590, 0
      %v613 = vsel %vm605, %v591, 0
      %v616 = vsel %vm605, %v592, 0
      %v619 = vsel %vm605, %v598, 0
      %v622 = vsel %vm605, %v600, 0
      %v625 = vsel %vm605, %v602, 0
      %v628 = vsel %vm605, %v604, 0
      %630 = vmatprep.subr.bf16.mxu0 0
      %631 = vmatpush1.bf16.xpose.msra.mxu0 0
      %632 = vmatprep.subr.bf16.mxu0 0
      %633 = vmatpush1.bf16.xpose.msra.mxu0 0
      %634 = vmatprep.subr.bf16.mxu0 0
      %635 = vmatpush1.bf16.xpose.msra.mxu0 0
      %636 = vmatprep.subr.bf16.mxu0 0
      %637 = vmatpush1.bf16.xpose.msra.mxu0 0
      %638 = vmatprep.subr.bf16.mxu0 0
      %639 = vmatpush1.bf16.xpose.msra.mxu0 %v628
      %640 = vmatprep.subr.bf16.mxu0 0
      %641 = vmatpush1.bf16.xpose.msra.mxu0 %v625
      %642 = vmatprep.subr.bf16.mxu0 0
      %643 = vmatpush1.bf16.xpose.msra.mxu0 %v622
      %644 = vmatprep.subr.bf16.mxu0 0
      %645 = vmatpush1.bf16.xpose.msra.mxu0 %v619
      %646 = vmatprep.subr.bf16.mxu0 0
      %647 = vmatpush2.bf16.xpose.msra.mxu0 0
      %648 = vmatprep.subr.bf16.mxu0 0
      %649 = vmatpush2.bf16.xpose.msra.mxu0 0
      %650 = vmatprep.subr.bf16.mxu0 0
      %651 = vmatpush2.bf16.xpose.msra.mxu0 0
      %652 = vmatprep.subr.bf16.mxu0 0
      %653 = vmatpush2.bf16.xpose.msra.mxu0 0
      %654 = vmatprep.subr.bf16.mxu0 0
      %655 = vmatpush2.bf16.xpose.msra.mxu0 0
      %656 = vmatprep.subr.bf16.mxu0 0
      %657 = vmatpush2.bf16.xpose.msra.mxu0 0
      %658 = vmatprep.subr.bf16.mxu0 0
      %659 = vmatpush2.bf16.xpose.msra.mxu0 0
      %660 = vmatprep.subr.bf16.mxu0 0
      %661 = vmatpush2.bf16.xpose.msra.mxu0 0
      %662 = vmatprep.mubr.bf16.mxu0 0
      %663 = vmatmul.mubr.bf16.gmra.mxu0 %v607
      %v664 = vpop.f32.mrf.mxu0
      %v665 = vadd.f32 0.0, %v664
      %v666 = vpop.f32.mrf.mxu0
      %v667 = vpop.f32.mrf.mxu0
      %v668 = vadd.f32 0.0, %v667
      %v669 = vpop.f32.mrf.mxu0
      %670 = vmatprep.mubr.bf16.mxu0 0
      %671 = vmatmul.mubr.bf16.gmra.mxu0 %v610
      %v672 = vpop.f32.mrf.mxu0
      %v673 = vadd.f32 0.0, %v672
      %v674 = vpop.f32.mrf.mxu0
      %v675 = vpop.f32.mrf.mxu0
      %v676 = vadd.f32 0.0, %v675
      %v677 = vpop.f32.mrf.mxu0
      %678 = vmatprep.mubr.bf16.mxu0 0
      %679 = vmatmul.mubr.bf16.gmra.mxu0 %v613
      %v680 = vpop.f32.mrf.mxu0
      %v681 = vadd.f32 0.0, %v680
      %v682 = vpop.f32.mrf.mxu0
      %v683 = vpop.f32.mrf.mxu0
      %v684 = vadd.f32 0.0, %v683
      %v685 = vpop.f32.mrf.mxu0
      %686 = vmatprep.mubr.bf16.mxu0 0
      %687 = vmatmul.mubr.bf16.gmra.mxu0 %v616
      %v688 = vpop.f32.mrf.mxu0
      %v689 = vadd.f32 0.0, %v688
      %v690 = vpop.f32.mrf.mxu0
      %v691 = vpop.f32.mrf.mxu0
      %v692 = vadd.f32 0.0, %v691
      %v693 = vpop.f32.mrf.mxu0
      %694 = vdwg.mxu0
      %v695 = vmul.f32 %v665, 0.5
      %v696 = vmul.f32 %v668, 0.5
      %v697 = vmul.f32 %v673, 0.5
      %v698 = vmul.f32 %v676, 0.5
      %v699 = vmul.f32 %v681, 0.5
      %v700 = vmul.f32 %v684, 0.5
      %v701 = vmul.f32 %v689, 0.5
      %v702 = vmul.f32 %v692, 0.5
      %vm703 = vcmask 523264
      %v704 = vsel %vm703, %v695, -inf
      %705 = vmax.xlane.f32.xlu0 %v704
      %v706 = vpop.xlane.xlu0 %705
      %v707 = vsel %vm703, %v696, -inf
      %708 = vmax.xlane.f32.xlu0 %v707
      %v709 = vpop.xlane.xlu0 %708
      %v710 = vsel %vm703, %v697, -inf
      %711 = vmax.xlane.f32.xlu0 %v710
      %v712 = vpop.xlane.xlu0 %711
      %v713 = vsel %vm703, %v698, -inf
      %714 = vmax.xlane.f32.xlu0 %v713
      %v715 = vpop.xlane.xlu0 %714
      %v716 = vsel %vm703, %v699, -inf
      %717 = vmax.xlane.f32.xlu0 %v716
      %v718 = vpop.xlane.xlu0 %717
      %v719 = vsel %vm703, %v700, -inf
      %720 = vmax.xlane.f32.xlu0 %v719
      %v721 = vpop.xlane.xlu0 %720
      %v722 = vsel %vm703, %v701, -inf
      %723 = vmax.xlane.f32.xlu0 %v722
      %v724 = vpop.xlane.xlu0 %723
      %v725 = vsel %vm703, %v702, -inf
      %726 = vmax.xlane.f32.xlu0 %v725
      %v727 = vpop.xlane.xlu0 %726
      %v728 = vsub.f32 %v695, %v706
      %v729 = vsub.f32 %v696, %v709
      %v730 = vsub.f32 %v697, %v712
      %v731 = vsub.f32 %v698, %v715
      %v732 = vsub.f32 %v699, %v718
      %v733 = vsub.f32 %v700, %v721
      %v734 = vsub.f32 %v701, %v724
      %v735 = vsub.f32 %v702, %v727
      %v736 = vmul.f32 %v728, 1.442695
      %v737 = vpow.pop %v736
      %v738 = vmul.f32 %v729, 1.442695
      %v739 = vpow.pop %v738
      %v740 = vmul.f32 %v730, 1.442695
      %v741 = vpow.pop %v740
      %v742 = vmul.f32 %v731, 1.442695
      %v743 = vpow.pop %v742
      %v744 = vmul.f32 %v732, 1.442695
      %v745 = vpow.pop %v744
      %v746 = vmul.f32 %v733, 1.442695
      %v747 = vpow.pop %v746
      %v748 = vmul.f32 %v734, 1.442695
      %v749 = vpow.pop %v748
      %v750 = vmul.f32 %v735, 1.442695
      %v751 = vpow.pop %v750
      %v752 = vsel %vm703, %v737, 0.0
      %753 = vadd.xlane.f32.xlu0 %v752
      %v754 = vpop.xlane.xlu0 %753
      %v755 = vsel %vm703, %v739, 0.0
      %756 = vadd.xlane.f32.xlu0 %v755
      %v757 = vpop.xlane.xlu0 %756
      %v758 = vsel %vm703, %v741, 0.0
      %759 = vadd.xlane.f32.xlu0 %v758
      %v760 = vpop.xlane.xlu0 %759
      %v761 = vsel %vm703, %v743, 0.0
      %762 = vadd.xlane.f32.xlu0 %v761
      %v763 = vpop.xlane.xlu0 %762
      %v764 = vsel %vm703, %v745, 0.0
      %765 = vadd.xlane.f32.xlu0 %v764
      %v766 = vpop.xlane.xlu0 %765
      %v767 = vsel %vm703, %v747, 0.0
      %768 = vadd.xlane.f32.xlu0 %v767
      %v769 = vpop.xlane.xlu0 %768
      %v770 = vsel %vm703, %v749, 0.0
      %771 = vadd.xlane.f32.xlu0 %v770
      %v772 = vpop.xlane.xlu0 %771
      %v773 = vsel %vm703, %v751, 0.0
      %774 = vadd.xlane.f32.xlu0 %v773
      %v775 = vpop.xlane.xlu0 %774
      %v776 = vrcp.pop %v754
      %v777 = vrcp.pop %v757
      %v778 = vrcp.pop %v760
      %v779 = vrcp.pop %v763
      %v780 = vrcp.pop %v766
      %v781 = vrcp.pop %v769
      %v782 = vrcp.pop %v772
      %v783 = vrcp.pop %v775
      %v784 = vmul.f32 %v737, %v776
      %v785 = vmul.f32 %v739, %v777
      %v786 = vmul.f32 %v741, %v778
      %v787 = vmul.f32 %v743, %v779
      %v788 = vmul.f32 %v745, %v780
      %v789 = vmul.f32 %v747, %v781
      %v790 = vmul.f32 %v749, %v782
      %v791 = vmul.f32 %v751, %v783
      %v792 = vpack.c.bf16 %v785, %v784
      %v793 = vpack.c.bf16 %v787, %v786
      %v794 = vpack.c.bf16 %v789, %v788
      %v795 = vpack.c.bf16 %v791, %v790
      %796 = vrot.lane.b32.xlu0 %v589, 96
      %v797 = vpop.permute.xlu0 %796
      %798 = vrot.lane.b32.xlu0 %v590, 96
      %v799 = vpop.permute.xlu0 %798
      %800 = vrot.lane.b32.xlu0 %v591, 96
      %v801 = vpop.permute.xlu0 %800
      %802 = vrot.lane.b32.xlu0 %v592, 96
      %v803 = vpop.permute.xlu0 %802
      %v809 = vsel %vm703, %v792, 0
      %v812 = vsel %vm703, %v793, 0
      %v815 = vsel %vm703, %v794, 0
      %v818 = vsel %vm703, %v795, 0
      %820 = vmatprep.subr.bf16.mxu0 0
      %821 = vmatpush1.bf16.msra.mxu0 0
      %822 = vmatprep.subr.bf16.mxu0 0
      %823 = vmatpush1.bf16.msra.mxu0 0
      %824 = vmatprep.subr.bf16.mxu0 0
      %825 = vmatpush1.bf16.msra.mxu0 0
      %826 = vmatprep.subr.bf16.mxu0 0
      %827 = vmatpush1.bf16.msra.mxu0 0
      %828 = vmatprep.subr.bf16.mxu0 0
      %829 = vmatpush1.bf16.msra.mxu0 %v803
      %830 = vmatprep.subr.bf16.mxu0 0
      %831 = vmatpush1.bf16.msra.mxu0 %v801
      %832 = vmatprep.subr.bf16.mxu0 0
      %833 = vmatpush1.bf16.msra.mxu0 %v799
      %834 = vmatprep.subr.bf16.mxu0 0
      %835 = vmatpush1.bf16.msra.mxu0 %v797
      %836 = vmatprep.subr.bf16.mxu0 0
      %837 = vmatpush2.bf16.msra.mxu0 0
      %838 = vmatprep.subr.bf16.mxu0 0
      %839 = vmatpush2.bf16.msra.mxu0 0
      %840 = vmatprep.subr.bf16.mxu0 0
      %841 = vmatpush2.bf16.msra.mxu0 0
      %842 = vmatprep.subr.bf16.mxu0 0
      %843 = vmatpush2.bf16.msra.mxu0 0
      %844 = vmatprep.subr.bf16.mxu0 0
      %845 = vmatpush2.bf16.msra.mxu0 0
      %846 = vmatprep.subr.bf16.mxu0 0
      %847 = vmatpush2.bf16.msra.mxu0 0
      %848 = vmatprep.subr.bf16.mxu0 0
      %849 = vmatpush2.bf16.msra.mxu0 0
      %850 = vmatprep.subr.bf16.mxu0 0
      %851 = vmatpush2.bf16.msra.mxu0 0
      %852 = vmatprep.mubr.bf16.mxu0 0
      %853 = vmatmul.mubr.bf16.gmra.mxu0 %v809
      %v854 = vpop.f32.mrf.mxu0
      %v855 = vadd.f32 0.0, %v854
      %v856 = vpop.f32.mrf.mxu0
      %v857 = vpop.f32.mrf.mxu0
      %v858 = vadd.f32 0.0, %v857
      %v859 = vpop.f32.mrf.mxu0
      %860 = vmatprep.mubr.bf16.mxu0 0
      %861 = vmatmul.mubr.bf16.gmra.mxu0 %v812
      %v862 = vpop.f32.mrf.mxu0
      %v863 = vadd.f32 0.0, %v862
      %v864 = vpop.f32.mrf.mxu0
      %v865 = vpop.f32.mrf.mxu0
      %v866 = vadd.f32 0.0, %v865
      %v867 = vpop.f32.mrf.mxu0
      %868 = vmatprep.mubr.bf16.mxu0 0
      %869 = vmatmul.mubr.bf16.gmra.mxu0 %v815
      %v870 = vpop.f32.mrf.mxu0
      %v871 = vadd.f32 0.0, %v870
      %v872 = vpop.f32.mrf.mxu0
      %v873 = vpop.f32.mrf.mxu0
      %v874 = vadd.f32 0.0, %v873
      %v875 = vpop.f32.mrf.mxu0
      %876 = vmatprep.mubr.bf16.mxu0 0
      %877 = vmatmul.mubr.bf16.gmra.mxu0 %v818
      %v878 = vpop.f32.mrf.mxu0
      %v879 = vadd.f32 0.0, %v878
      %v880 = vpop.f32.mrf.mxu0
      %v881 = vpop.f32.mrf.mxu0
      %v882 = vadd.f32 0.0, %v881
      %v883 = vpop.f32.mrf.mxu0
      %884 = vdwg.mxu0
      %v885 = vpack.c.bf16 %v858, %v855
      %v886 = vpack.c.bf16 %v866, %v863
      %v887 = vpack.c.bf16 %v874, %v871
      %v888 = vpack.c.bf16 %v882, %v879
      %v890 = vsel %vm605, %v885, 0
      %v893 = vsel %vm605, %v886, 0
      %v896 = vsel %vm605, %v887, 0
      %v899 = vsel %vm605, %v888, 0
      %vm901 = vcmask 1041408
      %v903 = vsel %vm901, %v345, 0
      %905 = vmatprep.subr.bf16.mxu0 0
      %906 = vmatpush1.bf16.msra.mxu0 0
      %907 = vmatprep.subr.bf16.mxu0 0
      %908 = vmatpush1.bf16.msra.mxu0 0
      %909 = vmatprep.subr.bf16.mxu0 0
      %910 = vmatpush1.bf16.msra.mxu0 0
      %911 = vmatprep.subr.bf16.mxu0 0
      %912 = vmatpush1.bf16.msra.mxu0 0
      %913 = vmatprep.subr.bf16.mxu0 0
      %914 = vmatpush1.bf16.msra.mxu0 0
      %915 = vmatprep.subr.bf16.mxu0 0
      %916 = vmatpush1.bf16.msra.mxu0 0
      %917 = vmatprep.subr.bf16.mxu0 0
      %918 = vmatpush1.bf16.msra.mxu0 0
      %919 = vmatprep.subr.bf16.mxu0 0
      %920 = vmatpush1.bf16.msra.mxu0 %v903
      %921 = vmatprep.subr.bf16.mxu0 0
      %922 = vmatpush2.bf16.msra.mxu0 0
      %923 = vmatprep.subr.bf16.mxu0 0
      %924 = vmatpush2.bf16.msra.mxu0 0
      %925 = vmatprep.subr.bf16.mxu0 0
      %926 = vmatpush2.bf16.msra.mxu0 0
      %927 = vmatprep.subr.bf16.mxu0 0
      %928 = vmatpush2.bf16.msra.mxu0 0
      %929 = vmatprep.subr.bf16.mxu0 0
      %930 = vmatpush2.bf16.msra.mxu0 0
      %931 = vmatprep.subr.bf16.mxu0 0
      %932 = vmatpush2.bf16.msra.mxu0 0
      %933 = vmatprep.subr.bf16.mxu0 0
      %934 = vmatpush2.bf16.msra.mxu0 0
      %935 = vmatprep.subr.bf16.mxu0 0
      %936 = vmatpush2.bf16.msra.mxu0 0
      %937 = vmatprep.mubr.bf16.mxu0 0
      %938 = vmatmul.mubr.bf16.gmra.mxu0 %v890
      %v939 = vpop.f32.mrf.mxu0
      %v940 = vadd.f32 0.0, %v939
      %v941 = vpop.f32.mrf.mxu0
      %v942 = vpop.f32.mrf.mxu0
      %v943 = vadd.f32 0.0, %v942
      %v944 = vpop.f32.mrf.mxu0
      %945 = vmatprep.mubr.bf16.mxu0 0
      %946 = vmatmul.mubr.bf16.gmra.mxu0 %v893
      %v947 = vpop.f32.mrf.mxu0
      %v948 = vadd.f32 0.0, %v947
      %v949 = vpop.f32.mrf.mxu0
      %v950 = vpop.f32.mrf.mxu0
      %v951 = vadd.f32 0.0, %v950
      %v952 = vpop.f32.mrf.mxu0
      %953 = vmatprep.mubr.bf16.mxu0 0
      %954 = vmatmul.mubr.bf16.gmra.mxu0 %v896
      %v955 = vpop.f32.mrf.mxu0
      %v956 = vadd.f32 0.0, %v955
      %v957 = vpop.f32.mrf.mxu0
      %v958 = vpop.f32.mrf.mxu0
      %v959 = vadd.f32 0.0, %v958
      %v960 = vpop.f32.mrf.mxu0
      %961 = vmatprep.mubr.bf16.mxu0 0
      %962 = vmatmul.mubr.bf16.gmra.mxu0 %v899
      %v963 = vpop.f32.mrf.mxu0
      %v964 = vadd.f32 0.0, %v963
      %v965 = vpop.f32.mrf.mxu0
      %v966 = vpop.f32.mrf.mxu0
      %v967 = vadd.f32 0.0, %v966
      %v968 = vpop.f32.mrf.mxu0
      %969 = vdwg.mxu0
      %v970 = vadd.f32 %v581, %v940
      %v971 = vadd.f32 %v582, %v943
      %v972 = vadd.f32 %v583, %v948
      %v973 = vadd.f32 %v584, %v951
      %v974 = vadd.f32 %v585, %v956
      %v975 = vadd.f32 %v586, %v959
      %v976 = vadd.f32 %v587, %v964
      %v977 = vadd.f32 %v588, %v967
      %978 = vrot.lane.b32.xlu0 %v589, 124
      %v979 = vpop.permute.xlu0 %978
      %980 = vrot.lane.b32.xlu0 %v590, 124
      %v981 = vpop.permute.xlu0 %980
      %982 = vrot.lane.b32.xlu0 %v591, 124
      %v983 = vpop.permute.xlu0 %982
      %984 = vrot.lane.b32.xlu0 %v592, 124
      %v985 = vpop.permute.xlu0 %984
      %986 = vrot.lane.b32.xlu0 %v589, 108
      %v987 = vpop.permute.xlu0 %986
      %988 = vrot.lane.b32.xlu0 %v590, 108
      %v989 = vpop.permute.xlu0 %988
      %990 = vrot.lane.b32.xlu0 %v591, 108
      %v991 = vpop.permute.xlu0 %990
      %992 = vrot.lane.b32.xlu0 %v592, 108
      %v993 = vpop.permute.xlu0 %992
      %v995 = vsel %vm605, %v979, 0
      %v998 = vsel %vm605, %v981, 0
      %v1001 = vsel %vm605, %v983, 0
      %v1004 = vsel %vm605, %v985, 0
      %v1007 = vsel %vm605, %v987, 0
      %v1010 = vsel %vm605, %v989, 0
      %v1013 = vsel %vm605, %v991, 0
      %v1016 = vsel %vm605, %v993, 0
      %1018 = vmatprep.subr.bf16.mxu0 0
      %1019 = vmatpush1.bf16.xpose.msra.mxu0 0
      %1020 = vmatprep.subr.bf16.mxu0 0
      %1021 = vmatpush1.bf16.xpose.msra.mxu0 0
      %1022 = vmatprep.subr.bf16.mxu0 0
      %1023 = vmatpush1.bf16.xpose.msra.mxu0 0
      %1024 = vmatprep.subr.bf16.mxu0 0
      %1025 = vmatpush1.bf16.xpose.msra.mxu0 0
      %1026 = vmatprep.subr.bf16.mxu0 0
      %1027 = vmatpush1.bf16.xpose.msra.mxu0 %v1016
      %1028 = vmatprep.subr.bf16.mxu0 0
      %1029 = vmatpush1.bf16.xpose.msra.mxu0 %v1013
      %1030 = vmatprep.subr.bf16.mxu0 0
      %1031 = vmatpush1.bf16.xpose.msra.mxu0 %v1010
      %1032 = vmatprep.subr.bf16.mxu0 0
      %1033 = vmatpush1.bf16.xpose.msra.mxu0 %v1007
      %1034 = vmatprep.subr.bf16.mxu0 0
      %1035 = vmatpush2.bf16.xpose.msra.mxu0 0
      %1036 = vmatprep.subr.bf16.mxu0 0
      %1037 = vmatpush2.bf16.xpose.msra.mxu0 0
      %1038 = vmatprep.subr.bf16.mxu0 0
      %1039 = vmatpush2.bf16.xpose.msra.mxu0 0
      %1040 = vmatprep.subr.bf16.mxu0 0
      %1041 = vmatpush2.bf16.xpose.msra.mxu0 0
      %1042 = vmatprep.subr.bf16.mxu0 0
      %1043 = vmatpush2.bf16.xpose.msra.mxu0 0
      %1044 = vmatprep.subr.bf16.mxu0 0
      %1045 = vmatpush2.bf16.xpose.msra.mxu0 0
      %1046 = vmatprep.subr.bf16.mxu0 0
      %1047 = vmatpush2.bf16.xpose.msra.mxu0 0
      %1048 = vmatprep.subr.bf16.mxu0 0
      %1049 = vmatpush2.bf16.xpose.msra.mxu0 0
      %1050 = vmatprep.mubr.bf16.mxu0 0
      %1051 = vmatmul.mubr.bf16.gmra.mxu0 %v995
      %v1052 = vpop.f32.mrf.mxu0
      %v1053 = vadd.f32 0.0, %v1052
      %v1054 = vpop.f32.mrf.mxu0
      %v1055 = vpop.f32.mrf.mxu0
      %v1056 = vadd.f32 0.0, %v1055
      %v1057 = vpop.f32.mrf.mxu0
      %1058 = vmatprep.mubr.bf16.mxu0 0
      %1059 = vmatmul.mubr.bf16.gmra.mxu0 %v998
      %v1060 = vpop.f32.mrf.mxu0
      %v1061 = vadd.f32 0.0, %v1060
      %v1062 = vpop.f32.mrf.mxu0
      %v1063 = vpop.f32.mrf.mxu0
      %v1064 = vadd.f32 0.0, %v1063
      %v1065 = vpop.f32.mrf.mxu0
      %1066 = vmatprep.mubr.bf16.mxu0 0
      %1067 = vmatmul.mubr.bf16.gmra.mxu0 %v1001
      %v1068 = vpop.f32.mrf.mxu0
      %v1069 = vadd.f32 0.0, %v1068
      %v1070 = vpop.f32.mrf.mxu0
      %v1071 = vpop.f32.mrf.mxu0
      %v1072 = vadd.f32 0.0, %v1071
      %v1073 = vpop.f32.mrf.mxu0
      %1074 = vmatprep.mubr.bf16.mxu0 0
      %1075 = vmatmul.mubr.bf16.gmra.mxu0 %v1004
      %v1076 = vpop.f32.mrf.mxu0
      %v1077 = vadd.f32 0.0, %v1076
      %v1078 = vpop.f32.mrf.mxu0
      %v1079 = vpop.f32.mrf.mxu0
      %v1080 = vadd.f32 0.0, %v1079
      %v1081 = vpop.f32.mrf.mxu0
      %1082 = vdwg.mxu0
      %v1083 = vmul.f32 %v1053, 0.5
      %v1084 = vmul.f32 %v1056, 0.5
      %v1085 = vmul.f32 %v1061, 0.5
      %v1086 = vmul.f32 %v1064, 0.5
      %v1087 = vmul.f32 %v1069, 0.5
      %v1088 = vmul.f32 %v1072, 0.5
      %v1089 = vmul.f32 %v1077, 0.5
      %v1090 = vmul.f32 %v1080, 0.5
      %v1091 = vsel %vm703, %v1083, -inf
      %1092 = vmax.xlane.f32.xlu0 %v1091
      %v1093 = vpop.xlane.xlu0 %1092
      %v1094 = vsel %vm703, %v1084, -inf
      %1095 = vmax.xlane.f32.xlu0 %v1094
      %v1096 = vpop.xlane.xlu0 %1095
      %v1097 = vsel %vm703, %v1085, -inf
      %1098 = vmax.xlane.f32.xlu0 %v1097
      %v1099 = vpop.xlane.xlu0 %1098
      %v1100 = vsel %vm703, %v1086, -inf
      %1101 = vmax.xlane.f32.xlu0 %v1100
      %v1102 = vpop.xlane.xlu0 %1101
      %v1103 = vsel %vm703, %v1087, -inf
      %1104 = vmax.xlane.f32.xlu0 %v1103
      %v1105 = vpop.xlane.xlu0 %1104
      %v1106 = vsel %vm703, %v1088, -inf
      %1107 = vmax.xlane.f32.xlu0 %v1106
      %v1108 = vpop.xlane.xlu0 %1107
      %v1109 = vsel %vm703, %v1089, -inf
      %1110 = vmax.xlane.f32.xlu0 %v1109
      %v1111 = vpop.xlane.xlu0 %1110
      %v1112 = vsel %vm703, %v1090, -inf
      %1113 = vmax.xlane.f32.xlu0 %v1112
      %v1114 = vpop.xlane.xlu0 %1113
      %v1115 = vsub.f32 %v1083, %v1093
      %v1116 = vsub.f32 %v1084, %v1096
      %v1117 = vsub.f32 %v1085, %v1099
      %v1118 = vsub.f32 %v1086, %v1102
      %v1119 = vsub.f32 %v1087, %v1105
      %v1120 = vsub.f32 %v1088, %v1108
      %v1121 = vsub.f32 %v1089, %v1111
      %v1122 = vsub.f32 %v1090, %v1114
      %v1123 = vmul.f32 %v1115, 1.442695
      %v1124 = vpow.pop %v1123
      %v1125 = vmul.f32 %v1116, 1.442695
      %v1126 = vpow.pop %v1125
      %v1127 = vmul.f32 %v1117, 1.442695
      %v1128 = vpow.pop %v1127
      %v1129 = vmul.f32 %v1118, 1.442695
      %v1130 = vpow.pop %v1129
      %v1131 = vmul.f32 %v1119, 1.442695
      %v1132 = vpow.pop %v1131
      %v1133 = vmul.f32 %v1120, 1.442695
      %v1134 = vpow.pop %v1133
      %v1135 = vmul.f32 %v1121, 1.442695
      %v1136 = vpow.pop %v1135
      %v1137 = vmul.f32 %v1122, 1.442695
      %v1138 = vpow.pop %v1137
      %v1139 = vsel %vm703, %v1124, 0.0
      %1140 = vadd.xlane.f32.xlu0 %v1139
      %v1141 = vpop.xlane.xlu0 %1140
      %v1142 = vsel %vm703, %v1126, 0.0
      %1143 = vadd.xlane.f32.xlu0 %v1142
      %v1144 = vpop.xlane.xlu0 %1143
      %v1145 = vsel %vm703, %v1128, 0.0
      %1146 = vadd.xlane.f32.xlu0 %v1145
      %v1147 = vpop.xlane.xlu0 %1146
      %v1148 = vsel %vm703, %v1130, 0.0
      %1149 = vadd.xlane.f32.xlu0 %v1148
      %v1150 = vpop.xlane.xlu0 %1149
      %v1151 = vsel %vm703, %v1132, 0.0
      %1152 = vadd.xlane.f32.xlu0 %v1151
      %v1153 = vpop.xlane.xlu0 %1152
      %v1154 = vsel %vm703, %v1134, 0.0
      %1155 = vadd.xlane.f32.xlu0 %v1154
      %v1156 = vpop.xlane.xlu0 %1155
      %v1157 = vsel %vm703, %v1136, 0.0
      %1158 = vadd.xlane.f32.xlu0 %v1157
      %v1159 = vpop.xlane.xlu0 %1158
      %v1160 = vsel %vm703, %v1138, 0.0
      %1161 = vadd.xlane.f32.xlu0 %v1160
      %v1162 = vpop.xlane.xlu0 %1161
      %v1163 = vrcp.pop %v1141
      %v1164 = vrcp.pop %v1144
      %v1165 = vrcp.pop %v1147
      %v1166 = vrcp.pop %v1150
      %v1167 = vrcp.pop %v1153
      %v1168 = vrcp.pop %v1156
      %v1169 = vrcp.pop %v1159
      %v1170 = vrcp.pop %v1162
      %v1171 = vmul.f32 %v1124, %v1163
      %v1172 = vmul.f32 %v1126, %v1164
      %v1173 = vmul.f32 %v1128, %v1165
      %v1174 = vmul.f32 %v1130, %v1166
      %v1175 = vmul.f32 %v1132, %v1167
      %v1176 = vmul.f32 %v1134, %v1168
      %v1177 = vmul.f32 %v1136, %v1169
      %v1178 = vmul.f32 %v1138, %v1170
      %v1179 = vpack.c.bf16 %v1172, %v1171
      %v1180 = vpack.c.bf16 %v1174, %v1173
      %v1181 = vpack.c.bf16 %v1176, %v1175
      %v1182 = vpack.c.bf16 %v1178, %v1177
      %1183 = vrot.lane.b32.xlu0 %v589, 92
      %v1184 = vpop.permute.xlu0 %1183
      %1185 = vrot.lane.b32.xlu0 %v590, 92
      %v1186 = vpop.permute.xlu0 %1185
      %1187 = vrot.lane.b32.xlu0 %v591, 92
      %v1188 = vpop.permute.xlu0 %1187
      %1189 = vrot.lane.b32.xlu0 %v592, 92
      %v1190 = vpop.permute.xlu0 %1189
      %v1196 = vsel %vm703, %v1179, 0
      %v1199 = vsel %vm703, %v1180, 0
      %v1202 = vsel %vm703, %v1181, 0
      %v1205 = vsel %vm703, %v1182, 0
      %1207 = vmatprep.subr.bf16.mxu0 0
      %1208 = vmatpush1.bf16.msra.mxu0 0
      %1209 = vmatprep.subr.bf16.mxu0 0
      %1210 = vmatpush1.bf16.msra.mxu0 0
      %1211 = vmatprep.subr.bf16.mxu0 0
      %1212 = vmatpush1.bf16.msra.mxu0 0
      %1213 = vmatprep.subr.bf16.mxu0 0
      %1214 = vmatpush1.bf16.msra.mxu0 0
      %1215 = vmatprep.subr.bf16.mxu0 0
      %1216 = vmatpush1.bf16.msra.mxu0 %v1190
      %1217 = vmatprep.subr.bf16.mxu0 0
      %1218 = vmatpush1.bf16.msra.mxu0 %v1188
      %1219 = vmatprep.subr.bf16.mxu0 0
      %1220 = vmatpush1.bf16.msra.mxu0 %v1186
      %1221 = vmatprep.subr.bf16.mxu0 0
      %1222 = vmatpush1.bf16.msra.mxu0 %v1184
      %1223 = vmatprep.subr.bf16.mxu0 0
      %1224 = vmatpush2.bf16.msra.mxu0 0
      %1225 = vmatprep.subr.bf16.mxu0 0
      %1226 = vmatpush2.bf16.msra.mxu0 0
      %1227 = vmatprep.subr.bf16.mxu0 0
      %1228 = vmatpush2.bf16.msra.mxu0 0
      %1229 = vmatprep.subr.bf16.mxu0 0
      %1230 = vmatpush2.bf16.msra.mxu0 0
      %1231 = vmatprep.subr.bf16.mxu0 0
      %1232 = vmatpush2.bf16.msra.mxu0 0
      %1233 = vmatprep.subr.bf16.mxu0 0
      %1234 = vmatpush2.bf16.msra.mxu0 0
      %1235 = vmatprep.subr.bf16.mxu0 0
      %1236 = vmatpush2.bf16.msra.mxu0 0
      %1237 = vmatprep.subr.bf16.mxu0 0
      %1238 = vmatpush2.bf16.msra.mxu0 0
      %1239 = vmatprep.mubr.bf16.mxu0 0
      %1240 = vmatmul.mubr.bf16.gmra.mxu0 %v1196
      %v1241 = vpop.f32.mrf.mxu0
      %v1242 = vadd.f32 0.0, %v1241
      %v1243 = vpop.f32.mrf.mxu0
      %v1244 = vpop.f32.mrf.mxu0
      %v1245 = vadd.f32 0.0, %v1244
      %v1246 = vpop.f32.mrf.mxu0
      %1247 = vmatprep.mubr.bf16.mxu0 0
      %1248 = vmatmul.mubr.bf16.gmra.mxu0 %v1199
      %v1249 = vpop.f32.mrf.mxu0
      %v1250 = vadd.f32 0.0, %v1249
      %v1251 = vpop.f32.mrf.mxu0
      %v1252 = vpop.f32.mrf.mxu0
      %v1253 = vadd.f32 0.0, %v1252
      %v1254 = vpop.f32.mrf.mxu0
      %1255 = vmatprep.mubr.bf16.mxu0 0
      %1256 = vmatmul.mubr.bf16.gmra.mxu0 %v1202
      %v1257 = vpop.f32.mrf.mxu0
      %v1258 = vadd.f32 0.0, %v1257
      %v1259 = vpop.f32.mrf.mxu0
      %v1260 = vpop.f32.mrf.mxu0
      %v1261 = vadd.f32 0.0, %v1260
      %v1262 = vpop.f32.mrf.mxu0
      %1263 = vmatprep.mubr.bf16.mxu0 0
      %1264 = vmatmul.mubr.bf16.gmra.mxu0 %v1205
      %v1265 = vpop.f32.mrf.mxu0
      %v1266 = vadd.f32 0.0, %v1265
      %v1267 = vpop.f32.mrf.mxu0
      %v1268 = vpop.f32.mrf.mxu0
      %v1269 = vadd.f32 0.0, %v1268
      %v1270 = vpop.f32.mrf.mxu0
      %1271 = vdwg.mxu0
      %v1272 = vpack.c.bf16 %v1245, %v1242
      %v1273 = vpack.c.bf16 %v1253, %v1250
      %v1274 = vpack.c.bf16 %v1261, %v1258
      %v1275 = vpack.c.bf16 %v1269, %v1266
      %v1277 = vunpack.c.l.b16 %v345
      %v1278 = vpack.c.b16 %v1277, %v1277
      %v1279 = vrot.slane %v1278, 2
      %v1281 = vsel %vm605, %v1272, 0
      %v1284 = vsel %vm605, %v1273, 0
      %v1287 = vsel %vm605, %v1274, 0
      %v1290 = vsel %vm605, %v1275, 0
      %v1293 = vsel %vm901, %v1279, 0
      %1295 = vmatprep.subr.bf16.mxu0 0
      %1296 = vmatpush1.bf16.msra.mxu0 0
      %1297 = vmatprep.subr.bf16.mxu0 0
      %1298 = vmatpush1.bf16.msra.mxu0 0
      %1299 = vmatprep.subr.bf16.mxu0 0
      %1300 = vmatpush1.bf16.msra.mxu0 0
      %1301 = vmatprep.subr.bf16.mxu0 0
      %1302 = vmatpush1.bf16.msra.mxu0 0
      %1303 = vmatprep.subr.bf16.mxu0 0
      %1304 = vmatpush1.bf16.msra.mxu0 0
      %1305 = vmatprep.subr.bf16.mxu0 0
      %1306 = vmatpush1.bf16.msra.mxu0 0
      %1307 = vmatprep.subr.bf16.mxu0 0
      %1308 = vmatpush1.bf16.msra.mxu0 0
      %1309 = vmatprep.subr.bf16.mxu0 0
      %1310 = vmatpush1.bf16.msra.mxu0 %v1293
      %1311 = vmatprep.subr.bf16.mxu0 0
      %1312 = vmatpush2.bf16.msra.mxu0 0
      %1313 = vmatprep.subr.bf16.mxu0 0
      %1314 = vmatpush2.bf16.msra.mxu0 0
      %1315 = vmatprep.subr.bf16.mxu0 0
      %1316 = vmatpush2.bf16.msra.mxu0 0
      %1317 = vmatprep.subr.bf16.mxu0 0
      %1318 = vmatpush2.bf16.msra.mxu0 0
      %1319 = vmatprep.subr.bf16.mxu0 0
      %1320 = vmatpush2.bf16.msra.mxu0 0
      %1321 = vmatprep.subr.bf16.mxu0 0
      %1322 = vmatpush2.bf16.msra.mxu0 0
      %1323 = vmatprep.subr.bf16.mxu0 0
      %1324 = vmatpush2.bf16.msra.mxu0 0
      %1325 = vmatprep.subr.bf16.mxu0 0
      %1326 = vmatpush2.bf16.msra.mxu0 0
      %1327 = vmatprep.mubr.bf16.mxu0 0
      %1328 = vmatmul.mubr.bf16.gmra.mxu0 %v1281
      %v1329 = vpop.f32.mrf.mxu0
      %v1330 = vadd.f32 0.0, %v1329
      %v1331 = vpop.f32.mrf.mxu0
      %v1332 = vpop.f32.mrf.mxu0
      %v1333 = vadd.f32 0.0, %v1332
      %v1334 = vpop.f32.mrf.mxu0
      %1335 = vmatprep.mubr.bf16.mxu0 0
      %1336 = vmatmul.mubr.bf16.gmra.mxu0 %v1284
      %v1337 = vpop.f32.mrf.mxu0
      %v1338 = vadd.f32 0.0, %v1337
      %v1339 = vpop.f32.mrf.mxu0
      %v1340 = vpop.f32.mrf.mxu0
      %v1341 = vadd.f32 0.0, %v1340
      %v1342 = vpop.f32.mrf.mxu0
      %1343 = vmatprep.mubr.bf16.mxu0 0
      %1344 = vmatmul.mubr.bf16.gmra.mxu0 %v1287
      %v1345 = vpop.f32.mrf.mxu0
      %v1346 = vadd.f32 0.0, %v1345
      %v1347 = vpop.f32.mrf.mxu0
      %v1348 = vpop.f32.mrf.mxu0
      %v1349 = vadd.f32 0.0, %v1348
      %v1350 = vpop.f32.mrf.mxu0
      %1351 = vmatprep.mubr.bf16.mxu0 0
      %1352 = vmatmul.mubr.bf16.gmra.mxu0 %v1290
      %v1353 = vpop.f32.mrf.mxu0
      %v1354 = vadd.f32 0.0, %v1353
      %v1355 = vpop.f32.mrf.mxu0
      %v1356 = vpop.f32.mrf.mxu0
      %v1357 = vadd.f32 0.0, %v1356
      %v1358 = vpop.f32.mrf.mxu0
      %1359 = vdwg.mxu0
      %v1360 = vadd.f32 %v970, %v1330
      %v1361 = vadd.f32 %v971, %v1333
      %v1362 = vadd.f32 %v972, %v1338
      %v1363 = vadd.f32 %v973, %v1341
      %v1364 = vadd.f32 %v974, %v1346
      %v1365 = vadd.f32 %v975, %v1349
      %v1366 = vadd.f32 %v976, %v1354
      %v1367 = vadd.f32 %v977, %v1357
      %1368 = vrot.lane.b32.xlu0 %v589, 120
      %v1369 = vpop.permute.xlu0 %1368
      %1370 = vrot.lane.b32.xlu0 %v590, 120
      %v1371 = vpop.permute.xlu0 %1370
      %1372 = vrot.lane.b32.xlu0 %v591, 120
      %v1373 = vpop.permute.xlu0 %1372
      %1374 = vrot.lane.b32.xlu0 %v592, 120
      %v1375 = vpop.permute.xlu0 %1374
      %1376 = vrot.lane.b32.xlu0 %v589, 104
      %v1377 = vpop.permute.xlu0 %1376
      %1378 = vrot.lane.b32.xlu0 %v590, 104
      %v1379 = vpop.permute.xlu0 %1378
      %1380 = vrot.lane.b32.xlu0 %v591, 104
      %v1381 = vpop.permute.xlu0 %1380
      %1382 = vrot.lane.b32.xlu0 %v592, 104
      %v1383 = vpop.permute.xlu0 %1382
      %v1385 = vsel %vm605, %v1369, 0
      %v1388 = vsel %vm605, %v1371, 0
      %v1391 = vsel %vm605, %v1373, 0
      %v1394 = vsel %vm605, %v1375, 0
      %v1397 = vsel %vm605, %v1377, 0
      %v1400 = vsel %vm605, %v1379, 0
      %v1403 = vsel %vm605, %v1381, 0
      %v1406 = vsel %vm605, %v1383, 0
      %1408 = vmatprep.subr.bf16.mxu0 0
      %1409 = vmatpush1.bf16.xpose.msra.mxu0 0
      %1410 = vmatprep.subr.bf16.mxu0 0
      %1411 = vmatpush1.bf16.xpose.msra.mxu0 0
      %1412 = vmatprep.subr.bf16.mxu0 0
      %1413 = vmatpush1.bf16.xpose.msra.mxu0 0
      %1414 = vmatprep.subr.bf16.mxu0 0
      %1415 = vmatpush1.bf16.xpose.msra.mxu0 0
      %1416 = vmatprep.subr.bf16.mxu0 0
      %1417 = vmatpush1.bf16.xpose.msra.mxu0 %v1406
      %1418 = vmatprep.subr.bf16.mxu0 0
      %1419 = vmatpush1.bf16.xpose.msra.mxu0 %v1403
      %1420 = vmatprep.subr.bf16.mxu0 0
      %1421 = vmatpush1.bf16.xpose.msra.mxu0 %v1400
      %1422 = vmatprep.subr.bf16.mxu0 0
      %1423 = vmatpush1.bf16.xpose.msra.mxu0 %v1397
      %1424 = vmatprep.subr.bf16.mxu0 0
      %1425 = vmatpush2.bf16.xpose.msra.mxu0 0
      %1426 = vmatprep.subr.bf16.mxu0 0
      %1427 = vmatpush2.bf16.xpose.msra.mxu0 0
      %1428 = vmatprep.subr.bf16.mxu0 0
      %1429 = vmatpush2.bf16.xpose.msra.mxu0 0
      %1430 = vmatprep.subr.bf16.mxu0 0
      %1431 = vmatpush2.bf16.xpose.msra.mxu0 0
      %1432 = vmatprep.subr.bf16.mxu0 0
      %1433 = vmatpush2.bf16.xpose.msra.mxu0 0
      %1434 = vmatprep.subr.bf16.mxu0 0
      %1435 = vmatpush2.bf16.xpose.msra.mxu0 0
      %1436 = vmatprep.subr.bf16.mxu0 0
      %1437 = vmatpush2.bf16.xpose.msra.mxu0 0
      %1438 = vmatprep.subr.bf16.mxu0 0
      %1439 = vmatpush2.bf16.xpose.msra.mxu0 0
      %1440 = vmatprep.mubr.bf16.mxu0 0
      %1441 = vmatmul.mubr.bf16.gmra.mxu0 %v1385
      %v1442 = vpop.f32.mrf.mxu0
      %v1443 = vadd.f32 0.0, %v1442
      %v1444 = vpop.f32.mrf.mxu0
      %v1445 = vpop.f32.mrf.mxu0
      %v1446 = vadd.f32 0.0, %v1445
      %v1447 = vpop.f32.mrf.mxu0
      %1448 = vmatprep.mubr.bf16.mxu0 0
      %1449 = vmatmul.mubr.bf16.gmra.mxu0 %v1388
      %v1450 = vpop.f32.mrf.mxu0
      %v1451 = vadd.f32 0.0, %v1450
      %v1452 = vpop.f32.mrf.mxu0
      %v1453 = vpop.f32.mrf.mxu0
      %v1454 = vadd.f32 0.0, %v1453
      %v1455 = vpop.f32.mrf.mxu0
      %1456 = vmatprep.mubr.bf16.mxu0 0
      %1457 = vmatmul.mubr.bf16.gmra.mxu0 %v1391
      %v1458 = vpop.f32.mrf.mxu0
      %v1459 = vadd.f32 0.0, %v1458
      %v1460 = vpop.f32.mrf.mxu0
      %v1461 = vpop.f32.mrf.mxu0
      %v1462 = vadd.f32 0.0, %v1461
      %v1463 = vpop.f32.mrf.mxu0
      %1464 = vmatprep.mubr.bf16.mxu0 0
      %1465 = vmatmul.mubr.bf16.gmra.mxu0 %v1394
      %v1466 = vpop.f32.mrf.mxu0
      %v1467 = vadd.f32 0.0, %v1466
      %v1468 = vpop.f32.mrf.mxu0
      %v1469 = vpop.f32.mrf.mxu0
      %v1470 = vadd.f32 0.0, %v1469
      %v1471 = vpop.f32.mrf.mxu0
      %1472 = vdwg.mxu0
      %v1473 = vmul.f32 %v1443, 0.5
      %v1474 = vmul.f32 %v1446, 0.5
      %v1475 = vmul.f32 %v1451, 0.5
      %v1476 = vmul.f32 %v1454, 0.5
      %v1477 = vmul.f32 %v1459, 0.5
      %v1478 = vmul.f32 %v1462, 0.5
      %v1479 = vmul.f32 %v1467, 0.5
      %v1480 = vmul.f32 %v1470, 0.5
      %v1481 = vsel %vm703, %v1473, -inf
      %1482 = vmax.xlane.f32.xlu0 %v1481
      %v1483 = vpop.xlane.xlu0 %1482
      %v1484 = vsel %vm703, %v1474, -inf
      %1485 = vmax.xlane.f32.xlu0 %v1484
      %v1486 = vpop.xlane.xlu0 %1485
      %v1487 = vsel %vm703, %v1475, -inf
      %1488 = vmax.xlane.f32.xlu0 %v1487
      %v1489 = vpop.xlane.xlu0 %1488
      %v1490 = vsel %vm703, %v1476, -inf
      %1491 = vmax.xlane.f32.xlu0 %v1490
      %v1492 = vpop.xlane.xlu0 %1491
      %v1493 = vsel %vm703, %v1477, -inf
      %1494 = vmax.xlane.f32.xlu0 %v1493
      %v1495 = vpop.xlane.xlu0 %1494
      %v1496 = vsel %vm703, %v1478, -inf
      %1497 = vmax.xlane.f32.xlu0 %v1496
      %v1498 = vpop.xlane.xlu0 %1497
      %v1499 = vsel %vm703, %v1479, -inf
      %1500 = vmax.xlane.f32.xlu0 %v1499
      %v1501 = vpop.xlane.xlu0 %1500
      %v1502 = vsel %vm703, %v1480, -inf
      %1503 = vmax.xlane.f32.xlu0 %v1502
      %v1504 = vpop.xlane.xlu0 %1503
      %v1505 = vsub.f32 %v1473, %v1483
      %v1506 = vsub.f32 %v1474, %v1486
      %v1507 = vsub.f32 %v1475, %v1489
      %v1508 = vsub.f32 %v1476, %v1492
      %v1509 = vsub.f32 %v1477, %v1495
      %v1510 = vsub.f32 %v1478, %v1498
      %v1511 = vsub.f32 %v1479, %v1501
      %v1512 = vsub.f32 %v1480, %v1504
      %v1513 = vmul.f32 %v1505, 1.442695
      %v1514 = vpow.pop %v1513
      %v1515 = vmul.f32 %v1506, 1.442695
      %v1516 = vpow.pop %v1515
      %v1517 = vmul.f32 %v1507, 1.442695
      %v1518 = vpow.pop %v1517
      %v1519 = vmul.f32 %v1508, 1.442695
      %v1520 = vpow.pop %v1519
      %v1521 = vmul.f32 %v1509, 1.442695
      %v1522 = vpow.pop %v1521
      %v1523 = vmul.f32 %v1510, 1.442695
      %v1524 = vpow.pop %v1523
      %v1525 = vmul.f32 %v1511, 1.442695
      %v1526 = vpow.pop %v1525
      %v1527 = vmul.f32 %v1512, 1.442695
      %v1528 = vpow.pop %v1527
      %v1529 = vsel %vm703, %v1514, 0.0
      %1530 = vadd.xlane.f32.xlu0 %v1529
      %v1531 = vpop.xlane.xlu0 %1530
      %v1532 = vsel %vm703, %v1516, 0.0
      %1533 = vadd.xlane.f32.xlu0 %v1532
      %v1534 = vpop.xlane.xlu0 %1533
      %v1535 = vsel %vm703, %v1518, 0.0
      %1536 = vadd.xlane.f32.xlu0 %v1535
      %v1537 = vpop.xlane.xlu0 %1536
      %v1538 = vsel %vm703, %v1520, 0.0
      %1539 = vadd.xlane.f32.xlu0 %v1538
      %v1540 = vpop.xlane.xlu0 %1539
      %v1541 = vsel %vm703, %v1522, 0.0
      %1542 = vadd.xlane.f32.xlu0 %v1541
      %v1543 = vpop.xlane.xlu0 %1542
      %v1544 = vsel %vm703, %v1524, 0.0
      %1545 = vadd.xlane.f32.xlu0 %v1544
      %v1546 = vpop.xlane.xlu0 %1545
      %v1547 = vsel %vm703, %v1526, 0.0
      %1548 = vadd.xlane.f32.xlu0 %v1547
      %v1549 = vpop.xlane.xlu0 %1548
      %v1550 = vsel %vm703, %v1528, 0.0
      %1551 = vadd.xlane.f32.xlu0 %v1550
      %v1552 = vpop.xlane.xlu0 %1551
      %v1553 = vrcp.pop %v1531
      %v1554 = vrcp.pop %v1534
      %v1555 = vrcp.pop %v1537
      %v1556 = vrcp.pop %v1540
      %v1557 = vrcp.pop %v1543
      %v1558 = vrcp.pop %v1546
      %v1559 = vrcp.pop %v1549
      %v1560 = vrcp.pop %v1552
      %v1561 = vmul.f32 %v1514, %v1553
      %v1562 = vmul.f32 %v1516, %v1554
      %v1563 = vmul.f32 %v1518, %v1555
      %v1564 = vmul.f32 %v1520, %v1556
      %v1565 = vmul.f32 %v1522, %v1557
      %v1566 = vmul.f32 %v1524, %v1558
      %v1567 = vmul.f32 %v1526, %v1559
      %v1568 = vmul.f32 %v1528, %v1560
      %v1569 = vpack.c.bf16 %v1562, %v1561
      %v1570 = vpack.c.bf16 %v1564, %v1563
      %v1571 = vpack.c.bf16 %v1566, %v1565
      %v1572 = vpack.c.bf16 %v1568, %v1567
      %1573 = vrot.lane.b32.xlu0 %v589, 88
      %v1574 = vpop.permute.xlu0 %1573
      %1575 = vrot.lane.b32.xlu0 %v590, 88
      %v1576 = vpop.permute.xlu0 %1575
      %1577 = vrot.lane.b32.xlu0 %v591, 88
      %v1578 = vpop.permute.xlu0 %1577
      %1579 = vrot.lane.b32.xlu0 %v592, 88
      %v1580 = vpop.permute.xlu0 %1579
      %v1586 = vsel %vm703, %v1569, 0
      %v1589 = vsel %vm703, %v1570, 0
      %v1592 = vsel %vm703, %v1571, 0
      %v1595 = vsel %vm703, %v1572, 0
      %1597 = vmatprep.subr.bf16.mxu0 0
      %1598 = vmatpush1.bf16.msra.mxu0 0
      %1599 = vmatprep.subr.bf16.mxu0 0
      %1600 = vmatpush1.bf16.msra.mxu0 0
      %1601 = vmatprep.subr.bf16.mxu0 0
      %1602 = vmatpush1.bf16.msra.mxu0 0
      %1603 = vmatprep.subr.bf16.mxu0 0
      %1604 = vmatpush1.bf16.msra.mxu0 0
      %1605 = vmatprep.subr.bf16.mxu0 0
      %1606 = vmatpush1.bf16.msra.mxu0 %v1580
      %1607 = vmatprep.subr.bf16.mxu0 0
      %1608 = vmatpush1.bf16.msra.mxu0 %v1578
      %1609 = vmatprep.subr.bf16.mxu0 0
      %1610 = vmatpush1.bf16.msra.mxu0 %v1576
      %1611 = vmatprep.subr.bf16.mxu0 0
      %1612 = vmatpush1.bf16.msra.mxu0 %v1574
      %1613 = vmatprep.subr.bf16.mxu0 0
      %1614 = vmatpush2.bf16.msra.mxu0 0
      %1615 = vmatprep.subr.bf16.mxu0 0
      %1616 = vmatpush2.bf16.msra.mxu0 0
      %1617 = vmatprep.subr.bf16.mxu0 0
      %1618 = vmatpush2.bf16.msra.mxu0 0
      %1619 = vmatprep.subr.bf16.mxu0 0
      %1620 = vmatpush2.bf16.msra.mxu0 0
      %1621 = vmatprep.subr.bf16.mxu0 0
      %1622 = vmatpush2.bf16.msra.mxu0 0
      %1623 = vmatprep.subr.bf16.mxu0 0
      %1624 = vmatpush2.bf16.msra.mxu0 0
      %1625 = vmatprep.subr.bf16.mxu0 0
      %1626 = vmatpush2.bf16.msra.mxu0 0
      %1627 = vmatprep.subr.bf16.mxu0 0
      %1628 = vmatpush2.bf16.msra.mxu0 0
      %1629 = vmatprep.mubr.bf16.mxu0 0
      %1630 = vmatmul.mubr.bf16.gmra.mxu0 %v1586
      %v1631 = vpop.f32.mrf.mxu0
      %v1632 = vadd.f32 0.0, %v1631
      %v1633 = vpop.f32.mrf.mxu0
      %v1634 = vpop.f32.mrf.mxu0
      %v1635 = vadd.f32 0.0, %v1634
      %v1636 = vpop.f32.mrf.mxu0
      %1637 = vmatprep.mubr.bf16.mxu0 0
      %1638 = vmatmul.mubr.bf16.gmra.mxu0 %v1589
      %v1639 = vpop.f32.mrf.mxu0
      %v1640 = vadd.f32 0.0, %v1639
      %v1641 = vpop.f32.mrf.mxu0
      %v1642 = vpop.f32.mrf.mxu0
      %v1643 = vadd.f32 0.0, %v1642
      %v1644 = vpop.f32.mrf.mxu0
      %1645 = vmatprep.mubr.bf16.mxu0 0
      %1646 = vmatmul.mubr.bf16.gmra.mxu0 %v1592
      %v1647 = vpop.f32.mrf.mxu0
      %v1648 = vadd.f32 0.0, %v1647
      %v1649 = vpop.f32.mrf.mxu0
      %v1650 = vpop.f32.mrf.mxu0
      %v1651 = vadd.f32 0.0, %v1650
      %v1652 = vpop.f32.mrf.mxu0
      %1653 = vmatprep.mubr.bf16.mxu0 0
      %1654 = vmatmul.mubr.bf16.gmra.mxu0 %v1595
      %v1655 = vpop.f32.mrf.mxu0
      %v1656 = vadd.f32 0.0, %v1655
      %v1657 = vpop.f32.mrf.mxu0
      %v1658 = vpop.f32.mrf.mxu0
      %v1659 = vadd.f32 0.0, %v1658
      %v1660 = vpop.f32.mrf.mxu0
      %1661 = vdwg.mxu0
      %v1662 = vpack.c.bf16 %v1635, %v1632
      %v1663 = vpack.c.bf16 %v1643, %v1640
      %v1664 = vpack.c.bf16 %v1651, %v1648
      %v1665 = vpack.c.bf16 %v1659, %v1656
      %v1667 = vsel %vm605, %v1662, 0
      %v1670 = vsel %vm605, %v1663, 0
      %v1673 = vsel %vm605, %v1664, 0
      %v1676 = vsel %vm605, %v1665, 0
      %v1679 = vsel %vm901, %v346, 0
      %1681 = vmatprep.subr.bf16.mxu0 0
      %1682 = vmatpush1.bf16.msra.mxu0 0
      %1683 = vmatprep.subr.bf16.mxu0 0
      %1684 = vmatpush1.bf16.msra.mxu0 0
      %1685 = vmatprep.subr.bf16.mxu0 0
      %1686 = vmatpush1.bf16.msra.mxu0 0
      %1687 = vmatprep.subr.bf16.mxu0 0
      %1688 = vmatpush1.bf16.msra.mxu0 0
      %1689 = vmatprep.subr.bf16.mxu0 0
      %1690 = vmatpush1.bf16.msra.mxu0 0
      %1691 = vmatprep.subr.bf16.mxu0 0
      %1692 = vmatpush1.bf16.msra.mxu0 0
      %1693 = vmatprep.subr.bf16.mxu0 0
      %1694 = vmatpush1.bf16.msra.mxu0 0
      %1695 = vmatprep.subr.bf16.mxu0 0
      %1696 = vmatpush1.bf16.msra.mxu0 %v1679
      %1697 = vmatprep.subr.bf16.mxu0 0
      %1698 = vmatpush2.bf16.msra.mxu0 0
      %1699 = vmatprep.subr.bf16.mxu0 0
      %1700 = vmatpush2.bf16.msra.mxu0 0
      %1701 = vmatprep.subr.bf16.mxu0 0
      %1702 = vmatpush2.bf16.msra.mxu0 0
      %1703 = vmatprep.subr.bf16.mxu0 0
      %1704 = vmatpush2.bf16.msra.mxu0 0
      %1705 = vmatprep.subr.bf16.mxu0 0
      %1706 = vmatpush2.bf16.msra.mxu0 0
      %1707 = vmatprep.subr.bf16.mxu0 0
      %1708 = vmatpush2.bf16.msra.mxu0 0
      %1709 = vmatprep.subr.bf16.mxu0 0
      %1710 = vmatpush2.bf16.msra.mxu0 0
      %1711 = vmatprep.subr.bf16.mxu0 0
      %1712 = vmatpush2.bf16.msra.mxu0 0
      %1713 = vmatprep.mubr.bf16.mxu0 0
      %1714 = vmatmul.mubr.bf16.gmra.mxu0 %v1667
      %v1715 = vpop.f32.mrf.mxu0
      %v1716 = vadd.f32 0.0, %v1715
      %v1717 = vpop.f32.mrf.mxu0
      %v1718 = vpop.f32.mrf.mxu0
      %v1719 = vadd.f32 0.0, %v1718
      %v1720 = vpop.f32.mrf.mxu0
      %1721 = vmatprep.mubr.bf16.mxu0 0
      %1722 = vmatmul.mubr.bf16.gmra.mxu0 %v1670
      %v1723 = vpop.f32.mrf.mxu0
      %v1724 = vadd.f32 0.0, %v1723
      %v1725 = vpop.f32.mrf.mxu0
      %v1726 = vpop.f32.mrf.mxu0
      %v1727 = vadd.f32 0.0, %v1726
      %v1728 = vpop.f32.mrf.mxu0
      %1729 = vmatprep.mubr.bf16.mxu0 0
      %1730 = vmatmul.mubr.bf16.gmra.mxu0 %v1673
      %v1731 = vpop.f32.mrf.mxu0
      %v1732 = vadd.f32 0.0, %v1731
      %v1733 = vpop.f32.mrf.mxu0
      %v1734 = vpop.f32.mrf.mxu0
      %v1735 = vadd.f32 0.0, %v1734
      %v1736 = vpop.f32.mrf.mxu0
      %1737 = vmatprep.mubr.bf16.mxu0 0
      %1738 = vmatmul.mubr.bf16.gmra.mxu0 %v1676
      %v1739 = vpop.f32.mrf.mxu0
      %v1740 = vadd.f32 0.0, %v1739
      %v1741 = vpop.f32.mrf.mxu0
      %v1742 = vpop.f32.mrf.mxu0
      %v1743 = vadd.f32 0.0, %v1742
      %v1744 = vpop.f32.mrf.mxu0
      %1745 = vdwg.mxu0
      %v1746 = vadd.f32 %v1360, %v1716
      %v1747 = vadd.f32 %v1361, %v1719
      %v1748 = vadd.f32 %v1362, %v1724
      %v1749 = vadd.f32 %v1363, %v1727
      %v1750 = vadd.f32 %v1364, %v1732
      %v1751 = vadd.f32 %v1365, %v1735
      %v1752 = vadd.f32 %v1366, %v1740
      %v1753 = vadd.f32 %v1367, %v1743
      %1754 = vrot.lane.b32.xlu0 %v589, 116
      %v1755 = vpop.permute.xlu0 %1754
      %1756 = vrot.lane.b32.xlu0 %v590, 116
      %v1757 = vpop.permute.xlu0 %1756
      %1758 = vrot.lane.b32.xlu0 %v591, 116
      %v1759 = vpop.permute.xlu0 %1758
      %1760 = vrot.lane.b32.xlu0 %v592, 116
      %v1761 = vpop.permute.xlu0 %1760
      %1762 = vrot.lane.b32.xlu0 %v589, 100
      %v1763 = vpop.permute.xlu0 %1762
      %1764 = vrot.lane.b32.xlu0 %v590, 100
      %v1765 = vpop.permute.xlu0 %1764
      %1766 = vrot.lane.b32.xlu0 %v591, 100
      %v1767 = vpop.permute.xlu0 %1766
      %1768 = vrot.lane.b32.xlu0 %v592, 100
      %v1769 = vpop.permute.xlu0 %1768
      %v1771 = vsel %vm605, %v1755, 0
      %v1774 = vsel %vm605, %v1757, 0
      %v1777 = vsel %vm605, %v1759, 0
      %v1780 = vsel %vm605, %v1761, 0
      %v1783 = vsel %vm605, %v1763, 0
      %v1786 = vsel %vm605, %v1765, 0
      %v1789 = vsel %vm605, %v1767, 0
      %v1792 = vsel %vm605, %v1769, 0
      %1794 = vmatprep.subr.bf16.mxu0 0
      %1795 = vmatpush1.bf16.xpose.msra.mxu0 0
      %1796 = vmatprep.subr.bf16.mxu0 0
      %1797 = vmatpush1.bf16.xpose.msra.mxu0 0
      %1798 = vmatprep.subr.bf16.mxu0 0
      %1799 = vmatpush1.bf16.xpose.msra.mxu0 0
      %1800 = vmatprep.subr.bf16.mxu0 0
      %1801 = vmatpush1.bf16.xpose.msra.mxu0 0
      %1802 = vmatprep.subr.bf16.mxu0 0
      %1803 = vmatpush1.bf16.xpose.msra.mxu0 %v1792
      %1804 = vmatprep.subr.bf16.mxu0 0
      %1805 = vmatpush1.bf16.xpose.msra.mxu0 %v1789
      %1806 = vmatprep.subr.bf16.mxu0 0
      %1807 = vmatpush1.bf16.xpose.msra.mxu0 %v1786
      %1808 = vmatprep.subr.bf16.mxu0 0
      %1809 = vmatpush1.bf16.xpose.msra.mxu0 %v1783
      %1810 = vmatprep.subr.bf16.mxu0 0
      %1811 = vmatpush2.bf16.xpose.msra.mxu0 0
      %1812 = vmatprep.subr.bf16.mxu0 0
      %1813 = vmatpush2.bf16.xpose.msra.mxu0 0
      %1814 = vmatprep.subr.bf16.mxu0 0
      %1815 = vmatpush2.bf16.xpose.msra.mxu0 0
      %1816 = vmatprep.subr.bf16.mxu0 0
      %1817 = vmatpush2.bf16.xpose.msra.mxu0 0
      %1818 = vmatprep.subr.bf16.mxu0 0
      %1819 = vmatpush2.bf16.xpose.msra.mxu0 0
      %1820 = vmatprep.subr.bf16.mxu0 0
      %1821 = vmatpush2.bf16.xpose.msra.mxu0 0
      %1822 = vmatprep.subr.bf16.mxu0 0
      %1823 = vmatpush2.bf16.xpose.msra.mxu0 0
      %1824 = vmatprep.subr.bf16.mxu0 0
      %1825 = vmatpush2.bf16.xpose.msra.mxu0 0
      %1826 = vmatprep.mubr.bf16.mxu0 0
      %1827 = vmatmul.mubr.bf16.gmra.mxu0 %v1771
      %v1828 = vpop.f32.mrf.mxu0
      %v1829 = vadd.f32 0.0, %v1828
      %v1830 = vpop.f32.mrf.mxu0
      %v1831 = vpop.f32.mrf.mxu0
      %v1832 = vadd.f32 0.0, %v1831
      %v1833 = vpop.f32.mrf.mxu0
      %1834 = vmatprep.mubr.bf16.mxu0 0
      %1835 = vmatmul.mubr.bf16.gmra.mxu0 %v1774
      %v1836 = vpop.f32.mrf.mxu0
      %v1837 = vadd.f32 0.0, %v1836
      %v1838 = vpop.f32.mrf.mxu0
      %v1839 = vpop.f32.mrf.mxu0
      %v1840 = vadd.f32 0.0, %v1839
      %v1841 = vpop.f32.mrf.mxu0
      %1842 = vmatprep.mubr.bf16.mxu0 0
      %1843 = vmatmul.mubr.bf16.gmra.mxu0 %v1777
      %v1844 = vpop.f32.mrf.mxu0
      %v1845 = vadd.f32 0.0, %v1844
      %v1846 = vpop.f32.mrf.mxu0
      %v1847 = vpop.f32.mrf.mxu0
      %v1848 = vadd.f32 0.0, %v1847
      %v1849 = vpop.f32.mrf.mxu0
      %1850 = vmatprep.mubr.bf16.mxu0 0
      %1851 = vmatmul.mubr.bf16.gmra.mxu0 %v1780
      %v1852 = vpop.f32.mrf.mxu0
      %v1853 = vadd.f32 0.0, %v1852
      %v1854 = vpop.f32.mrf.mxu0
      %v1855 = vpop.f32.mrf.mxu0
      %v1856 = vadd.f32 0.0, %v1855
      %v1857 = vpop.f32.mrf.mxu0
      %1858 = vdwg.mxu0
      %v1859 = vmul.f32 %v1829, 0.5
      %v1860 = vmul.f32 %v1832, 0.5
      %v1861 = vmul.f32 %v1837, 0.5
      %v1862 = vmul.f32 %v1840, 0.5
      %v1863 = vmul.f32 %v1845, 0.5
      %v1864 = vmul.f32 %v1848, 0.5
      %v1865 = vmul.f32 %v1853, 0.5
      %v1866 = vmul.f32 %v1856, 0.5
      %v1867 = vsel %vm703, %v1859, -inf
      %1868 = vmax.xlane.f32.xlu0 %v1867
      %v1869 = vpop.xlane.xlu0 %1868
      %v1870 = vsel %vm703, %v1860, -inf
      %1871 = vmax.xlane.f32.xlu0 %v1870
      %v1872 = vpop.xlane.xlu0 %1871
      %v1873 = vsel %vm703, %v1861, -inf
      %1874 = vmax.xlane.f32.xlu0 %v1873
      %v1875 = vpop.xlane.xlu0 %1874
      %v1876 = vsel %vm703, %v1862, -inf
      %1877 = vmax.xlane.f32.xlu0 %v1876
      %v1878 = vpop.xlane.xlu0 %1877
      %v1879 = vsel %vm703, %v1863, -inf
      %1880 = vmax.xlane.f32.xlu0 %v1879
      %v1881 = vpop.xlane.xlu0 %1880
      %v1882 = vsel %vm703, %v1864, -inf
      %1883 = vmax.xlane.f32.xlu0 %v1882
      %v1884 = vpop.xlane.xlu0 %1883
      %v1885 = vsel %vm703, %v1865, -inf
      %1886 = vmax.xlane.f32.xlu0 %v1885
      %v1887 = vpop.xlane.xlu0 %1886
      %v1888 = vsel %vm703, %v1866, -inf
      %1889 = vmax.xlane.f32.xlu0 %v1888
      %v1890 = vpop.xlane.xlu0 %1889
      %v1891 = vsub.f32 %v1859, %v1869
      %v1892 = vsub.f32 %v1860, %v1872
      %v1893 = vsub.f32 %v1861, %v1875
      %v1894 = vsub.f32 %v1862, %v1878
      %v1895 = vsub.f32 %v1863, %v1881
      %v1896 = vsub.f32 %v1864, %v1884
      %v1897 = vsub.f32 %v1865, %v1887
      %v1898 = vsub.f32 %v1866, %v1890
      %v1899 = vmul.f32 %v1891, 1.442695
      %v1900 = vpow.pop %v1899
      %v1901 = vmul.f32 %v1892, 1.442695
      %v1902 = vpow.pop %v1901
      %v1903 = vmul.f32 %v1893, 1.442695
      %v1904 = vpow.pop %v1903
      %v1905 = vmul.f32 %v1894, 1.442695
      %v1906 = vpow.pop %v1905
      %v1907 = vmul.f32 %v1895, 1.442695
      %v1908 = vpow.pop %v1907
      %v1909 = vmul.f32 %v1896, 1.442695
      %v1910 = vpow.pop %v1909
      %v1911 = vmul.f32 %v1897, 1.442695
      %v1912 = vpow.pop %v1911
      %v1913 = vmul.f32 %v1898, 1.442695
      %v1914 = vpow.pop %v1913
      %v1915 = vsel %vm703, %v1900, 0.0
      %1916 = vadd.xlane.f32.xlu0 %v1915
      %v1917 = vpop.xlane.xlu0 %1916
      %v1918 = vsel %vm703, %v1902, 0.0
      %1919 = vadd.xlane.f32.xlu0 %v1918
      %v1920 = vpop.xlane.xlu0 %1919
      %v1921 = vsel %vm703, %v1904, 0.0
      %1922 = vadd.xlane.f32.xlu0 %v1921
      %v1923 = vpop.xlane.xlu0 %1922
      %v1924 = vsel %vm703, %v1906, 0.0
      %1925 = vadd.xlane.f32.xlu0 %v1924
      %v1926 = vpop.xlane.xlu0 %1925
      %v1927 = vsel %vm703, %v1908, 0.0
      %1928 = vadd.xlane.f32.xlu0 %v1927
      %v1929 = vpop.xlane.xlu0 %1928
      %v1930 = vsel %vm703, %v1910, 0.0
      %1931 = vadd.xlane.f32.xlu0 %v1930
      %v1932 = vpop.xlane.xlu0 %1931
      %v1933 = vsel %vm703, %v1912, 0.0
      %1934 = vadd.xlane.f32.xlu0 %v1933
      %v1935 = vpop.xlane.xlu0 %1934
      %v1936 = vsel %vm703, %v1914, 0.0
      %1937 = vadd.xlane.f32.xlu0 %v1936
      %v1938 = vpop.xlane.xlu0 %1937
      %v1939 = vrcp.pop %v1917
      %v1940 = vrcp.pop %v1920
      %v1941 = vrcp.pop %v1923
      %v1942 = vrcp.pop %v1926
      %v1943 = vrcp.pop %v1929
      %v1944 = vrcp.pop %v1932
      %v1945 = vrcp.pop %v1935
      %v1946 = vrcp.pop %v1938
      %v1947 = vmul.f32 %v1900, %v1939
      %v1948 = vmul.f32 %v1902, %v1940
      %v1949 = vmul.f32 %v1904, %v1941
      %v1950 = vmul.f32 %v1906, %v1942
      %v1951 = vmul.f32 %v1908, %v1943
      %v1952 = vmul.f32 %v1910, %v1944
      %v1953 = vmul.f32 %v1912, %v1945
      %v1954 = vmul.f32 %v1914, %v1946
      %v1955 = vpack.c.bf16 %v1948, %v1947
      %v1956 = vpack.c.bf16 %v1950, %v1949
      %v1957 = vpack.c.bf16 %v1952, %v1951
      %v1958 = vpack.c.bf16 %v1954, %v1953
      %1959 = vrot.lane.b32.xlu0 %v589, 84
      %v1960 = vpop.permute.xlu0 %1959
      %1961 = vrot.lane.b32.xlu0 %v590, 84
      %v1962 = vpop.permute.xlu0 %1961
      %1963 = vrot.lane.b32.xlu0 %v591, 84
      %v1964 = vpop.permute.xlu0 %1963
      %1965 = vrot.lane.b32.xlu0 %v592, 84
      %v1966 = vpop.permute.xlu0 %1965
      %v1972 = vsel %vm703, %v1955, 0
      %v1975 = vsel %vm703, %v1956, 0
      %v1978 = vsel %vm703, %v1957, 0
      %v1981 = vsel %vm703, %v1958, 0
      %1983 = vmatprep.subr.bf16.mxu0 0
      %1984 = vmatpush1.bf16.msra.mxu0 0
      %1985 = vmatprep.subr.bf16.mxu0 0
      %1986 = vmatpush1.bf16.msra.mxu0 0
      %1987 = vmatprep.subr.bf16.mxu0 0
      %1988 = vmatpush1.bf16.msra.mxu0 0
      %1989 = vmatprep.subr.bf16.mxu0 0
      %1990 = vmatpush1.bf16.msra.mxu0 0
      %1991 = vmatprep.subr.bf16.mxu0 0
      %1992 = vmatpush1.bf16.msra.mxu0 %v1966
      %1993 = vmatprep.subr.bf16.mxu0 0
      %1994 = vmatpush1.bf16.msra.mxu0 %v1964
      %1995 = vmatprep.subr.bf16.mxu0 0
      %1996 = vmatpush1.bf16.msra.mxu0 %v1962
      %1997 = vmatprep.subr.bf16.mxu0 0
      %1998 = vmatpush1.bf16.msra.mxu0 %v1960
      %1999 = vmatprep.subr.bf16.mxu0 0
      %2000 = vmatpush2.bf16.msra.mxu0 0
      %2001 = vmatprep.subr.bf16.mxu0 0
      %2002 = vmatpush2.bf16.msra.mxu0 0
      %2003 = vmatprep.subr.bf16.mxu0 0
      %2004 = vmatpush2.bf16.msra.mxu0 0
      %2005 = vmatprep.subr.bf16.mxu0 0
      %2006 = vmatpush2.bf16.msra.mxu0 0
      %2007 = vmatprep.subr.bf16.mxu0 0
      %2008 = vmatpush2.bf16.msra.mxu0 0
      %2009 = vmatprep.subr.bf16.mxu0 0
      %2010 = vmatpush2.bf16.msra.mxu0 0
      %2011 = vmatprep.subr.bf16.mxu0 0
      %2012 = vmatpush2.bf16.msra.mxu0 0
      %2013 = vmatprep.subr.bf16.mxu0 0
      %2014 = vmatpush2.bf16.msra.mxu0 0
      %2015 = vmatprep.mubr.bf16.mxu0 0
      %2016 = vmatmul.mubr.bf16.gmra.mxu0 %v1972
      %v2017 = vpop.f32.mrf.mxu0
      %v2018 = vadd.f32 0.0, %v2017
      %v2019 = vpop.f32.mrf.mxu0
      %v2020 = vpop.f32.mrf.mxu0
      %v2021 = vadd.f32 0.0, %v2020
      %v2022 = vpop.f32.mrf.mxu0
      %2023 = vmatprep.mubr.bf16.mxu0 0
      %2024 = vmatmul.mubr.bf16.gmra.mxu0 %v1975
      %v2025 = vpop.f32.mrf.mxu0
      %v2026 = vadd.f32 0.0, %v2025
      %v2027 = vpop.f32.mrf.mxu0
      %v2028 = vpop.f32.mrf.mxu0
      %v2029 = vadd.f32 0.0, %v2028
      %v2030 = vpop.f32.mrf.mxu0
      %2031 = vmatprep.mubr.bf16.mxu0 0
      %2032 = vmatmul.mubr.bf16.gmra.mxu0 %v1978
      %v2033 = vpop.f32.mrf.mxu0
      %v2034 = vadd.f32 0.0, %v2033
      %v2035 = vpop.f32.mrf.mxu0
      %v2036 = vpop.f32.mrf.mxu0
      %v2037 = vadd.f32 0.0, %v2036
      %v2038 = vpop.f32.mrf.mxu0
      %2039 = vmatprep.mubr.bf16.mxu0 0
      %2040 = vmatmul.mubr.bf16.gmra.mxu0 %v1981
      %v2041 = vpop.f32.mrf.mxu0
      %v2042 = vadd.f32 0.0, %v2041
      %v2043 = vpop.f32.mrf.mxu0
      %v2044 = vpop.f32.mrf.mxu0
      %v2045 = vadd.f32 0.0, %v2044
      %v2046 = vpop.f32.mrf.mxu0
      %2047 = vdwg.mxu0
      %v2048 = vpack.c.bf16 %v2021, %v2018
      %v2049 = vpack.c.bf16 %v2029, %v2026
      %v2050 = vpack.c.bf16 %v2037, %v2034
      %v2051 = vpack.c.bf16 %v2045, %v2042
      %v2053 = vunpack.c.l.b16 %v346
      %v2054 = vpack.c.b16 %v2053, %v2053
      %v2055 = vrot.slane %v2054, 2
      %v2057 = vsel %vm605, %v2048, 0
      %v2060 = vsel %vm605, %v2049, 0
      %v2063 = vsel %vm605, %v2050, 0
      %v2066 = vsel %vm605, %v2051, 0
      %v2069 = vsel %vm901, %v2055, 0
      %2071 = vmatprep.subr.bf16.mxu0 0
      %2072 = vmatpush1.bf16.msra.mxu0 0
      %2073 = vmatprep.subr.bf16.mxu0 0
      %2074 = vmatpush1.bf16.msra.mxu0 0
      %2075 = vmatprep.subr.bf16.mxu0 0
      %2076 = vmatpush1.bf16.msra.mxu0 0
      %2077 = vmatprep.subr.bf16.mxu0 0
      %2078 = vmatpush1.bf16.msra.mxu0 0
      %2079 = vmatprep.subr.bf16.mxu0 0
      %2080 = vmatpush1.bf16.msra.mxu0 0
      %2081 = vmatprep.subr.bf16.mxu0 0
      %2082 = vmatpush1.bf16.msra.mxu0 0
      %2083 = vmatprep.subr.bf16.mxu0 0
      %2084 = vmatpush1.bf16.msra.mxu0 0
      %2085 = vmatprep.subr.bf16.mxu0 0
      %2086 = vmatpush1.bf16.msra.mxu0 %v2069
      %2087 = vmatprep.subr.bf16.mxu0 0
      %2088 = vmatpush2.bf16.msra.mxu0 0
      %2089 = vmatprep.subr.bf16.mxu0 0
      %2090 = vmatpush2.bf16.msra.mxu0 0
      %2091 = vmatprep.subr.bf16.mxu0 0
      %2092 = vmatpush2.bf16.msra.mxu0 0
      %2093 = vmatprep.subr.bf16.mxu0 0
      %2094 = vmatpush2.bf16.msra.mxu0 0
      %2095 = vmatprep.subr.bf16.mxu0 0
      %2096 = vmatpush2.bf16.msra.mxu0 0
      %2097 = vmatprep.subr.bf16.mxu0 0
      %2098 = vmatpush2.bf16.msra.mxu0 0
      %2099 = vmatprep.subr.bf16.mxu0 0
      %2100 = vmatpush2.bf16.msra.mxu0 0
      %2101 = vmatprep.subr.bf16.mxu0 0
      %2102 = vmatpush2.bf16.msra.mxu0 0
      %2103 = vmatprep.mubr.bf16.mxu0 0
      %2104 = vmatmul.mubr.bf16.gmra.mxu0 %v2057
      %v2105 = vpop.f32.mrf.mxu0
      %v2106 = vadd.f32 0.0, %v2105
      %v2107 = vpop.f32.mrf.mxu0
      %v2108 = vpop.f32.mrf.mxu0
      %v2109 = vadd.f32 0.0, %v2108
      %v2110 = vpop.f32.mrf.mxu0
      %2111 = vmatprep.mubr.bf16.mxu0 0
      %2112 = vmatmul.mubr.bf16.gmra.mxu0 %v2060
      %v2113 = vpop.f32.mrf.mxu0
      %v2114 = vadd.f32 0.0, %v2113
      %v2115 = vpop.f32.mrf.mxu0
      %v2116 = vpop.f32.mrf.mxu0
      %v2117 = vadd.f32 0.0, %v2116
      %v2118 = vpop.f32.mrf.mxu0
      %2119 = vmatprep.mubr.bf16.mxu0 0
      %2120 = vmatmul.mubr.bf16.gmra.mxu0 %v2063
      %v2121 = vpop.f32.mrf.mxu0
      %v2122 = vadd.f32 0.0, %v2121
      %v2123 = vpop.f32.mrf.mxu0
      %v2124 = vpop.f32.mrf.mxu0
      %v2125 = vadd.f32 0.0, %v2124
      %v2126 = vpop.f32.mrf.mxu0
      %2127 = vmatprep.mubr.bf16.mxu0 0
      %2128 = vmatmul.mubr.bf16.gmra.mxu0 %v2066
      %v2129 = vpop.f32.mrf.mxu0
      %v2130 = vadd.f32 0.0, %v2129
      %v2131 = vpop.f32.mrf.mxu0
      %v2132 = vpop.f32.mrf.mxu0
      %v2133 = vadd.f32 0.0, %v2132
      %v2134 = vpop.f32.mrf.mxu0
      %2135 = vdwg.mxu0
      %v2136 = vadd.f32 %v1746, %v2106
      %v2137 = vadd.f32 %v1747, %v2109
      %v2138 = vadd.f32 %v1748, %v2114
      %v2139 = vadd.f32 %v1749, %v2117
      %v2140 = vadd.f32 %v1750, %v2122
      %v2141 = vadd.f32 %v1751, %v2125
      %v2142 = vadd.f32 %v1752, %v2130
      %v2143 = vadd.f32 %v1753, %v2133
      %2144 = vst.msk [vmem:[%s321] sm:$0xff] %vm348, %v2136
      %2145 = vst.msk [vmem:[%s321 + $0x10] sm:$0xff] %vm348, %v2137
      %2146 = vst.msk [vmem:[%s321 + $0x20] sm:$0xff] %vm348, %v2138
      %2147 = vst.msk [vmem:[%s321 + $0x30] sm:$0xff] %vm348, %v2139
      %2148 = vst.msk [vmem:[%s321 + $0x40] sm:$0xff] %vm348, %v2140
      %2149 = vst.msk [vmem:[%s321 + $0x50] sm:$0xff] %vm348, %v2141
      %2150 = vst.msk [vmem:[%s321 + $0x60] sm:$0xff] %vm348, %v2142
      %2151 = vst.msk [vmem:[%s321 + $0x70] sm:$0xff] %vm348, %v2143
      %v2152 = vsel %vm348, %v325, 0.0
      %2153 = vadd.xlane.f32.xlu0 %v2152
      %v2154 = vpop.xlane.xlu0 %2153
      %v2155 = vsel %vm348, %v327, 0.0
      %2156 = vadd.xlane.f32.xlu0 %v2155
      %v2157 = vpop.xlane.xlu0 %2156
      %v2158 = vsel %vm348, %v329, 0.0
      %2159 = vadd.xlane.f32.xlu0 %v2158
      %v2160 = vpop.xlane.xlu0 %2159
      %v2161 = vsel %vm348, %v331, 0.0
      %2162 = vadd.xlane.f32.xlu0 %v2161
      %v2163 = vpop.xlane.xlu0 %2162
      %v2164 = vsel %vm348, %v333, 0.0
      %2165 = vadd.xlane.f32.xlu0 %v2164
      %v2166 = vpop.xlane.xlu0 %2165
      %v2167 = vsel %vm348, %v335, 0.0
      %2168 = vadd.xlane.f32.xlu0 %v2167
      %v2169 = vpop.xlane.xlu0 %2168
      %v2170 = vsel %vm348, %v337, 0.0
      %2171 = vadd.xlane.f32.xlu0 %v2170
      %v2172 = vpop.xlane.xlu0 %2171
      %v2173 = vsel %vm348, %v339, 0.0
      %2174 = vadd.xlane.f32.xlu0 %v2173
      %v2175 = vpop.xlane.xlu0 %2174
      %v2176 = vmul.f32 %v2154, %v373
      %v2177 = vmul.f32 %v2157, %v373
      %v2178 = vmul.f32 %v2160, %v373
      %v2179 = vmul.f32 %v2163, %v373
      %v2180 = vmul.f32 %v2166, %v373
      %v2181 = vmul.f32 %v2169, %v373
      %v2182 = vmul.f32 %v2172, %v373
      %v2183 = vmul.f32 %v2175, %v373
      %v2184 = vsub.f32 %v325, %v2176
      %v2185 = vsub.f32 %v327, %v2177
      %v2186 = vsub.f32 %v329, %v2178
      %v2187 = vsub.f32 %v331, %v2179
      %v2188 = vsub.f32 %v333, %v2180
      %v2189 = vsub.f32 %v335, %v2181
      %v2190 = vsub.f32 %v337, %v2182
      %v2191 = vsub.f32 %v339, %v2183
      %v2192 = vmul.f32 %v2184, %v2184
      %v2193 = vmul.f32 %v2185, %v2185
      %v2194 = vmul.f32 %v2186, %v2186
      %v2195 = vmul.f32 %v2187, %v2187
      %v2196 = vmul.f32 %v2188, %v2188
      %v2197 = vmul.f32 %v2189, %v2189
      %v2198 = vmul.f32 %v2190, %v2190
      %v2199 = vmul.f32 %v2191, %v2191
      %v2200 = vsel %vm348, %v2192, 0.0
      %2201 = vadd.xlane.f32.xlu0 %v2200
      %v2202 = vpop.xlane.xlu0 %2201
      %v2203 = vsel %vm348, %v2193, 0.0
      %2204 = vadd.xlane.f32.xlu0 %v2203
      %v2205 = vpop.xlane.xlu0 %2204
      %v2206 = vsel %vm348, %v2194, 0.0
      %2207 = vadd.xlane.f32.xlu0 %v2206
      %v2208 = vpop.xlane.xlu0 %2207
      %v2209 = vsel %vm348, %v2195, 0.0
      %2210 = vadd.xlane.f32.xlu0 %v2209
      %v2211 = vpop.xlane.xlu0 %2210
      %v2212 = vsel %vm348, %v2196, 0.0
      %2213 = vadd.xlane.f32.xlu0 %v2212
      %v2214 = vpop.xlane.xlu0 %2213
      %v2215 = vsel %vm348, %v2197, 0.0
      %2216 = vadd.xlane.f32.xlu0 %v2215
      %v2217 = vpop.xlane.xlu0 %2216
      %v2218 = vsel %vm348, %v2198, 0.0
      %2219 = vadd.xlane.f32.xlu0 %v2218
      %v2220 = vpop.xlane.xlu0 %2219
      %v2221 = vsel %vm348, %v2199, 0.0
      %2222 = vadd.xlane.f32.xlu0 %v2221
      %v2223 = vpop.xlane.xlu0 %2222
      %v2224 = vmul.f32 %v2202, %v373
      %v2225 = vmul.f32 %v2205, %v373
      %v2226 = vmul.f32 %v2208, %v373
      %v2227 = vmul.f32 %v2211, %v373
      %v2228 = vmul.f32 %v2214, %v373
      %v2229 = vmul.f32 %v2217, %v373
      %v2230 = vmul.f32 %v2220, %v373
      %v2231 = vmul.f32 %v2223, %v373
      %v2232 = vadd.f32 %v2224, 1e-05
      %v2233 = vadd.f32 %v2225, 1e-05
      %v2234 = vadd.f32 %v2226, 1e-05
      %v2235 = vadd.f32 %v2227, 1e-05
      %v2236 = vadd.f32 %v2228, 1e-05
      %v2237 = vadd.f32 %v2229, 1e-05
      %v2238 = vadd.f32 %v2230, 1e-05
      %v2239 = vadd.f32 %v2231, 1e-05
      %v2240 = vrsqrt.pop %v2232
      %v2241 = vrsqrt.pop %v2233
      %v2242 = vrsqrt.pop %v2234
      %v2243 = vrsqrt.pop %v2235
      %v2244 = vrsqrt.pop %v2236
      %v2245 = vrsqrt.pop %v2237
      %v2246 = vrsqrt.pop %v2238
      %v2247 = vrsqrt.pop %v2239
      %v2248 = vmul.f32 %v2184, %v2240
      %v2249 = vmul.f32 %v2185, %v2241
      %v2250 = vmul.f32 %v2186, %v2242
      %v2251 = vmul.f32 %v2187, %v2243
      %v2252 = vmul.f32 %v2188, %v2244
      %v2253 = vmul.f32 %v2189, %v2245
      %v2254 = vmul.f32 %v2190, %v2246
      %v2255 = vmul.f32 %v2191, %v2247
      %v2256 = vmul.f32 %v2248, %v458
      %v2257 = vmul.f32 %v2249, %v458
      %v2258 = vmul.f32 %v2250, %v458
      %v2259 = vmul.f32 %v2251, %v458
      %v2260 = vmul.f32 %v2252, %v458
      %v2261 = vmul.f32 %v2253, %v458
      %v2262 = vmul.f32 %v2254, %v458
      %v2263 = vmul.f32 %v2255, %v458
      %v2264 = vadd.f32 %v2256, %v472
      %v2265 = vadd.f32 %v2257, %v472
      %v2266 = vadd.f32 %v2258, %v472
      %v2267 = vadd.f32 %v2259, %v472
      %v2268 = vadd.f32 %v2260, %v472
      %v2269 = vadd.f32 %v2261, %v472
      %v2270 = vadd.f32 %v2262, %v472
      %v2271 = vadd.f32 %v2263, %v472
      %v2272 = vpack.c.bf16 %v2265, %v2264
      %v2273 = vpack.c.bf16 %v2267, %v2266
      %v2274 = vpack.c.bf16 %v2269, %v2268
      %v2275 = vpack.c.bf16 %v2271, %v2270
      %v2277 = vsel %vm348, %v2272, 0
      %v2280 = vsel %vm348, %v2273, 0
      %v2283 = vsel %vm348, %v2274, 0
      %v2286 = vsel %vm348, %v2275, 0
      %2288 = vmatprep.subr.bf16.mxu0 0
      %2289 = vmatpush1.bf16.msra.mxu0 0
      %2290 = vmatprep.subr.bf16.mxu0 0
      %2291 = vmatpush1.bf16.msra.mxu0 0
      %2292 = vmatprep.subr.bf16.mxu0 0
      %2293 = vmatpush1.bf16.msra.mxu0 0
      %2294 = vmatprep.subr.bf16.mxu0 0
      %2295 = vmatpush1.bf16.msra.mxu0 0
      %2296 = vmatprep.subr.bf16.mxu0 0
      %2297 = vmatpush1.bf16.msra.mxu0 0
      %2298 = vmatprep.subr.bf16.mxu0 0
      %2299 = vmatpush1.bf16.msra.mxu0 0
      %2300 = vmatprep.subr.bf16.mxu0 0
      %2301 = vmatpush1.bf16.msra.mxu0 0
      %2302 = vmatprep.subr.bf16.mxu0 0
      %2303 = vmatpush1.bf16.msra.mxu0 %v496
      %2304 = vmatprep.subr.bf16.mxu0 0
      %2305 = vmatpush2.bf16.msra.mxu0 0
      %2306 = vmatprep.subr.bf16.mxu0 0
      %2307 = vmatpush2.bf16.msra.mxu0 0
      %2308 = vmatprep.subr.bf16.mxu0 0
      %2309 = vmatpush2.bf16.msra.mxu0 0
      %2310 = vmatprep.subr.bf16.mxu0 0
      %2311 = vmatpush2.bf16.msra.mxu0 0
      %2312 = vmatprep.subr.bf16.mxu0 0
      %2313 = vmatpush2.bf16.msra.mxu0 0
      %2314 = vmatprep.subr.bf16.mxu0 0
      %2315 = vmatpush2.bf16.msra.mxu0 0
      %2316 = vmatprep.subr.bf16.mxu0 0
      %2317 = vmatpush2.bf16.msra.mxu0 0
      %2318 = vmatprep.subr.bf16.mxu0 0
      %2319 = vmatpush2.bf16.msra.mxu0 0
      %2320 = vmatprep.mubr.bf16.mxu0 0
      %2321 = vmatmul.mubr.bf16.gmra.mxu0 %v2277
      %v2322 = vpop.f32.mrf.mxu0
      %v2323 = vadd.f32 %v490, %v2322
      %v2324 = vpop.f32.mrf.mxu0
      %v2325 = vpop.f32.mrf.mxu0
      %v2326 = vadd.f32 %v490, %v2325
      %v2327 = vpop.f32.mrf.mxu0
      %2328 = vmatprep.mubr.bf16.mxu0 0
      %2329 = vmatmul.mubr.bf16.gmra.mxu0 %v2280
      %v2330 = vpop.f32.mrf.mxu0
      %v2331 = vadd.f32 %v490, %v2330
      %v2332 = vpop.f32.mrf.mxu0
      %v2333 = vpop.f32.mrf.mxu0
      %v2334 = vadd.f32 %v490, %v2333
      %v2335 = vpop.f32.mrf.mxu0
      %2336 = vmatprep.mubr.bf16.mxu0 0
      %2337 = vmatmul.mubr.bf16.gmra.mxu0 %v2283
      %v2338 = vpop.f32.mrf.mxu0
      %v2339 = vadd.f32 %v490, %v2338
      %v2340 = vpop.f32.mrf.mxu0
      %v2341 = vpop.f32.mrf.mxu0
      %v2342 = vadd.f32 %v490, %v2341
      %v2343 = vpop.f32.mrf.mxu0
      %2344 = vmatprep.mubr.bf16.mxu0 0
      %2345 = vmatmul.mubr.bf16.gmra.mxu0 %v2286
      %v2346 = vpop.f32.mrf.mxu0
      %v2347 = vadd.f32 %v490, %v2346
      %v2348 = vpop.f32.mrf.mxu0
      %v2349 = vpop.f32.mrf.mxu0
      %v2350 = vadd.f32 %v490, %v2349
      %v2351 = vpop.f32.mrf.mxu0
      %2352 = vdwg.mxu0
      %v2353 = vadd.f32 %v325, %v579
      %v2354 = vadd.f32 %v327, %v579
      %v2355 = vadd.f32 %v329, %v579
      %v2356 = vadd.f32 %v331, %v579
      %v2357 = vadd.f32 %v333, %v579
      %v2358 = vadd.f32 %v335, %v579
      %v2359 = vadd.f32 %v337, %v579
      %v2360 = vadd.f32 %v339, %v579
      %v2361 = vpack.c.bf16 %v2326, %v2323
      %v2362 = vpack.c.bf16 %v2334, %v2331
      %v2363 = vpack.c.bf16 %v2342, %v2339
      %v2364 = vpack.c.bf16 %v2350, %v2347
      %2369 = vrot.lane.b32.xlu0 %v2361, 112
      %v2370 = vpop.permute.xlu0 %2369
      %2371 = vrot.lane.b32.xlu0 %v2362, 112
      %v2372 = vpop.permute.xlu0 %2371
      %2373 = vrot.lane.b32.xlu0 %v2363, 112
      %v2374 = vpop.permute.xlu0 %2373
      %2375 = vrot.lane.b32.xlu0 %v2364, 112
      %v2376 = vpop.permute.xlu0 %2375
      %v2378 = vsel %vm605, %v2361, 0
      %v2381 = vsel %vm605, %v2362, 0
      %v2384 = vsel %vm605, %v2363, 0
      %v2387 = vsel %vm605, %v2364, 0
      %v2390 = vsel %vm605, %v2370, 0
      %v2393 = vsel %vm605, %v2372, 0
      %v2396 = vsel %vm605, %v2374, 0
      %v2399 = vsel %vm605, %v2376, 0
      %2401 = vmatprep.subr.bf16.mxu0 0
      %2402 = vmatpush1.bf16.xpose.msra.mxu0 0
      %2403 = vmatprep.subr.bf16.mxu0 0
      %2404 = vmatpush1.bf16.xpose.msra.mxu0 0
      %2405 = vmatprep.subr.bf16.mxu0 0
      %2406 = vmatpush1.bf16.xpose.msra.mxu0 0
      %2407 = vmatprep.subr.bf16.mxu0 0
      %2408 = vmatpush1.bf16.xpose.msra.mxu0 0
      %2409 = vmatprep.subr.bf16.mxu0 0
      %2410 = vmatpush1.bf16.xpose.msra.mxu0 %v2399
      %2411 = vmatprep.subr.bf16.mxu0 0
      %2412 = vmatpush1.bf16.xpose.msra.mxu0 %v2396
      %2413 = vmatprep.subr.bf16.mxu0 0
      %2414 = vmatpush1.bf16.xpose.msra.mxu0 %v2393
      %2415 = vmatprep.subr.bf16.mxu0 0
      %2416 = vmatpush1.bf16.xpose.msra.mxu0 %v2390
      %2417 = vmatprep.subr.bf16.mxu0 0
      %2418 = vmatpush2.bf16.xpose.msra.mxu0 0
      %2419 = vmatprep.subr.bf16.mxu0 0
      %2420 = vmatpush2.bf16.xpose.msra.mxu0 0
      %2421 = vmatprep.subr.bf16.mxu0 0
      %2422 = vmatpush2.bf16.xpose.msra.mxu0 0
      %2423 = vmatprep.subr.bf16.mxu0 0
      %2424 = vmatpush2.bf16.xpose.msra.mxu0 0
      %2425 = vmatprep.subr.bf16.mxu0 0
      %2426 = vmatpush2.bf16.xpose.msra.mxu0 0
      %2427 = vmatprep.subr.bf16.mxu0 0
      %2428 = vmatpush2.bf16.xpose.msra.mxu0 0
      %2429 = vmatprep.subr.bf16.mxu0 0
      %2430 = vmatpush2.bf16.xpose.msra.mxu0 0
      %2431 = vmatprep.subr.bf16.mxu0 0
      %2432 = vmatpush2.bf16.xpose.msra.mxu0 0
      %2433 = vmatprep.mubr.bf16.mxu0 0
      %2434 = vmatmul.mubr.bf16.gmra.mxu0 %v2378
      %v2435 = vpop.f32.mrf.mxu0
      %v2436 = vadd.f32 0.0, %v2435
      %v2437 = vpop.f32.mrf.mxu0
      %v2438 = vpop.f32.mrf.mxu0
      %v2439 = vadd.f32 0.0, %v2438
      %v2440 = vpop.f32.mrf.mxu0
      %2441 = vmatprep.mubr.bf16.mxu0 0
      %2442 = vmatmul.mubr.bf16.gmra.mxu0 %v2381
      %v2443 = vpop.f32.mrf.mxu0
      %v2444 = vadd.f32 0.0, %v2443
      %v2445 = vpop.f32.mrf.mxu0
      %v2446 = vpop.f32.mrf.mxu0
      %v2447 = vadd.f32 0.0, %v2446
      %v2448 = vpop.f32.mrf.mxu0
      %2449 = vmatprep.mubr.bf16.mxu0 0
      %2450 = vmatmul.mubr.bf16.gmra.mxu0 %v2384
      %v2451 = vpop.f32.mrf.mxu0
      %v2452 = vadd.f32 0.0, %v2451
      %v2453 = vpop.f32.mrf.mxu0
      %v2454 = vpop.f32.mrf.mxu0
      %v2455 = vadd.f32 0.0, %v2454
      %v2456 = vpop.f32.mrf.mxu0
      %2457 = vmatprep.mubr.bf16.mxu0 0
      %2458 = vmatmul.mubr.bf16.gmra.mxu0 %v2387
      %v2459 = vpop.f32.mrf.mxu0
      %v2460 = vadd.f32 0.0, %v2459
      %v2461 = vpop.f32.mrf.mxu0
      %v2462 = vpop.f32.mrf.mxu0
      %v2463 = vadd.f32 0.0, %v2462
      %v2464 = vpop.f32.mrf.mxu0
      %2465 = vdwg.mxu0
      %v2466 = vmul.f32 %v2436, 0.5
      %v2467 = vmul.f32 %v2439, 0.5
      %v2468 = vmul.f32 %v2444, 0.5
      %v2469 = vmul.f32 %v2447, 0.5
      %v2470 = vmul.f32 %v2452, 0.5
      %v2471 = vmul.f32 %v2455, 0.5
      %v2472 = vmul.f32 %v2460, 0.5
      %v2473 = vmul.f32 %v2463, 0.5
      %v2474 = vsel %vm703, %v2466, -inf
      %2475 = vmax.xlane.f32.xlu0 %v2474
      %v2476 = vpop.xlane.xlu0 %2475
      %v2477 = vsel %vm703, %v2467, -inf
      %2478 = vmax.xlane.f32.xlu0 %v2477
      %v2479 = vpop.xlane.xlu0 %2478
      %v2480 = vsel %vm703, %v2468, -inf
      %2481 = vmax.xlane.f32.xlu0 %v2480
      %v2482 = vpop.xlane.xlu0 %2481
      %v2483 = vsel %vm703, %v2469, -inf
      %2484 = vmax.xlane.f32.xlu0 %v2483
      %v2485 = vpop.xlane.xlu0 %2484
      %v2486 = vsel %vm703, %v2470, -inf
      %2487 = vmax.xlane.f32.xlu0 %v2486
      %v2488 = vpop.xlane.xlu0 %2487
      %v2489 = vsel %vm703, %v2471, -inf
      %2490 = vmax.xlane.f32.xlu0 %v2489
      %v2491 = vpop.xlane.xlu0 %2490
      %v2492 = vsel %vm703, %v2472, -inf
      %2493 = vmax.xlane.f32.xlu0 %v2492
      %v2494 = vpop.xlane.xlu0 %2493
      %v2495 = vsel %vm703, %v2473, -inf
      %2496 = vmax.xlane.f32.xlu0 %v2495
      %v2497 = vpop.xlane.xlu0 %2496
      %v2498 = vsub.f32 %v2466, %v2476
      %v2499 = vsub.f32 %v2467, %v2479
      %v2500 = vsub.f32 %v2468, %v2482
      %v2501 = vsub.f32 %v2469, %v2485
      %v2502 = vsub.f32 %v2470, %v2488
      %v2503 = vsub.f32 %v2471, %v2491
      %v2504 = vsub.f32 %v2472, %v2494
      %v2505 = vsub.f32 %v2473, %v2497
      %v2506 = vmul.f32 %v2498, 1.442695
      %v2507 = vpow.pop %v2506
      %v2508 = vmul.f32 %v2499, 1.442695
      %v2509 = vpow.pop %v2508
      %v2510 = vmul.f32 %v2500, 1.442695
      %v2511 = vpow.pop %v2510
      %v2512 = vmul.f32 %v2501, 1.442695
      %v2513 = vpow.pop %v2512
      %v2514 = vmul.f32 %v2502, 1.442695
      %v2515 = vpow.pop %v2514
      %v2516 = vmul.f32 %v2503, 1.442695
      %v2517 = vpow.pop %v2516
      %v2518 = vmul.f32 %v2504, 1.442695
      %v2519 = vpow.pop %v2518
      %v2520 = vmul.f32 %v2505, 1.442695
      %v2521 = vpow.pop %v2520
      %v2522 = vsel %vm703, %v2507, 0.0
      %2523 = vadd.xlane.f32.xlu0 %v2522
      %v2524 = vpop.xlane.xlu0 %2523
      %v2525 = vsel %vm703, %v2509, 0.0
      %2526 = vadd.xlane.f32.xlu0 %v2525
      %v2527 = vpop.xlane.xlu0 %2526
      %v2528 = vsel %vm703, %v2511, 0.0
      %2529 = vadd.xlane.f32.xlu0 %v2528
      %v2530 = vpop.xlane.xlu0 %2529
      %v2531 = vsel %vm703, %v2513, 0.0
      %2532 = vadd.xlane.f32.xlu0 %v2531
      %v2533 = vpop.xlane.xlu0 %2532
      %v2534 = vsel %vm703, %v2515, 0.0
      %2535 = vadd.xlane.f32.xlu0 %v2534
      %v2536 = vpop.xlane.xlu0 %2535
      %v2537 = vsel %vm703, %v2517, 0.0
      %2538 = vadd.xlane.f32.xlu0 %v2537
      %v2539 = vpop.xlane.xlu0 %2538
      %v2540 = vsel %vm703, %v2519, 0.0
      %2541 = vadd.xlane.f32.xlu0 %v2540
      %v2542 = vpop.xlane.xlu0 %2541
      %v2543 = vsel %vm703, %v2521, 0.0
      %2544 = vadd.xlane.f32.xlu0 %v2543
      %v2545 = vpop.xlane.xlu0 %2544
      %v2546 = vrcp.pop %v2524
      %v2547 = vrcp.pop %v2527
      %v2548 = vrcp.pop %v2530
      %v2549 = vrcp.pop %v2533
      %v2550 = vrcp.pop %v2536
      %v2551 = vrcp.pop %v2539
      %v2552 = vrcp.pop %v2542
      %v2553 = vrcp.pop %v2545
      %v2554 = vmul.f32 %v2507, %v2546
      %v2555 = vmul.f32 %v2509, %v2547
      %v2556 = vmul.f32 %v2511, %v2548
      %v2557 = vmul.f32 %v2513, %v2549
      %v2558 = vmul.f32 %v2515, %v2550
      %v2559 = vmul.f32 %v2517, %v2551
      %v2560 = vmul.f32 %v2519, %v2552
      %v2561 = vmul.f32 %v2521, %v2553
      %v2562 = vpack.c.bf16 %v2555, %v2554
      %v2563 = vpack.c.bf16 %v2557, %v2556
      %v2564 = vpack.c.bf16 %v2559, %v2558
      %v2565 = vpack.c.bf16 %v2561, %v2560
      %2566 = vrot.lane.b32.xlu0 %v2361, 96
      %v2567 = vpop.permute.xlu0 %2566
      %2568 = vrot.lane.b32.xlu0 %v2362, 96
      %v2569 = vpop.permute.xlu0 %2568
      %2570 = vrot.lane.b32.xlu0 %v2363, 96
      %v2571 = vpop.permute.xlu0 %2570
      %2572 = vrot.lane.b32.xlu0 %v2364, 96
      %v2573 = vpop.permute.xlu0 %2572
      %v2579 = vsel %vm703, %v2562, 0
      %v2582 = vsel %vm703, %v2563, 0
      %v2585 = vsel %vm703, %v2564, 0
      %v2588 = vsel %vm703, %v2565, 0
      %2590 = vmatprep.subr.bf16.mxu0 0
      %2591 = vmatpush1.bf16.msra.mxu0 0
      %2592 = vmatprep.subr.bf16.mxu0 0
      %2593 = vmatpush1.bf16.msra.mxu0 0
      %2594 = vmatprep.subr.bf16.mxu0 0
      %2595 = vmatpush1.bf16.msra.mxu0 0
      %2596 = vmatprep.subr.bf16.mxu0 0
      %2597 = vmatpush1.bf16.msra.mxu0 0
      %2598 = vmatprep.subr.bf16.mxu0 0
      %2599 = vmatpush1.bf16.msra.mxu0 %v2573
      %2600 = vmatprep.subr.bf16.mxu0 0
      %2601 = vmatpush1.bf16.msra.mxu0 %v2571
      %2602 = vmatprep.subr.bf16.mxu0 0
      %2603 = vmatpush1.bf16.msra.mxu0 %v2569
      %2604 = vmatprep.subr.bf16.mxu0 0
      %2605 = vmatpush1.bf16.msra.mxu0 %v2567
      %2606 = vmatprep.subr.bf16.mxu0 0
      %2607 = vmatpush2.bf16.msra.mxu0 0
      %2608 = vmatprep.subr.bf16.mxu0 0
      %2609 = vmatpush2.bf16.msra.mxu0 0
      %2610 = vmatprep.subr.bf16.mxu0 0
      %2611 = vmatpush2.bf16.msra.mxu0 0
      %2612 = vmatprep.subr.bf16.mxu0 0
      %2613 = vmatpush2.bf16.msra.mxu0 0
      %2614 = vmatprep.subr.bf16.mxu0 0
      %2615 = vmatpush2.bf16.msra.mxu0 0
      %2616 = vmatprep.subr.bf16.mxu0 0
      %2617 = vmatpush2.bf16.msra.mxu0 0
      %2618 = vmatprep.subr.bf16.mxu0 0
      %2619 = vmatpush2.bf16.msra.mxu0 0
      %2620 = vmatprep.subr.bf16.mxu0 0
      %2621 = vmatpush2.bf16.msra.mxu0 0
      %2622 = vmatprep.mubr.bf16.mxu0 0
      %2623 = vmatmul.mubr.bf16.gmra.mxu0 %v2579
      %v2624 = vpop.f32.mrf.mxu0
      %v2625 = vadd.f32 0.0, %v2624
      %v2626 = vpop.f32.mrf.mxu0
      %v2627 = vpop.f32.mrf.mxu0
      %v2628 = vadd.f32 0.0, %v2627
      %v2629 = vpop.f32.mrf.mxu0
      %2630 = vmatprep.mubr.bf16.mxu0 0
      %2631 = vmatmul.mubr.bf16.gmra.mxu0 %v2582
      %v2632 = vpop.f32.mrf.mxu0
      %v2633 = vadd.f32 0.0, %v2632
      %v2634 = vpop.f32.mrf.mxu0
      %v2635 = vpop.f32.mrf.mxu0
      %v2636 = vadd.f32 0.0, %v2635
      %v2637 = vpop.f32.mrf.mxu0
      %2638 = vmatprep.mubr.bf16.mxu0 0
      %2639 = vmatmul.mubr.bf16.gmra.mxu0 %v2585
      %v2640 = vpop.f32.mrf.mxu0
      %v2641 = vadd.f32 0.0, %v2640
      %v2642 = vpop.f32.mrf.mxu0
      %v2643 = vpop.f32.mrf.mxu0
      %v2644 = vadd.f32 0.0, %v2643
      %v2645 = vpop.f32.mrf.mxu0
      %2646 = vmatprep.mubr.bf16.mxu0 0
      %2647 = vmatmul.mubr.bf16.gmra.mxu0 %v2588
      %v2648 = vpop.f32.mrf.mxu0
      %v2649 = vadd.f32 0.0, %v2648
      %v2650 = vpop.f32.mrf.mxu0
      %v2651 = vpop.f32.mrf.mxu0
      %v2652 = vadd.f32 0.0, %v2651
      %v2653 = vpop.f32.mrf.mxu0
      %2654 = vdwg.mxu0
      %v2655 = vpack.c.bf16 %v2628, %v2625
      %v2656 = vpack.c.bf16 %v2636, %v2633
      %v2657 = vpack.c.bf16 %v2644, %v2641
      %v2658 = vpack.c.bf16 %v2652, %v2649
      %v2660 = vsel %vm605, %v2655, 0
      %v2663 = vsel %vm605, %v2656, 0
      %v2666 = vsel %vm605, %v2657, 0
      %v2669 = vsel %vm605, %v2658, 0
      %2671 = vmatprep.subr.bf16.mxu0 0
      %2672 = vmatpush1.bf16.msra.mxu0 0
      %2673 = vmatprep.subr.bf16.mxu0 0
      %2674 = vmatpush1.bf16.msra.mxu0 0
      %2675 = vmatprep.subr.bf16.mxu0 0
      %2676 = vmatpush1.bf16.msra.mxu0 0
      %2677 = vmatprep.subr.bf16.mxu0 0
      %2678 = vmatpush1.bf16.msra.mxu0 0
      %2679 = vmatprep.subr.bf16.mxu0 0
      %2680 = vmatpush1.bf16.msra.mxu0 0
      %2681 = vmatprep.subr.bf16.mxu0 0
      %2682 = vmatpush1.bf16.msra.mxu0 0
      %2683 = vmatprep.subr.bf16.mxu0 0
      %2684 = vmatpush1.bf16.msra.mxu0 0
      %2685 = vmatprep.subr.bf16.mxu0 0
      %2686 = vmatpush1.bf16.msra.mxu0 %v903
      %2687 = vmatprep.subr.bf16.mxu0 0
      %2688 = vmatpush2.bf16.msra.mxu0 0
      %2689 = vmatprep.subr.bf16.mxu0 0
      %2690 = vmatpush2.bf16.msra.mxu0 0
      %2691 = vmatprep.subr.bf16.mxu0 0
      %2692 = vmatpush2.bf16.msra.mxu0 0
      %2693 = vmatprep.subr.bf16.mxu0 0
      %2694 = vmatpush2.bf16.msra.mxu0 0
      %2695 = vmatprep.subr.bf16.mxu0 0
      %2696 = vmatpush2.bf16.msra.mxu0 0
      %2697 = vmatprep.subr.bf16.mxu0 0
      %2698 = vmatpush2.bf16.msra.mxu0 0
      %2699 = vmatprep.subr.bf16.mxu0 0
      %2700 = vmatpush2.bf16.msra.mxu0 0
      %2701 = vmatprep.subr.bf16.mxu0 0
      %2702 = vmatpush2.bf16.msra.mxu0 0
      %2703 = vmatprep.mubr.bf16.mxu0 0
      %2704 = vmatmul.mubr.bf16.gmra.mxu0 %v2660
      %v2705 = vpop.f32.mrf.mxu0
      %v2706 = vadd.f32 0.0, %v2705
      %v2707 = vpop.f32.mrf.mxu0
      %v2708 = vpop.f32.mrf.mxu0
      %v2709 = vadd.f32 0.0, %v2708
      %v2710 = vpop.f32.mrf.mxu0
      %2711 = vmatprep.mubr.bf16.mxu0 0
      %2712 = vmatmul.mubr.bf16.gmra.mxu0 %v2663
      %v2713 = vpop.f32.mrf.mxu0
      %v2714 = vadd.f32 0.0, %v2713
      %v2715 = vpop.f32.mrf.mxu0
      %v2716 = vpop.f32.mrf.mxu0
      %v2717 = vadd.f32 0.0, %v2716
      %v2718 = vpop.f32.mrf.mxu0
      %2719 = vmatprep.mubr.bf16.mxu0 0
      %2720 = vmatmul.mubr.bf16.gmra.mxu0 %v2666
      %v2721 = vpop.f32.mrf.mxu0
      %v2722 = vadd.f32 0.0, %v2721
      %v2723 = vpop.f32.mrf.mxu0
      %v2724 = vpop.f32.mrf.mxu0
      %v2725 = vadd.f32 0.0, %v2724
      %v2726 = vpop.f32.mrf.mxu0
      %2727 = vmatprep.mubr.bf16.mxu0 0
      %2728 = vmatmul.mubr.bf16.gmra.mxu0 %v2669
      %v2729 = vpop.f32.mrf.mxu0
      %v2730 = vadd.f32 0.0, %v2729
      %v2731 = vpop.f32.mrf.mxu0
      %v2732 = vpop.f32.mrf.mxu0
      %v2733 = vadd.f32 0.0, %v2732
      %v2734 = vpop.f32.mrf.mxu0
      %2735 = vdwg.mxu0
      %v2736 = vadd.f32 %v2353, %v2706
      %v2737 = vadd.f32 %v2354, %v2709
      %v2738 = vadd.f32 %v2355, %v2714
      %v2739 = vadd.f32 %v2356, %v2717
      %v2740 = vadd.f32 %v2357, %v2722
      %v2741 = vadd.f32 %v2358, %v2725
      %v2742 = vadd.f32 %v2359, %v2730
      %v2743 = vadd.f32 %v2360, %v2733
      %2744 = vrot.lane.b32.xlu0 %v2361, 124
      %v2745 = vpop.permute.xlu0 %2744
      %2746 = vrot.lane.b32.xlu0 %v2362, 124
      %v2747 = vpop.permute.xlu0 %2746
      %2748 = vrot.lane.b32.xlu0 %v2363, 124
      %v2749 = vpop.permute.xlu0 %2748
      %2750 = vrot.lane.b32.xlu0 %v2364, 124
      %v2751 = vpop.permute.xlu0 %2750
      %2752 = vrot.lane.b32.xlu0 %v2361, 108
      %v2753 = vpop.permute.xlu0 %2752
      %2754 = vrot.lane.b32.xlu0 %v2362, 108
      %v2755 = vpop.permute.xlu0 %2754
      %2756 = vrot.lane.b32.xlu0 %v2363, 108
      %v2757 = vpop.permute.xlu0 %2756
      %2758 = vrot.lane.b32.xlu0 %v2364, 108
      %v2759 = vpop.permute.xlu0 %2758
      %v2761 = vsel %vm605, %v2745, 0
      %v2764 = vsel %vm605, %v2747, 0
      %v2767 = vsel %vm605, %v2749, 0
      %v2770 = vsel %vm605, %v2751, 0
      %v2773 = vsel %vm605, %v2753, 0
      %v2776 = vsel %vm605, %v2755, 0
      %v2779 = vsel %vm605, %v2757, 0
      %v2782 = vsel %vm605, %v2759, 0
      %2784 = vmatprep.subr.bf16.mxu0 0
      %2785 = vmatpush1.bf16.xpose.msra.mxu0 0
      %2786 = vmatprep.subr.bf16.mxu0 0
      %2787 = vmatpush1.bf16.xpose.msra.mxu0 0
      %2788 = vmatprep.subr.bf16.mxu0 0
      %2789 = vmatpush1.bf16.xpose.msra.mxu0 0
      %2790 = vmatprep.subr.bf16.mxu0 0
      %2791 = vmatpush1.bf16.xpose.msra.mxu0 0
      %2792 = vmatprep.subr.bf16.mxu0 0
      %2793 = vmatpush1.bf16.xpose.msra.mxu0 %v2782
      %2794 = vmatprep.subr.bf16.mxu0 0
      %2795 = vmatpush1.bf16.xpose.msra.mxu0 %v2779
      %2796 = vmatprep.subr.bf16.mxu0 0
      %2797 = vmatpush1.bf16.xpose.msra.mxu0 %v2776
      %2798 = vmatprep.subr.bf16.mxu0 0
      %2799 = vmatpush1.bf16.xpose.msra.mxu0 %v2773
      %2800 = vmatprep.subr.bf16.mxu0 0
      %2801 = vmatpush2.bf16.xpose.msra.mxu0 0
      %2802 = vmatprep.subr.bf16.mxu0 0
      %2803 = vmatpush2.bf16.xpose.msra.mxu0 0
      %2804 = vmatprep.subr.bf16.mxu0 0
      %2805 = vmatpush2.bf16.xpose.msra.mxu0 0
      %2806 = vmatprep.subr.bf16.mxu0 0
      %2807 = vmatpush2.bf16.xpose.msra.mxu0 0
      %2808 = vmatprep.subr.bf16.mxu0 0
      %2809 = vmatpush2.bf16.xpose.msra.mxu0 0
      %2810 = vmatprep.subr.bf16.mxu0 0
      %2811 = vmatpush2.bf16.xpose.msra.mxu0 0
      %2812 = vmatprep.subr.bf16.mxu0 0
      %2813 = vmatpush2.bf16.xpose.msra.mxu0 0
      %2814 = vmatprep.subr.bf16.mxu0 0
      %2815 = vmatpush2.bf16.xpose.msra.mxu0 0
      %2816 = vmatprep.mubr.bf16.mxu0 0
      %2817 = vmatmul.mubr.bf16.gmra.mxu0 %v2761
      %v2818 = vpop.f32.mrf.mxu0
      %v2819 = vadd.f32 0.0, %v2818
      %v2820 = vpop.f32.mrf.mxu0
      %v2821 = vpop.f32.mrf.mxu0
      %v2822 = vadd.f32 0.0, %v2821
      %v2823 = vpop.f32.mrf.mxu0
      %2824 = vmatprep.mubr.bf16.mxu0 0
      %2825 = vmatmul.mubr.bf16.gmra.mxu0 %v2764
      %v2826 = vpop.f32.mrf.mxu0
      %v2827 = vadd.f32 0.0, %v2826
      %v2828 = vpop.f32.mrf.mxu0
      %v2829 = vpop.f32.mrf.mxu0
      %v2830 = vadd.f32 0.0, %v2829
      %v2831 = vpop.f32.mrf.mxu0
      %2832 = vmatprep.mubr.bf16.mxu0 0
      %2833 = vmatmul.mubr.bf16.gmra.mxu0 %v2767
      %v2834 = vpop.f32.mrf.mxu0
      %v2835 = vadd.f32 0.0, %v2834
      %v2836 = vpop.f32.mrf.mxu0
      %v2837 = vpop.f32.mrf.mxu0
      %v2838 = vadd.f32 0.0, %v2837
      %v2839 = vpop.f32.mrf.mxu0
      %2840 = vmatprep.mubr.bf16.mxu0 0
      %2841 = vmatmul.mubr.bf16.gmra.mxu0 %v2770
      %v2842 = vpop.f32.mrf.mxu0
      %v2843 = vadd.f32 0.0, %v2842
      %v2844 = vpop.f32.mrf.mxu0
      %v2845 = vpop.f32.mrf.mxu0
      %v2846 = vadd.f32 0.0, %v2845
      %v2847 = vpop.f32.mrf.mxu0
      %2848 = vdwg.mxu0
      %v2849 = vmul.f32 %v2819, 0.5
      %v2850 = vmul.f32 %v2822, 0.5
      %v2851 = vmul.f32 %v2827, 0.5
      %v2852 = vmul.f32 %v2830, 0.5
      %v2853 = vmul.f32 %v2835, 0.5
      %v2854 = vmul.f32 %v2838, 0.5
      %v2855 = vmul.f32 %v2843, 0.5
      %v2856 = vmul.f32 %v2846, 0.5
      %v2857 = vsel %vm703, %v2849, -inf
      %2858 = vmax.xlane.f32.xlu0 %v2857
      %v2859 = vpop.xlane.xlu0 %2858
      %v2860 = vsel %vm703, %v2850, -inf
      %2861 = vmax.xlane.f32.xlu0 %v2860
      %v2862 = vpop.xlane.xlu0 %2861
      %v2863 = vsel %vm703, %v2851, -inf
      %2864 = vmax.xlane.f32.xlu0 %v2863
      %v2865 = vpop.xlane.xlu0 %2864
      %v2866 = vsel %vm703, %v2852, -inf
      %2867 = vmax.xlane.f32.xlu0 %v2866
      %v2868 = vpop.xlane.xlu0 %2867
      %v2869 = vsel %vm703, %v2853, -inf
      %2870 = vmax.xlane.f32.xlu0 %v2869
      %v2871 = vpop.xlane.xlu0 %2870
      %v2872 = vsel %vm703, %v2854, -inf
      %2873 = vmax.xlane.f32.xlu0 %v2872
      %v2874 = vpop.xlane.xlu0 %2873
      %v2875 = vsel %vm703, %v2855, -inf
      %2876 = vmax.xlane.f32.xlu0 %v2875
      %v2877 = vpop.xlane.xlu0 %2876
      %v2878 = vsel %vm703, %v2856, -inf
      %2879 = vmax.xlane.f32.xlu0 %v2878
      %v2880 = vpop.xlane.xlu0 %2879
      %v2881 = vsub.f32 %v2849, %v2859
      %v2882 = vsub.f32 %v2850, %v2862
      %v2883 = vsub.f32 %v2851, %v2865
      %v2884 = vsub.f32 %v2852, %v2868
      %v2885 = vsub.f32 %v2853, %v2871
      %v2886 = vsub.f32 %v2854, %v2874
      %v2887 = vsub.f32 %v2855, %v2877
      %v2888 = vsub.f32 %v2856, %v2880
      %v2889 = vmul.f32 %v2881, 1.442695
      %v2890 = vpow.pop %v2889
      %v2891 = vmul.f32 %v2882, 1.442695
      %v2892 = vpow.pop %v2891
      %v2893 = vmul.f32 %v2883, 1.442695
      %v2894 = vpow.pop %v2893
      %v2895 = vmul.f32 %v2884, 1.442695
      %v2896 = vpow.pop %v2895
      %v2897 = vmul.f32 %v2885, 1.442695
      %v2898 = vpow.pop %v2897
      %v2899 = vmul.f32 %v2886, 1.442695
      %v2900 = vpow.pop %v2899
      %v2901 = vmul.f32 %v2887, 1.442695
      %v2902 = vpow.pop %v2901
      %v2903 = vmul.f32 %v2888, 1.442695
      %v2904 = vpow.pop %v2903
      %v2905 = vsel %vm703, %v2890, 0.0
      %2906 = vadd.xlane.f32.xlu0 %v2905
      %v2907 = vpop.xlane.xlu0 %2906
      %v2908 = vsel %vm703, %v2892, 0.0
      %2909 = vadd.xlane.f32.xlu0 %v2908
      %v2910 = vpop.xlane.xlu0 %2909
      %v2911 = vsel %vm703, %v2894, 0.0
      %2912 = vadd.xlane.f32.xlu0 %v2911
      %v2913 = vpop.xlane.xlu0 %2912
      %v2914 = vsel %vm703, %v2896, 0.0
      %2915 = vadd.xlane.f32.xlu0 %v2914
      %v2916 = vpop.xlane.xlu0 %2915
      %v2917 = vsel %vm703, %v2898, 0.0
      %2918 = vadd.xlane.f32.xlu0 %v2917
      %v2919 = vpop.xlane.xlu0 %2918
      %v2920 = vsel %vm703, %v2900, 0.0
      %2921 = vadd.xlane.f32.xlu0 %v2920
      %v2922 = vpop.xlane.xlu0 %2921
      %v2923 = vsel %vm703, %v2902, 0.0
      %2924 = vadd.xlane.f32.xlu0 %v2923
      %v2925 = vpop.xlane.xlu0 %2924
      %v2926 = vsel %vm703, %v2904, 0.0
      %2927 = vadd.xlane.f32.xlu0 %v2926
      %v2928 = vpop.xlane.xlu0 %2927
      %v2929 = vrcp.pop %v2907
      %v2930 = vrcp.pop %v2910
      %v2931 = vrcp.pop %v2913
      %v2932 = vrcp.pop %v2916
      %v2933 = vrcp.pop %v2919
      %v2934 = vrcp.pop %v2922
      %v2935 = vrcp.pop %v2925
      %v2936 = vrcp.pop %v2928
      %v2937 = vmul.f32 %v2890, %v2929
      %v2938 = vmul.f32 %v2892, %v2930
      %v2939 = vmul.f32 %v2894, %v2931
      %v2940 = vmul.f32 %v2896, %v2932
      %v2941 = vmul.f32 %v2898, %v2933
      %v2942 = vmul.f32 %v2900, %v2934
      %v2943 = vmul.f32 %v2902, %v2935
      %v2944 = vmul.f32 %v2904, %v2936
      %v2945 = vpack.c.bf16 %v2938, %v2937
      %v2946 = vpack.c.bf16 %v2940, %v2939
      %v2947 = vpack.c.bf16 %v2942, %v2941
      %v2948 = vpack.c.bf16 %v2944, %v2943
      %2949 = vrot.lane.b32.xlu0 %v2361, 92
      %v2950 = vpop.permute.xlu0 %2949
      %2951 = vrot.lane.b32.xlu0 %v2362, 92
      %v2952 = vpop.permute.xlu0 %2951
      %2953 = vrot.lane.b32.xlu0 %v2363, 92
      %v2954 = vpop.permute.xlu0 %2953
      %2955 = vrot.lane.b32.xlu0 %v2364, 92
      %v2956 = vpop.permute.xlu0 %2955
      %v2962 = vsel %vm703, %v2945, 0
      %v2965 = vsel %vm703, %v2946, 0
      %v2968 = vsel %vm703, %v2947, 0
      %v2971 = vsel %vm703, %v2948, 0
      %2973 = vmatprep.subr.bf16.mxu0 0
      %2974 = vmatpush1.bf16.msra.mxu0 0
      %2975 = vmatprep.subr.bf16.mxu0 0
      %2976 = vmatpush1.bf16.msra.mxu0 0
      %2977 = vmatprep.subr.bf16.mxu0 0
      %2978 = vmatpush1.bf16.msra.mxu0 0
      %2979 = vmatprep.subr.bf16.mxu0 0
      %2980 = vmatpush1.bf16.msra.mxu0 0
      %2981 = vmatprep.subr.bf16.mxu0 0
      %2982 = vmatpush1.bf16.msra.mxu0 %v2956
      %2983 = vmatprep.subr.bf16.mxu0 0
      %2984 = vmatpush1.bf16.msra.mxu0 %v2954
      %2985 = vmatprep.subr.bf16.mxu0 0
      %2986 = vmatpush1.bf16.msra.mxu0 %v2952
      %2987 = vmatprep.subr.bf16.mxu0 0
      %2988 = vmatpush1.bf16.msra.mxu0 %v2950
      %2989 = vmatprep.subr.bf16.mxu0 0
      %2990 = vmatpush2.bf16.msra.mxu0 0
      %2991 = vmatprep.subr.bf16.mxu0 0
      %2992 = vmatpush2.bf16.msra.mxu0 0
      %2993 = vmatprep.subr.bf16.mxu0 0
      %2994 = vmatpush2.bf16.msra.mxu0 0
      %2995 = vmatprep.subr.bf16.mxu0 0
      %2996 = vmatpush2.bf16.msra.mxu0 0
      %2997 = vmatprep.subr.bf16.mxu0 0
      %2998 = vmatpush2.bf16.msra.mxu0 0
      %2999 = vmatprep.subr.bf16.mxu0 0
      %3000 = vmatpush2.bf16.msra.mxu0 0
      %3001 = vmatprep.subr.bf16.mxu0 0
      %3002 = vmatpush2.bf16.msra.mxu0 0
      %3003 = vmatprep.subr.bf16.mxu0 0
      %3004 = vmatpush2.bf16.msra.mxu0 0
      %3005 = vmatprep.mubr.bf16.mxu0 0
      %3006 = vmatmul.mubr.bf16.gmra.mxu0 %v2962
      %v3007 = vpop.f32.mrf.mxu0
      %v3008 = vadd.f32 0.0, %v3007
      %v3009 = vpop.f32.mrf.mxu0
      %v3010 = vpop.f32.mrf.mxu0
      %v3011 = vadd.f32 0.0, %v3010
      %v3012 = vpop.f32.mrf.mxu0
      %3013 = vmatprep.mubr.bf16.mxu0 0
      %3014 = vmatmul.mubr.bf16.gmra.mxu0 %v2965
      %v3015 = vpop.f32.mrf.mxu0
      %v3016 = vadd.f32 0.0, %v3015
      %v3017 = vpop.f32.mrf.mxu0
      %v3018 = vpop.f32.mrf.mxu0
      %v3019 = vadd.f32 0.0, %v3018
      %v3020 = vpop.f32.mrf.mxu0
      %3021 = vmatprep.mubr.bf16.mxu0 0
      %3022 = vmatmul.mubr.bf16.gmra.mxu0 %v2968
      %v3023 = vpop.f32.mrf.mxu0
      %v3024 = vadd.f32 0.0, %v3023
      %v3025 = vpop.f32.mrf.mxu0
      %v3026 = vpop.f32.mrf.mxu0
      %v3027 = vadd.f32 0.0, %v3026
      %v3028 = vpop.f32.mrf.mxu0
      %3029 = vmatprep.mubr.bf16.mxu0 0
      %3030 = vmatmul.mubr.bf16.gmra.mxu0 %v2971
      %v3031 = vpop.f32.mrf.mxu0
      %v3032 = vadd.f32 0.0, %v3031
      %v3033 = vpop.f32.mrf.mxu0
      %v3034 = vpop.f32.mrf.mxu0
      %v3035 = vadd.f32 0.0, %v3034
      %v3036 = vpop.f32.mrf.mxu0
      %3037 = vdwg.mxu0
      %v3038 = vpack.c.bf16 %v3011, %v3008
      %v3039 = vpack.c.bf16 %v3019, %v3016
      %v3040 = vpack.c.bf16 %v3027, %v3024
      %v3041 = vpack.c.bf16 %v3035, %v3032
      %v3043 = vsel %vm605, %v3038, 0
      %v3046 = vsel %vm605, %v3039, 0
      %v3049 = vsel %vm605, %v3040, 0
      %v3052 = vsel %vm605, %v3041, 0
      %3054 = vmatprep.subr.bf16.mxu0 0
      %3055 = vmatpush1.bf16.msra.mxu0 0
      %3056 = vmatprep.subr.bf16.mxu0 0
      %3057 = vmatpush1.bf16.msra.mxu0 0
      %3058 = vmatprep.subr.bf16.mxu0 0
      %3059 = vmatpush1.bf16.msra.mxu0 0
      %3060 = vmatprep.subr.bf16.mxu0 0
      %3061 = vmatpush1.bf16.msra.mxu0 0
      %3062 = vmatprep.subr.bf16.mxu0 0
      %3063 = vmatpush1.bf16.msra.mxu0 0
      %3064 = vmatprep.subr.bf16.mxu0 0
      %3065 = vmatpush1.bf16.msra.mxu0 0
      %3066 = vmatprep.subr.bf16.mxu0 0
      %3067 = vmatpush1.bf16.msra.mxu0 0
      %3068 = vmatprep.subr.bf16.mxu0 0
      %3069 = vmatpush1.bf16.msra.mxu0 %v1293
      %3070 = vmatprep.subr.bf16.mxu0 0
      %3071 = vmatpush2.bf16.msra.mxu0 0
      %3072 = vmatprep.subr.bf16.mxu0 0
      %3073 = vmatpush2.bf16.msra.mxu0 0
      %3074 = vmatprep.subr.bf16.mxu0 0
      %3075 = vmatpush2.bf16.msra.mxu0 0
      %3076 = vmatprep.subr.bf16.mxu0 0
      %3077 = vmatpush2.bf16.msra.mxu0 0
      %3078 = vmatprep.subr.bf16.mxu0 0
      %3079 = vmatpush2.bf16.msra.mxu0 0
      %3080 = vmatprep.subr.bf16.mxu0 0
      %3081 = vmatpush2.bf16.msra.mxu0 0
      %3082 = vmatprep.subr.bf16.mxu0 0
      %3083 = vmatpush2.bf16.msra.mxu0 0
      %3084 = vmatprep.subr.bf16.mxu0 0
      %3085 = vmatpush2.bf16.msra.mxu0 0
      %3086 = vmatprep.mubr.bf16.mxu0 0
      %3087 = vmatmul.mubr.bf16.gmra.mxu0 %v3043
      %v3088 = vpop.f32.mrf.mxu0
      %v3089 = vadd.f32 0.0, %v3088
      %v3090 = vpop.f32.mrf.mxu0
      %v3091 = vpop.f32.mrf.mxu0
      %v3092 = vadd.f32 0.0, %v3091
      %v3093 = vpop.f32.mrf.mxu0
      %3094 = vmatprep.mubr.bf16.mxu0 0
      %3095 = vmatmul.mubr.bf16.gmra.mxu0 %v3046
      %v3096 = vpop.f32.mrf.mxu0
      %v3097 = vadd.f32 0.0, %v3096
      %v3098 = vpop.f32.mrf.mxu0
      %v3099 = vpop.f32.mrf.mxu0
      %v3100 = vadd.f32 0.0, %v3099
      %v3101 = vpop.f32.mrf.mxu0
      %3102 = vmatprep.mubr.bf16.mxu0 0
      %3103 = vmatmul.mubr.bf16.gmra.mxu0 %v3049
      %v3104 = vpop.f32.mrf.mxu0
      %v3105 = vadd.f32 0.0, %v3104
      %v3106 = vpop.f32.mrf.mxu0
      %v3107 = vpop.f32.mrf.mxu0
      %v3108 = vadd.f32 0.0, %v3107
      %v3109 = vpop.f32.mrf.mxu0
      %3110 = vmatprep.mubr.bf16.mxu0 0
      %3111 = vmatmul.mubr.bf16.gmra.mxu0 %v3052
      %v3112 = vpop.f32.mrf.mxu0
      %v3113 = vadd.f32 0.0, %v3112
      %v3114 = vpop.f32.mrf.mxu0
      %v3115 = vpop.f32.mrf.mxu0
      %v3116 = vadd.f32 0.0, %v3115
      %v3117 = vpop.f32.mrf.mxu0
      %3118 = vdwg.mxu0
      %v3119 = vadd.f32 %v2736, %v3089
      %v3120 = vadd.f32 %v2737, %v3092
      %v3121 = vadd.f32 %v2738, %v3097
      %v3122 = vadd.f32 %v2739, %v3100
      %v3123 = vadd.f32 %v2740, %v3105
      %v3124 = vadd.f32 %v2741, %v3108
      %v3125 = vadd.f32 %v2742, %v3113
      %v3126 = vadd.f32 %v2743, %v3116
      %3127 = vrot.lane.b32.xlu0 %v2361, 120
      %v3128 = vpop.permute.xlu0 %3127
      %3129 = vrot.lane.b32.xlu0 %v2362, 120
      %v3130 = vpop.permute.xlu0 %3129
      %3131 = vrot.lane.b32.xlu0 %v2363, 120
      %v3132 = vpop.permute.xlu0 %3131
      %3133 = vrot.lane.b32.xlu0 %v2364, 120
      %v3134 = vpop.permute.xlu0 %3133
      %3135 = vrot.lane.b32.xlu0 %v2361, 104
      %v3136 = vpop.permute.xlu0 %3135
      %3137 = vrot.lane.b32.xlu0 %v2362, 104
      %v3138 = vpop.permute.xlu0 %3137
      %3139 = vrot.lane.b32.xlu0 %v2363, 104
      %v3140 = vpop.permute.xlu0 %3139
      %3141 = vrot.lane.b32.xlu0 %v2364, 104
      %v3142 = vpop.permute.xlu0 %3141
      %v3144 = vsel %vm605, %v3128, 0
      %v3147 = vsel %vm605, %v3130, 0
      %v3150 = vsel %vm605, %v3132, 0
      %v3153 = vsel %vm605, %v3134, 0
      %v3156 = vsel %vm605, %v3136, 0
      %v3159 = vsel %vm605, %v3138, 0
      %v3162 = vsel %vm605, %v3140, 0
      %v3165 = vsel %vm605, %v3142, 0
      %3167 = vmatprep.subr.bf16.mxu0 0
      %3168 = vmatpush1.bf16.xpose.msra.mxu0 0
      %3169 = vmatprep.subr.bf16.mxu0 0
      %3170 = vmatpush1.bf16.xpose.msra.mxu0 0
      %3171 = vmatprep.subr.bf16.mxu0 0
      %3172 = vmatpush1.bf16.xpose.msra.mxu0 0
      %3173 = vmatprep.subr.bf16.mxu0 0
      %3174 = vmatpush1.bf16.xpose.msra.mxu0 0
      %3175 = vmatprep.subr.bf16.mxu0 0
      %3176 = vmatpush1.bf16.xpose.msra.mxu0 %v3165
      %3177 = vmatprep.subr.bf16.mxu0 0
      %3178 = vmatpush1.bf16.xpose.msra.mxu0 %v3162
      %3179 = vmatprep.subr.bf16.mxu0 0
      %3180 = vmatpush1.bf16.xpose.msra.mxu0 %v3159
      %3181 = vmatprep.subr.bf16.mxu0 0
      %3182 = vmatpush1.bf16.xpose.msra.mxu0 %v3156
      %3183 = vmatprep.subr.bf16.mxu0 0
      %3184 = vmatpush2.bf16.xpose.msra.mxu0 0
      %3185 = vmatprep.subr.bf16.mxu0 0
      %3186 = vmatpush2.bf16.xpose.msra.mxu0 0
      %3187 = vmatprep.subr.bf16.mxu0 0
      %3188 = vmatpush2.bf16.xpose.msra.mxu0 0
      %3189 = vmatprep.subr.bf16.mxu0 0
      %3190 = vmatpush2.bf16.xpose.msra.mxu0 0
      %3191 = vmatprep.subr.bf16.mxu0 0
      %3192 = vmatpush2.bf16.xpose.msra.mxu0 0
      %3193 = vmatprep.subr.bf16.mxu0 0
      %3194 = vmatpush2.bf16.xpose.msra.mxu0 0
      %3195 = vmatprep.subr.bf16.mxu0 0
      %3196 = vmatpush2.bf16.xpose.msra.mxu0 0
      %3197 = vmatprep.subr.bf16.mxu0 0
      %3198 = vmatpush2.bf16.xpose.msra.mxu0 0
      %3199 = vmatprep.mubr.bf16.mxu0 0
      %3200 = vmatmul.mubr.bf16.gmra.mxu0 %v3144
      %v3201 = vpop.f32.mrf.mxu0
      %v3202 = vadd.f32 0.0, %v3201
      %v3203 = vpop.f32.mrf.mxu0
      %v3204 = vpop.f32.mrf.mxu0
      %v3205 = vadd.f32 0.0, %v3204
      %v3206 = vpop.f32.mrf.mxu0
      %3207 = vmatprep.mubr.bf16.mxu0 0
      %3208 = vmatmul.mubr.bf16.gmra.mxu0 %v3147
      %v3209 = vpop.f32.mrf.mxu0
      %v3210 = vadd.f32 0.0, %v3209
      %v3211 = vpop.f32.mrf.mxu0
      %v3212 = vpop.f32.mrf.mxu0
      %v3213 = vadd.f32 0.0, %v3212
      %v3214 = vpop.f32.mrf.mxu0
      %3215 = vmatprep.mubr.bf16.mxu0 0
      %3216 = vmatmul.mubr.bf16.gmra.mxu0 %v3150
      %v3217 = vpop.f32.mrf.mxu0
      %v3218 = vadd.f32 0.0, %v3217
      %v3219 = vpop.f32.mrf.mxu0
      %v3220 = vpop.f32.mrf.mxu0
      %v3221 = vadd.f32 0.0, %v3220
      %v3222 = vpop.f32.mrf.mxu0
      %3223 = vmatprep.mubr.bf16.mxu0 0
      %3224 = vmatmul.mubr.bf16.gmra.mxu0 %v3153
      %v3225 = vpop.f32.mrf.mxu0
      %v3226 = vadd.f32 0.0, %v3225
      %v3227 = vpop.f32.mrf.mxu0
      %v3228 = vpop.f32.mrf.mxu0
      %v3229 = vadd.f32 0.0, %v3228
      %v3230 = vpop.f32.mrf.mxu0
      %3231 = vdwg.mxu0
      %v3232 = vmul.f32 %v3202, 0.5
      %v3233 = vmul.f32 %v3205, 0.5
      %v3234 = vmul.f32 %v3210, 0.5
      %v3235 = vmul.f32 %v3213, 0.5
      %v3236 = vmul.f32 %v3218, 0.5
      %v3237 = vmul.f32 %v3221, 0.5
      %v3238 = vmul.f32 %v3226, 0.5
      %v3239 = vmul.f32 %v3229, 0.5
      %v3240 = vsel %vm703, %v3232, -inf
      %3241 = vmax.xlane.f32.xlu0 %v3240
      %v3242 = vpop.xlane.xlu0 %3241
      %v3243 = vsel %vm703, %v3233, -inf
      %3244 = vmax.xlane.f32.xlu0 %v3243
      %v3245 = vpop.xlane.xlu0 %3244
      %v3246 = vsel %vm703, %v3234, -inf
      %3247 = vmax.xlane.f32.xlu0 %v3246
      %v3248 = vpop.xlane.xlu0 %3247
      %v3249 = vsel %vm703, %v3235, -inf
      %3250 = vmax.xlane.f32.xlu0 %v3249
      %v3251 = vpop.xlane.xlu0 %3250
      %v3252 = vsel %vm703, %v3236, -inf
      %3253 = vmax.xlane.f32.xlu0 %v3252
      %v3254 = vpop.xlane.xlu0 %3253
      %v3255 = vsel %vm703, %v3237, -inf
      %3256 = vmax.xlane.f32.xlu0 %v3255
      %v3257 = vpop.xlane.xlu0 %3256
      %v3258 = vsel %vm703, %v3238, -inf
      %3259 = vmax.xlane.f32.xlu0 %v3258
      %v3260 = vpop.xlane.xlu0 %3259
      %v3261 = vsel %vm703, %v3239, -inf
      %3262 = vmax.xlane.f32.xlu0 %v3261
      %v3263 = vpop.xlane.xlu0 %3262
      %v3264 = vsub.f32 %v3232, %v3242
      %v3265 = vsub.f32 %v3233, %v3245
      %v3266 = vsub.f32 %v3234, %v3248
      %v3267 = vsub.f32 %v3235, %v3251
      %v3268 = vsub.f32 %v3236, %v3254
      %v3269 = vsub.f32 %v3237, %v3257
      %v3270 = vsub.f32 %v3238, %v3260
      %v3271 = vsub.f32 %v3239, %v3263
      %v3272 = vmul.f32 %v3264, 1.442695
      %v3273 = vpow.pop %v3272
      %v3274 = vmul.f32 %v3265, 1.442695
      %v3275 = vpow.pop %v3274
      %v3276 = vmul.f32 %v3266, 1.442695
      %v3277 = vpow.pop %v3276
      %v3278 = vmul.f32 %v3267, 1.442695
      %v3279 = vpow.pop %v3278
      %v3280 = vmul.f32 %v3268, 1.442695
      %v3281 = vpow.pop %v3280
      %v3282 = vmul.f32 %v3269, 1.442695
      %v3283 = vpow.pop %v3282
      %v3284 = vmul.f32 %v3270, 1.442695
      %v3285 = vpow.pop %v3284
      %v3286 = vmul.f32 %v3271, 1.442695
      %v3287 = vpow.pop %v3286
      %v3288 = vsel %vm703, %v3273, 0.0
      %3289 = vadd.xlane.f32.xlu0 %v3288
      %v3290 = vpop.xlane.xlu0 %3289
      %v3291 = vsel %vm703, %v3275, 0.0
      %3292 = vadd.xlane.f32.xlu0 %v3291
      %v3293 = vpop.xlane.xlu0 %3292
      %v3294 = vsel %vm703, %v3277, 0.0
      %3295 = vadd.xlane.f32.xlu0 %v3294
      %v3296 = vpop.xlane.xlu0 %3295
      %v3297 = vsel %vm703, %v3279, 0.0
      %3298 = vadd.xlane.f32.xlu0 %v3297
      %v3299 = vpop.xlane.xlu0 %3298
      %v3300 = vsel %vm703, %v3281, 0.0
      %3301 = vadd.xlane.f32.xlu0 %v3300
      %v3302 = vpop.xlane.xlu0 %3301
      %v3303 = vsel %vm703, %v3283, 0.0
      %3304 = vadd.xlane.f32.xlu0 %v3303
      %v3305 = vpop.xlane.xlu0 %3304
      %v3306 = vsel %vm703, %v3285, 0.0
      %3307 = vadd.xlane.f32.xlu0 %v3306
      %v3308 = vpop.xlane.xlu0 %3307
      %v3309 = vsel %vm703, %v3287, 0.0
      %3310 = vadd.xlane.f32.xlu0 %v3309
      %v3311 = vpop.xlane.xlu0 %3310
      %v3312 = vrcp.pop %v3290
      %v3313 = vrcp.pop %v3293
      %v3314 = vrcp.pop %v3296
      %v3315 = vrcp.pop %v3299
      %v3316 = vrcp.pop %v3302
      %v3317 = vrcp.pop %v3305
      %v3318 = vrcp.pop %v3308
      %v3319 = vrcp.pop %v3311
      %v3320 = vmul.f32 %v3273, %v3312
      %v3321 = vmul.f32 %v3275, %v3313
      %v3322 = vmul.f32 %v3277, %v3314
      %v3323 = vmul.f32 %v3279, %v3315
      %v3324 = vmul.f32 %v3281, %v3316
      %v3325 = vmul.f32 %v3283, %v3317
      %v3326 = vmul.f32 %v3285, %v3318
      %v3327 = vmul.f32 %v3287, %v3319
      %v3328 = vpack.c.bf16 %v3321, %v3320
      %v3329 = vpack.c.bf16 %v3323, %v3322
      %v3330 = vpack.c.bf16 %v3325, %v3324
      %v3331 = vpack.c.bf16 %v3327, %v3326
      %3332 = vrot.lane.b32.xlu0 %v2361, 88
      %v3333 = vpop.permute.xlu0 %3332
      %3334 = vrot.lane.b32.xlu0 %v2362, 88
      %v3335 = vpop.permute.xlu0 %3334
      %3336 = vrot.lane.b32.xlu0 %v2363, 88
      %v3337 = vpop.permute.xlu0 %3336
      %3338 = vrot.lane.b32.xlu0 %v2364, 88
      %v3339 = vpop.permute.xlu0 %3338
      %v3345 = vsel %vm703, %v3328, 0
      %v3348 = vsel %vm703, %v3329, 0
      %v3351 = vsel %vm703, %v3330, 0
      %v3354 = vsel %vm703, %v3331, 0
      %3356 = vmatprep.subr.bf16.mxu0 0
      %3357 = vmatpush1.bf16.msra.mxu0 0
      %3358 = vmatprep.subr.bf16.mxu0 0
      %3359 = vmatpush1.bf16.msra.mxu0 0
      %3360 = vmatprep.subr.bf16.mxu0 0
      %3361 = vmatpush1.bf16.msra.mxu0 0
      %3362 = vmatprep.subr.bf16.mxu0 0
      %3363 = vmatpush1.bf16.msra.mxu0 0
      %3364 = vmatprep.subr.bf16.mxu0 0
      %3365 = vmatpush1.bf16.msra.mxu0 %v3339
      %3366 = vmatprep.subr.bf16.mxu0 0
      %3367 = vmatpush1.bf16.msra.mxu0 %v3337
      %3368 = vmatprep.subr.bf16.mxu0 0
      %3369 = vmatpush1.bf16.msra.mxu0 %v3335
      %3370 = vmatprep.subr.bf16.mxu0 0
      %3371 = vmatpush1.bf16.msra.mxu0 %v3333
      %3372 = vmatprep.subr.bf16.mxu0 0
      %3373 = vmatpush2.bf16.msra.mxu0 0
      %3374 = vmatprep.subr.bf16.mxu0 0
      %3375 = vmatpush2.bf16.msra.mxu0 0
      %3376 = vmatprep.subr.bf16.mxu0 0
      %3377 = vmatpush2.bf16.msra.mxu0 0
      %3378 = vmatprep.subr.bf16.mxu0 0
      %3379 = vmatpush2.bf16.msra.mxu0 0
      %3380 = vmatprep.subr.bf16.mxu0 0
      %3381 = vmatpush2.bf16.msra.mxu0 0
      %3382 = vmatprep.subr.bf16.mxu0 0
      %3383 = vmatpush2.bf16.msra.mxu0 0
      %3384 = vmatprep.subr.bf16.mxu0 0
      %3385 = vmatpush2.bf16.msra.mxu0 0
      %3386 = vmatprep.subr.bf16.mxu0 0
      %3387 = vmatpush2.bf16.msra.mxu0 0
      %3388 = vmatprep.mubr.bf16.mxu0 0
      %3389 = vmatmul.mubr.bf16.gmra.mxu0 %v3345
      %v3390 = vpop.f32.mrf.mxu0
      %v3391 = vadd.f32 0.0, %v3390
      %v3392 = vpop.f32.mrf.mxu0
      %v3393 = vpop.f32.mrf.mxu0
      %v3394 = vadd.f32 0.0, %v3393
      %v3395 = vpop.f32.mrf.mxu0
      %3396 = vmatprep.mubr.bf16.mxu0 0
      %3397 = vmatmul.mubr.bf16.gmra.mxu0 %v3348
      %v3398 = vpop.f32.mrf.mxu0
      %v3399 = vadd.f32 0.0, %v3398
      %v3400 = vpop.f32.mrf.mxu0
      %v3401 = vpop.f32.mrf.mxu0
      %v3402 = vadd.f32 0.0, %v3401
      %v3403 = vpop.f32.mrf.mxu0
      %3404 = vmatprep.mubr.bf16.mxu0 0
      %3405 = vmatmul.mubr.bf16.gmra.mxu0 %v3351
      %v3406 = vpop.f32.mrf.mxu0
      %v3407 = vadd.f32 0.0, %v3406
      %v3408 = vpop.f32.mrf.mxu0
      %v3409 = vpop.f32.mrf.mxu0
      %v3410 = vadd.f32 0.0, %v3409
      %v3411 = vpop.f32.mrf.mxu0
      %3412 = vmatprep.mubr.bf16.mxu0 0
      %3413 = vmatmul.mubr.bf16.gmra.mxu0 %v3354
      %v3414 = vpop.f32.mrf.mxu0
      %v3415 = vadd.f32 0.0, %v3414
      %v3416 = vpop.f32.mrf.mxu0
      %v3417 = vpop.f32.mrf.mxu0
      %v3418 = vadd.f32 0.0, %v3417
      %v3419 = vpop.f32.mrf.mxu0
      %3420 = vdwg.mxu0
      %v3421 = vpack.c.bf16 %v3394, %v3391
      %v3422 = vpack.c.bf16 %v3402, %v3399
      %v3423 = vpack.c.bf16 %v3410, %v3407
      %v3424 = vpack.c.bf16 %v3418, %v3415
      %v3426 = vsel %vm605, %v3421, 0
      %v3429 = vsel %vm605, %v3422, 0
      %v3432 = vsel %vm605, %v3423, 0
      %v3435 = vsel %vm605, %v3424, 0
      %3437 = vmatprep.subr.bf16.mxu0 0
      %3438 = vmatpush1.bf16.msra.mxu0 0
      %3439 = vmatprep.subr.bf16.mxu0 0
      %3440 = vmatpush1.bf16.msra.mxu0 0
      %3441 = vmatprep.subr.bf16.mxu0 0
      %3442 = vmatpush1.bf16.msra.mxu0 0
      %3443 = vmatprep.subr.bf16.mxu0 0
      %3444 = vmatpush1.bf16.msra.mxu0 0
      %3445 = vmatprep.subr.bf16.mxu0 0
      %3446 = vmatpush1.bf16.msra.mxu0 0
      %3447 = vmatprep.subr.bf16.mxu0 0
      %3448 = vmatpush1.bf16.msra.mxu0 0
      %3449 = vmatprep.subr.bf16.mxu0 0
      %3450 = vmatpush1.bf16.msra.mxu0 0
      %3451 = vmatprep.subr.bf16.mxu0 0
      %3452 = vmatpush1.bf16.msra.mxu0 %v1679
      %3453 = vmatprep.subr.bf16.mxu0 0
      %3454 = vmatpush2.bf16.msra.mxu0 0
      %3455 = vmatprep.subr.bf16.mxu0 0
      %3456 = vmatpush2.bf16.msra.mxu0 0
      %3457 = vmatprep.subr.bf16.mxu0 0
      %3458 = vmatpush2.bf16.msra.mxu0 0
      %3459 = vmatprep.subr.bf16.mxu0 0
      %3460 = vmatpush2.bf16.msra.mxu0 0
      %3461 = vmatprep.subr.bf16.mxu0 0
      %3462 = vmatpush2.bf16.msra.mxu0 0
      %3463 = vmatprep.subr.bf16.mxu0 0
      %3464 = vmatpush2.bf16.msra.mxu0 0
      %3465 = vmatprep.subr.bf16.mxu0 0
      %3466 = vmatpush2.bf16.msra.mxu0 0
      %3467 = vmatprep.subr.bf16.mxu0 0
      %3468 = vmatpush2.bf16.msra.mxu0 0
      %3469 = vmatprep.mubr.bf16.mxu0 0
      %3470 = vmatmul.mubr.bf16.gmra.mxu0 %v3426
      %v3471 = vpop.f32.mrf.mxu0
      %v3472 = vadd.f32 0.0, %v3471
      %v3473 = vpop.f32.mrf.mxu0
      %v3474 = vpop.f32.mrf.mxu0
      %v3475 = vadd.f32 0.0, %v3474
      %v3476 = vpop.f32.mrf.mxu0
      %3477 = vmatprep.mubr.bf16.mxu0 0
      %3478 = vmatmul.mubr.bf16.gmra.mxu0 %v3429
      %v3479 = vpop.f32.mrf.mxu0
      %v3480 = vadd.f32 0.0, %v3479
      %v3481 = vpop.f32.mrf.mxu0
      %v3482 = vpop.f32.mrf.mxu0
      %v3483 = vadd.f32 0.0, %v3482
      %v3484 = vpop.f32.mrf.mxu0
      %3485 = vmatprep.mubr.bf16.mxu0 0
      %3486 = vmatmul.mubr.bf16.gmra.mxu0 %v3432
      %v3487 = vpop.f32.mrf.mxu0
      %v3488 = vadd.f32 0.0, %v3487
      %v3489 = vpop.f32.mrf.mxu0
      %v3490 = vpop.f32.mrf.mxu0
      %v3491 = vadd.f32 0.0, %v3490
      %v3492 = vpop.f32.mrf.mxu0
      %3493 = vmatprep.mubr.bf16.mxu0 0
      %3494 = vmatmul.mubr.bf16.gmra.mxu0 %v3435
      %v3495 = vpop.f32.mrf.mxu0
      %v3496 = vadd.f32 0.0, %v3495
      %v3497 = vpop.f32.mrf.mxu0
      %v3498 = vpop.f32.mrf.mxu0
      %v3499 = vadd.f32 0.0, %v3498
      %v3500 = vpop.f32.mrf.mxu0
      %3501 = vdwg.mxu0
      %v3502 = vadd.f32 %v3119, %v3472
      %v3503 = vadd.f32 %v3120, %v3475
      %v3504 = vadd.f32 %v3121, %v3480
      %v3505 = vadd.f32 %v3122, %v3483
      %v3506 = vadd.f32 %v3123, %v3488
      %v3507 = vadd.f32 %v3124, %v3491
      %v3508 = vadd.f32 %v3125, %v3496
      %v3509 = vadd.f32 %v3126, %v3499
      %3510 = vrot.lane.b32.xlu0 %v2361, 116
      %v3511 = vpop.permute.xlu0 %3510
      %3512 = vrot.lane.b32.xlu0 %v2362, 116
      %v3513 = vpop.permute.xlu0 %3512
      %3514 = vrot.lane.b32.xlu0 %v2363, 116
      %v3515 = vpop.permute.xlu0 %3514
      %3516 = vrot.lane.b32.xlu0 %v2364, 116
      %v3517 = vpop.permute.xlu0 %3516
      %3518 = vrot.lane.b32.xlu0 %v2361, 100
      %v3519 = vpop.permute.xlu0 %3518
      %3520 = vrot.lane.b32.xlu0 %v2362, 100
      %v3521 = vpop.permute.xlu0 %3520
      %3522 = vrot.lane.b32.xlu0 %v2363, 100
      %v3523 = vpop.permute.xlu0 %3522
      %3524 = vrot.lane.b32.xlu0 %v2364, 100
      %v3525 = vpop.permute.xlu0 %3524
      %v3527 = vsel %vm605, %v3511, 0
      %v3530 = vsel %vm605, %v3513, 0
      %v3533 = vsel %vm605, %v3515, 0
      %v3536 = vsel %vm605, %v3517, 0
      %v3539 = vsel %vm605, %v3519, 0
      %v3542 = vsel %vm605, %v3521, 0
      %v3545 = vsel %vm605, %v3523, 0
      %v3548 = vsel %vm605, %v3525, 0
      %3550 = vmatprep.subr.bf16.mxu0 0
      %3551 = vmatpush1.bf16.xpose.msra.mxu0 0
      %3552 = vmatprep.subr.bf16.mxu0 0
      %3553 = vmatpush1.bf16.xpose.msra.mxu0 0
      %3554 = vmatprep.subr.bf16.mxu0 0
      %3555 = vmatpush1.bf16.xpose.msra.mxu0 0
      %3556 = vmatprep.subr.bf16.mxu0 0
      %3557 = vmatpush1.bf16.xpose.msra.mxu0 0
      %3558 = vmatprep.subr.bf16.mxu0 0
      %3559 = vmatpush1.bf16.xpose.msra.mxu0 %v3548
      %3560 = vmatprep.subr.bf16.mxu0 0
      %3561 = vmatpush1.bf16.xpose.msra.mxu0 %v3545
      %3562 = vmatprep.subr.bf16.mxu0 0
      %3563 = vmatpush1.bf16.xpose.msra.mxu0 %v3542
      %3564 = vmatprep.subr.bf16.mxu0 0
      %3565 = vmatpush1.bf16.xpose.msra.mxu0 %v3539
      %3566 = vmatprep.subr.bf16.mxu0 0
      %3567 = vmatpush2.bf16.xpose.msra.mxu0 0
      %3568 = vmatprep.subr.bf16.mxu0 0
      %3569 = vmatpush2.bf16.xpose.msra.mxu0 0
      %3570 = vmatprep.subr.bf16.mxu0 0
      %3571 = vmatpush2.bf16.xpose.msra.mxu0 0
      %3572 = vmatprep.subr.bf16.mxu0 0
      %3573 = vmatpush2.bf16.xpose.msra.mxu0 0
      %3574 = vmatprep.subr.bf16.mxu0 0
      %3575 = vmatpush2.bf16.xpose.msra.mxu0 0
      %3576 = vmatprep.subr.bf16.mxu0 0
      %3577 = vmatpush2.bf16.xpose.msra.mxu0 0
      %3578 = vmatprep.subr.bf16.mxu0 0
      %3579 = vmatpush2.bf16.xpose.msra.mxu0 0
      %3580 = vmatprep.subr.bf16.mxu0 0
      %3581 = vmatpush2.bf16.xpose.msra.mxu0 0
      %3582 = vmatprep.mubr.bf16.mxu0 0
      %3583 = vmatmul.mubr.bf16.gmra.mxu0 %v3527
      %v3584 = vpop.f32.mrf.mxu0
      %v3585 = vadd.f32 0.0, %v3584
      %v3586 = vpop.f32.mrf.mxu0
      %v3587 = vpop.f32.mrf.mxu0
      %v3588 = vadd.f32 0.0, %v3587
      %v3589 = vpop.f32.mrf.mxu0
      %3590 = vmatprep.mubr.bf16.mxu0 0
      %3591 = vmatmul.mubr.bf16.gmra.mxu0 %v3530
      %v3592 = vpop.f32.mrf.mxu0
      %v3593 = vadd.f32 0.0, %v3592
      %v3594 = vpop.f32.mrf.mxu0
      %v3595 = vpop.f32.mrf.mxu0
      %v3596 = vadd.f32 0.0, %v3595
      %v3597 = vpop.f32.mrf.mxu0
      %3598 = vmatprep.mubr.bf16.mxu0 0
      %3599 = vmatmul.mubr.bf16.gmra.mxu0 %v3533
      %v3600 = vpop.f32.mrf.mxu0
      %v3601 = vadd.f32 0.0, %v3600
      %v3602 = vpop.f32.mrf.mxu0
      %v3603 = vpop.f32.mrf.mxu0
      %v3604 = vadd.f32 0.0, %v3603
      %v3605 = vpop.f32.mrf.mxu0
      %3606 = vmatprep.mubr.bf16.mxu0 0
      %3607 = vmatmul.mubr.bf16.gmra.mxu0 %v3536
      %v3608 = vpop.f32.mrf.mxu0
      %v3609 = vadd.f32 0.0, %v3608
      %v3610 = vpop.f32.mrf.mxu0
      %v3611 = vpop.f32.mrf.mxu0
      %v3612 = vadd.f32 0.0, %v3611
      %v3613 = vpop.f32.mrf.mxu0
      %3614 = vdwg.mxu0
      %v3615 = vmul.f32 %v3585, 0.5
      %v3616 = vmul.f32 %v3588, 0.5
      %v3617 = vmul.f32 %v3593, 0.5
      %v3618 = vmul.f32 %v3596, 0.5
      %v3619 = vmul.f32 %v3601, 0.5
      %v3620 = vmul.f32 %v3604, 0.5
      %v3621 = vmul.f32 %v3609, 0.5
      %v3622 = vmul.f32 %v3612, 0.5
      %v3623 = vsel %vm703, %v3615, -inf
      %3624 = vmax.xlane.f32.xlu0 %v3623
      %v3625 = vpop.xlane.xlu0 %3624
      %v3626 = vsel %vm703, %v3616, -inf
      %3627 = vmax.xlane.f32.xlu0 %v3626
      %v3628 = vpop.xlane.xlu0 %3627
      %v3629 = vsel %vm703, %v3617, -inf
      %3630 = vmax.xlane.f32.xlu0 %v3629
      %v3631 = vpop.xlane.xlu0 %3630
      %v3632 = vsel %vm703, %v3618, -inf
      %3633 = vmax.xlane.f32.xlu0 %v3632
      %v3634 = vpop.xlane.xlu0 %3633
      %v3635 = vsel %vm703, %v3619, -inf
      %3636 = vmax.xlane.f32.xlu0 %v3635
      %v3637 = vpop.xlane.xlu0 %3636
      %v3638 = vsel %vm703, %v3620, -inf
      %3639 = vmax.xlane.f32.xlu0 %v3638
      %v3640 = vpop.xlane.xlu0 %3639
      %v3641 = vsel %vm703, %v3621, -inf
      %3642 = vmax.xlane.f32.xlu0 %v3641
      %v3643 = vpop.xlane.xlu0 %3642
      %v3644 = vsel %vm703, %v3622, -inf
      %3645 = vmax.xlane.f32.xlu0 %v3644
      %v3646 = vpop.xlane.xlu0 %3645
      %v3647 = vsub.f32 %v3615, %v3625
      %v3648 = vsub.f32 %v3616, %v3628
      %v3649 = vsub.f32 %v3617, %v3631
      %v3650 = vsub.f32 %v3618, %v3634
      %v3651 = vsub.f32 %v3619, %v3637
      %v3652 = vsub.f32 %v3620, %v3640
      %v3653 = vsub.f32 %v3621, %v3643
      %v3654 = vsub.f32 %v3622, %v3646
      %v3655 = vmul.f32 %v3647, 1.442695
      %v3656 = vpow.pop %v3655
      %v3657 = vmul.f32 %v3648, 1.442695
      %v3658 = vpow.pop %v3657
      %v3659 = vmul.f32 %v3649, 1.442695
      %v3660 = vpow.pop %v3659
      %v3661 = vmul.f32 %v3650, 1.442695
      %v3662 = vpow.pop %v3661
      %v3663 = vmul.f32 %v3651, 1.442695
      %v3664 = vpow.pop %v3663
      %v3665 = vmul.f32 %v3652, 1.442695
      %v3666 = vpow.pop %v3665
      %v3667 = vmul.f32 %v3653, 1.442695
      %v3668 = vpow.pop %v3667
      %v3669 = vmul.f32 %v3654, 1.442695
      %v3670 = vpow.pop %v3669
      %v3671 = vsel %vm703, %v3656, 0.0
      %3672 = vadd.xlane.f32.xlu0 %v3671
      %v3673 = vpop.xlane.xlu0 %3672
      %v3674 = vsel %vm703, %v3658, 0.0
      %3675 = vadd.xlane.f32.xlu0 %v3674
      %v3676 = vpop.xlane.xlu0 %3675
      %v3677 = vsel %vm703, %v3660, 0.0
      %3678 = vadd.xlane.f32.xlu0 %v3677
      %v3679 = vpop.xlane.xlu0 %3678
      %v3680 = vsel %vm703, %v3662, 0.0
      %3681 = vadd.xlane.f32.xlu0 %v3680
      %v3682 = vpop.xlane.xlu0 %3681
      %v3683 = vsel %vm703, %v3664, 0.0
      %3684 = vadd.xlane.f32.xlu0 %v3683
      %v3685 = vpop.xlane.xlu0 %3684
      %v3686 = vsel %vm703, %v3666, 0.0
      %3687 = vadd.xlane.f32.xlu0 %v3686
      %v3688 = vpop.xlane.xlu0 %3687
      %v3689 = vsel %vm703, %v3668, 0.0
      %3690 = vadd.xlane.f32.xlu0 %v3689
      %v3691 = vpop.xlane.xlu0 %3690
      %v3692 = vsel %vm703, %v3670, 0.0
      %3693 = vadd.xlane.f32.xlu0 %v3692
      %v3694 = vpop.xlane.xlu0 %3693
      %v3695 = vrcp.pop %v3673
      %v3696 = vrcp.pop %v3676
      %v3697 = vrcp.pop %v3679
      %v3698 = vrcp.pop %v3682
      %v3699 = vrcp.pop %v3685
      %v3700 = vrcp.pop %v3688
      %v3701 = vrcp.pop %v3691
      %v3702 = vrcp.pop %v3694
      %v3703 = vmul.f32 %v3656, %v3695
      %v3704 = vmul.f32 %v3658, %v3696
      %v3705 = vmul.f32 %v3660, %v3697
      %v3706 = vmul.f32 %v3662, %v3698
      %v3707 = vmul.f32 %v3664, %v3699
      %v3708 = vmul.f32 %v3666, %v3700
      %v3709 = vmul.f32 %v3668, %v3701
      %v3710 = vmul.f32 %v3670, %v3702
      %v3711 = vpack.c.bf16 %v3704, %v3703
      %v3712 = vpack.c.bf16 %v3706, %v3705
      %v3713 = vpack.c.bf16 %v3708, %v3707
      %v3714 = vpack.c.bf16 %v3710, %v3709
      %3715 = vrot.lane.b32.xlu0 %v2361, 84
      %v3716 = vpop.permute.xlu0 %3715
      %3717 = vrot.lane.b32.xlu0 %v2362, 84
      %v3718 = vpop.permute.xlu0 %3717
      %3719 = vrot.lane.b32.xlu0 %v2363, 84
      %v3720 = vpop.permute.xlu0 %3719
      %3721 = vrot.lane.b32.xlu0 %v2364, 84
      %v3722 = vpop.permute.xlu0 %3721
      %v3728 = vsel %vm703, %v3711, 0
      %v3731 = vsel %vm703, %v3712, 0
      %v3734 = vsel %vm703, %v3713, 0
      %v3737 = vsel %vm703, %v3714, 0
      %3739 = vmatprep.subr.bf16.mxu0 0
      %3740 = vmatpush1.bf16.msra.mxu0 0
      %3741 = vmatprep.subr.bf16.mxu0 0
      %3742 = vmatpush1.bf16.msra.mxu0 0
      %3743 = vmatprep.subr.bf16.mxu0 0
      %3744 = vmatpush1.bf16.msra.mxu0 0
      %3745 = vmatprep.subr.bf16.mxu0 0
      %3746 = vmatpush1.bf16.msra.mxu0 0
      %3747 = vmatprep.subr.bf16.mxu0 0
      %3748 = vmatpush1.bf16.msra.mxu0 %v3722
      %3749 = vmatprep.subr.bf16.mxu0 0
      %3750 = vmatpush1.bf16.msra.mxu0 %v3720
      %3751 = vmatprep.subr.bf16.mxu0 0
      %3752 = vmatpush1.bf16.msra.mxu0 %v3718
      %3753 = vmatprep.subr.bf16.mxu0 0
      %3754 = vmatpush1.bf16.msra.mxu0 %v3716
      %3755 = vmatprep.subr.bf16.mxu0 0
      %3756 = vmatpush2.bf16.msra.mxu0 0
      %3757 = vmatprep.subr.bf16.mxu0 0
      %3758 = vmatpush2.bf16.msra.mxu0 0
      %3759 = vmatprep.subr.bf16.mxu0 0
      %3760 = vmatpush2.bf16.msra.mxu0 0
      %3761 = vmatprep.subr.bf16.mxu0 0
      %3762 = vmatpush2.bf16.msra.mxu0 0
      %3763 = vmatprep.subr.bf16.mxu0 0
      %3764 = vmatpush2.bf16.msra.mxu0 0
      %3765 = vmatprep.subr.bf16.mxu0 0
      %3766 = vmatpush2.bf16.msra.mxu0 0
      %3767 = vmatprep.subr.bf16.mxu0 0
      %3768 = vmatpush2.bf16.msra.mxu0 0
      %3769 = vmatprep.subr.bf16.mxu0 0
      %3770 = vmatpush2.bf16.msra.mxu0 0
      %3771 = vmatprep.mubr.bf16.mxu0 0
      %3772 = vmatmul.mubr.bf16.gmra.mxu0 %v3728
      %v3773 = vpop.f32.mrf.mxu0
      %v3774 = vadd.f32 0.0, %v3773
      %v3775 = vpop.f32.mrf.mxu0
      %v3776 = vpop.f32.mrf.mxu0
      %v3777 = vadd.f32 0.0, %v3776
      %v3778 = vpop.f32.mrf.mxu0
      %3779 = vmatprep.mubr.bf16.mxu0 0
      %3780 = vmatmul.mubr.bf16.gmra.mxu0 %v3731
      %v3781 = vpop.f32.mrf.mxu0
      %v3782 = vadd.f32 0.0, %v3781
      %v3783 = vpop.f32.mrf.mxu0
      %v3784 = vpop.f32.mrf.mxu0
      %v3785 = vadd.f32 0.0, %v3784
      %v3786 = vpop.f32.mrf.mxu0
      %3787 = vmatprep.mubr.bf16.mxu0 0
      %3788 = vmatmul.mubr.bf16.gmra.mxu0 %v3734
      %v3789 = vpop.f32.mrf.mxu0
      %v3790 = vadd.f32 0.0, %v3789
      %v3791 = vpop.f32.mrf.mxu0
      %v3792 = vpop.f32.mrf.mxu0
      %v3793 = vadd.f32 0.0, %v3792
      %v3794 = vpop.f32.mrf.mxu0
      %3795 = vmatprep.mubr.bf16.mxu0 0
      %3796 = vmatmul.mubr.bf16.gmra.mxu0 %v3737
      %v3797 = vpop.f32.mrf.mxu0
      %v3798 = vadd.f32 0.0, %v3797
      %v3799 = vpop.f32.mrf.mxu0
      %v3800 = vpop.f32.mrf.mxu0
      %v3801 = vadd.f32 0.0, %v3800
      %v3802 = vpop.f32.mrf.mxu0
      %3803 = vdwg.mxu0
      %v3804 = vpack.c.bf16 %v3777, %v3774
      %v3805 = vpack.c.bf16 %v3785, %v3782
      %v3806 = vpack.c.bf16 %v3793, %v3790
      %v3807 = vpack.c.bf16 %v3801, %v3798
      %v3809 = vsel %vm605, %v3804, 0
      %v3812 = vsel %vm605, %v3805, 0
      %v3815 = vsel %vm605, %v3806, 0
      %v3818 = vsel %vm605, %v3807, 0
      %3820 = vmatprep.subr.bf16.mxu0 0
      %3821 = vmatpush1.bf16.msra.mxu0 0
      %3822 = vmatprep.subr.bf16.mxu0 0
      %3823 = vmatpush1.bf16.msra.mxu0 0
      %3824 = vmatprep.subr.bf16.mxu0 0
      %3825 = vmatpush1.bf16.msra.mxu0 0
      %3826 = vmatprep.subr.bf16.mxu0 0
      %3827 = vmatpush1.bf16.msra.mxu0 0
      %3828 = vmatprep.subr.bf16.mxu0 0
      %3829 = vmatpush1.bf16.msra.mxu0 0
      %3830 = vmatprep.subr.bf16.mxu0 0
      %3831 = vmatpush1.bf16.msra.mxu0 0
      %3832 = vmatprep.subr.bf16.mxu0 0
      %3833 = vmatpush1.bf16.msra.mxu0 0
      %3834 = vmatprep.subr.bf16.mxu0 0
      %3835 = vmatpush1.bf16.msra.mxu0 %v2069
      %3836 = vmatprep.subr.bf16.mxu0 0
      %3837 = vmatpush2.bf16.msra.mxu0 0
      %3838 = vmatprep.subr.bf16.mxu0 0
      %3839 = vmatpush2.bf16.msra.mxu0 0
      %3840 = vmatprep.subr.bf16.mxu0 0
      %3841 = vmatpush2.bf16.msra.mxu0 0
      %3842 = vmatprep.subr.bf16.mxu0 0
      %3843 = vmatpush2.bf16.msra.mxu0 0
      %3844 = vmatprep.subr.bf16.mxu0 0
      %3845 = vmatpush2.bf16.msra.mxu0 0
      %3846 = vmatprep.subr.bf16.mxu0 0
      %3847 = vmatpush2.bf16.msra.mxu0 0
      %3848 = vmatprep.subr.bf16.mxu0 0
      %3849 = vmatpush2.bf16.msra.mxu0 0
      %3850 = vmatprep.subr.bf16.mxu0 0
      %3851 = vmatpush2.bf16.msra.mxu0 0
      %3852 = vmatprep.mubr.bf16.mxu0 0
      %3853 = vmatmul.mubr.bf16.gmra.mxu0 %v3809
      %v3854 = vpop.f32.mrf.mxu0
      %v3855 = vadd.f32 0.0, %v3854
      %v3856 = vpop.f32.mrf.mxu0
      %v3857 = vpop.f32.mrf.mxu0
      %v3858 = vadd.f32 0.0, %v3857
      %v3859 = vpop.f32.mrf.mxu0
      %3860 = vmatprep.mubr.bf16.mxu0 0
      %3861 = vmatmul.mubr.bf16.gmra.mxu0 %v3812
      %v3862 = vpop.f32.mrf.mxu0
      %v3863 = vadd.f32 0.0, %v3862
      %v3864 = vpop.f32.mrf.mxu0
      %v3865 = vpop.f32.mrf.mxu0
      %v3866 = vadd.f32 0.0, %v3865
      %v3867 = vpop.f32.mrf.mxu0
      %3868 = vmatprep.mubr.bf16.mxu0 0
      %3869 = vmatmul.mubr.bf16.gmra.mxu0 %v3815
      %v3870 = vpop.f32.mrf.mxu0
      %v3871 = vadd.f32 0.0, %v3870
      %v3872 = vpop.f32.mrf.mxu0
      %v3873 = vpop.f32.mrf.mxu0
      %v3874 = vadd.f32 0.0, %v3873
      %v3875 = vpop.f32.mrf.mxu0
      %3876 = vmatprep.mubr.bf16.mxu0 0
      %3877 = vmatmul.mubr.bf16.gmra.mxu0 %v3818
      %v3878 = vpop.f32.mrf.mxu0
      %v3879 = vadd.f32 0.0, %v3878
      %v3880 = vpop.f32.mrf.mxu0
      %v3881 = vpop.f32.mrf.mxu0
      %v3882 = vadd.f32 0.0, %v3881
      %v3883 = vpop.f32.mrf.mxu0
      %3884 = vdwg.mxu0
      %v3885 = vadd.f32 %v3502, %v3855
      %v3886 = vadd.f32 %v3503, %v3858
      %v3887 = vadd.f32 %v3504, %v3863
      %v3888 = vadd.f32 %v3505, %v3866
      %v3889 = vadd.f32 %v3506, %v3871
      %v3890 = vadd.f32 %v3507, %v3874
      %v3891 = vadd.f32 %v3508, %v3879
      %v3892 = vadd.f32 %v3509, %v3882
      %3893 = vst.msk [vmem:[%s321 + $0x8] sm:$0xff] %vm348, %v3885
      %3894 = vst.msk [vmem:[%s321 + $0x18] sm:$0xff] %vm348, %v3886
      %3895 = vst.msk [vmem:[%s321 + $0x28] sm:$0xff] %vm348, %v3887
      %3896 = vst.msk [vmem:[%s321 + $0x38] sm:$0xff] %vm348, %v3888
      %3897 = vst.msk [vmem:[%s321 + $0x48] sm:$0xff] %vm348, %v3889
      %3898 = vst.msk [vmem:[%s321 + $0x58] sm:$0xff] %vm348, %v3890
      %3899 = vst.msk [vmem:[%s321 + $0x68] sm:$0xff] %vm348, %v3891
      %3900 = vst.msk [vmem:[%s321 + $0x78] sm:$0xff] %vm348, %v3892
      %s3901 = smul.u32 8, %s23
      %p3902 = scmp.lt.s32.totalorder %s22, 1
      %s3903 = scalar_select %p3902, %s22, 1
      %p3904 = scmp.lt.s32.totalorder %s3901, 15
      %s3905 = scalar_select %p3904, %s3901, 15
      %s3906 = smul.addr %s3905, 2
      %s3907 = smul.addr %s3903, 32
      %s3908 = sadd.s32 %s3906, %s3907
      %s3909 = smul.addr %s3908, 8
      %s3910 = scalar_lea.vmem %s7, %s3909
      // Predicated region
      $region49: #{transformer_forward.2} parent=47 // pred_check
        %p3911 = pneg %p204
      $region50: #{transformer_forward.2} parent=47 // pred_check_branch
        %3913 = sbr.rel (%p3911) target = $region52
      $region51: #{transformer_forward.2} parent=47 // pred_region
        %s3914 = smul.u32 8, %s23
      $region52: #{transformer_forward.2} parent=47 // pred_fallthru
        _
    $region48: #{transformer_forward.2} parent=5 // pred_fallthru
      _
    %p3915 = scmp.le.s32.totalorder 2, %s13
    // Predicated region
    $region53: #{transformer_forward.2} parent=5 // pred_check
      %p3916 = pneg %p3915
    $region54: #{transformer_forward.2} parent=5 // pred_check_branch
      %3918 = sbr.rel (%p3916) target = $region56
    $region55: #{transformer_forward.2} parent=5 // pred_region
      %s3919 = ssub.s32 %s13, 2
      // Predicated region
      $region57: #{transformer_forward.2} parent=55 // pred_check
        %p3920 = pneg %p210
      $region58: #{transformer_forward.2} parent=55 // pred_check_branch
        %3922 = sbr.rel (%p3920) target = $region60
      $region59: #{transformer_forward.2} parent=55 // pred_region
        %s3923 = smul.u32 8, %s25
        %p3924 = scmp.lt.s32.totalorder %s24, 1
        %s3925 = scalar_select %p3924, %s24, 1
        %p3926 = scmp.lt.s32.totalorder %s3923, 15
        %s3927 = scalar_select %p3926, %s3923, 15
        %s3928 = smul.addr %s3927, 2
        %s3929 = smul.addr %s3925, 32
        %s3930 = sadd.s32 %s3928, %s3929
        %s3931 = smul.addr %s3930, 8
        %s3932 = scalar_lea.vmem %s7, %s3931
      $region60: #{transformer_forward.2} parent=55 // pred_fallthru
        _
    $region56: #{transformer_forward.2} parent=5 // pred_fallthru
      _
  $region6: #{transformer_forward.2} parent=0 // loop_footer
    %s17 = sadd.s32 1, %s13
  $region7: #{transformer_forward.2} parent=0 // loop_footer_branch
    %12 = sbr.rel target = $region3
  $region8: #{transformer_forward.2} parent=0 // loop_exit
    _

</llo_original>
